<compile_context>
chip_gen: v5e
topology: v5e:2x2
jax: 0.10.0
libtpu: 0.0.40
codegen_flags: <defaults>
</compile_context>

<pallas_src>
import functools

import jax
import jax.numpy as jnp
from jax.experimental import pallas as pl
from jax.experimental.pallas import tpu as pltpu

LN_EPS = 1e-5  # PyTorch nn.LayerNorm default


def _round_up(n, m):
    return ((n + m - 1) // m) * m


def _ln_relu(h, gamma, beta):
    """LayerNorm over the last (feature) axis + ReLU.

    h: (tile_n, F); gamma/beta: (1, F).  Two-pass (centered) variance for
    robustness; matches PyTorch (biased variance, eps inside rsqrt).
    """
    mean = jnp.mean(h, axis=-1, keepdims=True)
    c = h - mean
    var = jnp.mean(c * c, axis=-1, keepdims=True)
    inv_std = jax.lax.rsqrt(var + LN_EPS)  # EUP slot
    return jnp.maximum(c * inv_std * gamma + beta, 0.0)


def _mlp_kernel(x_ref, w_ref, v_ref, o_ref, *, dims):
    f_in, h1, h2, f_out = dims

    x = x_ref[...]                                   # (tile_n, f_in)

    # Weight slabs are pre-transposed to (in, out) and zero-padded; slice the
    # live regions with static (zero-cost) ref slices.
    w1 = w_ref[0, :f_in, :h1]                        # (f_in, h1)
    w2 = w_ref[1, :h1, :h2]                          # (h1, h2)
    w3 = w_ref[2, :h2, :f_out]                       # (h2, f_out)

    v = v_ref[...]                                   # (7, wp) packed vectors
    b1, g1, be1 = v[0:1, :h1], v[1:2, :h1], v[2:3, :h1]
    b2, g2, be2 = v[3:4, :h2], v[4:5, :h2], v[5:6, :h2]
    b3 = v[6:7, :f_out]

    # hidden layer 1: Linear -> LayerNorm -> ReLU
    h = jnp.dot(x, w1, preferred_element_type=jnp.float32) + b1
    h = _ln_relu(h, g1, be1)
    # hidden layer 2: Linear -> LayerNorm -> ReLU
    h = jnp.dot(h, w2, preferred_element_type=jnp.float32) + b2
    h = _ln_relu(h, g2, be2)
    # output layer: Linear (output_activ is None -> no norm / activation)
    out = jnp.dot(h, w3, preferred_element_type=jnp.float32) + b3
    o_ref[...] = out.astype(o_ref.dtype)


def _tensorcores_per_chip():
    """Best-effort TensorCores-per-chip.  Default 2 is safe everywhere: an
    extra ~0.35us grid step on 1-TC parts vs. losing ~2x occupancy on 2-TC
    parts if we collapsed their grid to a single step."""
    try:
        kind = jax.devices()[0].device_kind.lower()
    except Exception:
        return 2
    if ("v5e" in kind or "v5 lite" in kind or "v5lite" in kind
            or "v6e" in kind or "v6 lite" in kind or "v6lite" in kind):
        return 1
    return 2  # v4/v5p/v7x-style megacore parts: keep >=2 steps on the parallel axis


def _pick_tile_n(n_rows):
    n_tc = _tensorcores_per_chip()
    n128 = _round_up(max(n_rows, 1), 128)
    tile = _round_up(pl.cdiv(n128, n_tc), 128)
    # VMEM guard for very large N: double-buffered x+out ~= 192*tile bytes.
    # 64K rows ~= 12.6 MiB, far under the 32 MiB scoped default (and v7x's
    # 64 MiB physical VMEM).
    tile = min(tile, 64 * 1024)
    return min(tile, n128)


def mlp_forward(x, wpack, vpack, *, dims, tile_n=None):
    """x: (N, F_in) float32, natural row-major layout in and out.
    wpack/vpack: outputs of pack_params().  Returns (N, F_out)."""
    n, f_in = x.shape
    f_in_p, h1, h2, f_out = dims
    assert f_in == f_in_p, "input feature size mismatch with packed params"

    if tile_n is None:
        tile_n = _pick_tile_n(n)
    tile_n = max(128, (tile_n // 128) * 128)
    grid = (pl.cdiv(n, tile_n),)

    kernel = functools.partial(_mlp_kernel, dims=dims)

    # Advisory cost estimate so XLA schedules the custom call tightly.
    flops = 2 * n * (f_in * h1 + h1 * h2 + h2 * f_out) + 12 * n * (h1 + h2)
    bytes_accessed = (x.size * x.dtype.itemsize + n * f_out * 4
                      + wpack.size * 4 + vpack.size * 4)

    def const_spec(shape):
        # Constant index_map -> block DMA'd once, stays resident across steps.
        return pl.BlockSpec(shape, lambda i: (0,) * len(shape))

    return pl.pallas_call(
        kernel,
        out_shape=jax.ShapeDtypeStruct((n, f_out), x.dtype),
        grid_spec=pltpu.PrefetchScalarGridSpec(
            num_scalar_prefetch=0,
            grid=grid,
            in_specs=[
                pl.BlockSpec((tile_n, f_in), lambda i: (i, 0)),   # x row-tile
                const_spec(wpack.shape),                          # packed weights
                const_spec(vpack.shape),                          # packed vectors
            ],
            out_specs=pl.BlockSpec((tile_n, f_out), lambda i: (i, 0)),
        ),
        compiler_params=pltpu.CompilerParams(
            dimension_semantics=("parallel",),   # rows independent; megacore-shardable
        ),
        cost_estimate=pl.CostEstimate(
            flops=int(flops), transcendentals=2 * n, bytes_accessed=int(bytes_accessed)),
    )(x, wpack, vpack)


def init_params(key, input_features, hidden_features_list, output_features):
    """Kaiming-uniform-ish init, PyTorch nn.Linear layout: W (out, in), b (out,)."""
    params = {}
    dims = [input_features] + list(hidden_features_list) + [output_features]
    keys = jax.random.split(key, 2 * (len(dims) - 1))
    for li in range(len(dims) - 1):
        fan_in, fan_out = dims[li], dims[li + 1]
        bound = 1.0 / jnp.sqrt(fan_in)
        w = jax.random.uniform(keys[2 * li], (fan_out, fan_in), jnp.float32, -bound, bound)
        b = jax.random.uniform(keys[2 * li + 1], (fan_out,), jnp.float32, -bound, bound)
        idx = li + 1
        params[f"w{idx}"] = w
        params[f"b{idx}"] = b
        if li < len(dims) - 2:  # hidden layers get LayerNorm affine params
            params[f"g{idx}"] = jnp.ones((fan_out,), jnp.float32)
            params[f"be{idx}"] = jnp.zeros((fan_out,), jnp.float32)
    return params


def pack_params(params):
    """One-time packing (outside the per-call path).

    wpack: (3, wp, wp) — the three weight matrices pre-transposed to (in, out)
           layout and zero-padded into a common slab.
    vpack: (7, wp) — rows b1, g1, be1, b2, g2, be2, b3 (zero-padded).
    dims:  (f_in, h1, h2, f_out) as static Python ints.
    """
    w1, w2, w3 = params["w1"], params["w2"], params["w3"]
    h1, f_in = w1.shape
    h2 = w2.shape[0]
    f_out = w3.shape[0]
    wp = _round_up(max(f_in, h1, h2, f_out), 8)

    wpack = jnp.zeros((3, wp, wp), jnp.float32)
    wpack = wpack.at[0, :f_in, :h1].set(w1.T)
    wpack = wpack.at[1, :h1, :h2].set(w2.T)
    wpack = wpack.at[2, :h2, :f_out].set(w3.T)

    vpack = jnp.zeros((7, wp), jnp.float32)
    vpack = vpack.at[0, :h1].set(params["b1"])
    vpack = vpack.at[1, :h1].set(params["g1"])
    vpack = vpack.at[2, :h1].set(params["be1"])
    vpack = vpack.at[3, :h2].set(params["b2"])
    vpack = vpack.at[4, :h2].set(params["g2"])
    vpack = vpack.at[5, :h2].set(params["be2"])
    vpack = vpack.at[6, :f_out].set(params["b3"])

    return wpack, vpack, (f_in, h1, h2, f_out)


def mlp_reference(x, params):
    """Pure-JAX reference (PyTorch semantics)."""
    def ln(h, g, b):
        mean = jnp.mean(h, axis=-1, keepdims=True)
        var = jnp.mean((h - mean) ** 2, axis=-1, keepdims=True)
        return (h - mean) * jax.lax.rsqrt(var + LN_EPS) * g + b

    h = x @ params["w1"].T + params["b1"]
    h = jnp.maximum(ln(h, params["g1"], params["be1"]), 0.0)
    h = h @ params["w2"].T + params["b2"]
    h = jnp.maximum(ln(h, params["g2"], params["be2"]), 0.0)
    return h @ params["w3"].T + params["b3"]


if __name__ == "__main__":
    INPUT_FEATURES = 16
    HIDDEN_FEATURES = [32, 32]
    OUTPUT_FEATURES = 8
    N = 2048  # number of hits

    key = jax.random.PRNGKey(0)
    kx, kp = jax.random.split(key)
    x = jax.random.normal(kx, (N, INPUT_FEATURES), jnp.float32)
    params = init_params(kp, INPUT_FEATURES, HIDDEN_FEATURES, OUTPUT_FEATURES)

    # One-time parameter packing, outside the per-call path.
    wpack, vpack, dims = pack_params(params)

    fwd = jax.jit(functools.partial(mlp_forward, dims=dims))
    out = jax.block_until_ready(fwd(x, wpack, vpack))

    ref = mlp_reference(x, params)
    assert out.shape == (N, OUTPUT_FEATURES)
    assert jnp.allclose(out, ref, atol=1e-4, rtol=1e-4), "mismatch vs reference"

    print("KERNEL_OK")
</pallas_src>

<mosaic_0001>
module attributes {stable_mosaic.version = 11 : i64} {
  func.func @_mlp_kernel(%arg0: i32, %arg1: memref<1024x16xf32, #tpu.memory_space<vmem>>, %arg2: memref<3x32x32xf32, #tpu.memory_space<vmem>>, %arg3: memref<7x32xf32, #tpu.memory_space<vmem>>, %arg4: memref<1024x8xf32, #tpu.memory_space<vmem>>) attributes {dimension_semantics = [#tpu.dimension_semantics<parallel>], iteration_bounds = array<i64: 2>, scalar_prefetch = 0 : i64, scratch_operands = 0 : i64, tpu.core_type = #tpu.core_type<tc>, window_params = [{transform_indices = @transform_0, window_bounds = array<i64: 1024, 16>}, {pipeline_mode = #tpu.pipeline_mode<synchronous>, transform_indices = @transform_1, window_bounds = array<i64: 3, 32, 32>}, {pipeline_mode = #tpu.pipeline_mode<synchronous>, transform_indices = @transform_2, window_bounds = array<i64: 7, 32>}, {transform_indices = @transform_3, window_bounds = array<i64: 1024, 8>}]} {
    %c0 = arith.constant 0 : index
    %c0_0 = arith.constant 0 : index
    %0 = vector.load %arg1[%c0, %c0_0] : memref<1024x16xf32, #tpu.memory_space<vmem>>, vector<1024x16xf32>
    %c0_1 = arith.constant 0 : index
    %c0_2 = arith.constant 0 : index
    %c0_3 = arith.constant 0 : index
    %1 = vector.load %arg2[%c0_1, %c0_2, %c0_3] : memref<3x32x32xf32, #tpu.memory_space<vmem>>, vector<1x16x32xf32>
    %2 = vector.shape_cast %1 : vector<1x16x32xf32> to vector<16x32xf32>
    %c1 = arith.constant 1 : index
    %c0_4 = arith.constant 0 : index
    %c0_5 = arith.constant 0 : index
    %3 = vector.load %arg2[%c1, %c0_4, %c0_5] : memref<3x32x32xf32, #tpu.memory_space<vmem>>, vector<1x32x32xf32>
    %4 = vector.shape_cast %3 : vector<1x32x32xf32> to vector<32x32xf32>
    %c2 = arith.constant 2 : index
    %c0_6 = arith.constant 0 : index
    %c0_7 = arith.constant 0 : index
    %5 = vector.load %arg2[%c2, %c0_6, %c0_7] : memref<3x32x32xf32, #tpu.memory_space<vmem>>, vector<1x32x8xf32>
    %6 = vector.shape_cast %5 : vector<1x32x8xf32> to vector<32x8xf32>
    %c0_8 = arith.constant 0 : index
    %c0_9 = arith.constant 0 : index
    %7 = vector.load %arg3[%c0_8, %c0_9] : memref<7x32xf32, #tpu.memory_space<vmem>>, vector<7x32xf32>
    %8 = vector.extract_strided_slice %7 {offsets = [0, 0], sizes = [1, 32], strides = [1, 1]} : vector<7x32xf32> to vector<1x32xf32>
    %9 = vector.extract_strided_slice %7 {offsets = [1, 0], sizes = [1, 32], strides = [1, 1]} : vector<7x32xf32> to vector<1x32xf32>
    %10 = vector.extract_strided_slice %7 {offsets = [2, 0], sizes = [1, 32], strides = [1, 1]} : vector<7x32xf32> to vector<1x32xf32>
    %11 = vector.extract_strided_slice %7 {offsets = [3, 0], sizes = [1, 32], strides = [1, 1]} : vector<7x32xf32> to vector<1x32xf32>
    %12 = vector.extract_strided_slice %7 {offsets = [4, 0], sizes = [1, 32], strides = [1, 1]} : vector<7x32xf32> to vector<1x32xf32>
    %13 = vector.extract_strided_slice %7 {offsets = [5, 0], sizes = [1, 32], strides = [1, 1]} : vector<7x32xf32> to vector<1x32xf32>
    %14 = vector.extract_strided_slice %7 {offsets = [6, 0], sizes = [1, 8], strides = [1, 1]} : vector<7x32xf32> to vector<1x8xf32>
    %cst = arith.constant dense<0.000000e+00> : vector<1024x32xf32>
    %15 = tpu.matmul %0, %2, %cst {dimension_numbers = #tpu.dot_dimension_numbers<[1], [0], [0], [1], [0, 0, 1, 1], [], []>} : vector<1024x16xf32>, vector<16x32xf32>, vector<1024x32xf32> -> vector<1024x32xf32>
    %16 = vector.broadcast %8 : vector<1x32xf32> to vector<1024x32xf32>
    %17 = arith.addf %15, %16 : vector<1024x32xf32>
    %cst_10 = arith.constant dense<0.000000e+00> : vector<1024xf32>
    %18 = vector.multi_reduction <add>, %17, %cst_10 [1] : vector<1024x32xf32> to vector<1024xf32>
    %19 = vector.shape_cast %18 : vector<1024xf32> to vector<1024x1xf32>
    %cst_11 = arith.constant 3.200000e+01 : f32
    %20 = vector.broadcast %cst_11 : f32 to vector<1024x1xf32>
    %21 = arith.divf %19, %20 : vector<1024x1xf32>
    %22 = vector.broadcast %21 : vector<1024x1xf32> to vector<1024x32xf32>
    %23 = arith.subf %17, %22 : vector<1024x32xf32>
    %24 = arith.mulf %23, %23 : vector<1024x32xf32>
    %cst_12 = arith.constant dense<0.000000e+00> : vector<1024xf32>
    %25 = vector.multi_reduction <add>, %24, %cst_12 [1] : vector<1024x32xf32> to vector<1024xf32>
    %26 = vector.shape_cast %25 : vector<1024xf32> to vector<1024x1xf32>
    %cst_13 = arith.constant 3.200000e+01 : f32
    %27 = vector.broadcast %cst_13 : f32 to vector<1024x1xf32>
    %28 = arith.divf %26, %27 : vector<1024x1xf32>
    %cst_14 = arith.constant 9.99999974E-6 : f32
    %29 = vector.broadcast %cst_14 : f32 to vector<1024x1xf32>
    %30 = arith.addf %28, %29 : vector<1024x1xf32>
    %31 = math.rsqrt %30 : vector<1024x1xf32>
    %32 = vector.broadcast %31 : vector<1024x1xf32> to vector<1024x32xf32>
    %33 = arith.mulf %23, %32 : vector<1024x32xf32>
    %34 = vector.broadcast %9 : vector<1x32xf32> to vector<1024x32xf32>
    %35 = arith.mulf %33, %34 : vector<1024x32xf32>
    %36 = vector.broadcast %10 : vector<1x32xf32> to vector<1024x32xf32>
    %37 = arith.addf %35, %36 : vector<1024x32xf32>
    %cst_15 = arith.constant 0.000000e+00 : f32
    %38 = vector.broadcast %cst_15 : f32 to vector<1024x32xf32>
    %39 = arith.maximumf %37, %38 : vector<1024x32xf32>
    %cst_16 = arith.constant dense<0.000000e+00> : vector<1024x32xf32>
    %40 = tpu.matmul %39, %4, %cst_16 {dimension_numbers = #tpu.dot_dimension_numbers<[1], [0], [0], [1], [0, 0, 1, 1], [], []>} : vector<1024x32xf32>, vector<32x32xf32>, vector<1024x32xf32> -> vector<1024x32xf32>
    %41 = vector.broadcast %11 : vector<1x32xf32> to vector<1024x32xf32>
    %42 = arith.addf %40, %41 : vector<1024x32xf32>
    %cst_17 = arith.constant dense<0.000000e+00> : vector<1024xf32>
    %43 = vector.multi_reduction <add>, %42, %cst_17 [1] : vector<1024x32xf32> to vector<1024xf32>
    %44 = vector.shape_cast %43 : vector<1024xf32> to vector<1024x1xf32>
    %cst_18 = arith.constant 3.200000e+01 : f32
    %45 = vector.broadcast %cst_18 : f32 to vector<1024x1xf32>
    %46 = arith.divf %44, %45 : vector<1024x1xf32>
    %47 = vector.broadcast %46 : vector<1024x1xf32> to vector<1024x32xf32>
    %48 = arith.subf %42, %47 : vector<1024x32xf32>
    %49 = arith.mulf %48, %48 : vector<1024x32xf32>
    %cst_19 = arith.constant dense<0.000000e+00> : vector<1024xf32>
    %50 = vector.multi_reduction <add>, %49, %cst_19 [1] : vector<1024x32xf32> to vector<1024xf32>
    %51 = vector.shape_cast %50 : vector<1024xf32> to vector<1024x1xf32>
    %cst_20 = arith.constant 3.200000e+01 : f32
    %52 = vector.broadcast %cst_20 : f32 to vector<1024x1xf32>
    %53 = arith.divf %51, %52 : vector<1024x1xf32>
    %cst_21 = arith.constant 9.99999974E-6 : f32
    %54 = vector.broadcast %cst_21 : f32 to vector<1024x1xf32>
    %55 = arith.addf %53, %54 : vector<1024x1xf32>
    %56 = math.rsqrt %55 : vector<1024x1xf32>
    %57 = vector.broadcast %56 : vector<1024x1xf32> to vector<1024x32xf32>
    %58 = arith.mulf %48, %57 : vector<1024x32xf32>
    %59 = vector.broadcast %12 : vector<1x32xf32> to vector<1024x32xf32>
    %60 = arith.mulf %58, %59 : vector<1024x32xf32>
    %61 = vector.broadcast %13 : vector<1x32xf32> to vector<1024x32xf32>
    %62 = arith.addf %60, %61 : vector<1024x32xf32>
    %cst_22 = arith.constant 0.000000e+00 : f32
    %63 = vector.broadcast %cst_22 : f32 to vector<1024x32xf32>
    %64 = arith.maximumf %62, %63 : vector<1024x32xf32>
    %cst_23 = arith.constant dense<0.000000e+00> : vector<1024x8xf32>
    %65 = tpu.matmul %64, %6, %cst_23 {dimension_numbers = #tpu.dot_dimension_numbers<[1], [0], [0], [1], [0, 0, 1, 1], [], []>} : vector<1024x32xf32>, vector<32x8xf32>, vector<1024x8xf32> -> vector<1024x8xf32>
    %66 = vector.broadcast %14 : vector<1x8xf32> to vector<1024x8xf32>
    %67 = arith.addf %65, %66 : vector<1024x8xf32>
    %c0_24 = arith.constant 0 : index
    %c0_25 = arith.constant 0 : index
    %68 = vector.load %arg4[%c0_24, %c0_25] : memref<1024x8xf32, #tpu.memory_space<vmem>>, vector<1024x8xf32>
    tpu.vector_store %arg4[%c0_24, %c0_25], %67 {strides = array<i32>} : memref<1024x8xf32, #tpu.memory_space<vmem>>, vector<1024x8xf32>,
    return
  }
  func.func @transform_0(%arg0: i32) -> (i32, i32) {
    %c0_i32 = arith.constant 0 : i32
    %c0_i32_0 = arith.constant 0 : i32
    return %arg0, %c0_i32 : i32, i32
  }
  func.func @transform_1(%arg0: i32) -> (i32, i32, i32) {
    %c0_i32 = arith.constant 0 : i32
    %c0_i32_0 = arith.constant 0 : i32
    %c0_i32_1 = arith.constant 0 : i32
    %c0_i32_2 = arith.constant 0 : i32
    return %c0_i32, %c0_i32_0, %c0_i32_1 : i32, i32, i32
  }
  func.func @transform_2(%arg0: i32) -> (i32, i32) {
    %c0_i32 = arith.constant 0 : i32
    %c0_i32_0 = arith.constant 0 : i32
    %c0_i32_1 = arith.constant 0 : i32
    return %c0_i32, %c0_i32_0 : i32, i32
  }
  func.func @transform_3(%arg0: i32) -> (i32, i32) {
    %c0_i32 = arith.constant 0 : i32
    %c0_i32_0 = arith.constant 0 : i32
    return %arg0, %c0_i32 : i32, i32
  }
}

</mosaic_0001>

<llo_original>
// kernel: mlp_forward.1
$region0: #{mlp_forward.1}
  #allocation0 [shape = 'u32[]', space=smem, size = 0x4, offset = 0x4, fixed_abs, tag = 'smem constant byte address 0x4 - core index']
  #allocation1 [shape = 'u32[72,128]{1,0:T(1,128)}', space=vmem, size = 0x9000, scoped, tag = 'internal scratch']
  %s0 = inlined_call_operand.vmem [shape: f32[2048,16], index: 0, kind: input, shape index: {}]
  %s1 = inlined_call_operand.vmem [shape: f32[3,32,32], index: 1, kind: input, shape index: {}]
  %s2 = inlined_call_operand.vmem [shape: f32[7,32], index: 2, kind: input, shape index: {}]
  %s3 = inlined_call_operand.vmem [shape: f32[2048,8], index: 3, kind: output, shape index: {}]
  %s4 = sld [smem:[#allocation0]]
  $region45: #{mlp_forward.1} parent=0
    _
  %s6 = ssub.s32 1, %s4
  %s7 = scalar_select 0, %s6, %s4
  loop: start=0, step=1, limit=4
  $region2: #{mlp_forward.1} parent=0 // loop_pre_header
    _
  $region3: #{mlp_forward.1} parent=0 // loop_header
    %s9 = sphi 0, %s13
    %p10 = scmp.ge.s32.totalorder %s9, 4
    %s19 = sphi 0, %s21
    %s22 = sphi 0, %s19
    %s23 = sphi 0, %s22
    %s39 = sphi 0, %s23
    %s43 = sphi 0, %s43
    %s45 = sphi 0, %s43
    %s46 = sphi 0, %s45
    %s60 = sphi 0, %s46
    %s64 = sphi 0, %s64
    %s66 = sphi 0, %s64
    %s67 = sphi 0, %s66
    %s81 = sphi 0, %s67
    %s87 = sphi 0, %s89
    %s90 = sphi 0, %s87
    %s91 = sphi 0, %s90
    %s107 = sphi 0, %s91
  $region4: #{mlp_forward.1} parent=0 // loop_header_branch
    %12 = sbr.rel (%p10) target = $region8
  $region5: #{mlp_forward.1} parent=0 // loop_body
    %s14 = ssub.s32 %s9, 1
    %s15 = ssub.s32 %s9, 2
    %s16 = sadd.s32 %s9, 1
    %s17 = ssub.s32 %s9, %s16
    %p18 = scmp.eq.s32.totalorder %s17, 0
    %s20 = sadd.s32 %s19, 1
    %s21 = scalar_select %p18, %s19, %s20
    %p24 = pneg %p18
    %p25 = scmp.eq.s32.totalorder %s9, 1
    %p26 = por %p24, %p25
    %p27 = scmp.ne.s32.totalorder %s19, %s22
    %p28 = scmp.eq.s32.totalorder %s9, 0
    %p29 = por %p27, %p28
    %p30 = scmp.ne.s32.totalorder %s19, %s22
    %p31 = scmp.eq.s32.totalorder %s14, 1
    %p32 = por %p30, %p31
    %p33 = scmp.ne.s32.totalorder %s22, %s23
    %p34 = scmp.eq.s32.totalorder %s14, 0
    %p35 = por %p33, %p34
    %p36 = scmp.ne.s32.totalorder %s22, %s23
    %p37 = scmp.eq.s32.totalorder %s15, 1
    %p38 = por %p36, %p37
    %p40 = scmp.ne.s32.totalorder %s23, %s39
    %p41 = scmp.eq.s32.totalorder %s15, 0
    %p42 = por %p40, %p41
    %s44 = sadd.s32 %s43, 1
    %p47 = scmp.eq.s32.totalorder %s9, 1
    %p48 = scmp.ne.s32.totalorder %s43, %s45
    %p49 = scmp.eq.s32.totalorder %s9, 0
    %p50 = por %p48, %p49
    %p51 = scmp.ne.s32.totalorder %s43, %s45
    %p52 = scmp.eq.s32.totalorder %s14, 1
    %p53 = por %p51, %p52
    %p54 = scmp.ne.s32.totalorder %s45, %s46
    %p55 = scmp.eq.s32.totalorder %s14, 0
    %p56 = por %p54, %p55
    %p57 = scmp.ne.s32.totalorder %s45, %s46
    %p58 = scmp.eq.s32.totalorder %s15, 1
    %p59 = por %p57, %p58
    %p61 = scmp.ne.s32.totalorder %s46, %s60
    %p62 = scmp.eq.s32.totalorder %s15, 0
    %p63 = por %p61, %p62
    %s65 = sadd.s32 %s64, 1
    %p68 = scmp.eq.s32.totalorder %s9, 1
    %p69 = scmp.ne.s32.totalorder %s64, %s66
    %p70 = scmp.eq.s32.totalorder %s9, 0
    %p71 = por %p69, %p70
    %p72 = scmp.ne.s32.totalorder %s64, %s66
    %p73 = scmp.eq.s32.totalorder %s14, 1
    %p74 = por %p72, %p73
    %p75 = scmp.ne.s32.totalorder %s66, %s67
    %p76 = scmp.eq.s32.totalorder %s14, 0
    %p77 = por %p75, %p76
    %p78 = scmp.ne.s32.totalorder %s66, %s67
    %p79 = scmp.eq.s32.totalorder %s15, 1
    %p80 = por %p78, %p79
    %p82 = scmp.ne.s32.totalorder %s67, %s81
    %p83 = scmp.eq.s32.totalorder %s15, 0
    %p84 = por %p82, %p83
    %s85 = ssub.s32 %s9, %s16
    %p86 = scmp.eq.s32.totalorder %s85, 0
    %s88 = sadd.s32 %s87, 1
    %s89 = scalar_select %p86, %s87, %s88
    %p92 = pneg %p86
    %p93 = scmp.eq.s32.totalorder %s9, 1
    %p94 = por %p92, %p93
    %p95 = scmp.ne.s32.totalorder %s87, %s90
    %p96 = scmp.eq.s32.totalorder %s9, 0
    %p97 = por %p95, %p96
    %p98 = scmp.ne.s32.totalorder %s87, %s90
    %p99 = scmp.eq.s32.totalorder %s14, 1
    %p100 = por %p98, %p99
    %p101 = scmp.ne.s32.totalorder %s90, %s91
    %p102 = scmp.eq.s32.totalorder %s14, 0
    %p103 = por %p101, %p102
    %p104 = scmp.ne.s32.totalorder %s90, %s91
    %p105 = scmp.eq.s32.totalorder %s15, 1
    %p106 = por %p104, %p105
    %p108 = scmp.ne.s32.totalorder %s91, %s107
    %p109 = scmp.eq.s32.totalorder %s15, 0
    %p110 = por %p108, %p109
    %p111 = scmp.le.s32.totalorder 1, %s9
    %p112 = scmp.lt.s32.totalorder %s9, 3
    %p113 = pnand %p111, %p112
    %p114 = pneg %p113
    // Predicated region
    $region9: #{mlp_forward.1} parent=5 // pred_check
      _
    $region10: #{mlp_forward.1} parent=5 // pred_check_branch
      %116 = sbr.rel (%p113) target = $region12
    $region11: #{mlp_forward.1} parent=5 // pred_region
      %s117 = ssub.s32 %s9, 1
      // Predicated region
      $region13: #{mlp_forward.1} parent=11 // pred_check
        %p118 = pneg %p56
      $region14: #{mlp_forward.1} parent=11 // pred_check_branch
        %120 = sbr.rel (%p118) target = $region16
      $region15: #{mlp_forward.1} parent=11 // pred_region
        _
      $region16: #{mlp_forward.1} parent=11 // pred_fallthru
        _
      // Predicated region
      $region17: #{mlp_forward.1} parent=11 // pred_check
        %p121 = pneg %p77
      $region18: #{mlp_forward.1} parent=11 // pred_check_branch
        %123 = sbr.rel (%p121) target = $region20
      $region19: #{mlp_forward.1} parent=11 // pred_region
        _
      $region20: #{mlp_forward.1} parent=11 // pred_fallthru
        _
    $region12: #{mlp_forward.1} parent=5 // pred_fallthru
      _
    %p124 = scmp.lt.s32.totalorder %s9, 2
    // Predicated region
    $region21: #{mlp_forward.1} parent=5 // pred_check
      %p125 = pneg %p124
    $region22: #{mlp_forward.1} parent=5 // pred_check_branch
      %127 = sbr.rel (%p125) target = $region24
    $region23: #{mlp_forward.1} parent=5 // pred_region
      // Predicated region
      $region25: #{mlp_forward.1} parent=23 // pred_check
        %p128 = pneg %p29
      $region26: #{mlp_forward.1} parent=23 // pred_check_branch
        %130 = sbr.rel (%p128) target = $region28
      $region27: #{mlp_forward.1} parent=23 // pred_region
        %s131 = smul.u32 128, %s9
        %p132 = scmp.lt.s32.totalorder %s131, 255
        %s133 = scalar_select %p132, %s131, 255
        %s134 = smul.addr %s133, 8
        %s135 = scalar_lea.vmem %s0, %s134
        %s136 = smul.u32 128, %s9
      $region28: #{mlp_forward.1} parent=23 // pred_fallthru
        _
    $region24: #{mlp_forward.1} parent=5 // pred_fallthru
      _
    %p137 = scmp.le.s32.totalorder 1, %s9
    %p138 = scmp.lt.s32.totalorder %s9, 3
    %p139 = pnand %p137, %p138
    %p140 = pneg %p139
    // Predicated region
    $region29: #{mlp_forward.1} parent=5 // pred_check
      _
    $region30: #{mlp_forward.1} parent=5 // pred_check_branch
      %142 = sbr.rel (%p139) target = $region32
    $region31: #{mlp_forward.1} parent=5 // pred_region
      %s143 = ssub.s32 %s9, 1
      %s144 = smul.u32 128, %s14
      %p145 = scmp.lt.s32.totalorder %s144, 255
      %s146 = scalar_select %p145, %s144, 255
      %s147 = smul.addr %s146, 8
      %s148 = scalar_lea.vmem %s0, %s147
      %p149 = pneg %p35
      %p150 = pneg %p32
      %p151 = pneg %p56
      %p152 = pneg %p53
      %p153 = pneg %p77
      %p154 = pneg %p74
      %p155 = pneg %p103
      %p156 = pneg %p100
      %s157 = smul.u32 128, %s14
      %p158 = scmp.lt.s32.totalorder %s157, 255
      %s159 = scalar_select %p158, %s157, 255
      %s160 = smul.addr %s159, 8
      %s161 = scalar_lea.vmem %s3, %s160
      %s162 = smul.u32 128, %s14
      %p163 = scmp.lt.s32.totalorder %s162, 255
      %s164 = scalar_select %p163, %s162, 255
      %s165 = smul.addr %s164, 8
      %s166 = scalar_lea.vmem %s0, %s165
      %s167 = smul.u32 128, %s14
      %s168 = smul.u32 128, %s14
      %p169 = scmp.lt.s32.totalorder %s168, 255
      %s170 = scalar_select %p169, %s168, 255
      %s171 = smul.addr %s170, 8
      %s172 = scalar_lea.vmem %s3, %s171
      %s173 = smul.u32 128, %s14
      %v174 = vld [vmem:[%s166] sm:$0xff]
      %v175 = vld [vmem:[%s166 + $0x8] sm:$0xff]
      %v176 = vld [vmem:[%s166 + $0x10] sm:$0xff]
      %v177 = vld [vmem:[%s166 + $0x18] sm:$0xff]
      %v178 = vld [vmem:[%s166 + $0x20] sm:$0xff]
      %v179 = vld [vmem:[%s166 + $0x28] sm:$0xff]
      %v180 = vld [vmem:[%s166 + $0x30] sm:$0xff]
      %v181 = vld [vmem:[%s166 + $0x38] sm:$0xff]
      %v182 = vld [vmem:[%s166 + $0x40] sm:$0xff]
      %v183 = vld [vmem:[%s166 + $0x48] sm:$0xff]
      %v184 = vld [vmem:[%s166 + $0x50] sm:$0xff]
      %v185 = vld [vmem:[%s166 + $0x58] sm:$0xff]
      %v186 = vld [vmem:[%s166 + $0x60] sm:$0xff]
      %v187 = vld [vmem:[%s166 + $0x68] sm:$0xff]
      %v188 = vld [vmem:[%s166 + $0x70] sm:$0xff]
      %v189 = vld [vmem:[%s166 + $0x78] sm:$0xff]
      %v190 = vld [vmem:[%s166 + $0x80] sm:$0xff]
      %v191 = vld [vmem:[%s166 + $0x88] sm:$0xff]
      %v192 = vld [vmem:[%s166 + $0x90] sm:$0xff]
      %v193 = vld [vmem:[%s166 + $0x98] sm:$0xff]
      %v194 = vld [vmem:[%s166 + $0xa0] sm:$0xff]
      %v195 = vld [vmem:[%s166 + $0xa8] sm:$0xff]
      %v196 = vld [vmem:[%s166 + $0xb0] sm:$0xff]
      %v197 = vld [vmem:[%s166 + $0xb8] sm:$0xff]
      %v198 = vld [vmem:[%s166 + $0xc0] sm:$0xff]
      %v199 = vld [vmem:[%s166 + $0xc8] sm:$0xff]
      %v200 = vld [vmem:[%s166 + $0xd0] sm:$0xff]
      %v201 = vld [vmem:[%s166 + $0xd8] sm:$0xff]
      %v202 = vld [vmem:[%s166 + $0xe0] sm:$0xff]
      %v203 = vld [vmem:[%s166 + $0xe8] sm:$0xff]
      %v204 = vld [vmem:[%s166 + $0xf0] sm:$0xff]
      %v205 = vld [vmem:[%s166 + $0xf8] sm:$0xff]
      %v206 = vld [vmem:[%s166 + $0x100] sm:$0xff]
      %v207 = vld [vmem:[%s166 + $0x108] sm:$0xff]
      %v208 = vld [vmem:[%s166 + $0x110] sm:$0xff]
      %v209 = vld [vmem:[%s166 + $0x118] sm:$0xff]
      %v210 = vld [vmem:[%s166 + $0x120] sm:$0xff]
      %v211 = vld [vmem:[%s166 + $0x128] sm:$0xff]
      %v212 = vld [vmem:[%s166 + $0x130] sm:$0xff]
      %v213 = vld [vmem:[%s166 + $0x138] sm:$0xff]
      %v214 = vld [vmem:[%s166 + $0x140] sm:$0xff]
      %v215 = vld [vmem:[%s166 + $0x148] sm:$0xff]
      %v216 = vld [vmem:[%s166 + $0x150] sm:$0xff]
      %v217 = vld [vmem:[%s166 + $0x158] sm:$0xff]
      %v218 = vld [vmem:[%s166 + $0x160] sm:$0xff]
      %v219 = vld [vmem:[%s166 + $0x168] sm:$0xff]
      %v220 = vld [vmem:[%s166 + $0x170] sm:$0xff]
      %v221 = vld [vmem:[%s166 + $0x178] sm:$0xff]
      %v222 = vld [vmem:[%s166 + $0x180] sm:$0xff]
      %v223 = vld [vmem:[%s166 + $0x188] sm:$0xff]
      %v224 = vld [vmem:[%s166 + $0x190] sm:$0xff]
      %v225 = vld [vmem:[%s166 + $0x198] sm:$0xff]
      %v226 = vld [vmem:[%s166 + $0x1a0] sm:$0xff]
      %v227 = vld [vmem:[%s166 + $0x1a8] sm:$0xff]
      %v228 = vld [vmem:[%s166 + $0x1b0] sm:$0xff]
      %v229 = vld [vmem:[%s166 + $0x1b8] sm:$0xff]
      %v230 = vld [vmem:[%s166 + $0x1c0] sm:$0xff]
      %v231 = vld [vmem:[%s166 + $0x1c8] sm:$0xff]
      %v232 = vld [vmem:[%s166 + $0x1d0] sm:$0xff]
      %v233 = vld [vmem:[%s166 + $0x1d8] sm:$0xff]
      %v234 = vld [vmem:[%s166 + $0x1e0] sm:$0xff]
      %v235 = vld [vmem:[%s166 + $0x1e8] sm:$0xff]
      %v236 = vld [vmem:[%s166 + $0x1f0] sm:$0xff]
      %v237 = vld [vmem:[%s166 + $0x1f8] sm:$0xff]
      %v238 = vld [vmem:[%s166 + $0x200] sm:$0xff]
      %v239 = vld [vmem:[%s166 + $0x208] sm:$0xff]
      %v240 = vld [vmem:[%s166 + $0x210] sm:$0xff]
      %v241 = vld [vmem:[%s166 + $0x218] sm:$0xff]
      %v242 = vld [vmem:[%s166 + $0x220] sm:$0xff]
      %v243 = vld [vmem:[%s166 + $0x228] sm:$0xff]
      %v244 = vld [vmem:[%s166 + $0x230] sm:$0xff]
      %v245 = vld [vmem:[%s166 + $0x238] sm:$0xff]
      %v246 = vld [vmem:[%s166 + $0x240] sm:$0xff]
      %v247 = vld [vmem:[%s166 + $0x248] sm:$0xff]
      %v248 = vld [vmem:[%s166 + $0x250] sm:$0xff]
      %v249 = vld [vmem:[%s166 + $0x258] sm:$0xff]
      %v250 = vld [vmem:[%s166 + $0x260] sm:$0xff]
      %v251 = vld [vmem:[%s166 + $0x268] sm:$0xff]
      %v252 = vld [vmem:[%s166 + $0x270] sm:$0xff]
      %v253 = vld [vmem:[%s166 + $0x278] sm:$0xff]
      %v254 = vld [vmem:[%s166 + $0x280] sm:$0xff]
      %v255 = vld [vmem:[%s166 + $0x288] sm:$0xff]
      %v256 = vld [vmem:[%s166 + $0x290] sm:$0xff]
      %v257 = vld [vmem:[%s166 + $0x298] sm:$0xff]
      %v258 = vld [vmem:[%s166 + $0x2a0] sm:$0xff]
      %v259 = vld [vmem:[%s166 + $0x2a8] sm:$0xff]
      %v260 = vld [vmem:[%s166 + $0x2b0] sm:$0xff]
      %v261 = vld [vmem:[%s166 + $0x2b8] sm:$0xff]
      %v262 = vld [vmem:[%s166 + $0x2c0] sm:$0xff]
      %v263 = vld [vmem:[%s166 + $0x2c8] sm:$0xff]
      %v264 = vld [vmem:[%s166 + $0x2d0] sm:$0xff]
      %v265 = vld [vmem:[%s166 + $0x2d8] sm:$0xff]
      %v266 = vld [vmem:[%s166 + $0x2e0] sm:$0xff]
      %v267 = vld [vmem:[%s166 + $0x2e8] sm:$0xff]
      %v268 = vld [vmem:[%s166 + $0x2f0] sm:$0xff]
      %v269 = vld [vmem:[%s166 + $0x2f8] sm:$0xff]
      %v270 = vld [vmem:[%s166 + $0x300] sm:$0xff]
      %v271 = vld [vmem:[%s166 + $0x308] sm:$0xff]
      %v272 = vld [vmem:[%s166 + $0x310] sm:$0xff]
      %v273 = vld [vmem:[%s166 + $0x318] sm:$0xff]
      %v274 = vld [vmem:[%s166 + $0x320] sm:$0xff]
      %v275 = vld [vmem:[%s166 + $0x328] sm:$0xff]
      %v276 = vld [vmem:[%s166 + $0x330] sm:$0xff]
      %v277 = vld [vmem:[%s166 + $0x338] sm:$0xff]
      %v278 = vld [vmem:[%s166 + $0x340] sm:$0xff]
      %v279 = vld [vmem:[%s166 + $0x348] sm:$0xff]
      %v280 = vld [vmem:[%s166 + $0x350] sm:$0xff]
      %v281 = vld [vmem:[%s166 + $0x358] sm:$0xff]
      %v282 = vld [vmem:[%s166 + $0x360] sm:$0xff]
      %v283 = vld [vmem:[%s166 + $0x368] sm:$0xff]
      %v284 = vld [vmem:[%s166 + $0x370] sm:$0xff]
      %v285 = vld [vmem:[%s166 + $0x378] sm:$0xff]
      %v286 = vld [vmem:[%s166 + $0x380] sm:$0xff]
      %v287 = vld [vmem:[%s166 + $0x388] sm:$0xff]
      %v288 = vld [vmem:[%s166 + $0x390] sm:$0xff]
      %v289 = vld [vmem:[%s166 + $0x398] sm:$0xff]
      %v290 = vld [vmem:[%s166 + $0x3a0] sm:$0xff]
      %v291 = vld [vmem:[%s166 + $0x3a8] sm:$0xff]
      %v292 = vld [vmem:[%s166 + $0x3b0] sm:$0xff]
      %v293 = vld [vmem:[%s166 + $0x3b8] sm:$0xff]
      %v294 = vld [vmem:[%s166 + $0x3c0] sm:$0xff]
      %v295 = vld [vmem:[%s166 + $0x3c8] sm:$0xff]
      %v296 = vld [vmem:[%s166 + $0x3d0] sm:$0xff]
      %v297 = vld [vmem:[%s166 + $0x3d8] sm:$0xff]
      %v298 = vld [vmem:[%s166 + $0x3e0] sm:$0xff]
      %v299 = vld [vmem:[%s166 + $0x3e8] sm:$0xff]
      %v300 = vld [vmem:[%s166 + $0x3f0] sm:$0xff]
      %v301 = vld [vmem:[%s166 + $0x3f8] sm:$0xff]
      %v302 = vld [vmem:[%s1] sm:$0xff]
      %v303 = vld [vmem:[%s1 + $0x8] sm:$0xff]
      %s304 = scalar_lea.vmem %s1, 32
      %v305 = vld [vmem:[%s304] sm:$0xff]
      %v306 = vld [vmem:[%s304 + $0x8] sm:$0xff]
      %v307 = vld [vmem:[%s304 + $0x10] sm:$0xff]
      %v308 = vld [vmem:[%s304 + $0x18] sm:$0xff]
      %s309 = scalar_lea.vmem %s1, 64
      %v310 = vld [vmem:[%s309] sm:$0xff]
      %v311 = vld [vmem:[%s309 + $0x8] sm:$0xff]
      %v312 = vld [vmem:[%s309 + $0x10] sm:$0xff]
      %v313 = vld [vmem:[%s309 + $0x18] sm:$0xff]
      %v314 = vld [vmem:[%s2] sm:$0x7f]
      %v315 = vperm.slane %v314, 0
      %vm316 = vcmask 130048
      %v318 = vsel %vm316, %v174, 0
      %v321 = vsel %vm316, %v175, 0
      %v324 = vsel %vm316, %v176, 0
      %v327 = vsel %vm316, %v177, 0
      %v330 = vsel %vm316, %v178, 0
      %v333 = vsel %vm316, %v179, 0
      %v336 = vsel %vm316, %v180, 0
      %v339 = vsel %vm316, %v181, 0
      %v342 = vsel %vm316, %v182, 0
      %v345 = vsel %vm316, %v183, 0
      %v348 = vsel %vm316, %v184, 0
      %v351 = vsel %vm316, %v185, 0
      %v354 = vsel %vm316, %v186, 0
      %v357 = vsel %vm316, %v187, 0
      %v360 = vsel %vm316, %v188, 0
      %v363 = vsel %vm316, %v189, 0
      %v366 = vsel %vm316, %v190, 0
      %v369 = vsel %vm316, %v191, 0
      %v372 = vsel %vm316, %v192, 0
      %v375 = vsel %vm316, %v193, 0
      %v378 = vsel %vm316, %v194, 0
      %v381 = vsel %vm316, %v195, 0
      %v384 = vsel %vm316, %v196, 0
      %v387 = vsel %vm316, %v197, 0
      %v390 = vsel %vm316, %v198, 0
      %v393 = vsel %vm316, %v199, 0
      %v396 = vsel %vm316, %v200, 0
      %v399 = vsel %vm316, %v201, 0
      %v402 = vsel %vm316, %v202, 0
      %v405 = vsel %vm316, %v203, 0
      %v408 = vsel %vm316, %v204, 0
      %v411 = vsel %vm316, %v205, 0
      %v414 = vsel %vm316, %v206, 0
      %v417 = vsel %vm316, %v207, 0
      %v420 = vsel %vm316, %v208, 0
      %v423 = vsel %vm316, %v209, 0
      %v426 = vsel %vm316, %v210, 0
      %v429 = vsel %vm316, %v211, 0
      %v432 = vsel %vm316, %v212, 0
      %v435 = vsel %vm316, %v213, 0
      %v438 = vsel %vm316, %v214, 0
      %v441 = vsel %vm316, %v215, 0
      %v444 = vsel %vm316, %v216, 0
      %v447 = vsel %vm316, %v217, 0
      %v450 = vsel %vm316, %v218, 0
      %v453 = vsel %vm316, %v219, 0
      %v456 = vsel %vm316, %v220, 0
      %v459 = vsel %vm316, %v221, 0
      %v462 = vsel %vm316, %v222, 0
      %v465 = vsel %vm316, %v223, 0
      %v468 = vsel %vm316, %v224, 0
      %v471 = vsel %vm316, %v225, 0
      %v474 = vsel %vm316, %v226, 0
      %v477 = vsel %vm316, %v227, 0
      %v480 = vsel %vm316, %v228, 0
      %v483 = vsel %vm316, %v229, 0
      %v486 = vsel %vm316, %v230, 0
      %v489 = vsel %vm316, %v231, 0
      %v492 = vsel %vm316, %v232, 0
      %v495 = vsel %vm316, %v233, 0
      %v498 = vsel %vm316, %v234, 0
      %v501 = vsel %vm316, %v235, 0
      %v504 = vsel %vm316, %v236, 0
      %v507 = vsel %vm316, %v237, 0
      %v510 = vsel %vm316, %v238, 0
      %v513 = vsel %vm316, %v239, 0
      %v516 = vsel %vm316, %v240, 0
      %v519 = vsel %vm316, %v241, 0
      %v522 = vsel %vm316, %v242, 0
      %v525 = vsel %vm316, %v243, 0
      %v528 = vsel %vm316, %v244, 0
      %v531 = vsel %vm316, %v245, 0
      %v534 = vsel %vm316, %v246, 0
      %v537 = vsel %vm316, %v247, 0
      %v540 = vsel %vm316, %v248, 0
      %v543 = vsel %vm316, %v249, 0
      %v546 = vsel %vm316, %v250, 0
      %v549 = vsel %vm316, %v251, 0
      %v552 = vsel %vm316, %v252, 0
      %v555 = vsel %vm316, %v253, 0
      %v558 = vsel %vm316, %v254, 0
      %v561 = vsel %vm316, %v255, 0
      %v564 = vsel %vm316, %v256, 0
      %v567 = vsel %vm316, %v257, 0
      %v570 = vsel %vm316, %v258, 0
      %v573 = vsel %vm316, %v259, 0
      %v576 = vsel %vm316, %v260, 0
      %v579 = vsel %vm316, %v261, 0
      %v582 = vsel %vm316, %v262, 0
      %v585 = vsel %vm316, %v263, 0
      %v588 = vsel %vm316, %v264, 0
      %v591 = vsel %vm316, %v265, 0
      %v594 = vsel %vm316, %v266, 0
      %v597 = vsel %vm316, %v267, 0
      %v600 = vsel %vm316, %v268, 0
      %v603 = vsel %vm316, %v269, 0
      %v606 = vsel %vm316, %v270, 0
      %v609 = vsel %vm316, %v271, 0
      %v612 = vsel %vm316, %v272, 0
      %v615 = vsel %vm316, %v273, 0
      %v618 = vsel %vm316, %v274, 0
      %v621 = vsel %vm316, %v275, 0
      %v624 = vsel %vm316, %v276, 0
      %v627 = vsel %vm316, %v277, 0
      %v630 = vsel %vm316, %v278, 0
      %v633 = vsel %vm316, %v279, 0
      %v636 = vsel %vm316, %v280, 0
      %v639 = vsel %vm316, %v281, 0
      %v642 = vsel %vm316, %v282, 0
      %v645 = vsel %vm316, %v283, 0
      %v648 = vsel %vm316, %v284, 0
      %v651 = vsel %vm316, %v285, 0
      %v654 = vsel %vm316, %v286, 0
      %v657 = vsel %vm316, %v287, 0
      %v660 = vsel %vm316, %v288, 0
      %v663 = vsel %vm316, %v289, 0
      %v666 = vsel %vm316, %v290, 0
      %v669 = vsel %vm316, %v291, 0
      %v672 = vsel %vm316, %v292, 0
      %v675 = vsel %vm316, %v293, 0
      %v678 = vsel %vm316, %v294, 0
      %v681 = vsel %vm316, %v295, 0
      %v684 = vsel %vm316, %v296, 0
      %v687 = vsel %vm316, %v297, 0
      %v690 = vsel %vm316, %v298, 0
      %v693 = vsel %vm316, %v299, 0
      %v696 = vsel %vm316, %v300, 0
      %v699 = vsel %vm316, %v301, 0
      %701 = vmatpush.msra.mxu0 0.0
      %702 = vmatpush.msra.mxu0 0.0
      %703 = vmatpush.msra.mxu0 0.0
      %704 = vmatpush.msra.mxu0 0.0
      %705 = vmatpush.msra.mxu0 0.0
      %706 = vmatpush.msra.mxu0 0.0
      %707 = vmatpush.msra.mxu0 0.0
      %708 = vmatpush.msra.mxu0 0.0
      %709 = vmatpush.msra.mxu0 0.0
      %710 = vmatpush.msra.mxu0 0.0
      %711 = vmatpush.msra.mxu0 0.0
      %712 = vmatpush.msra.mxu0 0.0
      %713 = vmatpush.msra.mxu0 0.0
      %714 = vmatpush.msra.mxu0 0.0
      %715 = vmatpush.msra.mxu0 %v303
      %716 = vmatpush.msra.mxu0 %v302
      %717 = vmatmul.f32.gmra.mxu0 %v318
      %v718 = vpop.f32.mrf.mxu0
      %v719 = vadd.f32 %v315, %v718
      %720 = vmatmul.f32.gmra.mxu0 %v321
      %v721 = vpop.f32.mrf.mxu0
      %v722 = vadd.f32 %v315, %v721
      %723 = vmatmul.f32.gmra.mxu0 %v324
      %v724 = vpop.f32.mrf.mxu0
      %v725 = vadd.f32 %v315, %v724
      %726 = vmatmul.f32.gmra.mxu0 %v327
      %v727 = vpop.f32.mrf.mxu0
      %v728 = vadd.f32 %v315, %v727
      %729 = vmatmul.f32.gmra.mxu0 %v330
      %v730 = vpop.f32.mrf.mxu0
      %v731 = vadd.f32 %v315, %v730
      %732 = vmatmul.f32.gmra.mxu0 %v333
      %v733 = vpop.f32.mrf.mxu0
      %v734 = vadd.f32 %v315, %v733
      %735 = vmatmul.f32.gmra.mxu0 %v336
      %v736 = vpop.f32.mrf.mxu0
      %v737 = vadd.f32 %v315, %v736
      %738 = vmatmul.f32.gmra.mxu0 %v339
      %v739 = vpop.f32.mrf.mxu0
      %v740 = vadd.f32 %v315, %v739
      %741 = vmatmul.f32.gmra.mxu0 %v342
      %v742 = vpop.f32.mrf.mxu0
      %v743 = vadd.f32 %v315, %v742
      %744 = vmatmul.f32.gmra.mxu0 %v345
      %v745 = vpop.f32.mrf.mxu0
      %v746 = vadd.f32 %v315, %v745
      %747 = vmatmul.f32.gmra.mxu0 %v348
      %v748 = vpop.f32.mrf.mxu0
      %v749 = vadd.f32 %v315, %v748
      %750 = vmatmul.f32.gmra.mxu0 %v351
      %v751 = vpop.f32.mrf.mxu0
      %v752 = vadd.f32 %v315, %v751
      %753 = vmatmul.f32.gmra.mxu0 %v354
      %v754 = vpop.f32.mrf.mxu0
      %v755 = vadd.f32 %v315, %v754
      %756 = vmatmul.f32.gmra.mxu0 %v357
      %v757 = vpop.f32.mrf.mxu0
      %v758 = vadd.f32 %v315, %v757
      %759 = vmatmul.f32.gmra.mxu0 %v360
      %v760 = vpop.f32.mrf.mxu0
      %v761 = vadd.f32 %v315, %v760
      %762 = vmatmul.f32.gmra.mxu0 %v363
      %v763 = vpop.f32.mrf.mxu0
      %v764 = vadd.f32 %v315, %v763
      %765 = vmatmul.f32.gmra.mxu0 %v366
      %v766 = vpop.f32.mrf.mxu0
      %v767 = vadd.f32 %v315, %v766
      %768 = vmatmul.f32.gmra.mxu0 %v369
      %v769 = vpop.f32.mrf.mxu0
      %v770 = vadd.f32 %v315, %v769
      %771 = vmatmul.f32.gmra.mxu0 %v372
      %v772 = vpop.f32.mrf.mxu0
      %v773 = vadd.f32 %v315, %v772
      %774 = vmatmul.f32.gmra.mxu0 %v375
      %v775 = vpop.f32.mrf.mxu0
      %v776 = vadd.f32 %v315, %v775
      %777 = vmatmul.f32.gmra.mxu0 %v378
      %v778 = vpop.f32.mrf.mxu0
      %v779 = vadd.f32 %v315, %v778
      %780 = vmatmul.f32.gmra.mxu0 %v381
      %v781 = vpop.f32.mrf.mxu0
      %v782 = vadd.f32 %v315, %v781
      %783 = vmatmul.f32.gmra.mxu0 %v384
      %v784 = vpop.f32.mrf.mxu0
      %v785 = vadd.f32 %v315, %v784
      %786 = vmatmul.f32.gmra.mxu0 %v387
      %v787 = vpop.f32.mrf.mxu0
      %v788 = vadd.f32 %v315, %v787
      %789 = vmatmul.f32.gmra.mxu0 %v390
      %v790 = vpop.f32.mrf.mxu0
      %v791 = vadd.f32 %v315, %v790
      %792 = vmatmul.f32.gmra.mxu0 %v393
      %v793 = vpop.f32.mrf.mxu0
      %v794 = vadd.f32 %v315, %v793
      %795 = vmatmul.f32.gmra.mxu0 %v396
      %v796 = vpop.f32.mrf.mxu0
      %v797 = vadd.f32 %v315, %v796
      %798 = vmatmul.f32.gmra.mxu0 %v399
      %v799 = vpop.f32.mrf.mxu0
      %v800 = vadd.f32 %v315, %v799
      %801 = vmatmul.f32.gmra.mxu0 %v402
      %v802 = vpop.f32.mrf.mxu0
      %v803 = vadd.f32 %v315, %v802
      %804 = vmatmul.f32.gmra.mxu0 %v405
      %v805 = vpop.f32.mrf.mxu0
      %v806 = vadd.f32 %v315, %v805
      %807 = vmatmul.f32.gmra.mxu0 %v408
      %v808 = vpop.f32.mrf.mxu0
      %v809 = vadd.f32 %v315, %v808
      %810 = vmatmul.f32.gmra.mxu0 %v411
      %v811 = vpop.f32.mrf.mxu0
      %v812 = vadd.f32 %v315, %v811
      %813 = vmatmul.f32.gmra.mxu0 %v414
      %v814 = vpop.f32.mrf.mxu0
      %v815 = vadd.f32 %v315, %v814
      %816 = vmatmul.f32.gmra.mxu0 %v417
      %v817 = vpop.f32.mrf.mxu0
      %v818 = vadd.f32 %v315, %v817
      %819 = vmatmul.f32.gmra.mxu0 %v420
      %v820 = vpop.f32.mrf.mxu0
      %v821 = vadd.f32 %v315, %v820
      %822 = vmatmul.f32.gmra.mxu0 %v423
      %v823 = vpop.f32.mrf.mxu0
      %v824 = vadd.f32 %v315, %v823
      %825 = vmatmul.f32.gmra.mxu0 %v426
      %v826 = vpop.f32.mrf.mxu0
      %v827 = vadd.f32 %v315, %v826
      %828 = vmatmul.f32.gmra.mxu0 %v429
      %v829 = vpop.f32.mrf.mxu0
      %v830 = vadd.f32 %v315, %v829
      %831 = vmatmul.f32.gmra.mxu0 %v432
      %v832 = vpop.f32.mrf.mxu0
      %v833 = vadd.f32 %v315, %v832
      %834 = vmatmul.f32.gmra.mxu0 %v435
      %v835 = vpop.f32.mrf.mxu0
      %v836 = vadd.f32 %v315, %v835
      %837 = vmatmul.f32.gmra.mxu0 %v438
      %v838 = vpop.f32.mrf.mxu0
      %v839 = vadd.f32 %v315, %v838
      %840 = vmatmul.f32.gmra.mxu0 %v441
      %v841 = vpop.f32.mrf.mxu0
      %v842 = vadd.f32 %v315, %v841
      %843 = vmatmul.f32.gmra.mxu0 %v444
      %v844 = vpop.f32.mrf.mxu0
      %v845 = vadd.f32 %v315, %v844
      %846 = vmatmul.f32.gmra.mxu0 %v447
      %v847 = vpop.f32.mrf.mxu0
      %v848 = vadd.f32 %v315, %v847
      %849 = vmatmul.f32.gmra.mxu0 %v450
      %v850 = vpop.f32.mrf.mxu0
      %v851 = vadd.f32 %v315, %v850
      %852 = vmatmul.f32.gmra.mxu0 %v453
      %v853 = vpop.f32.mrf.mxu0
      %v854 = vadd.f32 %v315, %v853
      %855 = vmatmul.f32.gmra.mxu0 %v456
      %v856 = vpop.f32.mrf.mxu0
      %v857 = vadd.f32 %v315, %v856
      %858 = vmatmul.f32.gmra.mxu0 %v459
      %v859 = vpop.f32.mrf.mxu0
      %v860 = vadd.f32 %v315, %v859
      %861 = vmatmul.f32.gmra.mxu0 %v462
      %v862 = vpop.f32.mrf.mxu0
      %v863 = vadd.f32 %v315, %v862
      %864 = vmatmul.f32.gmra.mxu0 %v465
      %v865 = vpop.f32.mrf.mxu0
      %v866 = vadd.f32 %v315, %v865
      %867 = vmatmul.f32.gmra.mxu0 %v468
      %v868 = vpop.f32.mrf.mxu0
      %v869 = vadd.f32 %v315, %v868
      %870 = vmatmul.f32.gmra.mxu0 %v471
      %v871 = vpop.f32.mrf.mxu0
      %v872 = vadd.f32 %v315, %v871
      %873 = vmatmul.f32.gmra.mxu0 %v474
      %v874 = vpop.f32.mrf.mxu0
      %v875 = vadd.f32 %v315, %v874
      %876 = vmatmul.f32.gmra.mxu0 %v477
      %v877 = vpop.f32.mrf.mxu0
      %v878 = vadd.f32 %v315, %v877
      %879 = vmatmul.f32.gmra.mxu0 %v480
      %v880 = vpop.f32.mrf.mxu0
      %v881 = vadd.f32 %v315, %v880
      %882 = vmatmul.f32.gmra.mxu0 %v483
      %v883 = vpop.f32.mrf.mxu0
      %v884 = vadd.f32 %v315, %v883
      %885 = vmatmul.f32.gmra.mxu0 %v486
      %v886 = vpop.f32.mrf.mxu0
      %v887 = vadd.f32 %v315, %v886
      %888 = vmatmul.f32.gmra.mxu0 %v489
      %v889 = vpop.f32.mrf.mxu0
      %v890 = vadd.f32 %v315, %v889
      %891 = vmatmul.f32.gmra.mxu0 %v492
      %v892 = vpop.f32.mrf.mxu0
      %v893 = vadd.f32 %v315, %v892
      %894 = vmatmul.f32.gmra.mxu0 %v495
      %v895 = vpop.f32.mrf.mxu0
      %v896 = vadd.f32 %v315, %v895
      %897 = vmatmul.f32.gmra.mxu0 %v498
      %v898 = vpop.f32.mrf.mxu0
      %v899 = vadd.f32 %v315, %v898
      %900 = vmatmul.f32.gmra.mxu0 %v501
      %v901 = vpop.f32.mrf.mxu0
      %v902 = vadd.f32 %v315, %v901
      %903 = vmatmul.f32.gmra.mxu0 %v504
      %v904 = vpop.f32.mrf.mxu0
      %v905 = vadd.f32 %v315, %v904
      %906 = vmatmul.f32.gmra.mxu0 %v507
      %v907 = vpop.f32.mrf.mxu0
      %v908 = vadd.f32 %v315, %v907
      %909 = vmatmul.f32.gmra.mxu0 %v510
      %v910 = vpop.f32.mrf.mxu0
      %v911 = vadd.f32 %v315, %v910
      %912 = vmatmul.f32.gmra.mxu0 %v513
      %v913 = vpop.f32.mrf.mxu0
      %v914 = vadd.f32 %v315, %v913
      %915 = vmatmul.f32.gmra.mxu0 %v516
      %v916 = vpop.f32.mrf.mxu0
      %v917 = vadd.f32 %v315, %v916
      %918 = vmatmul.f32.gmra.mxu0 %v519
      %v919 = vpop.f32.mrf.mxu0
      %v920 = vadd.f32 %v315, %v919
      %921 = vmatmul.f32.gmra.mxu0 %v522
      %v922 = vpop.f32.mrf.mxu0
      %v923 = vadd.f32 %v315, %v922
      %924 = vmatmul.f32.gmra.mxu0 %v525
      %v925 = vpop.f32.mrf.mxu0
      %v926 = vadd.f32 %v315, %v925
      %927 = vmatmul.f32.gmra.mxu0 %v528
      %v928 = vpop.f32.mrf.mxu0
      %v929 = vadd.f32 %v315, %v928
      %930 = vmatmul.f32.gmra.mxu0 %v531
      %v931 = vpop.f32.mrf.mxu0
      %v932 = vadd.f32 %v315, %v931
      %933 = vmatmul.f32.gmra.mxu0 %v534
      %v934 = vpop.f32.mrf.mxu0
      %v935 = vadd.f32 %v315, %v934
      %936 = vmatmul.f32.gmra.mxu0 %v537
      %v937 = vpop.f32.mrf.mxu0
      %v938 = vadd.f32 %v315, %v937
      %939 = vmatmul.f32.gmra.mxu0 %v540
      %v940 = vpop.f32.mrf.mxu0
      %v941 = vadd.f32 %v315, %v940
      %942 = vmatmul.f32.gmra.mxu0 %v543
      %v943 = vpop.f32.mrf.mxu0
      %v944 = vadd.f32 %v315, %v943
      %945 = vmatmul.f32.gmra.mxu0 %v546
      %v946 = vpop.f32.mrf.mxu0
      %v947 = vadd.f32 %v315, %v946
      %948 = vmatmul.f32.gmra.mxu0 %v549
      %v949 = vpop.f32.mrf.mxu0
      %v950 = vadd.f32 %v315, %v949
      %951 = vmatmul.f32.gmra.mxu0 %v552
      %v952 = vpop.f32.mrf.mxu0
      %v953 = vadd.f32 %v315, %v952
      %954 = vmatmul.f32.gmra.mxu0 %v555
      %v955 = vpop.f32.mrf.mxu0
      %v956 = vadd.f32 %v315, %v955
      %957 = vmatmul.f32.gmra.mxu0 %v558
      %v958 = vpop.f32.mrf.mxu0
      %v959 = vadd.f32 %v315, %v958
      %960 = vmatmul.f32.gmra.mxu0 %v561
      %v961 = vpop.f32.mrf.mxu0
      %v962 = vadd.f32 %v315, %v961
      %963 = vmatmul.f32.gmra.mxu0 %v564
      %v964 = vpop.f32.mrf.mxu0
      %v965 = vadd.f32 %v315, %v964
      %966 = vmatmul.f32.gmra.mxu0 %v567
      %v967 = vpop.f32.mrf.mxu0
      %v968 = vadd.f32 %v315, %v967
      %969 = vmatmul.f32.gmra.mxu0 %v570
      %v970 = vpop.f32.mrf.mxu0
      %v971 = vadd.f32 %v315, %v970
      %972 = vmatmul.f32.gmra.mxu0 %v573
      %v973 = vpop.f32.mrf.mxu0
      %v974 = vadd.f32 %v315, %v973
      %975 = vmatmul.f32.gmra.mxu0 %v576
      %v976 = vpop.f32.mrf.mxu0
      %v977 = vadd.f32 %v315, %v976
      %978 = vmatmul.f32.gmra.mxu0 %v579
      %v979 = vpop.f32.mrf.mxu0
      %v980 = vadd.f32 %v315, %v979
      %981 = vmatmul.f32.gmra.mxu0 %v582
      %v982 = vpop.f32.mrf.mxu0
      %v983 = vadd.f32 %v315, %v982
      %984 = vmatmul.f32.gmra.mxu0 %v585
      %v985 = vpop.f32.mrf.mxu0
      %v986 = vadd.f32 %v315, %v985
      %987 = vmatmul.f32.gmra.mxu0 %v588
      %v988 = vpop.f32.mrf.mxu0
      %v989 = vadd.f32 %v315, %v988
      %990 = vmatmul.f32.gmra.mxu0 %v591
      %v991 = vpop.f32.mrf.mxu0
      %v992 = vadd.f32 %v315, %v991
      %993 = vmatmul.f32.gmra.mxu0 %v594
      %v994 = vpop.f32.mrf.mxu0
      %v995 = vadd.f32 %v315, %v994
      %996 = vmatmul.f32.gmra.mxu0 %v597
      %v997 = vpop.f32.mrf.mxu0
      %v998 = vadd.f32 %v315, %v997
      %999 = vmatmul.f32.gmra.mxu0 %v600
      %v1000 = vpop.f32.mrf.mxu0
      %v1001 = vadd.f32 %v315, %v1000
      %1002 = vmatmul.f32.gmra.mxu0 %v603
      %v1003 = vpop.f32.mrf.mxu0
      %v1004 = vadd.f32 %v315, %v1003
      %1005 = vmatmul.f32.gmra.mxu0 %v606
      %v1006 = vpop.f32.mrf.mxu0
      %v1007 = vadd.f32 %v315, %v1006
      %1008 = vmatmul.f32.gmra.mxu0 %v609
      %v1009 = vpop.f32.mrf.mxu0
      %v1010 = vadd.f32 %v315, %v1009
      %1011 = vmatmul.f32.gmra.mxu0 %v612
      %v1012 = vpop.f32.mrf.mxu0
      %v1013 = vadd.f32 %v315, %v1012
      %1014 = vmatmul.f32.gmra.mxu0 %v615
      %v1015 = vpop.f32.mrf.mxu0
      %v1016 = vadd.f32 %v315, %v1015
      %1017 = vmatmul.f32.gmra.mxu0 %v618
      %v1018 = vpop.f32.mrf.mxu0
      %v1019 = vadd.f32 %v315, %v1018
      %1020 = vmatmul.f32.gmra.mxu0 %v621
      %v1021 = vpop.f32.mrf.mxu0
      %v1022 = vadd.f32 %v315, %v1021
      %1023 = vmatmul.f32.gmra.mxu0 %v624
      %v1024 = vpop.f32.mrf.mxu0
      %v1025 = vadd.f32 %v315, %v1024
      %1026 = vmatmul.f32.gmra.mxu0 %v627
      %v1027 = vpop.f32.mrf.mxu0
      %v1028 = vadd.f32 %v315, %v1027
      %1029 = vmatmul.f32.gmra.mxu0 %v630
      %v1030 = vpop.f32.mrf.mxu0
      %v1031 = vadd.f32 %v315, %v1030
      %1032 = vmatmul.f32.gmra.mxu0 %v633
      %v1033 = vpop.f32.mrf.mxu0
      %v1034 = vadd.f32 %v315, %v1033
      %1035 = vmatmul.f32.gmra.mxu0 %v636
      %v1036 = vpop.f32.mrf.mxu0
      %v1037 = vadd.f32 %v315, %v1036
      %1038 = vmatmul.f32.gmra.mxu0 %v639
      %v1039 = vpop.f32.mrf.mxu0
      %v1040 = vadd.f32 %v315, %v1039
      %1041 = vmatmul.f32.gmra.mxu0 %v642
      %v1042 = vpop.f32.mrf.mxu0
      %v1043 = vadd.f32 %v315, %v1042
      %1044 = vmatmul.f32.gmra.mxu0 %v645
      %v1045 = vpop.f32.mrf.mxu0
      %v1046 = vadd.f32 %v315, %v1045
      %1047 = vmatmul.f32.gmra.mxu0 %v648
      %v1048 = vpop.f32.mrf.mxu0
      %v1049 = vadd.f32 %v315, %v1048
      %1050 = vmatmul.f32.gmra.mxu0 %v651
      %v1051 = vpop.f32.mrf.mxu0
      %v1052 = vadd.f32 %v315, %v1051
      %1053 = vmatmul.f32.gmra.mxu0 %v654
      %v1054 = vpop.f32.mrf.mxu0
      %v1055 = vadd.f32 %v315, %v1054
      %1056 = vmatmul.f32.gmra.mxu0 %v657
      %v1057 = vpop.f32.mrf.mxu0
      %v1058 = vadd.f32 %v315, %v1057
      %1059 = vmatmul.f32.gmra.mxu0 %v660
      %v1060 = vpop.f32.mrf.mxu0
      %v1061 = vadd.f32 %v315, %v1060
      %1062 = vmatmul.f32.gmra.mxu0 %v663
      %v1063 = vpop.f32.mrf.mxu0
      %v1064 = vadd.f32 %v315, %v1063
      %1065 = vmatmul.f32.gmra.mxu0 %v666
      %v1066 = vpop.f32.mrf.mxu0
      %v1067 = vadd.f32 %v315, %v1066
      %1068 = vmatmul.f32.gmra.mxu0 %v669
      %v1069 = vpop.f32.mrf.mxu0
      %v1070 = vadd.f32 %v315, %v1069
      %1071 = vmatmul.f32.gmra.mxu0 %v672
      %v1072 = vpop.f32.mrf.mxu0
      %v1073 = vadd.f32 %v315, %v1072
      %1074 = vmatmul.f32.gmra.mxu0 %v675
      %v1075 = vpop.f32.mrf.mxu0
      %v1076 = vadd.f32 %v315, %v1075
      %1077 = vmatmul.f32.gmra.mxu0 %v678
      %v1078 = vpop.f32.mrf.mxu0
      %v1079 = vadd.f32 %v315, %v1078
      %1080 = vmatmul.f32.gmra.mxu0 %v681
      %v1081 = vpop.f32.mrf.mxu0
      %v1082 = vadd.f32 %v315, %v1081
      %1083 = vmatmul.f32.gmra.mxu0 %v684
      %v1084 = vpop.f32.mrf.mxu0
      %v1085 = vadd.f32 %v315, %v1084
      %1086 = vmatmul.f32.gmra.mxu0 %v687
      %v1087 = vpop.f32.mrf.mxu0
      %v1088 = vadd.f32 %v315, %v1087
      %1089 = vmatmul.f32.gmra.mxu0 %v690
      %v1090 = vpop.f32.mrf.mxu0
      %v1091 = vadd.f32 %v315, %v1090
      %1092 = vmatmul.f32.gmra.mxu0 %v693
      %v1093 = vpop.f32.mrf.mxu0
      %v1094 = vadd.f32 %v315, %v1093
      %1095 = vmatmul.f32.gmra.mxu0 %v696
      %v1096 = vpop.f32.mrf.mxu0
      %v1097 = vadd.f32 %v315, %v1096
      %1098 = vmatmul.f32.gmra.mxu0 %v699
      %v1099 = vpop.f32.mrf.mxu0
      %v1100 = vadd.f32 %v315, %v1099
      %1101 = vdwg.mxu0
      %vm1102 = vcmask 261120
      %v1103 = vsel %vm1102, %v719, 0.0
      %1104 = vadd.xlane.f32.xlu0 %v1103
      %v1105 = vpop.xlane.xlu0 %1104
      %v1106 = vsel %vm1102, %v722, 0.0
      %1107 = vadd.xlane.f32.xlu0 %v1106
      %v1108 = vpop.xlane.xlu0 %1107
      %v1109 = vsel %vm1102, %v725, 0.0
      %1110 = vadd.xlane.f32.xlu0 %v1109
      %v1111 = vpop.xlane.xlu0 %1110
      %v1112 = vsel %vm1102, %v728, 0.0
      %1113 = vadd.xlane.f32.xlu0 %v1112
      %v1114 = vpop.xlane.xlu0 %1113
      %v1115 = vsel %vm1102, %v731, 0.0
      %1116 = vadd.xlane.f32.xlu0 %v1115
      %v1117 = vpop.xlane.xlu0 %1116
      %v1118 = vsel %vm1102, %v734, 0.0
      %1119 = vadd.xlane.f32.xlu0 %v1118
      %v1120 = vpop.xlane.xlu0 %1119
      %v1121 = vsel %vm1102, %v737, 0.0
      %1122 = vadd.xlane.f32.xlu0 %v1121
      %v1123 = vpop.xlane.xlu0 %1122
      %v1124 = vsel %vm1102, %v740, 0.0
      %1125 = vadd.xlane.f32.xlu0 %v1124
      %v1126 = vpop.xlane.xlu0 %1125
      %v1127 = vsel %vm1102, %v743, 0.0
      %1128 = vadd.xlane.f32.xlu0 %v1127
      %v1129 = vpop.xlane.xlu0 %1128
      %v1130 = vsel %vm1102, %v746, 0.0
      %1131 = vadd.xlane.f32.xlu0 %v1130
      %v1132 = vpop.xlane.xlu0 %1131
      %v1133 = vsel %vm1102, %v749, 0.0
      %1134 = vadd.xlane.f32.xlu0 %v1133
      %v1135 = vpop.xlane.xlu0 %1134
      %v1136 = vsel %vm1102, %v752, 0.0
      %1137 = vadd.xlane.f32.xlu0 %v1136
      %v1138 = vpop.xlane.xlu0 %1137
      %v1139 = vsel %vm1102, %v755, 0.0
      %1140 = vadd.xlane.f32.xlu0 %v1139
      %v1141 = vpop.xlane.xlu0 %1140
      %v1142 = vsel %vm1102, %v758, 0.0
      %1143 = vadd.xlane.f32.xlu0 %v1142
      %v1144 = vpop.xlane.xlu0 %1143
      %v1145 = vsel %vm1102, %v761, 0.0
      %1146 = vadd.xlane.f32.xlu0 %v1145
      %v1147 = vpop.xlane.xlu0 %1146
      %v1148 = vsel %vm1102, %v764, 0.0
      %1149 = vadd.xlane.f32.xlu0 %v1148
      %v1150 = vpop.xlane.xlu0 %1149
      %v1151 = vsel %vm1102, %v767, 0.0
      %1152 = vadd.xlane.f32.xlu0 %v1151
      %v1153 = vpop.xlane.xlu0 %1152
      %v1154 = vsel %vm1102, %v770, 0.0
      %1155 = vadd.xlane.f32.xlu0 %v1154
      %v1156 = vpop.xlane.xlu0 %1155
      %v1157 = vsel %vm1102, %v773, 0.0
      %1158 = vadd.xlane.f32.xlu0 %v1157
      %v1159 = vpop.xlane.xlu0 %1158
      %v1160 = vsel %vm1102, %v776, 0.0
      %1161 = vadd.xlane.f32.xlu0 %v1160
      %v1162 = vpop.xlane.xlu0 %1161
      %v1163 = vsel %vm1102, %v779, 0.0
      %1164 = vadd.xlane.f32.xlu0 %v1163
      %v1165 = vpop.xlane.xlu0 %1164
      %v1166 = vsel %vm1102, %v782, 0.0
      %1167 = vadd.xlane.f32.xlu0 %v1166
      %v1168 = vpop.xlane.xlu0 %1167
      %v1169 = vsel %vm1102, %v785, 0.0
      %1170 = vadd.xlane.f32.xlu0 %v1169
      %v1171 = vpop.xlane.xlu0 %1170
      %v1172 = vsel %vm1102, %v788, 0.0
      %1173 = vadd.xlane.f32.xlu0 %v1172
      %v1174 = vpop.xlane.xlu0 %1173
      %v1175 = vsel %vm1102, %v791, 0.0
      %1176 = vadd.xlane.f32.xlu0 %v1175
      %v1177 = vpop.xlane.xlu0 %1176
      %v1178 = vsel %vm1102, %v794, 0.0
      %1179 = vadd.xlane.f32.xlu0 %v1178
      %v1180 = vpop.xlane.xlu0 %1179
      %v1181 = vsel %vm1102, %v797, 0.0
      %1182 = vadd.xlane.f32.xlu0 %v1181
      %v1183 = vpop.xlane.xlu0 %1182
      %v1184 = vsel %vm1102, %v800, 0.0
      %1185 = vadd.xlane.f32.xlu0 %v1184
      %v1186 = vpop.xlane.xlu0 %1185
      %v1187 = vsel %vm1102, %v803, 0.0
      %1188 = vadd.xlane.f32.xlu0 %v1187
      %v1189 = vpop.xlane.xlu0 %1188
      %v1190 = vsel %vm1102, %v806, 0.0
      %1191 = vadd.xlane.f32.xlu0 %v1190
      %v1192 = vpop.xlane.xlu0 %1191
      %v1193 = vsel %vm1102, %v809, 0.0
      %1194 = vadd.xlane.f32.xlu0 %v1193
      %v1195 = vpop.xlane.xlu0 %1194
      %v1196 = vsel %vm1102, %v812, 0.0
      %1197 = vadd.xlane.f32.xlu0 %v1196
      %v1198 = vpop.xlane.xlu0 %1197
      %v1199 = vsel %vm1102, %v815, 0.0
      %1200 = vadd.xlane.f32.xlu0 %v1199
      %v1201 = vpop.xlane.xlu0 %1200
      %v1202 = vsel %vm1102, %v818, 0.0
      %1203 = vadd.xlane.f32.xlu0 %v1202
      %v1204 = vpop.xlane.xlu0 %1203
      %v1205 = vsel %vm1102, %v821, 0.0
      %1206 = vadd.xlane.f32.xlu0 %v1205
      %v1207 = vpop.xlane.xlu0 %1206
      %v1208 = vsel %vm1102, %v824, 0.0
      %1209 = vadd.xlane.f32.xlu0 %v1208
      %v1210 = vpop.xlane.xlu0 %1209
      %v1211 = vsel %vm1102, %v827, 0.0
      %1212 = vadd.xlane.f32.xlu0 %v1211
      %v1213 = vpop.xlane.xlu0 %1212
      %v1214 = vsel %vm1102, %v830, 0.0
      %1215 = vadd.xlane.f32.xlu0 %v1214
      %v1216 = vpop.xlane.xlu0 %1215
      %v1217 = vsel %vm1102, %v833, 0.0
      %1218 = vadd.xlane.f32.xlu0 %v1217
      %v1219 = vpop.xlane.xlu0 %1218
      %v1220 = vsel %vm1102, %v836, 0.0
      %1221 = vadd.xlane.f32.xlu0 %v1220
      %v1222 = vpop.xlane.xlu0 %1221
      %v1223 = vsel %vm1102, %v839, 0.0
      %1224 = vadd.xlane.f32.xlu0 %v1223
      %v1225 = vpop.xlane.xlu0 %1224
      %v1226 = vsel %vm1102, %v842, 0.0
      %1227 = vadd.xlane.f32.xlu0 %v1226
      %v1228 = vpop.xlane.xlu0 %1227
      %v1229 = vsel %vm1102, %v845, 0.0
      %1230 = vadd.xlane.f32.xlu0 %v1229
      %v1231 = vpop.xlane.xlu0 %1230
      %v1232 = vsel %vm1102, %v848, 0.0
      %1233 = vadd.xlane.f32.xlu0 %v1232
      %v1234 = vpop.xlane.xlu0 %1233
      %v1235 = vsel %vm1102, %v851, 0.0
      %1236 = vadd.xlane.f32.xlu0 %v1235
      %v1237 = vpop.xlane.xlu0 %1236
      %v1238 = vsel %vm1102, %v854, 0.0
      %1239 = vadd.xlane.f32.xlu0 %v1238
      %v1240 = vpop.xlane.xlu0 %1239
      %v1241 = vsel %vm1102, %v857, 0.0
      %1242 = vadd.xlane.f32.xlu0 %v1241
      %v1243 = vpop.xlane.xlu0 %1242
      %v1244 = vsel %vm1102, %v860, 0.0
      %1245 = vadd.xlane.f32.xlu0 %v1244
      %v1246 = vpop.xlane.xlu0 %1245
      %v1247 = vsel %vm1102, %v863, 0.0
      %1248 = vadd.xlane.f32.xlu0 %v1247
      %v1249 = vpop.xlane.xlu0 %1248
      %v1250 = vsel %vm1102, %v866, 0.0
      %1251 = vadd.xlane.f32.xlu0 %v1250
      %v1252 = vpop.xlane.xlu0 %1251
      %v1253 = vsel %vm1102, %v869, 0.0
      %1254 = vadd.xlane.f32.xlu0 %v1253
      %v1255 = vpop.xlane.xlu0 %1254
      %v1256 = vsel %vm1102, %v872, 0.0
      %1257 = vadd.xlane.f32.xlu0 %v1256
      %v1258 = vpop.xlane.xlu0 %1257
      %v1259 = vsel %vm1102, %v875, 0.0
      %1260 = vadd.xlane.f32.xlu0 %v1259
      %v1261 = vpop.xlane.xlu0 %1260
      %v1262 = vsel %vm1102, %v878, 0.0
      %1263 = vadd.xlane.f32.xlu0 %v1262
      %v1264 = vpop.xlane.xlu0 %1263
      %v1265 = vsel %vm1102, %v881, 0.0
      %1266 = vadd.xlane.f32.xlu0 %v1265
      %v1267 = vpop.xlane.xlu0 %1266
      %v1268 = vsel %vm1102, %v884, 0.0
      %1269 = vadd.xlane.f32.xlu0 %v1268
      %v1270 = vpop.xlane.xlu0 %1269
      %v1271 = vsel %vm1102, %v887, 0.0
      %1272 = vadd.xlane.f32.xlu0 %v1271
      %v1273 = vpop.xlane.xlu0 %1272
      %v1274 = vsel %vm1102, %v890, 0.0
      %1275 = vadd.xlane.f32.xlu0 %v1274
      %v1276 = vpop.xlane.xlu0 %1275
      %v1277 = vsel %vm1102, %v893, 0.0
      %1278 = vadd.xlane.f32.xlu0 %v1277
      %v1279 = vpop.xlane.xlu0 %1278
      %v1280 = vsel %vm1102, %v896, 0.0
      %1281 = vadd.xlane.f32.xlu0 %v1280
      %v1282 = vpop.xlane.xlu0 %1281
      %v1283 = vsel %vm1102, %v899, 0.0
      %1284 = vadd.xlane.f32.xlu0 %v1283
      %v1285 = vpop.xlane.xlu0 %1284
      %v1286 = vsel %vm1102, %v902, 0.0
      %1287 = vadd.xlane.f32.xlu0 %v1286
      %v1288 = vpop.xlane.xlu0 %1287
      %v1289 = vsel %vm1102, %v905, 0.0
      %1290 = vadd.xlane.f32.xlu0 %v1289
      %v1291 = vpop.xlane.xlu0 %1290
      %v1292 = vsel %vm1102, %v908, 0.0
      %1293 = vadd.xlane.f32.xlu0 %v1292
      %v1294 = vpop.xlane.xlu0 %1293
      %v1295 = vsel %vm1102, %v911, 0.0
      %1296 = vadd.xlane.f32.xlu0 %v1295
      %v1297 = vpop.xlane.xlu0 %1296
      %v1298 = vsel %vm1102, %v914, 0.0
      %1299 = vadd.xlane.f32.xlu0 %v1298
      %v1300 = vpop.xlane.xlu0 %1299
      %v1301 = vsel %vm1102, %v917, 0.0
      %1302 = vadd.xlane.f32.xlu0 %v1301
      %v1303 = vpop.xlane.xlu0 %1302
      %v1304 = vsel %vm1102, %v920, 0.0
      %1305 = vadd.xlane.f32.xlu0 %v1304
      %v1306 = vpop.xlane.xlu0 %1305
      %v1307 = vsel %vm1102, %v923, 0.0
      %1308 = vadd.xlane.f32.xlu0 %v1307
      %v1309 = vpop.xlane.xlu0 %1308
      %v1310 = vsel %vm1102, %v926, 0.0
      %1311 = vadd.xlane.f32.xlu0 %v1310
      %v1312 = vpop.xlane.xlu0 %1311
      %v1313 = vsel %vm1102, %v929, 0.0
      %1314 = vadd.xlane.f32.xlu0 %v1313
      %v1315 = vpop.xlane.xlu0 %1314
      %v1316 = vsel %vm1102, %v932, 0.0
      %1317 = vadd.xlane.f32.xlu0 %v1316
      %v1318 = vpop.xlane.xlu0 %1317
      %v1319 = vsel %vm1102, %v935, 0.0
      %1320 = vadd.xlane.f32.xlu0 %v1319
      %v1321 = vpop.xlane.xlu0 %1320
      %v1322 = vsel %vm1102, %v938, 0.0
      %1323 = vadd.xlane.f32.xlu0 %v1322
      %v1324 = vpop.xlane.xlu0 %1323
      %v1325 = vsel %vm1102, %v941, 0.0
      %1326 = vadd.xlane.f32.xlu0 %v1325
      %v1327 = vpop.xlane.xlu0 %1326
      %v1328 = vsel %vm1102, %v944, 0.0
      %1329 = vadd.xlane.f32.xlu0 %v1328
      %v1330 = vpop.xlane.xlu0 %1329
      %v1331 = vsel %vm1102, %v947, 0.0
      %1332 = vadd.xlane.f32.xlu0 %v1331
      %v1333 = vpop.xlane.xlu0 %1332
      %v1334 = vsel %vm1102, %v950, 0.0
      %1335 = vadd.xlane.f32.xlu0 %v1334
      %v1336 = vpop.xlane.xlu0 %1335
      %v1337 = vsel %vm1102, %v953, 0.0
      %1338 = vadd.xlane.f32.xlu0 %v1337
      %v1339 = vpop.xlane.xlu0 %1338
      %v1340 = vsel %vm1102, %v956, 0.0
      %1341 = vadd.xlane.f32.xlu0 %v1340
      %v1342 = vpop.xlane.xlu0 %1341
      %v1343 = vsel %vm1102, %v959, 0.0
      %1344 = vadd.xlane.f32.xlu0 %v1343
      %v1345 = vpop.xlane.xlu0 %1344
      %v1346 = vsel %vm1102, %v962, 0.0
      %1347 = vadd.xlane.f32.xlu0 %v1346
      %v1348 = vpop.xlane.xlu0 %1347
      %v1349 = vsel %vm1102, %v965, 0.0
      %1350 = vadd.xlane.f32.xlu0 %v1349
      %v1351 = vpop.xlane.xlu0 %1350
      %v1352 = vsel %vm1102, %v968, 0.0
      %1353 = vadd.xlane.f32.xlu0 %v1352
      %v1354 = vpop.xlane.xlu0 %1353
      %v1355 = vsel %vm1102, %v971, 0.0
      %1356 = vadd.xlane.f32.xlu0 %v1355
      %v1357 = vpop.xlane.xlu0 %1356
      %v1358 = vsel %vm1102, %v974, 0.0
      %1359 = vadd.xlane.f32.xlu0 %v1358
      %v1360 = vpop.xlane.xlu0 %1359
      %v1361 = vsel %vm1102, %v977, 0.0
      %1362 = vadd.xlane.f32.xlu0 %v1361
      %v1363 = vpop.xlane.xlu0 %1362
      %v1364 = vsel %vm1102, %v980, 0.0
      %1365 = vadd.xlane.f32.xlu0 %v1364
      %v1366 = vpop.xlane.xlu0 %1365
      %v1367 = vsel %vm1102, %v983, 0.0
      %1368 = vadd.xlane.f32.xlu0 %v1367
      %v1369 = vpop.xlane.xlu0 %1368
      %v1370 = vsel %vm1102, %v986, 0.0
      %1371 = vadd.xlane.f32.xlu0 %v1370
      %v1372 = vpop.xlane.xlu0 %1371
      %v1373 = vsel %vm1102, %v989, 0.0
      %1374 = vadd.xlane.f32.xlu0 %v1373
      %v1375 = vpop.xlane.xlu0 %1374
      %v1376 = vsel %vm1102, %v992, 0.0
      %1377 = vadd.xlane.f32.xlu0 %v1376
      %v1378 = vpop.xlane.xlu0 %1377
      %v1379 = vsel %vm1102, %v995, 0.0
      %1380 = vadd.xlane.f32.xlu0 %v1379
      %v1381 = vpop.xlane.xlu0 %1380
      %v1382 = vsel %vm1102, %v998, 0.0
      %1383 = vadd.xlane.f32.xlu0 %v1382
      %v1384 = vpop.xlane.xlu0 %1383
      %v1385 = vsel %vm1102, %v1001, 0.0
      %1386 = vadd.xlane.f32.xlu0 %v1385
      %v1387 = vpop.xlane.xlu0 %1386
      %v1388 = vsel %vm1102, %v1004, 0.0
      %1389 = vadd.xlane.f32.xlu0 %v1388
      %v1390 = vpop.xlane.xlu0 %1389
      %v1391 = vsel %vm1102, %v1007, 0.0
      %1392 = vadd.xlane.f32.xlu0 %v1391
      %v1393 = vpop.xlane.xlu0 %1392
      %v1394 = vsel %vm1102, %v1010, 0.0
      %1395 = vadd.xlane.f32.xlu0 %v1394
      %v1396 = vpop.xlane.xlu0 %1395
      %v1397 = vsel %vm1102, %v1013, 0.0
      %1398 = vadd.xlane.f32.xlu0 %v1397
      %v1399 = vpop.xlane.xlu0 %1398
      %v1400 = vsel %vm1102, %v1016, 0.0
      %1401 = vadd.xlane.f32.xlu0 %v1400
      %v1402 = vpop.xlane.xlu0 %1401
      %v1403 = vsel %vm1102, %v1019, 0.0
      %1404 = vadd.xlane.f32.xlu0 %v1403
      %v1405 = vpop.xlane.xlu0 %1404
      %v1406 = vsel %vm1102, %v1022, 0.0
      %1407 = vadd.xlane.f32.xlu0 %v1406
      %v1408 = vpop.xlane.xlu0 %1407
      %v1409 = vsel %vm1102, %v1025, 0.0
      %1410 = vadd.xlane.f32.xlu0 %v1409
      %v1411 = vpop.xlane.xlu0 %1410
      %v1412 = vsel %vm1102, %v1028, 0.0
      %1413 = vadd.xlane.f32.xlu0 %v1412
      %v1414 = vpop.xlane.xlu0 %1413
      %v1415 = vsel %vm1102, %v1031, 0.0
      %1416 = vadd.xlane.f32.xlu0 %v1415
      %v1417 = vpop.xlane.xlu0 %1416
      %v1418 = vsel %vm1102, %v1034, 0.0
      %1419 = vadd.xlane.f32.xlu0 %v1418
      %v1420 = vpop.xlane.xlu0 %1419
      %v1421 = vsel %vm1102, %v1037, 0.0
      %1422 = vadd.xlane.f32.xlu0 %v1421
      %v1423 = vpop.xlane.xlu0 %1422
      %v1424 = vsel %vm1102, %v1040, 0.0
      %1425 = vadd.xlane.f32.xlu0 %v1424
      %v1426 = vpop.xlane.xlu0 %1425
      %v1427 = vsel %vm1102, %v1043, 0.0
      %1428 = vadd.xlane.f32.xlu0 %v1427
      %v1429 = vpop.xlane.xlu0 %1428
      %v1430 = vsel %vm1102, %v1046, 0.0
      %1431 = vadd.xlane.f32.xlu0 %v1430
      %v1432 = vpop.xlane.xlu0 %1431
      %v1433 = vsel %vm1102, %v1049, 0.0
      %1434 = vadd.xlane.f32.xlu0 %v1433
      %v1435 = vpop.xlane.xlu0 %1434
      %v1436 = vsel %vm1102, %v1052, 0.0
      %1437 = vadd.xlane.f32.xlu0 %v1436
      %v1438 = vpop.xlane.xlu0 %1437
      %v1439 = vsel %vm1102, %v1055, 0.0
      %1440 = vadd.xlane.f32.xlu0 %v1439
      %v1441 = vpop.xlane.xlu0 %1440
      %v1442 = vsel %vm1102, %v1058, 0.0
      %1443 = vadd.xlane.f32.xlu0 %v1442
      %v1444 = vpop.xlane.xlu0 %1443
      %v1445 = vsel %vm1102, %v1061, 0.0
      %1446 = vadd.xlane.f32.xlu0 %v1445
      %v1447 = vpop.xlane.xlu0 %1446
      %v1448 = vsel %vm1102, %v1064, 0.0
      %1449 = vadd.xlane.f32.xlu0 %v1448
      %v1450 = vpop.xlane.xlu0 %1449
      %v1451 = vsel %vm1102, %v1067, 0.0
      %1452 = vadd.xlane.f32.xlu0 %v1451
      %v1453 = vpop.xlane.xlu0 %1452
      %v1454 = vsel %vm1102, %v1070, 0.0
      %1455 = vadd.xlane.f32.xlu0 %v1454
      %v1456 = vpop.xlane.xlu0 %1455
      %v1457 = vsel %vm1102, %v1073, 0.0
      %1458 = vadd.xlane.f32.xlu0 %v1457
      %v1459 = vpop.xlane.xlu0 %1458
      %v1460 = vsel %vm1102, %v1076, 0.0
      %1461 = vadd.xlane.f32.xlu0 %v1460
      %v1462 = vpop.xlane.xlu0 %1461
      %v1463 = vsel %vm1102, %v1079, 0.0
      %1464 = vadd.xlane.f32.xlu0 %v1463
      %v1465 = vpop.xlane.xlu0 %1464
      %v1466 = vsel %vm1102, %v1082, 0.0
      %1467 = vadd.xlane.f32.xlu0 %v1466
      %v1468 = vpop.xlane.xlu0 %1467
      %v1469 = vsel %vm1102, %v1085, 0.0
      %1470 = vadd.xlane.f32.xlu0 %v1469
      %v1471 = vpop.xlane.xlu0 %1470
      %v1472 = vsel %vm1102, %v1088, 0.0
      %1473 = vadd.xlane.f32.xlu0 %v1472
      %v1474 = vpop.xlane.xlu0 %1473
      %v1475 = vsel %vm1102, %v1091, 0.0
      %1476 = vadd.xlane.f32.xlu0 %v1475
      %v1477 = vpop.xlane.xlu0 %1476
      %v1478 = vsel %vm1102, %v1094, 0.0
      %1479 = vadd.xlane.f32.xlu0 %v1478
      %v1480 = vpop.xlane.xlu0 %1479
      %v1481 = vsel %vm1102, %v1097, 0.0
      %1482 = vadd.xlane.f32.xlu0 %v1481
      %v1483 = vpop.xlane.xlu0 %1482
      %v1484 = vsel %vm1102, %v1100, 0.0
      %1485 = vadd.xlane.f32.xlu0 %v1484
      %v1486 = vpop.xlane.xlu0 %1485
      %v1487 = vrcp.pop 32.0
      %v1488 = vmul.f32 32.0, %v1487
      %v1489 = vsub.f32 1.0, %v1488
      %v1490 = vmul.f32 %v1487, %v1489
      %v1491 = vadd.f32 %v1487, %v1490
      %vm1492 = vweird.f32 %v1487
      %v1493 = vsel %vm1492, %v1487, %v1491
      %v1494 = vmul.f32 %v1105, %v1493
      %v1495 = vmul.f32 %v1108, %v1493
      %v1496 = vmul.f32 %v1111, %v1493
      %v1497 = vmul.f32 %v1114, %v1493
      %v1498 = vmul.f32 %v1117, %v1493
      %v1499 = vmul.f32 %v1120, %v1493
      %v1500 = vmul.f32 %v1123, %v1493
      %v1501 = vmul.f32 %v1126, %v1493
      %v1502 = vmul.f32 %v1129, %v1493
      %v1503 = vmul.f32 %v1132, %v1493
      %v1504 = vmul.f32 %v1135, %v1493
      %v1505 = vmul.f32 %v1138, %v1493
      %v1506 = vmul.f32 %v1141, %v1493
      %v1507 = vmul.f32 %v1144, %v1493
      %v1508 = vmul.f32 %v1147, %v1493
      %v1509 = vmul.f32 %v1150, %v1493
      %v1510 = vmul.f32 %v1153, %v1493
      %v1511 = vmul.f32 %v1156, %v1493
      %v1512 = vmul.f32 %v1159, %v1493
      %v1513 = vmul.f32 %v1162, %v1493
      %v1514 = vmul.f32 %v1165, %v1493
      %v1515 = vmul.f32 %v1168, %v1493
      %v1516 = vmul.f32 %v1171, %v1493
      %v1517 = vmul.f32 %v1174, %v1493
      %v1518 = vmul.f32 %v1177, %v1493
      %v1519 = vmul.f32 %v1180, %v1493
      %v1520 = vmul.f32 %v1183, %v1493
      %v1521 = vmul.f32 %v1186, %v1493
      %v1522 = vmul.f32 %v1189, %v1493
      %v1523 = vmul.f32 %v1192, %v1493
      %v1524 = vmul.f32 %v1195, %v1493
      %v1525 = vmul.f32 %v1198, %v1493
      %v1526 = vmul.f32 %v1201, %v1493
      %v1527 = vmul.f32 %v1204, %v1493
      %v1528 = vmul.f32 %v1207, %v1493
      %v1529 = vmul.f32 %v1210, %v1493
      %v1530 = vmul.f32 %v1213, %v1493
      %v1531 = vmul.f32 %v1216, %v1493
      %v1532 = vmul.f32 %v1219, %v1493
      %v1533 = vmul.f32 %v1222, %v1493
      %v1534 = vmul.f32 %v1225, %v1493
      %v1535 = vmul.f32 %v1228, %v1493
      %v1536 = vmul.f32 %v1231, %v1493
      %v1537 = vmul.f32 %v1234, %v1493
      %v1538 = vmul.f32 %v1237, %v1493
      %v1539 = vmul.f32 %v1240, %v1493
      %v1540 = vmul.f32 %v1243, %v1493
      %v1541 = vmul.f32 %v1246, %v1493
      %v1542 = vmul.f32 %v1249, %v1493
      %v1543 = vmul.f32 %v1252, %v1493
      %v1544 = vmul.f32 %v1255, %v1493
      %v1545 = vmul.f32 %v1258, %v1493
      %v1546 = vmul.f32 %v1261, %v1493
      %v1547 = vmul.f32 %v1264, %v1493
      %v1548 = vmul.f32 %v1267, %v1493
      %v1549 = vmul.f32 %v1270, %v1493
      %v1550 = vmul.f32 %v1273, %v1493
      %v1551 = vmul.f32 %v1276, %v1493
      %v1552 = vmul.f32 %v1279, %v1493
      %v1553 = vmul.f32 %v1282, %v1493
      %v1554 = vmul.f32 %v1285, %v1493
      %v1555 = vmul.f32 %v1288, %v1493
      %v1556 = vmul.f32 %v1291, %v1493
      %v1557 = vmul.f32 %v1294, %v1493
      %v1558 = vmul.f32 %v1297, %v1493
      %v1559 = vmul.f32 %v1300, %v1493
      %v1560 = vmul.f32 %v1303, %v1493
      %v1561 = vmul.f32 %v1306, %v1493
      %v1562 = vmul.f32 %v1309, %v1493
      %v1563 = vmul.f32 %v1312, %v1493
      %v1564 = vmul.f32 %v1315, %v1493
      %v1565 = vmul.f32 %v1318, %v1493
      %v1566 = vmul.f32 %v1321, %v1493
      %v1567 = vmul.f32 %v1324, %v1493
      %v1568 = vmul.f32 %v1327, %v1493
      %v1569 = vmul.f32 %v1330, %v1493
      %v1570 = vmul.f32 %v1333, %v1493
      %v1571 = vmul.f32 %v1336, %v1493
      %v1572 = vmul.f32 %v1339, %v1493
      %v1573 = vmul.f32 %v1342, %v1493
      %v1574 = vmul.f32 %v1345, %v1493
      %v1575 = vmul.f32 %v1348, %v1493
      %v1576 = vmul.f32 %v1351, %v1493
      %v1577 = vmul.f32 %v1354, %v1493
      %v1578 = vmul.f32 %v1357, %v1493
      %v1579 = vmul.f32 %v1360, %v1493
      %v1580 = vmul.f32 %v1363, %v1493
      %v1581 = vmul.f32 %v1366, %v1493
      %v1582 = vmul.f32 %v1369, %v1493
      %v1583 = vmul.f32 %v1372, %v1493
      %v1584 = vmul.f32 %v1375, %v1493
      %v1585 = vmul.f32 %v1378, %v1493
      %v1586 = vmul.f32 %v1381, %v1493
      %v1587 = vmul.f32 %v1384, %v1493
      %v1588 = vmul.f32 %v1387, %v1493
      %v1589 = vmul.f32 %v1390, %v1493
      %v1590 = vmul.f32 %v1393, %v1493
      %v1591 = vmul.f32 %v1396, %v1493
      %v1592 = vmul.f32 %v1399, %v1493
      %v1593 = vmul.f32 %v1402, %v1493
      %v1594 = vmul.f32 %v1405, %v1493
      %v1595 = vmul.f32 %v1408, %v1493
      %v1596 = vmul.f32 %v1411, %v1493
      %v1597 = vmul.f32 %v1414, %v1493
      %v1598 = vmul.f32 %v1417, %v1493
      %v1599 = vmul.f32 %v1420, %v1493
      %v1600 = vmul.f32 %v1423, %v1493
      %v1601 = vmul.f32 %v1426, %v1493
      %v1602 = vmul.f32 %v1429, %v1493
      %v1603 = vmul.f32 %v1432, %v1493
      %v1604 = vmul.f32 %v1435, %v1493
      %v1605 = vmul.f32 %v1438, %v1493
      %v1606 = vmul.f32 %v1441, %v1493
      %v1607 = vmul.f32 %v1444, %v1493
      %v1608 = vmul.f32 %v1447, %v1493
      %v1609 = vmul.f32 %v1450, %v1493
      %v1610 = vmul.f32 %v1453, %v1493
      %v1611 = vmul.f32 %v1456, %v1493
      %v1612 = vmul.f32 %v1459, %v1493
      %v1613 = vmul.f32 %v1462, %v1493
      %v1614 = vmul.f32 %v1465, %v1493
      %v1615 = vmul.f32 %v1468, %v1493
      %v1616 = vmul.f32 %v1471, %v1493
      %v1617 = vmul.f32 %v1474, %v1493
      %v1618 = vmul.f32 %v1477, %v1493
      %v1619 = vmul.f32 %v1480, %v1493
      %v1620 = vmul.f32 %v1483, %v1493
      %v1621 = vmul.f32 %v1486, %v1493
      %v1622 = vsub.f32 %v719, %v1494
      %v1623 = vsub.f32 %v722, %v1495
      %v1624 = vsub.f32 %v725, %v1496
      %v1625 = vsub.f32 %v728, %v1497
      %v1626 = vsub.f32 %v731, %v1498
      %v1627 = vsub.f32 %v734, %v1499
      %v1628 = vsub.f32 %v737, %v1500
      %v1629 = vsub.f32 %v740, %v1501
      %v1630 = vsub.f32 %v743, %v1502
      %v1631 = vsub.f32 %v746, %v1503
      %v1632 = vsub.f32 %v749, %v1504
      %v1633 = vsub.f32 %v752, %v1505
      %v1634 = vsub.f32 %v755, %v1506
      %v1635 = vsub.f32 %v758, %v1507
      %v1636 = vsub.f32 %v761, %v1508
      %v1637 = vsub.f32 %v764, %v1509
      %v1638 = vsub.f32 %v767, %v1510
      %v1639 = vsub.f32 %v770, %v1511
      %v1640 = vsub.f32 %v773, %v1512
      %v1641 = vsub.f32 %v776, %v1513
      %v1642 = vsub.f32 %v779, %v1514
      %v1643 = vsub.f32 %v782, %v1515
      %v1644 = vsub.f32 %v785, %v1516
      %v1645 = vsub.f32 %v788, %v1517
      %v1646 = vsub.f32 %v791, %v1518
      %v1647 = vsub.f32 %v794, %v1519
      %v1648 = vsub.f32 %v797, %v1520
      %v1649 = vsub.f32 %v800, %v1521
      %v1650 = vsub.f32 %v803, %v1522
      %v1651 = vsub.f32 %v806, %v1523
      %v1652 = vsub.f32 %v809, %v1524
      %v1653 = vsub.f32 %v812, %v1525
      %v1654 = vsub.f32 %v815, %v1526
      %v1655 = vsub.f32 %v818, %v1527
      %v1656 = vsub.f32 %v821, %v1528
      %v1657 = vsub.f32 %v824, %v1529
      %v1658 = vsub.f32 %v827, %v1530
      %v1659 = vsub.f32 %v830, %v1531
      %v1660 = vsub.f32 %v833, %v1532
      %v1661 = vsub.f32 %v836, %v1533
      %v1662 = vsub.f32 %v839, %v1534
      %v1663 = vsub.f32 %v842, %v1535
      %v1664 = vsub.f32 %v845, %v1536
      %v1665 = vsub.f32 %v848, %v1537
      %v1666 = vsub.f32 %v851, %v1538
      %v1667 = vsub.f32 %v854, %v1539
      %v1668 = vsub.f32 %v857, %v1540
      %v1669 = vsub.f32 %v860, %v1541
      %v1670 = vsub.f32 %v863, %v1542
      %v1671 = vsub.f32 %v866, %v1543
      %v1672 = vsub.f32 %v869, %v1544
      %v1673 = vsub.f32 %v872, %v1545
      %v1674 = vsub.f32 %v875, %v1546
      %v1675 = vsub.f32 %v878, %v1547
      %v1676 = vsub.f32 %v881, %v1548
      %v1677 = vsub.f32 %v884, %v1549
      %v1678 = vsub.f32 %v887, %v1550
      %v1679 = vsub.f32 %v890, %v1551
      %v1680 = vsub.f32 %v893, %v1552
      %v1681 = vsub.f32 %v896, %v1553
      %v1682 = vsub.f32 %v899, %v1554
      %v1683 = vsub.f32 %v902, %v1555
      %v1684 = vsub.f32 %v905, %v1556
      %v1685 = vsub.f32 %v908, %v1557
      %v1686 = vsub.f32 %v911, %v1558
      %v1687 = vsub.f32 %v914, %v1559
      %v1688 = vsub.f32 %v917, %v1560
      %v1689 = vsub.f32 %v920, %v1561
      %v1690 = vsub.f32 %v923, %v1562
      %v1691 = vsub.f32 %v926, %v1563
      %v1692 = vsub.f32 %v929, %v1564
      %v1693 = vsub.f32 %v932, %v1565
      %v1694 = vsub.f32 %v935, %v1566
      %v1695 = vsub.f32 %v938, %v1567
      %v1696 = vsub.f32 %v941, %v1568
      %v1697 = vsub.f32 %v944, %v1569
      %v1698 = vsub.f32 %v947, %v1570
      %v1699 = vsub.f32 %v950, %v1571
      %v1700 = vsub.f32 %v953, %v1572
      %v1701 = vsub.f32 %v956, %v1573
      %v1702 = vsub.f32 %v959, %v1574
      %v1703 = vsub.f32 %v962, %v1575
      %v1704 = vsub.f32 %v965, %v1576
      %v1705 = vsub.f32 %v968, %v1577
      %v1706 = vsub.f32 %v971, %v1578
      %v1707 = vsub.f32 %v974, %v1579
      %v1708 = vsub.f32 %v977, %v1580
      %v1709 = vsub.f32 %v980, %v1581
      %v1710 = vsub.f32 %v983, %v1582
      %v1711 = vsub.f32 %v986, %v1583
      %v1712 = vsub.f32 %v989, %v1584
      %v1713 = vsub.f32 %v992, %v1585
      %v1714 = vsub.f32 %v995, %v1586
      %v1715 = vsub.f32 %v998, %v1587
      %v1716 = vsub.f32 %v1001, %v1588
      %v1717 = vsub.f32 %v1004, %v1589
      %v1718 = vsub.f32 %v1007, %v1590
      %v1719 = vsub.f32 %v1010, %v1591
      %v1720 = vsub.f32 %v1013, %v1592
      %v1721 = vsub.f32 %v1016, %v1593
      %v1722 = vsub.f32 %v1019, %v1594
      %v1723 = vsub.f32 %v1022, %v1595
      %v1724 = vsub.f32 %v1025, %v1596
      %v1725 = vsub.f32 %v1028, %v1597
      %v1726 = vsub.f32 %v1031, %v1598
      %v1727 = vsub.f32 %v1034, %v1599
      %v1728 = vsub.f32 %v1037, %v1600
      %v1729 = vsub.f32 %v1040, %v1601
      %v1730 = vsub.f32 %v1043, %v1602
      %v1731 = vsub.f32 %v1046, %v1603
      %v1732 = vsub.f32 %v1049, %v1604
      %v1733 = vsub.f32 %v1052, %v1605
      %v1734 = vsub.f32 %v1055, %v1606
      %v1735 = vsub.f32 %v1058, %v1607
      %v1736 = vsub.f32 %v1061, %v1608
      %v1737 = vsub.f32 %v1064, %v1609
      %v1738 = vsub.f32 %v1067, %v1610
      %v1739 = vsub.f32 %v1070, %v1611
      %v1740 = vsub.f32 %v1073, %v1612
      %v1741 = vsub.f32 %v1076, %v1613
      %v1742 = vsub.f32 %v1079, %v1614
      %v1743 = vsub.f32 %v1082, %v1615
      %v1744 = vsub.f32 %v1085, %v1616
      %v1745 = vsub.f32 %v1088, %v1617
      %v1746 = vsub.f32 %v1091, %v1618
      %v1747 = vsub.f32 %v1094, %v1619
      %v1748 = vsub.f32 %v1097, %v1620
      %v1749 = vsub.f32 %v1100, %v1621
      %v1750 = vmul.f32 %v1622, %v1622
      %v1751 = vmul.f32 %v1623, %v1623
      %v1752 = vmul.f32 %v1624, %v1624
      %v1753 = vmul.f32 %v1625, %v1625
      %v1754 = vmul.f32 %v1626, %v1626
      %v1755 = vmul.f32 %v1627, %v1627
      %v1756 = vmul.f32 %v1628, %v1628
      %v1757 = vmul.f32 %v1629, %v1629
      %v1758 = vmul.f32 %v1630, %v1630
      %v1759 = vmul.f32 %v1631, %v1631
      %v1760 = vmul.f32 %v1632, %v1632
      %v1761 = vmul.f32 %v1633, %v1633
      %v1762 = vmul.f32 %v1634, %v1634
      %v1763 = vmul.f32 %v1635, %v1635
      %v1764 = vmul.f32 %v1636, %v1636
      %v1765 = vmul.f32 %v1637, %v1637
      %v1766 = vmul.f32 %v1638, %v1638
      %v1767 = vmul.f32 %v1639, %v1639
      %v1768 = vmul.f32 %v1640, %v1640
      %v1769 = vmul.f32 %v1641, %v1641
      %v1770 = vmul.f32 %v1642, %v1642
      %v1771 = vmul.f32 %v1643, %v1643
      %v1772 = vmul.f32 %v1644, %v1644
      %v1773 = vmul.f32 %v1645, %v1645
      %v1774 = vmul.f32 %v1646, %v1646
      %v1775 = vmul.f32 %v1647, %v1647
      %v1776 = vmul.f32 %v1648, %v1648
      %v1777 = vmul.f32 %v1649, %v1649
      %v1778 = vmul.f32 %v1650, %v1650
      %v1779 = vmul.f32 %v1651, %v1651
      %v1780 = vmul.f32 %v1652, %v1652
      %v1781 = vmul.f32 %v1653, %v1653
      %v1782 = vmul.f32 %v1654, %v1654
      %v1783 = vmul.f32 %v1655, %v1655
      %v1784 = vmul.f32 %v1656, %v1656
      %v1785 = vmul.f32 %v1657, %v1657
      %v1786 = vmul.f32 %v1658, %v1658
      %v1787 = vmul.f32 %v1659, %v1659
      %v1788 = vmul.f32 %v1660, %v1660
      %v1789 = vmul.f32 %v1661, %v1661
      %v1790 = vmul.f32 %v1662, %v1662
      %v1791 = vmul.f32 %v1663, %v1663
      %v1792 = vmul.f32 %v1664, %v1664
      %v1793 = vmul.f32 %v1665, %v1665
      %v1794 = vmul.f32 %v1666, %v1666
      %v1795 = vmul.f32 %v1667, %v1667
      %v1796 = vmul.f32 %v1668, %v1668
      %v1797 = vmul.f32 %v1669, %v1669
      %v1798 = vmul.f32 %v1670, %v1670
      %v1799 = vmul.f32 %v1671, %v1671
      %v1800 = vmul.f32 %v1672, %v1672
      %v1801 = vmul.f32 %v1673, %v1673
      %v1802 = vmul.f32 %v1674, %v1674
      %v1803 = vmul.f32 %v1675, %v1675
      %v1804 = vmul.f32 %v1676, %v1676
      %v1805 = vmul.f32 %v1677, %v1677
      %v1806 = vmul.f32 %v1678, %v1678
      %v1807 = vmul.f32 %v1679, %v1679
      %v1808 = vmul.f32 %v1680, %v1680
      %v1809 = vmul.f32 %v1681, %v1681
      %v1810 = vmul.f32 %v1682, %v1682
      %v1811 = vmul.f32 %v1683, %v1683
      %v1812 = vmul.f32 %v1684, %v1684
      %v1813 = vmul.f32 %v1685, %v1685
      %v1814 = vmul.f32 %v1686, %v1686
      %v1815 = vmul.f32 %v1687, %v1687
      %v1816 = vmul.f32 %v1688, %v1688
      %v1817 = vmul.f32 %v1689, %v1689
      %v1818 = vmul.f32 %v1690, %v1690
      %v1819 = vmul.f32 %v1691, %v1691
      %v1820 = vmul.f32 %v1692, %v1692
      %v1821 = vmul.f32 %v1693, %v1693
      %v1822 = vmul.f32 %v1694, %v1694
      %v1823 = vmul.f32 %v1695, %v1695
      %v1824 = vmul.f32 %v1696, %v1696
      %v1825 = vmul.f32 %v1697, %v1697
      %v1826 = vmul.f32 %v1698, %v1698
      %v1827 = vmul.f32 %v1699, %v1699
      %v1828 = vmul.f32 %v1700, %v1700
      %v1829 = vmul.f32 %v1701, %v1701
      %v1830 = vmul.f32 %v1702, %v1702
      %v1831 = vmul.f32 %v1703, %v1703
      %v1832 = vmul.f32 %v1704, %v1704
      %v1833 = vmul.f32 %v1705, %v1705
      %v1834 = vmul.f32 %v1706, %v1706
      %v1835 = vmul.f32 %v1707, %v1707
      %v1836 = vmul.f32 %v1708, %v1708
      %v1837 = vmul.f32 %v1709, %v1709
      %v1838 = vmul.f32 %v1710, %v1710
      %v1839 = vmul.f32 %v1711, %v1711
      %v1840 = vmul.f32 %v1712, %v1712
      %v1841 = vmul.f32 %v1713, %v1713
      %v1842 = vmul.f32 %v1714, %v1714
      %v1843 = vmul.f32 %v1715, %v1715
      %v1844 = vmul.f32 %v1716, %v1716
      %v1845 = vmul.f32 %v1717, %v1717
      %v1846 = vmul.f32 %v1718, %v1718
      %v1847 = vmul.f32 %v1719, %v1719
      %v1848 = vmul.f32 %v1720, %v1720
      %v1849 = vmul.f32 %v1721, %v1721
      %v1850 = vmul.f32 %v1722, %v1722
      %v1851 = vmul.f32 %v1723, %v1723
      %v1852 = vmul.f32 %v1724, %v1724
      %v1853 = vmul.f32 %v1725, %v1725
      %v1854 = vmul.f32 %v1726, %v1726
      %v1855 = vmul.f32 %v1727, %v1727
      %v1856 = vmul.f32 %v1728, %v1728
      %v1857 = vmul.f32 %v1729, %v1729
      %v1858 = vmul.f32 %v1730, %v1730
      %v1859 = vmul.f32 %v1731, %v1731
      %v1860 = vmul.f32 %v1732, %v1732
      %v1861 = vmul.f32 %v1733, %v1733
      %v1862 = vmul.f32 %v1734, %v1734
      %v1863 = vmul.f32 %v1735, %v1735
      %v1864 = vmul.f32 %v1736, %v1736
      %v1865 = vmul.f32 %v1737, %v1737
      %v1866 = vmul.f32 %v1738, %v1738
      %v1867 = vmul.f32 %v1739, %v1739
      %v1868 = vmul.f32 %v1740, %v1740
      %v1869 = vmul.f32 %v1741, %v1741
      %v1870 = vmul.f32 %v1742, %v1742
      %v1871 = vmul.f32 %v1743, %v1743
      %v1872 = vmul.f32 %v1744, %v1744
      %v1873 = vmul.f32 %v1745, %v1745
      %v1874 = vmul.f32 %v1746, %v1746
      %v1875 = vmul.f32 %v1747, %v1747
      %v1876 = vmul.f32 %v1748, %v1748
      %v1877 = vmul.f32 %v1749, %v1749
      %v1878 = vsel %vm1102, %v1750, 0.0
      %1879 = vadd.xlane.f32.xlu0 %v1878
      %v1880 = vpop.xlane.xlu0 %1879
      %v1881 = vsel %vm1102, %v1751, 0.0
      %1882 = vadd.xlane.f32.xlu0 %v1881
      %v1883 = vpop.xlane.xlu0 %1882
      %v1884 = vsel %vm1102, %v1752, 0.0
      %1885 = vadd.xlane.f32.xlu0 %v1884
      %v1886 = vpop.xlane.xlu0 %1885
      %v1887 = vsel %vm1102, %v1753, 0.0
      %1888 = vadd.xlane.f32.xlu0 %v1887
      %v1889 = vpop.xlane.xlu0 %1888
      %v1890 = vsel %vm1102, %v1754, 0.0
      %1891 = vadd.xlane.f32.xlu0 %v1890
      %v1892 = vpop.xlane.xlu0 %1891
      %v1893 = vsel %vm1102, %v1755, 0.0
      %1894 = vadd.xlane.f32.xlu0 %v1893
      %v1895 = vpop.xlane.xlu0 %1894
      %v1896 = vsel %vm1102, %v1756, 0.0
      %1897 = vadd.xlane.f32.xlu0 %v1896
      %v1898 = vpop.xlane.xlu0 %1897
      %v1899 = vsel %vm1102, %v1757, 0.0
      %1900 = vadd.xlane.f32.xlu0 %v1899
      %v1901 = vpop.xlane.xlu0 %1900
      %v1902 = vsel %vm1102, %v1758, 0.0
      %1903 = vadd.xlane.f32.xlu0 %v1902
      %v1904 = vpop.xlane.xlu0 %1903
      %v1905 = vsel %vm1102, %v1759, 0.0
      %1906 = vadd.xlane.f32.xlu0 %v1905
      %v1907 = vpop.xlane.xlu0 %1906
      %v1908 = vsel %vm1102, %v1760, 0.0
      %1909 = vadd.xlane.f32.xlu0 %v1908
      %v1910 = vpop.xlane.xlu0 %1909
      %v1911 = vsel %vm1102, %v1761, 0.0
      %1912 = vadd.xlane.f32.xlu0 %v1911
      %v1913 = vpop.xlane.xlu0 %1912
      %v1914 = vsel %vm1102, %v1762, 0.0
      %1915 = vadd.xlane.f32.xlu0 %v1914
      %v1916 = vpop.xlane.xlu0 %1915
      %v1917 = vsel %vm1102, %v1763, 0.0
      %1918 = vadd.xlane.f32.xlu0 %v1917
      %v1919 = vpop.xlane.xlu0 %1918
      %v1920 = vsel %vm1102, %v1764, 0.0
      %1921 = vadd.xlane.f32.xlu0 %v1920
      %v1922 = vpop.xlane.xlu0 %1921
      %v1923 = vsel %vm1102, %v1765, 0.0
      %1924 = vadd.xlane.f32.xlu0 %v1923
      %v1925 = vpop.xlane.xlu0 %1924
      %v1926 = vsel %vm1102, %v1766, 0.0
      %1927 = vadd.xlane.f32.xlu0 %v1926
      %v1928 = vpop.xlane.xlu0 %1927
      %v1929 = vsel %vm1102, %v1767, 0.0
      %1930 = vadd.xlane.f32.xlu0 %v1929
      %v1931 = vpop.xlane.xlu0 %1930
      %v1932 = vsel %vm1102, %v1768, 0.0
      %1933 = vadd.xlane.f32.xlu0 %v1932
      %v1934 = vpop.xlane.xlu0 %1933
      %v1935 = vsel %vm1102, %v1769, 0.0
      %1936 = vadd.xlane.f32.xlu0 %v1935
      %v1937 = vpop.xlane.xlu0 %1936
      %v1938 = vsel %vm1102, %v1770, 0.0
      %1939 = vadd.xlane.f32.xlu0 %v1938
      %v1940 = vpop.xlane.xlu0 %1939
      %v1941 = vsel %vm1102, %v1771, 0.0
      %1942 = vadd.xlane.f32.xlu0 %v1941
      %v1943 = vpop.xlane.xlu0 %1942
      %v1944 = vsel %vm1102, %v1772, 0.0
      %1945 = vadd.xlane.f32.xlu0 %v1944
      %v1946 = vpop.xlane.xlu0 %1945
      %v1947 = vsel %vm1102, %v1773, 0.0
      %1948 = vadd.xlane.f32.xlu0 %v1947
      %v1949 = vpop.xlane.xlu0 %1948
      %v1950 = vsel %vm1102, %v1774, 0.0
      %1951 = vadd.xlane.f32.xlu0 %v1950
      %v1952 = vpop.xlane.xlu0 %1951
      %v1953 = vsel %vm1102, %v1775, 0.0
      %1954 = vadd.xlane.f32.xlu0 %v1953
      %v1955 = vpop.xlane.xlu0 %1954
      %v1956 = vsel %vm1102, %v1776, 0.0
      %1957 = vadd.xlane.f32.xlu0 %v1956
      %v1958 = vpop.xlane.xlu0 %1957
      %v1959 = vsel %vm1102, %v1777, 0.0
      %1960 = vadd.xlane.f32.xlu0 %v1959
      %v1961 = vpop.xlane.xlu0 %1960
      %v1962 = vsel %vm1102, %v1778, 0.0
      %1963 = vadd.xlane.f32.xlu0 %v1962
      %v1964 = vpop.xlane.xlu0 %1963
      %v1965 = vsel %vm1102, %v1779, 0.0
      %1966 = vadd.xlane.f32.xlu0 %v1965
      %v1967 = vpop.xlane.xlu0 %1966
      %v1968 = vsel %vm1102, %v1780, 0.0
      %1969 = vadd.xlane.f32.xlu0 %v1968
      %v1970 = vpop.xlane.xlu0 %1969
      %v1971 = vsel %vm1102, %v1781, 0.0
      %1972 = vadd.xlane.f32.xlu0 %v1971
      %v1973 = vpop.xlane.xlu0 %1972
      %v1974 = vsel %vm1102, %v1782, 0.0
      %1975 = vadd.xlane.f32.xlu0 %v1974
      %v1976 = vpop.xlane.xlu0 %1975
      %v1977 = vsel %vm1102, %v1783, 0.0
      %1978 = vadd.xlane.f32.xlu0 %v1977
      %v1979 = vpop.xlane.xlu0 %1978
      %v1980 = vsel %vm1102, %v1784, 0.0
      %1981 = vadd.xlane.f32.xlu0 %v1980
      %v1982 = vpop.xlane.xlu0 %1981
      %v1983 = vsel %vm1102, %v1785, 0.0
      %1984 = vadd.xlane.f32.xlu0 %v1983
      %v1985 = vpop.xlane.xlu0 %1984
      %v1986 = vsel %vm1102, %v1786, 0.0
      %1987 = vadd.xlane.f32.xlu0 %v1986
      %v1988 = vpop.xlane.xlu0 %1987
      %v1989 = vsel %vm1102, %v1787, 0.0
      %1990 = vadd.xlane.f32.xlu0 %v1989
      %v1991 = vpop.xlane.xlu0 %1990
      %v1992 = vsel %vm1102, %v1788, 0.0
      %1993 = vadd.xlane.f32.xlu0 %v1992
      %v1994 = vpop.xlane.xlu0 %1993
      %v1995 = vsel %vm1102, %v1789, 0.0
      %1996 = vadd.xlane.f32.xlu0 %v1995
      %v1997 = vpop.xlane.xlu0 %1996
      %v1998 = vsel %vm1102, %v1790, 0.0
      %1999 = vadd.xlane.f32.xlu0 %v1998
      %v2000 = vpop.xlane.xlu0 %1999
      %v2001 = vsel %vm1102, %v1791, 0.0
      %2002 = vadd.xlane.f32.xlu0 %v2001
      %v2003 = vpop.xlane.xlu0 %2002
      %v2004 = vsel %vm1102, %v1792, 0.0
      %2005 = vadd.xlane.f32.xlu0 %v2004
      %v2006 = vpop.xlane.xlu0 %2005
      %v2007 = vsel %vm1102, %v1793, 0.0
      %2008 = vadd.xlane.f32.xlu0 %v2007
      %v2009 = vpop.xlane.xlu0 %2008
      %v2010 = vsel %vm1102, %v1794, 0.0
      %2011 = vadd.xlane.f32.xlu0 %v2010
      %v2012 = vpop.xlane.xlu0 %2011
      %v2013 = vsel %vm1102, %v1795, 0.0
      %2014 = vadd.xlane.f32.xlu0 %v2013
      %v2015 = vpop.xlane.xlu0 %2014
      %v2016 = vsel %vm1102, %v1796, 0.0
      %2017 = vadd.xlane.f32.xlu0 %v2016
      %v2018 = vpop.xlane.xlu0 %2017
      %v2019 = vsel %vm1102, %v1797, 0.0
      %2020 = vadd.xlane.f32.xlu0 %v2019
      %v2021 = vpop.xlane.xlu0 %2020
      %v2022 = vsel %vm1102, %v1798, 0.0
      %2023 = vadd.xlane.f32.xlu0 %v2022
      %v2024 = vpop.xlane.xlu0 %2023
      %v2025 = vsel %vm1102, %v1799, 0.0
      %2026 = vadd.xlane.f32.xlu0 %v2025
      %v2027 = vpop.xlane.xlu0 %2026
      %v2028 = vsel %vm1102, %v1800, 0.0
      %2029 = vadd.xlane.f32.xlu0 %v2028
      %v2030 = vpop.xlane.xlu0 %2029
      %v2031 = vsel %vm1102, %v1801, 0.0
      %2032 = vadd.xlane.f32.xlu0 %v2031
      %v2033 = vpop.xlane.xlu0 %2032
      %v2034 = vsel %vm1102, %v1802, 0.0
      %2035 = vadd.xlane.f32.xlu0 %v2034
      %v2036 = vpop.xlane.xlu0 %2035
      %v2037 = vsel %vm1102, %v1803, 0.0
      %2038 = vadd.xlane.f32.xlu0 %v2037
      %v2039 = vpop.xlane.xlu0 %2038
      %v2040 = vsel %vm1102, %v1804, 0.0
      %2041 = vadd.xlane.f32.xlu0 %v2040
      %v2042 = vpop.xlane.xlu0 %2041
      %v2043 = vsel %vm1102, %v1805, 0.0
      %2044 = vadd.xlane.f32.xlu0 %v2043
      %v2045 = vpop.xlane.xlu0 %2044
      %v2046 = vsel %vm1102, %v1806, 0.0
      %2047 = vadd.xlane.f32.xlu0 %v2046
      %v2048 = vpop.xlane.xlu0 %2047
      %v2049 = vsel %vm1102, %v1807, 0.0
      %2050 = vadd.xlane.f32.xlu0 %v2049
      %v2051 = vpop.xlane.xlu0 %2050
      %v2052 = vsel %vm1102, %v1808, 0.0
      %2053 = vadd.xlane.f32.xlu0 %v2052
      %v2054 = vpop.xlane.xlu0 %2053
      %v2055 = vsel %vm1102, %v1809, 0.0
      %2056 = vadd.xlane.f32.xlu0 %v2055
      %v2057 = vpop.xlane.xlu0 %2056
      %v2058 = vsel %vm1102, %v1810, 0.0
      %2059 = vadd.xlane.f32.xlu0 %v2058
      %v2060 = vpop.xlane.xlu0 %2059
      %v2061 = vsel %vm1102, %v1811, 0.0
      %2062 = vadd.xlane.f32.xlu0 %v2061
      %v2063 = vpop.xlane.xlu0 %2062
      %v2064 = vsel %vm1102, %v1812, 0.0
      %2065 = vadd.xlane.f32.xlu0 %v2064
      %v2066 = vpop.xlane.xlu0 %2065
      %v2067 = vsel %vm1102, %v1813, 0.0
      %2068 = vadd.xlane.f32.xlu0 %v2067
      %v2069 = vpop.xlane.xlu0 %2068
      %v2070 = vsel %vm1102, %v1814, 0.0
      %2071 = vadd.xlane.f32.xlu0 %v2070
      %v2072 = vpop.xlane.xlu0 %2071
      %v2073 = vsel %vm1102, %v1815, 0.0
      %2074 = vadd.xlane.f32.xlu0 %v2073
      %v2075 = vpop.xlane.xlu0 %2074
      %v2076 = vsel %vm1102, %v1816, 0.0
      %2077 = vadd.xlane.f32.xlu0 %v2076
      %v2078 = vpop.xlane.xlu0 %2077
      %v2079 = vsel %vm1102, %v1817, 0.0
      %2080 = vadd.xlane.f32.xlu0 %v2079
      %v2081 = vpop.xlane.xlu0 %2080
      %v2082 = vsel %vm1102, %v1818, 0.0
      %2083 = vadd.xlane.f32.xlu0 %v2082
      %v2084 = vpop.xlane.xlu0 %2083
      %v2085 = vsel %vm1102, %v1819, 0.0
      %2086 = vadd.xlane.f32.xlu0 %v2085
      %v2087 = vpop.xlane.xlu0 %2086
      %v2088 = vsel %vm1102, %v1820, 0.0
      %2089 = vadd.xlane.f32.xlu0 %v2088
      %v2090 = vpop.xlane.xlu0 %2089
      %v2091 = vsel %vm1102, %v1821, 0.0
      %2092 = vadd.xlane.f32.xlu0 %v2091
      %v2093 = vpop.xlane.xlu0 %2092
      %v2094 = vsel %vm1102, %v1822, 0.0
      %2095 = vadd.xlane.f32.xlu0 %v2094
      %v2096 = vpop.xlane.xlu0 %2095
      %v2097 = vsel %vm1102, %v1823, 0.0
      %2098 = vadd.xlane.f32.xlu0 %v2097
      %v2099 = vpop.xlane.xlu0 %2098
      %v2100 = vsel %vm1102, %v1824, 0.0
      %2101 = vadd.xlane.f32.xlu0 %v2100
      %v2102 = vpop.xlane.xlu0 %2101
      %v2103 = vsel %vm1102, %v1825, 0.0
      %2104 = vadd.xlane.f32.xlu0 %v2103
      %v2105 = vpop.xlane.xlu0 %2104
      %v2106 = vsel %vm1102, %v1826, 0.0
      %2107 = vadd.xlane.f32.xlu0 %v2106
      %v2108 = vpop.xlane.xlu0 %2107
      %v2109 = vsel %vm1102, %v1827, 0.0
      %2110 = vadd.xlane.f32.xlu0 %v2109
      %v2111 = vpop.xlane.xlu0 %2110
      %v2112 = vsel %vm1102, %v1828, 0.0
      %2113 = vadd.xlane.f32.xlu0 %v2112
      %v2114 = vpop.xlane.xlu0 %2113
      %v2115 = vsel %vm1102, %v1829, 0.0
      %2116 = vadd.xlane.f32.xlu0 %v2115
      %v2117 = vpop.xlane.xlu0 %2116
      %v2118 = vsel %vm1102, %v1830, 0.0
      %2119 = vadd.xlane.f32.xlu0 %v2118
      %v2120 = vpop.xlane.xlu0 %2119
      %v2121 = vsel %vm1102, %v1831, 0.0
      %2122 = vadd.xlane.f32.xlu0 %v2121
      %v2123 = vpop.xlane.xlu0 %2122
      %v2124 = vsel %vm1102, %v1832, 0.0
      %2125 = vadd.xlane.f32.xlu0 %v2124
      %v2126 = vpop.xlane.xlu0 %2125
      %v2127 = vsel %vm1102, %v1833, 0.0
      %2128 = vadd.xlane.f32.xlu0 %v2127
      %v2129 = vpop.xlane.xlu0 %2128
      %v2130 = vsel %vm1102, %v1834, 0.0
      %2131 = vadd.xlane.f32.xlu0 %v2130
      %v2132 = vpop.xlane.xlu0 %2131
      %v2133 = vsel %vm1102, %v1835, 0.0
      %2134 = vadd.xlane.f32.xlu0 %v2133
      %v2135 = vpop.xlane.xlu0 %2134
      %v2136 = vsel %vm1102, %v1836, 0.0
      %2137 = vadd.xlane.f32.xlu0 %v2136
      %v2138 = vpop.xlane.xlu0 %2137
      %v2139 = vsel %vm1102, %v1837, 0.0
      %2140 = vadd.xlane.f32.xlu0 %v2139
      %v2141 = vpop.xlane.xlu0 %2140
      %v2142 = vsel %vm1102, %v1838, 0.0
      %2143 = vadd.xlane.f32.xlu0 %v2142
      %v2144 = vpop.xlane.xlu0 %2143
      %v2145 = vsel %vm1102, %v1839, 0.0
      %2146 = vadd.xlane.f32.xlu0 %v2145
      %v2147 = vpop.xlane.xlu0 %2146
      %v2148 = vsel %vm1102, %v1840, 0.0
      %2149 = vadd.xlane.f32.xlu0 %v2148
      %v2150 = vpop.xlane.xlu0 %2149
      %v2151 = vsel %vm1102, %v1841, 0.0
      %2152 = vadd.xlane.f32.xlu0 %v2151
      %v2153 = vpop.xlane.xlu0 %2152
      %v2154 = vsel %vm1102, %v1842, 0.0
      %2155 = vadd.xlane.f32.xlu0 %v2154
      %v2156 = vpop.xlane.xlu0 %2155
      %v2157 = vsel %vm1102, %v1843, 0.0
      %2158 = vadd.xlane.f32.xlu0 %v2157
      %v2159 = vpop.xlane.xlu0 %2158
      %v2160 = vsel %vm1102, %v1844, 0.0
      %2161 = vadd.xlane.f32.xlu0 %v2160
      %v2162 = vpop.xlane.xlu0 %2161
      %v2163 = vsel %vm1102, %v1845, 0.0
      %2164 = vadd.xlane.f32.xlu0 %v2163
      %v2165 = vpop.xlane.xlu0 %2164
      %v2166 = vsel %vm1102, %v1846, 0.0
      %2167 = vadd.xlane.f32.xlu0 %v2166
      %v2168 = vpop.xlane.xlu0 %2167
      %v2169 = vsel %vm1102, %v1847, 0.0
      %2170 = vadd.xlane.f32.xlu0 %v2169
      %v2171 = vpop.xlane.xlu0 %2170
      %v2172 = vsel %vm1102, %v1848, 0.0
      %2173 = vadd.xlane.f32.xlu0 %v2172
      %v2174 = vpop.xlane.xlu0 %2173
      %v2175 = vsel %vm1102, %v1849, 0.0
      %2176 = vadd.xlane.f32.xlu0 %v2175
      %v2177 = vpop.xlane.xlu0 %2176
      %v2178 = vsel %vm1102, %v1850, 0.0
      %2179 = vadd.xlane.f32.xlu0 %v2178
      %v2180 = vpop.xlane.xlu0 %2179
      %v2181 = vsel %vm1102, %v1851, 0.0
      %2182 = vadd.xlane.f32.xlu0 %v2181
      %v2183 = vpop.xlane.xlu0 %2182
      %v2184 = vsel %vm1102, %v1852, 0.0
      %2185 = vadd.xlane.f32.xlu0 %v2184
      %v2186 = vpop.xlane.xlu0 %2185
      %v2187 = vsel %vm1102, %v1853, 0.0
      %2188 = vadd.xlane.f32.xlu0 %v2187
      %v2189 = vpop.xlane.xlu0 %2188
      %v2190 = vsel %vm1102, %v1854, 0.0
      %2191 = vadd.xlane.f32.xlu0 %v2190
      %v2192 = vpop.xlane.xlu0 %2191
      %v2193 = vsel %vm1102, %v1855, 0.0
      %2194 = vadd.xlane.f32.xlu0 %v2193
      %v2195 = vpop.xlane.xlu0 %2194
      %v2196 = vsel %vm1102, %v1856, 0.0
      %2197 = vadd.xlane.f32.xlu0 %v2196
      %v2198 = vpop.xlane.xlu0 %2197
      %v2199 = vsel %vm1102, %v1857, 0.0
      %2200 = vadd.xlane.f32.xlu0 %v2199
      %v2201 = vpop.xlane.xlu0 %2200
      %v2202 = vsel %vm1102, %v1858, 0.0
      %2203 = vadd.xlane.f32.xlu0 %v2202
      %v2204 = vpop.xlane.xlu0 %2203
      %v2205 = vsel %vm1102, %v1859, 0.0
      %2206 = vadd.xlane.f32.xlu0 %v2205
      %v2207 = vpop.xlane.xlu0 %2206
      %v2208 = vsel %vm1102, %v1860, 0.0
      %2209 = vadd.xlane.f32.xlu0 %v2208
      %v2210 = vpop.xlane.xlu0 %2209
      %v2211 = vsel %vm1102, %v1861, 0.0
      %2212 = vadd.xlane.f32.xlu0 %v2211
      %v2213 = vpop.xlane.xlu0 %2212
      %v2214 = vsel %vm1102, %v1862, 0.0
      %2215 = vadd.xlane.f32.xlu0 %v2214
      %v2216 = vpop.xlane.xlu0 %2215
      %v2217 = vsel %vm1102, %v1863, 0.0
      %2218 = vadd.xlane.f32.xlu0 %v2217
      %v2219 = vpop.xlane.xlu0 %2218
      %v2220 = vsel %vm1102, %v1864, 0.0
      %2221 = vadd.xlane.f32.xlu0 %v2220
      %v2222 = vpop.xlane.xlu0 %2221
      %v2223 = vsel %vm1102, %v1865, 0.0
      %2224 = vadd.xlane.f32.xlu0 %v2223
      %v2225 = vpop.xlane.xlu0 %2224
      %v2226 = vsel %vm1102, %v1866, 0.0
      %2227 = vadd.xlane.f32.xlu0 %v2226
      %v2228 = vpop.xlane.xlu0 %2227
      %v2229 = vsel %vm1102, %v1867, 0.0
      %2230 = vadd.xlane.f32.xlu0 %v2229
      %v2231 = vpop.xlane.xlu0 %2230
      %v2232 = vsel %vm1102, %v1868, 0.0
      %2233 = vadd.xlane.f32.xlu0 %v2232
      %v2234 = vpop.xlane.xlu0 %2233
      %v2235 = vsel %vm1102, %v1869, 0.0
      %2236 = vadd.xlane.f32.xlu0 %v2235
      %v2237 = vpop.xlane.xlu0 %2236
      %v2238 = vsel %vm1102, %v1870, 0.0
      %2239 = vadd.xlane.f32.xlu0 %v2238
      %v2240 = vpop.xlane.xlu0 %2239
      %v2241 = vsel %vm1102, %v1871, 0.0
      %2242 = vadd.xlane.f32.xlu0 %v2241
      %v2243 = vpop.xlane.xlu0 %2242
      %v2244 = vsel %vm1102, %v1872, 0.0
      %2245 = vadd.xlane.f32.xlu0 %v2244
      %v2246 = vpop.xlane.xlu0 %2245
      %v2247 = vsel %vm1102, %v1873, 0.0
      %2248 = vadd.xlane.f32.xlu0 %v2247
      %v2249 = vpop.xlane.xlu0 %2248
      %v2250 = vsel %vm1102, %v1874, 0.0
      %2251 = vadd.xlane.f32.xlu0 %v2250
      %v2252 = vpop.xlane.xlu0 %2251
      %v2253 = vsel %vm1102, %v1875, 0.0
      %2254 = vadd.xlane.f32.xlu0 %v2253
      %v2255 = vpop.xlane.xlu0 %2254
      %v2256 = vsel %vm1102, %v1876, 0.0
      %2257 = vadd.xlane.f32.xlu0 %v2256
      %v2258 = vpop.xlane.xlu0 %2257
      %v2259 = vsel %vm1102, %v1877, 0.0
      %2260 = vadd.xlane.f32.xlu0 %v2259
      %v2261 = vpop.xlane.xlu0 %2260
      %v2262 = vmul.f32 %v1880, %v1493
      %v2263 = vmul.f32 %v1883, %v1493
      %v2264 = vmul.f32 %v1886, %v1493
      %v2265 = vmul.f32 %v1889, %v1493
      %v2266 = vmul.f32 %v1892, %v1493
      %v2267 = vmul.f32 %v1895, %v1493
      %v2268 = vmul.f32 %v1898, %v1493
      %v2269 = vmul.f32 %v1901, %v1493
      %v2270 = vmul.f32 %v1904, %v1493
      %v2271 = vmul.f32 %v1907, %v1493
      %v2272 = vmul.f32 %v1910, %v1493
      %v2273 = vmul.f32 %v1913, %v1493
      %v2274 = vmul.f32 %v1916, %v1493
      %v2275 = vmul.f32 %v1919, %v1493
      %v2276 = vmul.f32 %v1922, %v1493
      %v2277 = vmul.f32 %v1925, %v1493
      %v2278 = vmul.f32 %v1928, %v1493
      %v2279 = vmul.f32 %v1931, %v1493
      %v2280 = vmul.f32 %v1934, %v1493
      %v2281 = vmul.f32 %v1937, %v1493
      %v2282 = vmul.f32 %v1940, %v1493
      %v2283 = vmul.f32 %v1943, %v1493
      %v2284 = vmul.f32 %v1946, %v1493
      %v2285 = vmul.f32 %v1949, %v1493
      %v2286 = vmul.f32 %v1952, %v1493
      %v2287 = vmul.f32 %v1955, %v1493
      %v2288 = vmul.f32 %v1958, %v1493
      %v2289 = vmul.f32 %v1961, %v1493
      %v2290 = vmul.f32 %v1964, %v1493
      %v2291 = vmul.f32 %v1967, %v1493
      %v2292 = vmul.f32 %v1970, %v1493
      %v2293 = vmul.f32 %v1973, %v1493
      %v2294 = vmul.f32 %v1976, %v1493
      %v2295 = vmul.f32 %v1979, %v1493
      %v2296 = vmul.f32 %v1982, %v1493
      %v2297 = vmul.f32 %v1985, %v1493
      %v2298 = vmul.f32 %v1988, %v1493
      %v2299 = vmul.f32 %v1991, %v1493
      %v2300 = vmul.f32 %v1994, %v1493
      %v2301 = vmul.f32 %v1997, %v1493
      %v2302 = vmul.f32 %v2000, %v1493
      %v2303 = vmul.f32 %v2003, %v1493
      %v2304 = vmul.f32 %v2006, %v1493
      %v2305 = vmul.f32 %v2009, %v1493
      %v2306 = vmul.f32 %v2012, %v1493
      %v2307 = vmul.f32 %v2015, %v1493
      %v2308 = vmul.f32 %v2018, %v1493
      %v2309 = vmul.f32 %v2021, %v1493
      %v2310 = vmul.f32 %v2024, %v1493
      %v2311 = vmul.f32 %v2027, %v1493
      %v2312 = vmul.f32 %v2030, %v1493
      %v2313 = vmul.f32 %v2033, %v1493
      %v2314 = vmul.f32 %v2036, %v1493
      %v2315 = vmul.f32 %v2039, %v1493
      %v2316 = vmul.f32 %v2042, %v1493
      %v2317 = vmul.f32 %v2045, %v1493
      %v2318 = vmul.f32 %v2048, %v1493
      %v2319 = vmul.f32 %v2051, %v1493
      %v2320 = vmul.f32 %v2054, %v1493
      %v2321 = vmul.f32 %v2057, %v1493
      %v2322 = vmul.f32 %v2060, %v1493
      %v2323 = vmul.f32 %v2063, %v1493
      %v2324 = vmul.f32 %v2066, %v1493
      %v2325 = vmul.f32 %v2069, %v1493
      %v2326 = vmul.f32 %v2072, %v1493
      %v2327 = vmul.f32 %v2075, %v1493
      %v2328 = vmul.f32 %v2078, %v1493
      %v2329 = vmul.f32 %v2081, %v1493
      %v2330 = vmul.f32 %v2084, %v1493
      %v2331 = vmul.f32 %v2087, %v1493
      %v2332 = vmul.f32 %v2090, %v1493
      %v2333 = vmul.f32 %v2093, %v1493
      %v2334 = vmul.f32 %v2096, %v1493
      %v2335 = vmul.f32 %v2099, %v1493
      %v2336 = vmul.f32 %v2102, %v1493
      %v2337 = vmul.f32 %v2105, %v1493
      %v2338 = vmul.f32 %v2108, %v1493
      %v2339 = vmul.f32 %v2111, %v1493
      %v2340 = vmul.f32 %v2114, %v1493
      %v2341 = vmul.f32 %v2117, %v1493
      %v2342 = vmul.f32 %v2120, %v1493
      %v2343 = vmul.f32 %v2123, %v1493
      %v2344 = vmul.f32 %v2126, %v1493
      %v2345 = vmul.f32 %v2129, %v1493
      %v2346 = vmul.f32 %v2132, %v1493
      %v2347 = vmul.f32 %v2135, %v1493
      %v2348 = vmul.f32 %v2138, %v1493
      %v2349 = vmul.f32 %v2141, %v1493
      %v2350 = vmul.f32 %v2144, %v1493
      %v2351 = vmul.f32 %v2147, %v1493
      %v2352 = vmul.f32 %v2150, %v1493
      %v2353 = vmul.f32 %v2153, %v1493
      %v2354 = vmul.f32 %v2156, %v1493
      %v2355 = vmul.f32 %v2159, %v1493
      %v2356 = vmul.f32 %v2162, %v1493
      %v2357 = vmul.f32 %v2165, %v1493
      %v2358 = vmul.f32 %v2168, %v1493
      %v2359 = vmul.f32 %v2171, %v1493
      %v2360 = vmul.f32 %v2174, %v1493
      %v2361 = vmul.f32 %v2177, %v1493
      %v2362 = vmul.f32 %v2180, %v1493
      %v2363 = vmul.f32 %v2183, %v1493
      %v2364 = vmul.f32 %v2186, %v1493
      %v2365 = vmul.f32 %v2189, %v1493
      %v2366 = vmul.f32 %v2192, %v1493
      %v2367 = vmul.f32 %v2195, %v1493
      %v2368 = vmul.f32 %v2198, %v1493
      %v2369 = vmul.f32 %v2201, %v1493
      %v2370 = vmul.f32 %v2204, %v1493
      %v2371 = vmul.f32 %v2207, %v1493
      %v2372 = vmul.f32 %v2210, %v1493
      %v2373 = vmul.f32 %v2213, %v1493
      %v2374 = vmul.f32 %v2216, %v1493
      %v2375 = vmul.f32 %v2219, %v1493
      %v2376 = vmul.f32 %v2222, %v1493
      %v2377 = vmul.f32 %v2225, %v1493
      %v2378 = vmul.f32 %v2228, %v1493
      %v2379 = vmul.f32 %v2231, %v1493
      %v2380 = vmul.f32 %v2234, %v1493
      %v2381 = vmul.f32 %v2237, %v1493
      %v2382 = vmul.f32 %v2240, %v1493
      %v2383 = vmul.f32 %v2243, %v1493
      %v2384 = vmul.f32 %v2246, %v1493
      %v2385 = vmul.f32 %v2249, %v1493
      %v2386 = vmul.f32 %v2252, %v1493
      %v2387 = vmul.f32 %v2255, %v1493
      %v2388 = vmul.f32 %v2258, %v1493
      %v2389 = vmul.f32 %v2261, %v1493
      %v2390 = vadd.f32 %v2262, 1e-05
      %v2391 = vadd.f32 %v2263, 1e-05
      %v2392 = vadd.f32 %v2264, 1e-05
      %v2393 = vadd.f32 %v2265, 1e-05
      %v2394 = vadd.f32 %v2266, 1e-05
      %v2395 = vadd.f32 %v2267, 1e-05
      %v2396 = vadd.f32 %v2268, 1e-05
      %v2397 = vadd.f32 %v2269, 1e-05
      %v2398 = vadd.f32 %v2270, 1e-05
      %v2399 = vadd.f32 %v2271, 1e-05
      %v2400 = vadd.f32 %v2272, 1e-05
      %v2401 = vadd.f32 %v2273, 1e-05
      %v2402 = vadd.f32 %v2274, 1e-05
      %v2403 = vadd.f32 %v2275, 1e-05
      %v2404 = vadd.f32 %v2276, 1e-05
      %v2405 = vadd.f32 %v2277, 1e-05
      %v2406 = vadd.f32 %v2278, 1e-05
      %v2407 = vadd.f32 %v2279, 1e-05
      %v2408 = vadd.f32 %v2280, 1e-05
      %v2409 = vadd.f32 %v2281, 1e-05
      %v2410 = vadd.f32 %v2282, 1e-05
      %v2411 = vadd.f32 %v2283, 1e-05
      %v2412 = vadd.f32 %v2284, 1e-05
      %v2413 = vadd.f32 %v2285, 1e-05
      %v2414 = vadd.f32 %v2286, 1e-05
      %v2415 = vadd.f32 %v2287, 1e-05
      %v2416 = vadd.f32 %v2288, 1e-05
      %v2417 = vadd.f32 %v2289, 1e-05
      %v2418 = vadd.f32 %v2290, 1e-05
      %v2419 = vadd.f32 %v2291, 1e-05
      %v2420 = vadd.f32 %v2292, 1e-05
      %v2421 = vadd.f32 %v2293, 1e-05
      %v2422 = vadd.f32 %v2294, 1e-05
      %v2423 = vadd.f32 %v2295, 1e-05
      %v2424 = vadd.f32 %v2296, 1e-05
      %v2425 = vadd.f32 %v2297, 1e-05
      %v2426 = vadd.f32 %v2298, 1e-05
      %v2427 = vadd.f32 %v2299, 1e-05
      %v2428 = vadd.f32 %v2300, 1e-05
      %v2429 = vadd.f32 %v2301, 1e-05
      %v2430 = vadd.f32 %v2302, 1e-05
      %v2431 = vadd.f32 %v2303, 1e-05
      %v2432 = vadd.f32 %v2304, 1e-05
      %v2433 = vadd.f32 %v2305, 1e-05
      %v2434 = vadd.f32 %v2306, 1e-05
      %v2435 = vadd.f32 %v2307, 1e-05
      %v2436 = vadd.f32 %v2308, 1e-05
      %v2437 = vadd.f32 %v2309, 1e-05
      %v2438 = vadd.f32 %v2310, 1e-05
      %v2439 = vadd.f32 %v2311, 1e-05
      %v2440 = vadd.f32 %v2312, 1e-05
      %v2441 = vadd.f32 %v2313, 1e-05
      %v2442 = vadd.f32 %v2314, 1e-05
      %v2443 = vadd.f32 %v2315, 1e-05
      %v2444 = vadd.f32 %v2316, 1e-05
      %v2445 = vadd.f32 %v2317, 1e-05
      %v2446 = vadd.f32 %v2318, 1e-05
      %v2447 = vadd.f32 %v2319, 1e-05
      %v2448 = vadd.f32 %v2320, 1e-05
      %v2449 = vadd.f32 %v2321, 1e-05
      %v2450 = vadd.f32 %v2322, 1e-05
      %v2451 = vadd.f32 %v2323, 1e-05
      %v2452 = vadd.f32 %v2324, 1e-05
      %v2453 = vadd.f32 %v2325, 1e-05
      %v2454 = vadd.f32 %v2326, 1e-05
      %v2455 = vadd.f32 %v2327, 1e-05
      %v2456 = vadd.f32 %v2328, 1e-05
      %v2457 = vadd.f32 %v2329, 1e-05
      %v2458 = vadd.f32 %v2330, 1e-05
      %v2459 = vadd.f32 %v2331, 1e-05
      %v2460 = vadd.f32 %v2332, 1e-05
      %v2461 = vadd.f32 %v2333, 1e-05
      %v2462 = vadd.f32 %v2334, 1e-05
      %v2463 = vadd.f32 %v2335, 1e-05
      %v2464 = vadd.f32 %v2336, 1e-05
      %v2465 = vadd.f32 %v2337, 1e-05
      %v2466 = vadd.f32 %v2338, 1e-05
      %v2467 = vadd.f32 %v2339, 1e-05
      %v2468 = vadd.f32 %v2340, 1e-05
      %v2469 = vadd.f32 %v2341, 1e-05
      %v2470 = vadd.f32 %v2342, 1e-05
      %v2471 = vadd.f32 %v2343, 1e-05
      %v2472 = vadd.f32 %v2344, 1e-05
      %v2473 = vadd.f32 %v2345, 1e-05
      %v2474 = vadd.f32 %v2346, 1e-05
      %v2475 = vadd.f32 %v2347, 1e-05
      %v2476 = vadd.f32 %v2348, 1e-05
      %v2477 = vadd.f32 %v2349, 1e-05
      %v2478 = vadd.f32 %v2350, 1e-05
      %v2479 = vadd.f32 %v2351, 1e-05
      %v2480 = vadd.f32 %v2352, 1e-05
      %v2481 = vadd.f32 %v2353, 1e-05
      %v2482 = vadd.f32 %v2354, 1e-05
      %v2483 = vadd.f32 %v2355, 1e-05
      %v2484 = vadd.f32 %v2356, 1e-05
      %v2485 = vadd.f32 %v2357, 1e-05
      %v2486 = vadd.f32 %v2358, 1e-05
      %v2487 = vadd.f32 %v2359, 1e-05
      %v2488 = vadd.f32 %v2360, 1e-05
      %v2489 = vadd.f32 %v2361, 1e-05
      %v2490 = vadd.f32 %v2362, 1e-05
      %v2491 = vadd.f32 %v2363, 1e-05
      %v2492 = vadd.f32 %v2364, 1e-05
      %v2493 = vadd.f32 %v2365, 1e-05
      %v2494 = vadd.f32 %v2366, 1e-05
      %v2495 = vadd.f32 %v2367, 1e-05
      %v2496 = vadd.f32 %v2368, 1e-05
      %v2497 = vadd.f32 %v2369, 1e-05
      %v2498 = vadd.f32 %v2370, 1e-05
      %v2499 = vadd.f32 %v2371, 1e-05
      %v2500 = vadd.f32 %v2372, 1e-05
      %v2501 = vadd.f32 %v2373, 1e-05
      %v2502 = vadd.f32 %v2374, 1e-05
      %v2503 = vadd.f32 %v2375, 1e-05
      %v2504 = vadd.f32 %v2376, 1e-05
      %v2505 = vadd.f32 %v2377, 1e-05
      %v2506 = vadd.f32 %v2378, 1e-05
      %v2507 = vadd.f32 %v2379, 1e-05
      %v2508 = vadd.f32 %v2380, 1e-05
      %v2509 = vadd.f32 %v2381, 1e-05
      %v2510 = vadd.f32 %v2382, 1e-05
      %v2511 = vadd.f32 %v2383, 1e-05
      %v2512 = vadd.f32 %v2384, 1e-05
      %v2513 = vadd.f32 %v2385, 1e-05
      %v2514 = vadd.f32 %v2386, 1e-05
      %v2515 = vadd.f32 %v2387, 1e-05
      %v2516 = vadd.f32 %v2388, 1e-05
      %v2517 = vadd.f32 %v2389, 1e-05
      %v2518 = vrsqrt.pop %v2390
      %v2519 = vmul.f32 %v2518, %v2390
      %v2520 = vmul.f32 %v2519, %v2518
      %v2521 = vmul.f32 0.5, %v2520
      %v2522 = vsub.f32 1.5, %v2521
      %v2523 = vmul.f32 %v2518, %v2522
      %vm2524 = vweird.f32 %v2390
      %vm2525 = vweird.f32 %v2518
      %vm2526 = vmor %vm2524, %vm2525
      %v2527 = vsel %vm2526, %v2518, %v2523
      %v2528 = vrsqrt.pop %v2391
      %v2529 = vmul.f32 %v2528, %v2391
      %v2530 = vmul.f32 %v2529, %v2528
      %v2531 = vmul.f32 0.5, %v2530
      %v2532 = vsub.f32 1.5, %v2531
      %v2533 = vmul.f32 %v2528, %v2532
      %vm2534 = vweird.f32 %v2391
      %vm2535 = vweird.f32 %v2528
      %vm2536 = vmor %vm2534, %vm2535
      %v2537 = vsel %vm2536, %v2528, %v2533
      %v2538 = vrsqrt.pop %v2392
      %v2539 = vmul.f32 %v2538, %v2392
      %v2540 = vmul.f32 %v2539, %v2538
      %v2541 = vmul.f32 0.5, %v2540
      %v2542 = vsub.f32 1.5, %v2541
      %v2543 = vmul.f32 %v2538, %v2542
      %vm2544 = vweird.f32 %v2392
      %vm2545 = vweird.f32 %v2538
      %vm2546 = vmor %vm2544, %vm2545
      %v2547 = vsel %vm2546, %v2538, %v2543
      %v2548 = vrsqrt.pop %v2393
      %v2549 = vmul.f32 %v2548, %v2393
      %v2550 = vmul.f32 %v2549, %v2548
      %v2551 = vmul.f32 0.5, %v2550
      %v2552 = vsub.f32 1.5, %v2551
      %v2553 = vmul.f32 %v2548, %v2552
      %vm2554 = vweird.f32 %v2393
      %vm2555 = vweird.f32 %v2548
      %vm2556 = vmor %vm2554, %vm2555
      %v2557 = vsel %vm2556, %v2548, %v2553
      %v2558 = vrsqrt.pop %v2394
      %v2559 = vmul.f32 %v2558, %v2394
      %v2560 = vmul.f32 %v2559, %v2558
      %v2561 = vmul.f32 0.5, %v2560
      %v2562 = vsub.f32 1.5, %v2561
      %v2563 = vmul.f32 %v2558, %v2562
      %vm2564 = vweird.f32 %v2394
      %vm2565 = vweird.f32 %v2558
      %vm2566 = vmor %vm2564, %vm2565
      %v2567 = vsel %vm2566, %v2558, %v2563
      %v2568 = vrsqrt.pop %v2395
      %v2569 = vmul.f32 %v2568, %v2395
      %v2570 = vmul.f32 %v2569, %v2568
      %v2571 = vmul.f32 0.5, %v2570
      %v2572 = vsub.f32 1.5, %v2571
      %v2573 = vmul.f32 %v2568, %v2572
      %vm2574 = vweird.f32 %v2395
      %vm2575 = vweird.f32 %v2568
      %vm2576 = vmor %vm2574, %vm2575
      %v2577 = vsel %vm2576, %v2568, %v2573
      %v2578 = vrsqrt.pop %v2396
      %v2579 = vmul.f32 %v2578, %v2396
      %v2580 = vmul.f32 %v2579, %v2578
      %v2581 = vmul.f32 0.5, %v2580
      %v2582 = vsub.f32 1.5, %v2581
      %v2583 = vmul.f32 %v2578, %v2582
      %vm2584 = vweird.f32 %v2396
      %vm2585 = vweird.f32 %v2578
      %vm2586 = vmor %vm2584, %vm2585
      %v2587 = vsel %vm2586, %v2578, %v2583
      %v2588 = vrsqrt.pop %v2397
      %v2589 = vmul.f32 %v2588, %v2397
      %v2590 = vmul.f32 %v2589, %v2588
      %v2591 = vmul.f32 0.5, %v2590
      %v2592 = vsub.f32 1.5, %v2591
      %v2593 = vmul.f32 %v2588, %v2592
      %vm2594 = vweird.f32 %v2397
      %vm2595 = vweird.f32 %v2588
      %vm2596 = vmor %vm2594, %vm2595
      %v2597 = vsel %vm2596, %v2588, %v2593
      %v2598 = vrsqrt.pop %v2398
      %v2599 = vmul.f32 %v2598, %v2398
      %v2600 = vmul.f32 %v2599, %v2598
      %v2601 = vmul.f32 0.5, %v2600
      %v2602 = vsub.f32 1.5, %v2601
      %v2603 = vmul.f32 %v2598, %v2602
      %vm2604 = vweird.f32 %v2398
      %vm2605 = vweird.f32 %v2598
      %vm2606 = vmor %vm2604, %vm2605
      %v2607 = vsel %vm2606, %v2598, %v2603
      %v2608 = vrsqrt.pop %v2399
      %v2609 = vmul.f32 %v2608, %v2399
      %v2610 = vmul.f32 %v2609, %v2608
      %v2611 = vmul.f32 0.5, %v2610
      %v2612 = vsub.f32 1.5, %v2611
      %v2613 = vmul.f32 %v2608, %v2612
      %vm2614 = vweird.f32 %v2399
      %vm2615 = vweird.f32 %v2608
      %vm2616 = vmor %vm2614, %vm2615
      %v2617 = vsel %vm2616, %v2608, %v2613
      %v2618 = vrsqrt.pop %v2400
      %v2619 = vmul.f32 %v2618, %v2400
      %v2620 = vmul.f32 %v2619, %v2618
      %v2621 = vmul.f32 0.5, %v2620
      %v2622 = vsub.f32 1.5, %v2621
      %v2623 = vmul.f32 %v2618, %v2622
      %vm2624 = vweird.f32 %v2400
      %vm2625 = vweird.f32 %v2618
      %vm2626 = vmor %vm2624, %vm2625
      %v2627 = vsel %vm2626, %v2618, %v2623
      %v2628 = vrsqrt.pop %v2401
      %v2629 = vmul.f32 %v2628, %v2401
      %v2630 = vmul.f32 %v2629, %v2628
      %v2631 = vmul.f32 0.5, %v2630
      %v2632 = vsub.f32 1.5, %v2631
      %v2633 = vmul.f32 %v2628, %v2632
      %vm2634 = vweird.f32 %v2401
      %vm2635 = vweird.f32 %v2628
      %vm2636 = vmor %vm2634, %vm2635
      %v2637 = vsel %vm2636, %v2628, %v2633
      %v2638 = vrsqrt.pop %v2402
      %v2639 = vmul.f32 %v2638, %v2402
      %v2640 = vmul.f32 %v2639, %v2638
      %v2641 = vmul.f32 0.5, %v2640
      %v2642 = vsub.f32 1.5, %v2641
      %v2643 = vmul.f32 %v2638, %v2642
      %vm2644 = vweird.f32 %v2402
      %vm2645 = vweird.f32 %v2638
      %vm2646 = vmor %vm2644, %vm2645
      %v2647 = vsel %vm2646, %v2638, %v2643
      %v2648 = vrsqrt.pop %v2403
      %v2649 = vmul.f32 %v2648, %v2403
      %v2650 = vmul.f32 %v2649, %v2648
      %v2651 = vmul.f32 0.5, %v2650
      %v2652 = vsub.f32 1.5, %v2651
      %v2653 = vmul.f32 %v2648, %v2652
      %vm2654 = vweird.f32 %v2403
      %vm2655 = vweird.f32 %v2648
      %vm2656 = vmor %vm2654, %vm2655
      %v2657 = vsel %vm2656, %v2648, %v2653
      %v2658 = vrsqrt.pop %v2404
      %v2659 = vmul.f32 %v2658, %v2404
      %v2660 = vmul.f32 %v2659, %v2658
      %v2661 = vmul.f32 0.5, %v2660
      %v2662 = vsub.f32 1.5, %v2661
      %v2663 = vmul.f32 %v2658, %v2662
      %vm2664 = vweird.f32 %v2404
      %vm2665 = vweird.f32 %v2658
      %vm2666 = vmor %vm2664, %vm2665
      %v2667 = vsel %vm2666, %v2658, %v2663
      %v2668 = vrsqrt.pop %v2405
      %v2669 = vmul.f32 %v2668, %v2405
      %v2670 = vmul.f32 %v2669, %v2668
      %v2671 = vmul.f32 0.5, %v2670
      %v2672 = vsub.f32 1.5, %v2671
      %v2673 = vmul.f32 %v2668, %v2672
      %vm2674 = vweird.f32 %v2405
      %vm2675 = vweird.f32 %v2668
      %vm2676 = vmor %vm2674, %vm2675
      %v2677 = vsel %vm2676, %v2668, %v2673
      %v2678 = vrsqrt.pop %v2406
      %v2679 = vmul.f32 %v2678, %v2406
      %v2680 = vmul.f32 %v2679, %v2678
      %v2681 = vmul.f32 0.5, %v2680
      %v2682 = vsub.f32 1.5, %v2681
      %v2683 = vmul.f32 %v2678, %v2682
      %vm2684 = vweird.f32 %v2406
      %vm2685 = vweird.f32 %v2678
      %vm2686 = vmor %vm2684, %vm2685
      %v2687 = vsel %vm2686, %v2678, %v2683
      %v2688 = vrsqrt.pop %v2407
      %v2689 = vmul.f32 %v2688, %v2407
      %v2690 = vmul.f32 %v2689, %v2688
      %v2691 = vmul.f32 0.5, %v2690
      %v2692 = vsub.f32 1.5, %v2691
      %v2693 = vmul.f32 %v2688, %v2692
      %vm2694 = vweird.f32 %v2407
      %vm2695 = vweird.f32 %v2688
      %vm2696 = vmor %vm2694, %vm2695
      %v2697 = vsel %vm2696, %v2688, %v2693
      %v2698 = vrsqrt.pop %v2408
      %v2699 = vmul.f32 %v2698, %v2408
      %v2700 = vmul.f32 %v2699, %v2698
      %v2701 = vmul.f32 0.5, %v2700
      %v2702 = vsub.f32 1.5, %v2701
      %v2703 = vmul.f32 %v2698, %v2702
      %vm2704 = vweird.f32 %v2408
      %vm2705 = vweird.f32 %v2698
      %vm2706 = vmor %vm2704, %vm2705
      %v2707 = vsel %vm2706, %v2698, %v2703
      %v2708 = vrsqrt.pop %v2409
      %v2709 = vmul.f32 %v2708, %v2409
      %v2710 = vmul.f32 %v2709, %v2708
      %v2711 = vmul.f32 0.5, %v2710
      %v2712 = vsub.f32 1.5, %v2711
      %v2713 = vmul.f32 %v2708, %v2712
      %vm2714 = vweird.f32 %v2409
      %vm2715 = vweird.f32 %v2708
      %vm2716 = vmor %vm2714, %vm2715
      %v2717 = vsel %vm2716, %v2708, %v2713
      %v2718 = vrsqrt.pop %v2410
      %v2719 = vmul.f32 %v2718, %v2410
      %v2720 = vmul.f32 %v2719, %v2718
      %v2721 = vmul.f32 0.5, %v2720
      %v2722 = vsub.f32 1.5, %v2721
      %v2723 = vmul.f32 %v2718, %v2722
      %vm2724 = vweird.f32 %v2410
      %vm2725 = vweird.f32 %v2718
      %vm2726 = vmor %vm2724, %vm2725
      %v2727 = vsel %vm2726, %v2718, %v2723
      %v2728 = vrsqrt.pop %v2411
      %v2729 = vmul.f32 %v2728, %v2411
      %v2730 = vmul.f32 %v2729, %v2728
      %v2731 = vmul.f32 0.5, %v2730
      %v2732 = vsub.f32 1.5, %v2731
      %v2733 = vmul.f32 %v2728, %v2732
      %vm2734 = vweird.f32 %v2411
      %vm2735 = vweird.f32 %v2728
      %vm2736 = vmor %vm2734, %vm2735
      %v2737 = vsel %vm2736, %v2728, %v2733
      %v2738 = vrsqrt.pop %v2412
      %v2739 = vmul.f32 %v2738, %v2412
      %v2740 = vmul.f32 %v2739, %v2738
      %v2741 = vmul.f32 0.5, %v2740
      %v2742 = vsub.f32 1.5, %v2741
      %v2743 = vmul.f32 %v2738, %v2742
      %vm2744 = vweird.f32 %v2412
      %vm2745 = vweird.f32 %v2738
      %vm2746 = vmor %vm2744, %vm2745
      %v2747 = vsel %vm2746, %v2738, %v2743
      %v2748 = vrsqrt.pop %v2413
      %v2749 = vmul.f32 %v2748, %v2413
      %v2750 = vmul.f32 %v2749, %v2748
      %v2751 = vmul.f32 0.5, %v2750
      %v2752 = vsub.f32 1.5, %v2751
      %v2753 = vmul.f32 %v2748, %v2752
      %vm2754 = vweird.f32 %v2413
      %vm2755 = vweird.f32 %v2748
      %vm2756 = vmor %vm2754, %vm2755
      %v2757 = vsel %vm2756, %v2748, %v2753
      %v2758 = vrsqrt.pop %v2414
      %v2759 = vmul.f32 %v2758, %v2414
      %v2760 = vmul.f32 %v2759, %v2758
      %v2761 = vmul.f32 0.5, %v2760
      %v2762 = vsub.f32 1.5, %v2761
      %v2763 = vmul.f32 %v2758, %v2762
      %vm2764 = vweird.f32 %v2414
      %vm2765 = vweird.f32 %v2758
      %vm2766 = vmor %vm2764, %vm2765
      %v2767 = vsel %vm2766, %v2758, %v2763
      %v2768 = vrsqrt.pop %v2415
      %v2769 = vmul.f32 %v2768, %v2415
      %v2770 = vmul.f32 %v2769, %v2768
      %v2771 = vmul.f32 0.5, %v2770
      %v2772 = vsub.f32 1.5, %v2771
      %v2773 = vmul.f32 %v2768, %v2772
      %vm2774 = vweird.f32 %v2415
      %vm2775 = vweird.f32 %v2768
      %vm2776 = vmor %vm2774, %vm2775
      %v2777 = vsel %vm2776, %v2768, %v2773
      %v2778 = vrsqrt.pop %v2416
      %v2779 = vmul.f32 %v2778, %v2416
      %v2780 = vmul.f32 %v2779, %v2778
      %v2781 = vmul.f32 0.5, %v2780
      %v2782 = vsub.f32 1.5, %v2781
      %v2783 = vmul.f32 %v2778, %v2782
      %vm2784 = vweird.f32 %v2416
      %vm2785 = vweird.f32 %v2778
      %vm2786 = vmor %vm2784, %vm2785
      %v2787 = vsel %vm2786, %v2778, %v2783
      %v2788 = vrsqrt.pop %v2417
      %v2789 = vmul.f32 %v2788, %v2417
      %v2790 = vmul.f32 %v2789, %v2788
      %v2791 = vmul.f32 0.5, %v2790
      %v2792 = vsub.f32 1.5, %v2791
      %v2793 = vmul.f32 %v2788, %v2792
      %vm2794 = vweird.f32 %v2417
      %vm2795 = vweird.f32 %v2788
      %vm2796 = vmor %vm2794, %vm2795
      %v2797 = vsel %vm2796, %v2788, %v2793
      %v2798 = vrsqrt.pop %v2418
      %v2799 = vmul.f32 %v2798, %v2418
      %v2800 = vmul.f32 %v2799, %v2798
      %v2801 = vmul.f32 0.5, %v2800
      %v2802 = vsub.f32 1.5, %v2801
      %v2803 = vmul.f32 %v2798, %v2802
      %vm2804 = vweird.f32 %v2418
      %vm2805 = vweird.f32 %v2798
      %vm2806 = vmor %vm2804, %vm2805
      %v2807 = vsel %vm2806, %v2798, %v2803
      %v2808 = vrsqrt.pop %v2419
      %v2809 = vmul.f32 %v2808, %v2419
      %v2810 = vmul.f32 %v2809, %v2808
      %v2811 = vmul.f32 0.5, %v2810
      %v2812 = vsub.f32 1.5, %v2811
      %v2813 = vmul.f32 %v2808, %v2812
      %vm2814 = vweird.f32 %v2419
      %vm2815 = vweird.f32 %v2808
      %vm2816 = vmor %vm2814, %vm2815
      %v2817 = vsel %vm2816, %v2808, %v2813
      %v2818 = vrsqrt.pop %v2420
      %v2819 = vmul.f32 %v2818, %v2420
      %v2820 = vmul.f32 %v2819, %v2818
      %v2821 = vmul.f32 0.5, %v2820
      %v2822 = vsub.f32 1.5, %v2821
      %v2823 = vmul.f32 %v2818, %v2822
      %vm2824 = vweird.f32 %v2420
      %vm2825 = vweird.f32 %v2818
      %vm2826 = vmor %vm2824, %vm2825
      %v2827 = vsel %vm2826, %v2818, %v2823
      %v2828 = vrsqrt.pop %v2421
      %v2829 = vmul.f32 %v2828, %v2421
      %v2830 = vmul.f32 %v2829, %v2828
      %v2831 = vmul.f32 0.5, %v2830
      %v2832 = vsub.f32 1.5, %v2831
      %v2833 = vmul.f32 %v2828, %v2832
      %vm2834 = vweird.f32 %v2421
      %vm2835 = vweird.f32 %v2828
      %vm2836 = vmor %vm2834, %vm2835
      %v2837 = vsel %vm2836, %v2828, %v2833
      %v2838 = vrsqrt.pop %v2422
      %v2839 = vmul.f32 %v2838, %v2422
      %v2840 = vmul.f32 %v2839, %v2838
      %v2841 = vmul.f32 0.5, %v2840
      %v2842 = vsub.f32 1.5, %v2841
      %v2843 = vmul.f32 %v2838, %v2842
      %vm2844 = vweird.f32 %v2422
      %vm2845 = vweird.f32 %v2838
      %vm2846 = vmor %vm2844, %vm2845
      %v2847 = vsel %vm2846, %v2838, %v2843
      %v2848 = vrsqrt.pop %v2423
      %v2849 = vmul.f32 %v2848, %v2423
      %v2850 = vmul.f32 %v2849, %v2848
      %v2851 = vmul.f32 0.5, %v2850
      %v2852 = vsub.f32 1.5, %v2851
      %v2853 = vmul.f32 %v2848, %v2852
      %vm2854 = vweird.f32 %v2423
      %vm2855 = vweird.f32 %v2848
      %vm2856 = vmor %vm2854, %vm2855
      %v2857 = vsel %vm2856, %v2848, %v2853
      %v2858 = vrsqrt.pop %v2424
      %v2859 = vmul.f32 %v2858, %v2424
      %v2860 = vmul.f32 %v2859, %v2858
      %v2861 = vmul.f32 0.5, %v2860
      %v2862 = vsub.f32 1.5, %v2861
      %v2863 = vmul.f32 %v2858, %v2862
      %vm2864 = vweird.f32 %v2424
      %vm2865 = vweird.f32 %v2858
      %vm2866 = vmor %vm2864, %vm2865
      %v2867 = vsel %vm2866, %v2858, %v2863
      %v2868 = vrsqrt.pop %v2425
      %v2869 = vmul.f32 %v2868, %v2425
      %v2870 = vmul.f32 %v2869, %v2868
      %v2871 = vmul.f32 0.5, %v2870
      %v2872 = vsub.f32 1.5, %v2871
      %v2873 = vmul.f32 %v2868, %v2872
      %vm2874 = vweird.f32 %v2425
      %vm2875 = vweird.f32 %v2868
      %vm2876 = vmor %vm2874, %vm2875
      %v2877 = vsel %vm2876, %v2868, %v2873
      %v2878 = vrsqrt.pop %v2426
      %v2879 = vmul.f32 %v2878, %v2426
      %v2880 = vmul.f32 %v2879, %v2878
      %v2881 = vmul.f32 0.5, %v2880
      %v2882 = vsub.f32 1.5, %v2881
      %v2883 = vmul.f32 %v2878, %v2882
      %vm2884 = vweird.f32 %v2426
      %vm2885 = vweird.f32 %v2878
      %vm2886 = vmor %vm2884, %vm2885
      %v2887 = vsel %vm2886, %v2878, %v2883
      %v2888 = vrsqrt.pop %v2427
      %v2889 = vmul.f32 %v2888, %v2427
      %v2890 = vmul.f32 %v2889, %v2888
      %v2891 = vmul.f32 0.5, %v2890
      %v2892 = vsub.f32 1.5, %v2891
      %v2893 = vmul.f32 %v2888, %v2892
      %vm2894 = vweird.f32 %v2427
      %vm2895 = vweird.f32 %v2888
      %vm2896 = vmor %vm2894, %vm2895
      %v2897 = vsel %vm2896, %v2888, %v2893
      %v2898 = vrsqrt.pop %v2428
      %v2899 = vmul.f32 %v2898, %v2428
      %v2900 = vmul.f32 %v2899, %v2898
      %v2901 = vmul.f32 0.5, %v2900
      %v2902 = vsub.f32 1.5, %v2901
      %v2903 = vmul.f32 %v2898, %v2902
      %vm2904 = vweird.f32 %v2428
      %vm2905 = vweird.f32 %v2898
      %vm2906 = vmor %vm2904, %vm2905
      %v2907 = vsel %vm2906, %v2898, %v2903
      %v2908 = vrsqrt.pop %v2429
      %v2909 = vmul.f32 %v2908, %v2429
      %v2910 = vmul.f32 %v2909, %v2908
      %v2911 = vmul.f32 0.5, %v2910
      %v2912 = vsub.f32 1.5, %v2911
      %v2913 = vmul.f32 %v2908, %v2912
      %vm2914 = vweird.f32 %v2429
      %vm2915 = vweird.f32 %v2908
      %vm2916 = vmor %vm2914, %vm2915
      %v2917 = vsel %vm2916, %v2908, %v2913
      %v2918 = vrsqrt.pop %v2430
      %v2919 = vmul.f32 %v2918, %v2430
      %v2920 = vmul.f32 %v2919, %v2918
      %v2921 = vmul.f32 0.5, %v2920
      %v2922 = vsub.f32 1.5, %v2921
      %v2923 = vmul.f32 %v2918, %v2922
      %vm2924 = vweird.f32 %v2430
      %vm2925 = vweird.f32 %v2918
      %vm2926 = vmor %vm2924, %vm2925
      %v2927 = vsel %vm2926, %v2918, %v2923
      %v2928 = vrsqrt.pop %v2431
      %v2929 = vmul.f32 %v2928, %v2431
      %v2930 = vmul.f32 %v2929, %v2928
      %v2931 = vmul.f32 0.5, %v2930
      %v2932 = vsub.f32 1.5, %v2931
      %v2933 = vmul.f32 %v2928, %v2932
      %vm2934 = vweird.f32 %v2431
      %vm2935 = vweird.f32 %v2928
      %vm2936 = vmor %vm2934, %vm2935
      %v2937 = vsel %vm2936, %v2928, %v2933
      %v2938 = vrsqrt.pop %v2432
      %v2939 = vmul.f32 %v2938, %v2432
      %v2940 = vmul.f32 %v2939, %v2938
      %v2941 = vmul.f32 0.5, %v2940
      %v2942 = vsub.f32 1.5, %v2941
      %v2943 = vmul.f32 %v2938, %v2942
      %vm2944 = vweird.f32 %v2432
      %vm2945 = vweird.f32 %v2938
      %vm2946 = vmor %vm2944, %vm2945
      %v2947 = vsel %vm2946, %v2938, %v2943
      %v2948 = vrsqrt.pop %v2433
      %v2949 = vmul.f32 %v2948, %v2433
      %v2950 = vmul.f32 %v2949, %v2948
      %v2951 = vmul.f32 0.5, %v2950
      %v2952 = vsub.f32 1.5, %v2951
      %v2953 = vmul.f32 %v2948, %v2952
      %vm2954 = vweird.f32 %v2433
      %vm2955 = vweird.f32 %v2948
      %vm2956 = vmor %vm2954, %vm2955
      %v2957 = vsel %vm2956, %v2948, %v2953
      %v2958 = vrsqrt.pop %v2434
      %v2959 = vmul.f32 %v2958, %v2434
      %v2960 = vmul.f32 %v2959, %v2958
      %v2961 = vmul.f32 0.5, %v2960
      %v2962 = vsub.f32 1.5, %v2961
      %v2963 = vmul.f32 %v2958, %v2962
      %vm2964 = vweird.f32 %v2434
      %vm2965 = vweird.f32 %v2958
      %vm2966 = vmor %vm2964, %vm2965
      %v2967 = vsel %vm2966, %v2958, %v2963
      %v2968 = vrsqrt.pop %v2435
      %v2969 = vmul.f32 %v2968, %v2435
      %v2970 = vmul.f32 %v2969, %v2968
      %v2971 = vmul.f32 0.5, %v2970
      %v2972 = vsub.f32 1.5, %v2971
      %v2973 = vmul.f32 %v2968, %v2972
      %vm2974 = vweird.f32 %v2435
      %vm2975 = vweird.f32 %v2968
      %vm2976 = vmor %vm2974, %vm2975
      %v2977 = vsel %vm2976, %v2968, %v2973
      %v2978 = vrsqrt.pop %v2436
      %v2979 = vmul.f32 %v2978, %v2436
      %v2980 = vmul.f32 %v2979, %v2978
      %v2981 = vmul.f32 0.5, %v2980
      %v2982 = vsub.f32 1.5, %v2981
      %v2983 = vmul.f32 %v2978, %v2982
      %vm2984 = vweird.f32 %v2436
      %vm2985 = vweird.f32 %v2978
      %vm2986 = vmor %vm2984, %vm2985
      %v2987 = vsel %vm2986, %v2978, %v2983
      %v2988 = vrsqrt.pop %v2437
      %v2989 = vmul.f32 %v2988, %v2437
      %v2990 = vmul.f32 %v2989, %v2988
      %v2991 = vmul.f32 0.5, %v2990
      %v2992 = vsub.f32 1.5, %v2991
      %v2993 = vmul.f32 %v2988, %v2992
      %vm2994 = vweird.f32 %v2437
      %vm2995 = vweird.f32 %v2988
      %vm2996 = vmor %vm2994, %vm2995
      %v2997 = vsel %vm2996, %v2988, %v2993
      %v2998 = vrsqrt.pop %v2438
      %v2999 = vmul.f32 %v2998, %v2438
      %v3000 = vmul.f32 %v2999, %v2998
      %v3001 = vmul.f32 0.5, %v3000
      %v3002 = vsub.f32 1.5, %v3001
      %v3003 = vmul.f32 %v2998, %v3002
      %vm3004 = vweird.f32 %v2438
      %vm3005 = vweird.f32 %v2998
      %vm3006 = vmor %vm3004, %vm3005
      %v3007 = vsel %vm3006, %v2998, %v3003
      %v3008 = vrsqrt.pop %v2439
      %v3009 = vmul.f32 %v3008, %v2439
      %v3010 = vmul.f32 %v3009, %v3008
      %v3011 = vmul.f32 0.5, %v3010
      %v3012 = vsub.f32 1.5, %v3011
      %v3013 = vmul.f32 %v3008, %v3012
      %vm3014 = vweird.f32 %v2439
      %vm3015 = vweird.f32 %v3008
      %vm3016 = vmor %vm3014, %vm3015
      %v3017 = vsel %vm3016, %v3008, %v3013
      %v3018 = vrsqrt.pop %v2440
      %v3019 = vmul.f32 %v3018, %v2440
      %v3020 = vmul.f32 %v3019, %v3018
      %v3021 = vmul.f32 0.5, %v3020
      %v3022 = vsub.f32 1.5, %v3021
      %v3023 = vmul.f32 %v3018, %v3022
      %vm3024 = vweird.f32 %v2440
      %vm3025 = vweird.f32 %v3018
      %vm3026 = vmor %vm3024, %vm3025
      %v3027 = vsel %vm3026, %v3018, %v3023
      %v3028 = vrsqrt.pop %v2441
      %v3029 = vmul.f32 %v3028, %v2441
      %v3030 = vmul.f32 %v3029, %v3028
      %v3031 = vmul.f32 0.5, %v3030
      %v3032 = vsub.f32 1.5, %v3031
      %v3033 = vmul.f32 %v3028, %v3032
      %vm3034 = vweird.f32 %v2441
      %vm3035 = vweird.f32 %v3028
      %vm3036 = vmor %vm3034, %vm3035
      %v3037 = vsel %vm3036, %v3028, %v3033
      %v3038 = vrsqrt.pop %v2442
      %v3039 = vmul.f32 %v3038, %v2442
      %v3040 = vmul.f32 %v3039, %v3038
      %v3041 = vmul.f32 0.5, %v3040
      %v3042 = vsub.f32 1.5, %v3041
      %v3043 = vmul.f32 %v3038, %v3042
      %vm3044 = vweird.f32 %v2442
      %vm3045 = vweird.f32 %v3038
      %vm3046 = vmor %vm3044, %vm3045
      %v3047 = vsel %vm3046, %v3038, %v3043
      %v3048 = vrsqrt.pop %v2443
      %v3049 = vmul.f32 %v3048, %v2443
      %v3050 = vmul.f32 %v3049, %v3048
      %v3051 = vmul.f32 0.5, %v3050
      %v3052 = vsub.f32 1.5, %v3051
      %v3053 = vmul.f32 %v3048, %v3052
      %vm3054 = vweird.f32 %v2443
      %vm3055 = vweird.f32 %v3048
      %vm3056 = vmor %vm3054, %vm3055
      %v3057 = vsel %vm3056, %v3048, %v3053
      %v3058 = vrsqrt.pop %v2444
      %v3059 = vmul.f32 %v3058, %v2444
      %v3060 = vmul.f32 %v3059, %v3058
      %v3061 = vmul.f32 0.5, %v3060
      %v3062 = vsub.f32 1.5, %v3061
      %v3063 = vmul.f32 %v3058, %v3062
      %vm3064 = vweird.f32 %v2444
      %vm3065 = vweird.f32 %v3058
      %vm3066 = vmor %vm3064, %vm3065
      %v3067 = vsel %vm3066, %v3058, %v3063
      %v3068 = vrsqrt.pop %v2445
      %v3069 = vmul.f32 %v3068, %v2445
      %v3070 = vmul.f32 %v3069, %v3068
      %v3071 = vmul.f32 0.5, %v3070
      %v3072 = vsub.f32 1.5, %v3071
      %v3073 = vmul.f32 %v3068, %v3072
      %vm3074 = vweird.f32 %v2445
      %vm3075 = vweird.f32 %v3068
      %vm3076 = vmor %vm3074, %vm3075
      %v3077 = vsel %vm3076, %v3068, %v3073
      %v3078 = vrsqrt.pop %v2446
      %v3079 = vmul.f32 %v3078, %v2446
      %v3080 = vmul.f32 %v3079, %v3078
      %v3081 = vmul.f32 0.5, %v3080
      %v3082 = vsub.f32 1.5, %v3081
      %v3083 = vmul.f32 %v3078, %v3082
      %vm3084 = vweird.f32 %v2446
      %vm3085 = vweird.f32 %v3078
      %vm3086 = vmor %vm3084, %vm3085
      %v3087 = vsel %vm3086, %v3078, %v3083
      %v3088 = vrsqrt.pop %v2447
      %v3089 = vmul.f32 %v3088, %v2447
      %v3090 = vmul.f32 %v3089, %v3088
      %v3091 = vmul.f32 0.5, %v3090
      %v3092 = vsub.f32 1.5, %v3091
      %v3093 = vmul.f32 %v3088, %v3092
      %vm3094 = vweird.f32 %v2447
      %vm3095 = vweird.f32 %v3088
      %vm3096 = vmor %vm3094, %vm3095
      %v3097 = vsel %vm3096, %v3088, %v3093
      %v3098 = vrsqrt.pop %v2448
      %v3099 = vmul.f32 %v3098, %v2448
      %v3100 = vmul.f32 %v3099, %v3098
      %v3101 = vmul.f32 0.5, %v3100
      %v3102 = vsub.f32 1.5, %v3101
      %v3103 = vmul.f32 %v3098, %v3102
      %vm3104 = vweird.f32 %v2448
      %vm3105 = vweird.f32 %v3098
      %vm3106 = vmor %vm3104, %vm3105
      %v3107 = vsel %vm3106, %v3098, %v3103
      %v3108 = vrsqrt.pop %v2449
      %v3109 = vmul.f32 %v3108, %v2449
      %v3110 = vmul.f32 %v3109, %v3108
      %v3111 = vmul.f32 0.5, %v3110
      %v3112 = vsub.f32 1.5, %v3111
      %v3113 = vmul.f32 %v3108, %v3112
      %vm3114 = vweird.f32 %v2449
      %vm3115 = vweird.f32 %v3108
      %vm3116 = vmor %vm3114, %vm3115
      %v3117 = vsel %vm3116, %v3108, %v3113
      %v3118 = vrsqrt.pop %v2450
      %v3119 = vmul.f32 %v3118, %v2450
      %v3120 = vmul.f32 %v3119, %v3118
      %v3121 = vmul.f32 0.5, %v3120
      %v3122 = vsub.f32 1.5, %v3121
      %v3123 = vmul.f32 %v3118, %v3122
      %vm3124 = vweird.f32 %v2450
      %vm3125 = vweird.f32 %v3118
      %vm3126 = vmor %vm3124, %vm3125
      %v3127 = vsel %vm3126, %v3118, %v3123
      %v3128 = vrsqrt.pop %v2451
      %v3129 = vmul.f32 %v3128, %v2451
      %v3130 = vmul.f32 %v3129, %v3128
      %v3131 = vmul.f32 0.5, %v3130
      %v3132 = vsub.f32 1.5, %v3131
      %v3133 = vmul.f32 %v3128, %v3132
      %vm3134 = vweird.f32 %v2451
      %vm3135 = vweird.f32 %v3128
      %vm3136 = vmor %vm3134, %vm3135
      %v3137 = vsel %vm3136, %v3128, %v3133
      %v3138 = vrsqrt.pop %v2452
      %v3139 = vmul.f32 %v3138, %v2452
      %v3140 = vmul.f32 %v3139, %v3138
      %v3141 = vmul.f32 0.5, %v3140
      %v3142 = vsub.f32 1.5, %v3141
      %v3143 = vmul.f32 %v3138, %v3142
      %vm3144 = vweird.f32 %v2452
      %vm3145 = vweird.f32 %v3138
      %vm3146 = vmor %vm3144, %vm3145
      %v3147 = vsel %vm3146, %v3138, %v3143
      %v3148 = vrsqrt.pop %v2453
      %v3149 = vmul.f32 %v3148, %v2453
      %v3150 = vmul.f32 %v3149, %v3148
      %v3151 = vmul.f32 0.5, %v3150
      %v3152 = vsub.f32 1.5, %v3151
      %v3153 = vmul.f32 %v3148, %v3152
      %vm3154 = vweird.f32 %v2453
      %vm3155 = vweird.f32 %v3148
      %vm3156 = vmor %vm3154, %vm3155
      %v3157 = vsel %vm3156, %v3148, %v3153
      %v3158 = vrsqrt.pop %v2454
      %v3159 = vmul.f32 %v3158, %v2454
      %v3160 = vmul.f32 %v3159, %v3158
      %v3161 = vmul.f32 0.5, %v3160
      %v3162 = vsub.f32 1.5, %v3161
      %v3163 = vmul.f32 %v3158, %v3162
      %vm3164 = vweird.f32 %v2454
      %vm3165 = vweird.f32 %v3158
      %vm3166 = vmor %vm3164, %vm3165
      %v3167 = vsel %vm3166, %v3158, %v3163
      %v3168 = vrsqrt.pop %v2455
      %v3169 = vmul.f32 %v3168, %v2455
      %v3170 = vmul.f32 %v3169, %v3168
      %v3171 = vmul.f32 0.5, %v3170
      %v3172 = vsub.f32 1.5, %v3171
      %v3173 = vmul.f32 %v3168, %v3172
      %vm3174 = vweird.f32 %v2455
      %vm3175 = vweird.f32 %v3168
      %vm3176 = vmor %vm3174, %vm3175
      %v3177 = vsel %vm3176, %v3168, %v3173
      %v3178 = vrsqrt.pop %v2456
      %v3179 = vmul.f32 %v3178, %v2456
      %v3180 = vmul.f32 %v3179, %v3178
      %v3181 = vmul.f32 0.5, %v3180
      %v3182 = vsub.f32 1.5, %v3181
      %v3183 = vmul.f32 %v3178, %v3182
      %vm3184 = vweird.f32 %v2456
      %vm3185 = vweird.f32 %v3178
      %vm3186 = vmor %vm3184, %vm3185
      %v3187 = vsel %vm3186, %v3178, %v3183
      %v3188 = vrsqrt.pop %v2457
      %v3189 = vmul.f32 %v3188, %v2457
      %v3190 = vmul.f32 %v3189, %v3188
      %v3191 = vmul.f32 0.5, %v3190
      %v3192 = vsub.f32 1.5, %v3191
      %v3193 = vmul.f32 %v3188, %v3192
      %vm3194 = vweird.f32 %v2457
      %vm3195 = vweird.f32 %v3188
      %vm3196 = vmor %vm3194, %vm3195
      %v3197 = vsel %vm3196, %v3188, %v3193
      %v3198 = vrsqrt.pop %v2458
      %v3199 = vmul.f32 %v3198, %v2458
      %v3200 = vmul.f32 %v3199, %v3198
      %v3201 = vmul.f32 0.5, %v3200
      %v3202 = vsub.f32 1.5, %v3201
      %v3203 = vmul.f32 %v3198, %v3202
      %vm3204 = vweird.f32 %v2458
      %vm3205 = vweird.f32 %v3198
      %vm3206 = vmor %vm3204, %vm3205
      %v3207 = vsel %vm3206, %v3198, %v3203
      %v3208 = vrsqrt.pop %v2459
      %v3209 = vmul.f32 %v3208, %v2459
      %v3210 = vmul.f32 %v3209, %v3208
      %v3211 = vmul.f32 0.5, %v3210
      %v3212 = vsub.f32 1.5, %v3211
      %v3213 = vmul.f32 %v3208, %v3212
      %vm3214 = vweird.f32 %v2459
      %vm3215 = vweird.f32 %v3208
      %vm3216 = vmor %vm3214, %vm3215
      %v3217 = vsel %vm3216, %v3208, %v3213
      %v3218 = vrsqrt.pop %v2460
      %v3219 = vmul.f32 %v3218, %v2460
      %v3220 = vmul.f32 %v3219, %v3218
      %v3221 = vmul.f32 0.5, %v3220
      %v3222 = vsub.f32 1.5, %v3221
      %v3223 = vmul.f32 %v3218, %v3222
      %vm3224 = vweird.f32 %v2460
      %vm3225 = vweird.f32 %v3218
      %vm3226 = vmor %vm3224, %vm3225
      %v3227 = vsel %vm3226, %v3218, %v3223
      %v3228 = vrsqrt.pop %v2461
      %v3229 = vmul.f32 %v3228, %v2461
      %v3230 = vmul.f32 %v3229, %v3228
      %v3231 = vmul.f32 0.5, %v3230
      %v3232 = vsub.f32 1.5, %v3231
      %v3233 = vmul.f32 %v3228, %v3232
      %vm3234 = vweird.f32 %v2461
      %vm3235 = vweird.f32 %v3228
      %vm3236 = vmor %vm3234, %vm3235
      %v3237 = vsel %vm3236, %v3228, %v3233
      %v3238 = vrsqrt.pop %v2462
      %v3239 = vmul.f32 %v3238, %v2462
      %v3240 = vmul.f32 %v3239, %v3238
      %v3241 = vmul.f32 0.5, %v3240
      %v3242 = vsub.f32 1.5, %v3241
      %v3243 = vmul.f32 %v3238, %v3242
      %vm3244 = vweird.f32 %v2462
      %vm3245 = vweird.f32 %v3238
      %vm3246 = vmor %vm3244, %vm3245
      %v3247 = vsel %vm3246, %v3238, %v3243
      %v3248 = vrsqrt.pop %v2463
      %v3249 = vmul.f32 %v3248, %v2463
      %v3250 = vmul.f32 %v3249, %v3248
      %v3251 = vmul.f32 0.5, %v3250
      %v3252 = vsub.f32 1.5, %v3251
      %v3253 = vmul.f32 %v3248, %v3252
      %vm3254 = vweird.f32 %v2463
      %vm3255 = vweird.f32 %v3248
      %vm3256 = vmor %vm3254, %vm3255
      %v3257 = vsel %vm3256, %v3248, %v3253
      %v3258 = vrsqrt.pop %v2464
      %v3259 = vmul.f32 %v3258, %v2464
      %v3260 = vmul.f32 %v3259, %v3258
      %v3261 = vmul.f32 0.5, %v3260
      %v3262 = vsub.f32 1.5, %v3261
      %v3263 = vmul.f32 %v3258, %v3262
      %vm3264 = vweird.f32 %v2464
      %vm3265 = vweird.f32 %v3258
      %vm3266 = vmor %vm3264, %vm3265
      %v3267 = vsel %vm3266, %v3258, %v3263
      %v3268 = vrsqrt.pop %v2465
      %v3269 = vmul.f32 %v3268, %v2465
      %v3270 = vmul.f32 %v3269, %v3268
      %v3271 = vmul.f32 0.5, %v3270
      %v3272 = vsub.f32 1.5, %v3271
      %v3273 = vmul.f32 %v3268, %v3272
      %vm3274 = vweird.f32 %v2465
      %vm3275 = vweird.f32 %v3268
      %vm3276 = vmor %vm3274, %vm3275
      %v3277 = vsel %vm3276, %v3268, %v3273
      %v3278 = vrsqrt.pop %v2466
      %v3279 = vmul.f32 %v3278, %v2466
      %v3280 = vmul.f32 %v3279, %v3278
      %v3281 = vmul.f32 0.5, %v3280
      %v3282 = vsub.f32 1.5, %v3281
      %v3283 = vmul.f32 %v3278, %v3282
      %vm3284 = vweird.f32 %v2466
      %vm3285 = vweird.f32 %v3278
      %vm3286 = vmor %vm3284, %vm3285
      %v3287 = vsel %vm3286, %v3278, %v3283
      %v3288 = vrsqrt.pop %v2467
      %v3289 = vmul.f32 %v3288, %v2467
      %v3290 = vmul.f32 %v3289, %v3288
      %v3291 = vmul.f32 0.5, %v3290
      %v3292 = vsub.f32 1.5, %v3291
      %v3293 = vmul.f32 %v3288, %v3292
      %vm3294 = vweird.f32 %v2467
      %vm3295 = vweird.f32 %v3288
      %vm3296 = vmor %vm3294, %vm3295
      %v3297 = vsel %vm3296, %v3288, %v3293
      %v3298 = vrsqrt.pop %v2468
      %v3299 = vmul.f32 %v3298, %v2468
      %v3300 = vmul.f32 %v3299, %v3298
      %v3301 = vmul.f32 0.5, %v3300
      %v3302 = vsub.f32 1.5, %v3301
      %v3303 = vmul.f32 %v3298, %v3302
      %vm3304 = vweird.f32 %v2468
      %vm3305 = vweird.f32 %v3298
      %vm3306 = vmor %vm3304, %vm3305
      %v3307 = vsel %vm3306, %v3298, %v3303
      %v3308 = vrsqrt.pop %v2469
      %v3309 = vmul.f32 %v3308, %v2469
      %v3310 = vmul.f32 %v3309, %v3308
      %v3311 = vmul.f32 0.5, %v3310
      %v3312 = vsub.f32 1.5, %v3311
      %v3313 = vmul.f32 %v3308, %v3312
      %vm3314 = vweird.f32 %v2469
      %vm3315 = vweird.f32 %v3308
      %vm3316 = vmor %vm3314, %vm3315
      %v3317 = vsel %vm3316, %v3308, %v3313
      %v3318 = vrsqrt.pop %v2470
      %v3319 = vmul.f32 %v3318, %v2470
      %v3320 = vmul.f32 %v3319, %v3318
      %v3321 = vmul.f32 0.5, %v3320
      %v3322 = vsub.f32 1.5, %v3321
      %v3323 = vmul.f32 %v3318, %v3322
      %vm3324 = vweird.f32 %v2470
      %vm3325 = vweird.f32 %v3318
      %vm3326 = vmor %vm3324, %vm3325
      %v3327 = vsel %vm3326, %v3318, %v3323
      %v3328 = vrsqrt.pop %v2471
      %v3329 = vmul.f32 %v3328, %v2471
      %v3330 = vmul.f32 %v3329, %v3328
      %v3331 = vmul.f32 0.5, %v3330
      %v3332 = vsub.f32 1.5, %v3331
      %v3333 = vmul.f32 %v3328, %v3332
      %vm3334 = vweird.f32 %v2471
      %vm3335 = vweird.f32 %v3328
      %vm3336 = vmor %vm3334, %vm3335
      %v3337 = vsel %vm3336, %v3328, %v3333
      %v3338 = vrsqrt.pop %v2472
      %v3339 = vmul.f32 %v3338, %v2472
      %v3340 = vmul.f32 %v3339, %v3338
      %v3341 = vmul.f32 0.5, %v3340
      %v3342 = vsub.f32 1.5, %v3341
      %v3343 = vmul.f32 %v3338, %v3342
      %vm3344 = vweird.f32 %v2472
      %vm3345 = vweird.f32 %v3338
      %vm3346 = vmor %vm3344, %vm3345
      %v3347 = vsel %vm3346, %v3338, %v3343
      %v3348 = vrsqrt.pop %v2473
      %v3349 = vmul.f32 %v3348, %v2473
      %v3350 = vmul.f32 %v3349, %v3348
      %v3351 = vmul.f32 0.5, %v3350
      %v3352 = vsub.f32 1.5, %v3351
      %v3353 = vmul.f32 %v3348, %v3352
      %vm3354 = vweird.f32 %v2473
      %vm3355 = vweird.f32 %v3348
      %vm3356 = vmor %vm3354, %vm3355
      %v3357 = vsel %vm3356, %v3348, %v3353
      %v3358 = vrsqrt.pop %v2474
      %v3359 = vmul.f32 %v3358, %v2474
      %v3360 = vmul.f32 %v3359, %v3358
      %v3361 = vmul.f32 0.5, %v3360
      %v3362 = vsub.f32 1.5, %v3361
      %v3363 = vmul.f32 %v3358, %v3362
      %vm3364 = vweird.f32 %v2474
      %vm3365 = vweird.f32 %v3358
      %vm3366 = vmor %vm3364, %vm3365
      %v3367 = vsel %vm3366, %v3358, %v3363
      %v3368 = vrsqrt.pop %v2475
      %v3369 = vmul.f32 %v3368, %v2475
      %v3370 = vmul.f32 %v3369, %v3368
      %v3371 = vmul.f32 0.5, %v3370
      %v3372 = vsub.f32 1.5, %v3371
      %v3373 = vmul.f32 %v3368, %v3372
      %vm3374 = vweird.f32 %v2475
      %vm3375 = vweird.f32 %v3368
      %vm3376 = vmor %vm3374, %vm3375
      %v3377 = vsel %vm3376, %v3368, %v3373
      %v3378 = vrsqrt.pop %v2476
      %v3379 = vmul.f32 %v3378, %v2476
      %v3380 = vmul.f32 %v3379, %v3378
      %v3381 = vmul.f32 0.5, %v3380
      %v3382 = vsub.f32 1.5, %v3381
      %v3383 = vmul.f32 %v3378, %v3382
      %vm3384 = vweird.f32 %v2476
      %vm3385 = vweird.f32 %v3378
      %vm3386 = vmor %vm3384, %vm3385
      %v3387 = vsel %vm3386, %v3378, %v3383
      %v3388 = vrsqrt.pop %v2477
      %v3389 = vmul.f32 %v3388, %v2477
      %v3390 = vmul.f32 %v3389, %v3388
      %v3391 = vmul.f32 0.5, %v3390
      %v3392 = vsub.f32 1.5, %v3391
      %v3393 = vmul.f32 %v3388, %v3392
      %vm3394 = vweird.f32 %v2477
      %vm3395 = vweird.f32 %v3388
      %vm3396 = vmor %vm3394, %vm3395
      %v3397 = vsel %vm3396, %v3388, %v3393
      %v3398 = vrsqrt.pop %v2478
      %v3399 = vmul.f32 %v3398, %v2478
      %v3400 = vmul.f32 %v3399, %v3398
      %v3401 = vmul.f32 0.5, %v3400
      %v3402 = vsub.f32 1.5, %v3401
      %v3403 = vmul.f32 %v3398, %v3402
      %vm3404 = vweird.f32 %v2478
      %vm3405 = vweird.f32 %v3398
      %vm3406 = vmor %vm3404, %vm3405
      %v3407 = vsel %vm3406, %v3398, %v3403
      %v3408 = vrsqrt.pop %v2479
      %v3409 = vmul.f32 %v3408, %v2479
      %v3410 = vmul.f32 %v3409, %v3408
      %v3411 = vmul.f32 0.5, %v3410
      %v3412 = vsub.f32 1.5, %v3411
      %v3413 = vmul.f32 %v3408, %v3412
      %vm3414 = vweird.f32 %v2479
      %vm3415 = vweird.f32 %v3408
      %vm3416 = vmor %vm3414, %vm3415
      %v3417 = vsel %vm3416, %v3408, %v3413
      %v3418 = vrsqrt.pop %v2480
      %v3419 = vmul.f32 %v3418, %v2480
      %v3420 = vmul.f32 %v3419, %v3418
      %v3421 = vmul.f32 0.5, %v3420
      %v3422 = vsub.f32 1.5, %v3421
      %v3423 = vmul.f32 %v3418, %v3422
      %vm3424 = vweird.f32 %v2480
      %vm3425 = vweird.f32 %v3418
      %vm3426 = vmor %vm3424, %vm3425
      %v3427 = vsel %vm3426, %v3418, %v3423
      %v3428 = vrsqrt.pop %v2481
      %v3429 = vmul.f32 %v3428, %v2481
      %v3430 = vmul.f32 %v3429, %v3428
      %v3431 = vmul.f32 0.5, %v3430
      %v3432 = vsub.f32 1.5, %v3431
      %v3433 = vmul.f32 %v3428, %v3432
      %vm3434 = vweird.f32 %v2481
      %vm3435 = vweird.f32 %v3428
      %vm3436 = vmor %vm3434, %vm3435
      %v3437 = vsel %vm3436, %v3428, %v3433
      %v3438 = vrsqrt.pop %v2482
      %v3439 = vmul.f32 %v3438, %v2482
      %v3440 = vmul.f32 %v3439, %v3438
      %v3441 = vmul.f32 0.5, %v3440
      %v3442 = vsub.f32 1.5, %v3441
      %v3443 = vmul.f32 %v3438, %v3442
      %vm3444 = vweird.f32 %v2482
      %vm3445 = vweird.f32 %v3438
      %vm3446 = vmor %vm3444, %vm3445
      %v3447 = vsel %vm3446, %v3438, %v3443
      %v3448 = vrsqrt.pop %v2483
      %v3449 = vmul.f32 %v3448, %v2483
      %v3450 = vmul.f32 %v3449, %v3448
      %v3451 = vmul.f32 0.5, %v3450
      %v3452 = vsub.f32 1.5, %v3451
      %v3453 = vmul.f32 %v3448, %v3452
      %vm3454 = vweird.f32 %v2483
      %vm3455 = vweird.f32 %v3448
      %vm3456 = vmor %vm3454, %vm3455
      %v3457 = vsel %vm3456, %v3448, %v3453
      %v3458 = vrsqrt.pop %v2484
      %v3459 = vmul.f32 %v3458, %v2484
      %v3460 = vmul.f32 %v3459, %v3458
      %v3461 = vmul.f32 0.5, %v3460
      %v3462 = vsub.f32 1.5, %v3461
      %v3463 = vmul.f32 %v3458, %v3462
      %vm3464 = vweird.f32 %v2484
      %vm3465 = vweird.f32 %v3458
      %vm3466 = vmor %vm3464, %vm3465
      %v3467 = vsel %vm3466, %v3458, %v3463
      %v3468 = vrsqrt.pop %v2485
      %v3469 = vmul.f32 %v3468, %v2485
      %v3470 = vmul.f32 %v3469, %v3468
      %v3471 = vmul.f32 0.5, %v3470
      %v3472 = vsub.f32 1.5, %v3471
      %v3473 = vmul.f32 %v3468, %v3472
      %vm3474 = vweird.f32 %v2485
      %vm3475 = vweird.f32 %v3468
      %vm3476 = vmor %vm3474, %vm3475
      %v3477 = vsel %vm3476, %v3468, %v3473
      %v3478 = vrsqrt.pop %v2486
      %v3479 = vmul.f32 %v3478, %v2486
      %v3480 = vmul.f32 %v3479, %v3478
      %v3481 = vmul.f32 0.5, %v3480
      %v3482 = vsub.f32 1.5, %v3481
      %v3483 = vmul.f32 %v3478, %v3482
      %vm3484 = vweird.f32 %v2486
      %vm3485 = vweird.f32 %v3478
      %vm3486 = vmor %vm3484, %vm3485
      %v3487 = vsel %vm3486, %v3478, %v3483
      %v3488 = vrsqrt.pop %v2487
      %v3489 = vmul.f32 %v3488, %v2487
      %v3490 = vmul.f32 %v3489, %v3488
      %v3491 = vmul.f32 0.5, %v3490
      %v3492 = vsub.f32 1.5, %v3491
      %v3493 = vmul.f32 %v3488, %v3492
      %vm3494 = vweird.f32 %v2487
      %vm3495 = vweird.f32 %v3488
      %vm3496 = vmor %vm3494, %vm3495
      %v3497 = vsel %vm3496, %v3488, %v3493
      %v3498 = vrsqrt.pop %v2488
      %v3499 = vmul.f32 %v3498, %v2488
      %v3500 = vmul.f32 %v3499, %v3498
      %v3501 = vmul.f32 0.5, %v3500
      %v3502 = vsub.f32 1.5, %v3501
      %v3503 = vmul.f32 %v3498, %v3502
      %vm3504 = vweird.f32 %v2488
      %vm3505 = vweird.f32 %v3498
      %vm3506 = vmor %vm3504, %vm3505
      %v3507 = vsel %vm3506, %v3498, %v3503
      %v3508 = vrsqrt.pop %v2489
      %v3509 = vmul.f32 %v3508, %v2489
      %v3510 = vmul.f32 %v3509, %v3508
      %v3511 = vmul.f32 0.5, %v3510
      %v3512 = vsub.f32 1.5, %v3511
      %v3513 = vmul.f32 %v3508, %v3512
      %vm3514 = vweird.f32 %v2489
      %vm3515 = vweird.f32 %v3508
      %vm3516 = vmor %vm3514, %vm3515
      %v3517 = vsel %vm3516, %v3508, %v3513
      %v3518 = vrsqrt.pop %v2490
      %v3519 = vmul.f32 %v3518, %v2490
      %v3520 = vmul.f32 %v3519, %v3518
      %v3521 = vmul.f32 0.5, %v3520
      %v3522 = vsub.f32 1.5, %v3521
      %v3523 = vmul.f32 %v3518, %v3522
      %vm3524 = vweird.f32 %v2490
      %vm3525 = vweird.f32 %v3518
      %vm3526 = vmor %vm3524, %vm3525
      %v3527 = vsel %vm3526, %v3518, %v3523
      %v3528 = vrsqrt.pop %v2491
      %v3529 = vmul.f32 %v3528, %v2491
      %v3530 = vmul.f32 %v3529, %v3528
      %v3531 = vmul.f32 0.5, %v3530
      %v3532 = vsub.f32 1.5, %v3531
      %v3533 = vmul.f32 %v3528, %v3532
      %vm3534 = vweird.f32 %v2491
      %vm3535 = vweird.f32 %v3528
      %vm3536 = vmor %vm3534, %vm3535
      %v3537 = vsel %vm3536, %v3528, %v3533
      %v3538 = vrsqrt.pop %v2492
      %v3539 = vmul.f32 %v3538, %v2492
      %v3540 = vmul.f32 %v3539, %v3538
      %v3541 = vmul.f32 0.5, %v3540
      %v3542 = vsub.f32 1.5, %v3541
      %v3543 = vmul.f32 %v3538, %v3542
      %vm3544 = vweird.f32 %v2492
      %vm3545 = vweird.f32 %v3538
      %vm3546 = vmor %vm3544, %vm3545
      %v3547 = vsel %vm3546, %v3538, %v3543
      %v3548 = vrsqrt.pop %v2493
      %v3549 = vmul.f32 %v3548, %v2493
      %v3550 = vmul.f32 %v3549, %v3548
      %v3551 = vmul.f32 0.5, %v3550
      %v3552 = vsub.f32 1.5, %v3551
      %v3553 = vmul.f32 %v3548, %v3552
      %vm3554 = vweird.f32 %v2493
      %vm3555 = vweird.f32 %v3548
      %vm3556 = vmor %vm3554, %vm3555
      %v3557 = vsel %vm3556, %v3548, %v3553
      %v3558 = vrsqrt.pop %v2494
      %v3559 = vmul.f32 %v3558, %v2494
      %v3560 = vmul.f32 %v3559, %v3558
      %v3561 = vmul.f32 0.5, %v3560
      %v3562 = vsub.f32 1.5, %v3561
      %v3563 = vmul.f32 %v3558, %v3562
      %vm3564 = vweird.f32 %v2494
      %vm3565 = vweird.f32 %v3558
      %vm3566 = vmor %vm3564, %vm3565
      %v3567 = vsel %vm3566, %v3558, %v3563
      %v3568 = vrsqrt.pop %v2495
      %v3569 = vmul.f32 %v3568, %v2495
      %v3570 = vmul.f32 %v3569, %v3568
      %v3571 = vmul.f32 0.5, %v3570
      %v3572 = vsub.f32 1.5, %v3571
      %v3573 = vmul.f32 %v3568, %v3572
      %vm3574 = vweird.f32 %v2495
      %vm3575 = vweird.f32 %v3568
      %vm3576 = vmor %vm3574, %vm3575
      %v3577 = vsel %vm3576, %v3568, %v3573
      %v3578 = vrsqrt.pop %v2496
      %v3579 = vmul.f32 %v3578, %v2496
      %v3580 = vmul.f32 %v3579, %v3578
      %v3581 = vmul.f32 0.5, %v3580
      %v3582 = vsub.f32 1.5, %v3581
      %v3583 = vmul.f32 %v3578, %v3582
      %vm3584 = vweird.f32 %v2496
      %vm3585 = vweird.f32 %v3578
      %vm3586 = vmor %vm3584, %vm3585
      %v3587 = vsel %vm3586, %v3578, %v3583
      %v3588 = vrsqrt.pop %v2497
      %v3589 = vmul.f32 %v3588, %v2497
      %v3590 = vmul.f32 %v3589, %v3588
      %v3591 = vmul.f32 0.5, %v3590
      %v3592 = vsub.f32 1.5, %v3591
      %v3593 = vmul.f32 %v3588, %v3592
      %vm3594 = vweird.f32 %v2497
      %vm3595 = vweird.f32 %v3588
      %vm3596 = vmor %vm3594, %vm3595
      %v3597 = vsel %vm3596, %v3588, %v3593
      %v3598 = vrsqrt.pop %v2498
      %v3599 = vmul.f32 %v3598, %v2498
      %v3600 = vmul.f32 %v3599, %v3598
      %v3601 = vmul.f32 0.5, %v3600
      %v3602 = vsub.f32 1.5, %v3601
      %v3603 = vmul.f32 %v3598, %v3602
      %vm3604 = vweird.f32 %v2498
      %vm3605 = vweird.f32 %v3598
      %vm3606 = vmor %vm3604, %vm3605
      %v3607 = vsel %vm3606, %v3598, %v3603
      %v3608 = vrsqrt.pop %v2499
      %v3609 = vmul.f32 %v3608, %v2499
      %v3610 = vmul.f32 %v3609, %v3608
      %v3611 = vmul.f32 0.5, %v3610
      %v3612 = vsub.f32 1.5, %v3611
      %v3613 = vmul.f32 %v3608, %v3612
      %vm3614 = vweird.f32 %v2499
      %vm3615 = vweird.f32 %v3608
      %vm3616 = vmor %vm3614, %vm3615
      %v3617 = vsel %vm3616, %v3608, %v3613
      %v3618 = vrsqrt.pop %v2500
      %v3619 = vmul.f32 %v3618, %v2500
      %v3620 = vmul.f32 %v3619, %v3618
      %v3621 = vmul.f32 0.5, %v3620
      %v3622 = vsub.f32 1.5, %v3621
      %v3623 = vmul.f32 %v3618, %v3622
      %vm3624 = vweird.f32 %v2500
      %vm3625 = vweird.f32 %v3618
      %vm3626 = vmor %vm3624, %vm3625
      %v3627 = vsel %vm3626, %v3618, %v3623
      %v3628 = vrsqrt.pop %v2501
      %v3629 = vmul.f32 %v3628, %v2501
      %v3630 = vmul.f32 %v3629, %v3628
      %v3631 = vmul.f32 0.5, %v3630
      %v3632 = vsub.f32 1.5, %v3631
      %v3633 = vmul.f32 %v3628, %v3632
      %vm3634 = vweird.f32 %v2501
      %vm3635 = vweird.f32 %v3628
      %vm3636 = vmor %vm3634, %vm3635
      %v3637 = vsel %vm3636, %v3628, %v3633
      %v3638 = vrsqrt.pop %v2502
      %v3639 = vmul.f32 %v3638, %v2502
      %v3640 = vmul.f32 %v3639, %v3638
      %v3641 = vmul.f32 0.5, %v3640
      %v3642 = vsub.f32 1.5, %v3641
      %v3643 = vmul.f32 %v3638, %v3642
      %vm3644 = vweird.f32 %v2502
      %vm3645 = vweird.f32 %v3638
      %vm3646 = vmor %vm3644, %vm3645
      %v3647 = vsel %vm3646, %v3638, %v3643
      %v3648 = vrsqrt.pop %v2503
      %v3649 = vmul.f32 %v3648, %v2503
      %v3650 = vmul.f32 %v3649, %v3648
      %v3651 = vmul.f32 0.5, %v3650
      %v3652 = vsub.f32 1.5, %v3651
      %v3653 = vmul.f32 %v3648, %v3652
      %vm3654 = vweird.f32 %v2503
      %vm3655 = vweird.f32 %v3648
      %vm3656 = vmor %vm3654, %vm3655
      %v3657 = vsel %vm3656, %v3648, %v3653
      %v3658 = vrsqrt.pop %v2504
      %v3659 = vmul.f32 %v3658, %v2504
      %v3660 = vmul.f32 %v3659, %v3658
      %v3661 = vmul.f32 0.5, %v3660
      %v3662 = vsub.f32 1.5, %v3661
      %v3663 = vmul.f32 %v3658, %v3662
      %vm3664 = vweird.f32 %v2504
      %vm3665 = vweird.f32 %v3658
      %vm3666 = vmor %vm3664, %vm3665
      %v3667 = vsel %vm3666, %v3658, %v3663
      %v3668 = vrsqrt.pop %v2505
      %v3669 = vmul.f32 %v3668, %v2505
      %v3670 = vmul.f32 %v3669, %v3668
      %v3671 = vmul.f32 0.5, %v3670
      %v3672 = vsub.f32 1.5, %v3671
      %v3673 = vmul.f32 %v3668, %v3672
      %vm3674 = vweird.f32 %v2505
      %vm3675 = vweird.f32 %v3668
      %vm3676 = vmor %vm3674, %vm3675
      %v3677 = vsel %vm3676, %v3668, %v3673
      %v3678 = vrsqrt.pop %v2506
      %v3679 = vmul.f32 %v3678, %v2506
      %v3680 = vmul.f32 %v3679, %v3678
      %v3681 = vmul.f32 0.5, %v3680
      %v3682 = vsub.f32 1.5, %v3681
      %v3683 = vmul.f32 %v3678, %v3682
      %vm3684 = vweird.f32 %v2506
      %vm3685 = vweird.f32 %v3678
      %vm3686 = vmor %vm3684, %vm3685
      %v3687 = vsel %vm3686, %v3678, %v3683
      %v3688 = vrsqrt.pop %v2507
      %v3689 = vmul.f32 %v3688, %v2507
      %v3690 = vmul.f32 %v3689, %v3688
      %v3691 = vmul.f32 0.5, %v3690
      %v3692 = vsub.f32 1.5, %v3691
      %v3693 = vmul.f32 %v3688, %v3692
      %vm3694 = vweird.f32 %v2507
      %vm3695 = vweird.f32 %v3688
      %vm3696 = vmor %vm3694, %vm3695
      %v3697 = vsel %vm3696, %v3688, %v3693
      %v3698 = vrsqrt.pop %v2508
      %v3699 = vmul.f32 %v3698, %v2508
      %v3700 = vmul.f32 %v3699, %v3698
      %v3701 = vmul.f32 0.5, %v3700
      %v3702 = vsub.f32 1.5, %v3701
      %v3703 = vmul.f32 %v3698, %v3702
      %vm3704 = vweird.f32 %v2508
      %vm3705 = vweird.f32 %v3698
      %vm3706 = vmor %vm3704, %vm3705
      %v3707 = vsel %vm3706, %v3698, %v3703
      %v3708 = vrsqrt.pop %v2509
      %v3709 = vmul.f32 %v3708, %v2509
      %v3710 = vmul.f32 %v3709, %v3708
      %v3711 = vmul.f32 0.5, %v3710
      %v3712 = vsub.f32 1.5, %v3711
      %v3713 = vmul.f32 %v3708, %v3712
      %vm3714 = vweird.f32 %v2509
      %vm3715 = vweird.f32 %v3708
      %vm3716 = vmor %vm3714, %vm3715
      %v3717 = vsel %vm3716, %v3708, %v3713
      %v3718 = vrsqrt.pop %v2510
      %v3719 = vmul.f32 %v3718, %v2510
      %v3720 = vmul.f32 %v3719, %v3718
      %v3721 = vmul.f32 0.5, %v3720
      %v3722 = vsub.f32 1.5, %v3721
      %v3723 = vmul.f32 %v3718, %v3722
      %vm3724 = vweird.f32 %v2510
      %vm3725 = vweird.f32 %v3718
      %vm3726 = vmor %vm3724, %vm3725
      %v3727 = vsel %vm3726, %v3718, %v3723
      %v3728 = vrsqrt.pop %v2511
      %v3729 = vmul.f32 %v3728, %v2511
      %v3730 = vmul.f32 %v3729, %v3728
      %v3731 = vmul.f32 0.5, %v3730
      %v3732 = vsub.f32 1.5, %v3731
      %v3733 = vmul.f32 %v3728, %v3732
      %vm3734 = vweird.f32 %v2511
      %vm3735 = vweird.f32 %v3728
      %vm3736 = vmor %vm3734, %vm3735
      %v3737 = vsel %vm3736, %v3728, %v3733
      %v3738 = vrsqrt.pop %v2512
      %v3739 = vmul.f32 %v3738, %v2512
      %v3740 = vmul.f32 %v3739, %v3738
      %v3741 = vmul.f32 0.5, %v3740
      %v3742 = vsub.f32 1.5, %v3741
      %v3743 = vmul.f32 %v3738, %v3742
      %vm3744 = vweird.f32 %v2512
      %vm3745 = vweird.f32 %v3738
      %vm3746 = vmor %vm3744, %vm3745
      %v3747 = vsel %vm3746, %v3738, %v3743
      %v3748 = vrsqrt.pop %v2513
      %v3749 = vmul.f32 %v3748, %v2513
      %v3750 = vmul.f32 %v3749, %v3748
      %v3751 = vmul.f32 0.5, %v3750
      %v3752 = vsub.f32 1.5, %v3751
      %v3753 = vmul.f32 %v3748, %v3752
      %vm3754 = vweird.f32 %v2513
      %vm3755 = vweird.f32 %v3748
      %vm3756 = vmor %vm3754, %vm3755
      %v3757 = vsel %vm3756, %v3748, %v3753
      %v3758 = vrsqrt.pop %v2514
      %v3759 = vmul.f32 %v3758, %v2514
      %v3760 = vmul.f32 %v3759, %v3758
      %v3761 = vmul.f32 0.5, %v3760
      %v3762 = vsub.f32 1.5, %v3761
      %v3763 = vmul.f32 %v3758, %v3762
      %vm3764 = vweird.f32 %v2514
      %vm3765 = vweird.f32 %v3758
      %vm3766 = vmor %vm3764, %vm3765
      %v3767 = vsel %vm3766, %v3758, %v3763
      %v3768 = vrsqrt.pop %v2515
      %v3769 = vmul.f32 %v3768, %v2515
      %v3770 = vmul.f32 %v3769, %v3768
      %v3771 = vmul.f32 0.5, %v3770
      %v3772 = vsub.f32 1.5, %v3771
      %v3773 = vmul.f32 %v3768, %v3772
      %vm3774 = vweird.f32 %v2515
      %vm3775 = vweird.f32 %v3768
      %vm3776 = vmor %vm3774, %vm3775
      %v3777 = vsel %vm3776, %v3768, %v3773
      %v3778 = vrsqrt.pop %v2516
      %v3779 = vmul.f32 %v3778, %v2516
      %v3780 = vmul.f32 %v3779, %v3778
      %v3781 = vmul.f32 0.5, %v3780
      %v3782 = vsub.f32 1.5, %v3781
      %v3783 = vmul.f32 %v3778, %v3782
      %vm3784 = vweird.f32 %v2516
      %vm3785 = vweird.f32 %v3778
      %vm3786 = vmor %vm3784, %vm3785
      %v3787 = vsel %vm3786, %v3778, %v3783
      %v3788 = vrsqrt.pop %v2517
      %v3789 = vmul.f32 %v3788, %v2517
      %v3790 = vmul.f32 %v3789, %v3788
      %v3791 = vmul.f32 0.5, %v3790
      %v3792 = vsub.f32 1.5, %v3791
      %v3793 = vmul.f32 %v3788, %v3792
      %vm3794 = vweird.f32 %v2517
      %vm3795 = vweird.f32 %v3788
      %vm3796 = vmor %vm3794, %vm3795
      %v3797 = vsel %vm3796, %v3788, %v3793
      %v3798 = vmul.f32 %v1622, %v2527
      %v3799 = vmul.f32 %v1623, %v2537
      %v3800 = vmul.f32 %v1624, %v2547
      %v3801 = vmul.f32 %v1625, %v2557
      %v3802 = vmul.f32 %v1626, %v2567
      %v3803 = vmul.f32 %v1627, %v2577
      %v3804 = vmul.f32 %v1628, %v2587
      %v3805 = vmul.f32 %v1629, %v2597
      %v3806 = vmul.f32 %v1630, %v2607
      %v3807 = vmul.f32 %v1631, %v2617
      %v3808 = vmul.f32 %v1632, %v2627
      %v3809 = vmul.f32 %v1633, %v2637
      %v3810 = vmul.f32 %v1634, %v2647
      %v3811 = vmul.f32 %v1635, %v2657
      %v3812 = vmul.f32 %v1636, %v2667
      %v3813 = vmul.f32 %v1637, %v2677
      %v3814 = vmul.f32 %v1638, %v2687
      %v3815 = vmul.f32 %v1639, %v2697
      %v3816 = vmul.f32 %v1640, %v2707
      %v3817 = vmul.f32 %v1641, %v2717
      %v3818 = vmul.f32 %v1642, %v2727
      %v3819 = vmul.f32 %v1643, %v2737
      %v3820 = vmul.f32 %v1644, %v2747
      %v3821 = vmul.f32 %v1645, %v2757
      %v3822 = vmul.f32 %v1646, %v2767
      %v3823 = vmul.f32 %v1647, %v2777
      %v3824 = vmul.f32 %v1648, %v2787
      %v3825 = vmul.f32 %v1649, %v2797
      %v3826 = vmul.f32 %v1650, %v2807
      %v3827 = vmul.f32 %v1651, %v2817
      %v3828 = vmul.f32 %v1652, %v2827
      %v3829 = vmul.f32 %v1653, %v2837
      %v3830 = vmul.f32 %v1654, %v2847
      %v3831 = vmul.f32 %v1655, %v2857
      %v3832 = vmul.f32 %v1656, %v2867
      %v3833 = vmul.f32 %v1657, %v2877
      %v3834 = vmul.f32 %v1658, %v2887
      %v3835 = vmul.f32 %v1659, %v2897
      %v3836 = vmul.f32 %v1660, %v2907
      %v3837 = vmul.f32 %v1661, %v2917
      %v3838 = vmul.f32 %v1662, %v2927
      %v3839 = vmul.f32 %v1663, %v2937
      %v3840 = vmul.f32 %v1664, %v2947
      %v3841 = vmul.f32 %v1665, %v2957
      %v3842 = vmul.f32 %v1666, %v2967
      %v3843 = vmul.f32 %v1667, %v2977
      %v3844 = vmul.f32 %v1668, %v2987
      %v3845 = vmul.f32 %v1669, %v2997
      %v3846 = vmul.f32 %v1670, %v3007
      %v3847 = vmul.f32 %v1671, %v3017
      %v3848 = vmul.f32 %v1672, %v3027
      %v3849 = vmul.f32 %v1673, %v3037
      %v3850 = vmul.f32 %v1674, %v3047
      %v3851 = vmul.f32 %v1675, %v3057
      %v3852 = vmul.f32 %v1676, %v3067
      %v3853 = vmul.f32 %v1677, %v3077
      %v3854 = vmul.f32 %v1678, %v3087
      %v3855 = vmul.f32 %v1679, %v3097
      %v3856 = vmul.f32 %v1680, %v3107
      %v3857 = vmul.f32 %v1681, %v3117
      %v3858 = vmul.f32 %v1682, %v3127
      %v3859 = vmul.f32 %v1683, %v3137
      %v3860 = vmul.f32 %v1684, %v3147
      %v3861 = vmul.f32 %v1685, %v3157
      %v3862 = vmul.f32 %v1686, %v3167
      %v3863 = vmul.f32 %v1687, %v3177
      %v3864 = vmul.f32 %v1688, %v3187
      %v3865 = vmul.f32 %v1689, %v3197
      %v3866 = vmul.f32 %v1690, %v3207
      %v3867 = vmul.f32 %v1691, %v3217
      %v3868 = vmul.f32 %v1692, %v3227
      %v3869 = vmul.f32 %v1693, %v3237
      %v3870 = vmul.f32 %v1694, %v3247
      %v3871 = vmul.f32 %v1695, %v3257
      %v3872 = vmul.f32 %v1696, %v3267
      %v3873 = vmul.f32 %v1697, %v3277
      %v3874 = vmul.f32 %v1698, %v3287
      %v3875 = vmul.f32 %v1699, %v3297
      %v3876 = vmul.f32 %v1700, %v3307
      %v3877 = vmul.f32 %v1701, %v3317
      %v3878 = vmul.f32 %v1702, %v3327
      %v3879 = vmul.f32 %v1703, %v3337
      %v3880 = vmul.f32 %v1704, %v3347
      %v3881 = vmul.f32 %v1705, %v3357
      %v3882 = vmul.f32 %v1706, %v3367
      %v3883 = vmul.f32 %v1707, %v3377
      %v3884 = vmul.f32 %v1708, %v3387
      %v3885 = vmul.f32 %v1709, %v3397
      %v3886 = vmul.f32 %v1710, %v3407
      %v3887 = vmul.f32 %v1711, %v3417
      %v3888 = vmul.f32 %v1712, %v3427
      %v3889 = vmul.f32 %v1713, %v3437
      %v3890 = vmul.f32 %v1714, %v3447
      %v3891 = vmul.f32 %v1715, %v3457
      %v3892 = vmul.f32 %v1716, %v3467
      %v3893 = vmul.f32 %v1717, %v3477
      %v3894 = vmul.f32 %v1718, %v3487
      %v3895 = vmul.f32 %v1719, %v3497
      %v3896 = vmul.f32 %v1720, %v3507
      %v3897 = vmul.f32 %v1721, %v3517
      %v3898 = vmul.f32 %v1722, %v3527
      %v3899 = vmul.f32 %v1723, %v3537
      %v3900 = vmul.f32 %v1724, %v3547
      %v3901 = vmul.f32 %v1725, %v3557
      %v3902 = vmul.f32 %v1726, %v3567
      %v3903 = vmul.f32 %v1727, %v3577
      %v3904 = vmul.f32 %v1728, %v3587
      %v3905 = vmul.f32 %v1729, %v3597
      %v3906 = vmul.f32 %v1730, %v3607
      %v3907 = vmul.f32 %v1731, %v3617
      %v3908 = vmul.f32 %v1732, %v3627
      %v3909 = vmul.f32 %v1733, %v3637
      %v3910 = vmul.f32 %v1734, %v3647
      %v3911 = vmul.f32 %v1735, %v3657
      %v3912 = vmul.f32 %v1736, %v3667
      %v3913 = vmul.f32 %v1737, %v3677
      %v3914 = vmul.f32 %v1738, %v3687
      %v3915 = vmul.f32 %v1739, %v3697
      %v3916 = vmul.f32 %v1740, %v3707
      %v3917 = vmul.f32 %v1741, %v3717
      %v3918 = vmul.f32 %v1742, %v3727
      %v3919 = vmul.f32 %v1743, %v3737
      %v3920 = vmul.f32 %v1744, %v3747
      %v3921 = vmul.f32 %v1745, %v3757
      %v3922 = vmul.f32 %v1746, %v3767
      %v3923 = vmul.f32 %v1747, %v3777
      %v3924 = vmul.f32 %v1748, %v3787
      %v3925 = vmul.f32 %v1749, %v3797
      %v3926 = vperm.slane %v314, 1
      %v3927 = vmul.f32 %v3798, %v3926
      %v3928 = vmul.f32 %v3799, %v3926
      %v3929 = vmul.f32 %v3800, %v3926
      %v3930 = vmul.f32 %v3801, %v3926
      %v3931 = vmul.f32 %v3802, %v3926
      %v3932 = vmul.f32 %v3803, %v3926
      %v3933 = vmul.f32 %v3804, %v3926
      %v3934 = vmul.f32 %v3805, %v3926
      %v3935 = vmul.f32 %v3806, %v3926
      %v3936 = vmul.f32 %v3807, %v3926
      %v3937 = vmul.f32 %v3808, %v3926
      %v3938 = vmul.f32 %v3809, %v3926
      %v3939 = vmul.f32 %v3810, %v3926
      %v3940 = vmul.f32 %v3811, %v3926
      %v3941 = vmul.f32 %v3812, %v3926
      %v3942 = vmul.f32 %v3813, %v3926
      %v3943 = vmul.f32 %v3814, %v3926
      %v3944 = vmul.f32 %v3815, %v3926
      %v3945 = vmul.f32 %v3816, %v3926
      %v3946 = vmul.f32 %v3817, %v3926
      %v3947 = vmul.f32 %v3818, %v3926
      %v3948 = vmul.f32 %v3819, %v3926
      %v3949 = vmul.f32 %v3820, %v3926
      %v3950 = vmul.f32 %v3821, %v3926
      %v3951 = vmul.f32 %v3822, %v3926
      %v3952 = vmul.f32 %v3823, %v3926
      %v3953 = vmul.f32 %v3824, %v3926
      %v3954 = vmul.f32 %v3825, %v3926
      %v3955 = vmul.f32 %v3826, %v3926
      %v3956 = vmul.f32 %v3827, %v3926
      %v3957 = vmul.f32 %v3828, %v3926
      %v3958 = vmul.f32 %v3829, %v3926
      %v3959 = vmul.f32 %v3830, %v3926
      %v3960 = vmul.f32 %v3831, %v3926
      %v3961 = vmul.f32 %v3832, %v3926
      %v3962 = vmul.f32 %v3833, %v3926
      %v3963 = vmul.f32 %v3834, %v3926
      %v3964 = vmul.f32 %v3835, %v3926
      %v3965 = vmul.f32 %v3836, %v3926
      %v3966 = vmul.f32 %v3837, %v3926
      %v3967 = vmul.f32 %v3838, %v3926
      %v3968 = vmul.f32 %v3839, %v3926
      %v3969 = vmul.f32 %v3840, %v3926
      %v3970 = vmul.f32 %v3841, %v3926
      %v3971 = vmul.f32 %v3842, %v3926
      %v3972 = vmul.f32 %v3843, %v3926
      %v3973 = vmul.f32 %v3844, %v3926
      %v3974 = vmul.f32 %v3845, %v3926
      %v3975 = vmul.f32 %v3846, %v3926
      %v3976 = vmul.f32 %v3847, %v3926
      %v3977 = vmul.f32 %v3848, %v3926
      %v3978 = vmul.f32 %v3849, %v3926
      %v3979 = vmul.f32 %v3850, %v3926
      %v3980 = vmul.f32 %v3851, %v3926
      %v3981 = vmul.f32 %v3852, %v3926
      %v3982 = vmul.f32 %v3853, %v3926
      %v3983 = vmul.f32 %v3854, %v3926
      %v3984 = vmul.f32 %v3855, %v3926
      %v3985 = vmul.f32 %v3856, %v3926
      %v3986 = vmul.f32 %v3857, %v3926
      %v3987 = vmul.f32 %v3858, %v3926
      %v3988 = vmul.f32 %v3859, %v3926
      %v3989 = vmul.f32 %v3860, %v3926
      %v3990 = vmul.f32 %v3861, %v3926
      %v3991 = vmul.f32 %v3862, %v3926
      %v3992 = vmul.f32 %v3863, %v3926
      %v3993 = vmul.f32 %v3864, %v3926
      %v3994 = vmul.f32 %v3865, %v3926
      %v3995 = vmul.f32 %v3866, %v3926
      %v3996 = vmul.f32 %v3867, %v3926
      %v3997 = vmul.f32 %v3868, %v3926
      %v3998 = vmul.f32 %v3869, %v3926
      %v3999 = vmul.f32 %v3870, %v3926
      %v4000 = vmul.f32 %v3871, %v3926
      %v4001 = vmul.f32 %v3872, %v3926
      %v4002 = vmul.f32 %v3873, %v3926
      %v4003 = vmul.f32 %v3874, %v3926
      %v4004 = vmul.f32 %v3875, %v3926
      %v4005 = vmul.f32 %v3876, %v3926
      %v4006 = vmul.f32 %v3877, %v3926
      %v4007 = vmul.f32 %v3878, %v3926
      %v4008 = vmul.f32 %v3879, %v3926
      %v4009 = vmul.f32 %v3880, %v3926
      %v4010 = vmul.f32 %v3881, %v3926
      %v4011 = vmul.f32 %v3882, %v3926
      %v4012 = vmul.f32 %v3883, %v3926
      %v4013 = vmul.f32 %v3884, %v3926
      %v4014 = vmul.f32 %v3885, %v3926
      %v4015 = vmul.f32 %v3886, %v3926
      %v4016 = vmul.f32 %v3887, %v3926
      %v4017 = vmul.f32 %v3888, %v3926
      %v4018 = vmul.f32 %v3889, %v3926
      %v4019 = vmul.f32 %v3890, %v3926
      %v4020 = vmul.f32 %v3891, %v3926
      %v4021 = vmul.f32 %v3892, %v3926
      %v4022 = vmul.f32 %v3893, %v3926
      %v4023 = vmul.f32 %v3894, %v3926
      %v4024 = vmul.f32 %v3895, %v3926
      %v4025 = vmul.f32 %v3896, %v3926
      %v4026 = vmul.f32 %v3897, %v3926
      %v4027 = vmul.f32 %v3898, %v3926
      %v4028 = vmul.f32 %v3899, %v3926
      %v4029 = vmul.f32 %v3900, %v3926
      %v4030 = vmul.f32 %v3901, %v3926
      %v4031 = vmul.f32 %v3902, %v3926
      %v4032 = vmul.f32 %v3903, %v3926
      %v4033 = vmul.f32 %v3904, %v3926
      %v4034 = vmul.f32 %v3905, %v3926
      %v4035 = vmul.f32 %v3906, %v3926
      %v4036 = vmul.f32 %v3907, %v3926
      %v4037 = vmul.f32 %v3908, %v3926
      %v4038 = vmul.f32 %v3909, %v3926
      %v4039 = vmul.f32 %v3910, %v3926
      %v4040 = vmul.f32 %v3911, %v3926
      %v4041 = vmul.f32 %v3912, %v3926
      %v4042 = vmul.f32 %v3913, %v3926
      %v4043 = vmul.f32 %v3914, %v3926
      %v4044 = vmul.f32 %v3915, %v3926
      %v4045 = vmul.f32 %v3916, %v3926
      %v4046 = vmul.f32 %v3917, %v3926
      %v4047 = vmul.f32 %v3918, %v3926
      %v4048 = vmul.f32 %v3919, %v3926
      %v4049 = vmul.f32 %v3920, %v3926
      %v4050 = vmul.f32 %v3921, %v3926
      %v4051 = vmul.f32 %v3922, %v3926
      %v4052 = vmul.f32 %v3923, %v3926
      %v4053 = vmul.f32 %v3924, %v3926
      %v4054 = vmul.f32 %v3925, %v3926
      %v4055 = vperm.slane %v314, 2
      %v4056 = vadd.f32 %v3927, %v4055
      %v4057 = vadd.f32 %v3928, %v4055
      %v4058 = vadd.f32 %v3929, %v4055
      %v4059 = vadd.f32 %v3930, %v4055
      %v4060 = vadd.f32 %v3931, %v4055
      %v4061 = vadd.f32 %v3932, %v4055
      %v4062 = vadd.f32 %v3933, %v4055
      %v4063 = vadd.f32 %v3934, %v4055
      %v4064 = vadd.f32 %v3935, %v4055
      %v4065 = vadd.f32 %v3936, %v4055
      %v4066 = vadd.f32 %v3937, %v4055
      %v4067 = vadd.f32 %v3938, %v4055
      %v4068 = vadd.f32 %v3939, %v4055
      %v4069 = vadd.f32 %v3940, %v4055
      %v4070 = vadd.f32 %v3941, %v4055
      %v4071 = vadd.f32 %v3942, %v4055
      %v4072 = vadd.f32 %v3943, %v4055
      %v4073 = vadd.f32 %v3944, %v4055
      %v4074 = vadd.f32 %v3945, %v4055
      %v4075 = vadd.f32 %v3946, %v4055
      %v4076 = vadd.f32 %v3947, %v4055
      %v4077 = vadd.f32 %v3948, %v4055
      %v4078 = vadd.f32 %v3949, %v4055
      %v4079 = vadd.f32 %v3950, %v4055
      %v4080 = vadd.f32 %v3951, %v4055
      %v4081 = vadd.f32 %v3952, %v4055
      %v4082 = vadd.f32 %v3953, %v4055
      %v4083 = vadd.f32 %v3954, %v4055
      %v4084 = vadd.f32 %v3955, %v4055
      %v4085 = vadd.f32 %v3956, %v4055
      %v4086 = vadd.f32 %v3957, %v4055
      %v4087 = vadd.f32 %v3958, %v4055
      %v4088 = vadd.f32 %v3959, %v4055
      %v4089 = vadd.f32 %v3960, %v4055
      %v4090 = vadd.f32 %v3961, %v4055
      %v4091 = vadd.f32 %v3962, %v4055
      %v4092 = vadd.f32 %v3963, %v4055
      %v4093 = vadd.f32 %v3964, %v4055
      %v4094 = vadd.f32 %v3965, %v4055
      %v4095 = vadd.f32 %v3966, %v4055
      %v4096 = vadd.f32 %v3967, %v4055
      %v4097 = vadd.f32 %v3968, %v4055
      %v4098 = vadd.f32 %v3969, %v4055
      %v4099 = vadd.f32 %v3970, %v4055
      %v4100 = vadd.f32 %v3971, %v4055
      %v4101 = vadd.f32 %v3972, %v4055
      %v4102 = vadd.f32 %v3973, %v4055
      %v4103 = vadd.f32 %v3974, %v4055
      %v4104 = vadd.f32 %v3975, %v4055
      %v4105 = vadd.f32 %v3976, %v4055
      %v4106 = vadd.f32 %v3977, %v4055
      %v4107 = vadd.f32 %v3978, %v4055
      %v4108 = vadd.f32 %v3979, %v4055
      %v4109 = vadd.f32 %v3980, %v4055
      %v4110 = vadd.f32 %v3981, %v4055
      %v4111 = vadd.f32 %v3982, %v4055
      %v4112 = vadd.f32 %v3983, %v4055
      %v4113 = vadd.f32 %v3984, %v4055
      %v4114 = vadd.f32 %v3985, %v4055
      %v4115 = vadd.f32 %v3986, %v4055
      %v4116 = vadd.f32 %v3987, %v4055
      %v4117 = vadd.f32 %v3988, %v4055
      %v4118 = vadd.f32 %v3989, %v4055
      %v4119 = vadd.f32 %v3990, %v4055
      %v4120 = vadd.f32 %v3991, %v4055
      %v4121 = vadd.f32 %v3992, %v4055
      %v4122 = vadd.f32 %v3993, %v4055
      %v4123 = vadd.f32 %v3994, %v4055
      %v4124 = vadd.f32 %v3995, %v4055
      %v4125 = vadd.f32 %v3996, %v4055
      %v4126 = vadd.f32 %v3997, %v4055
      %v4127 = vadd.f32 %v3998, %v4055
      %v4128 = vadd.f32 %v3999, %v4055
      %v4129 = vadd.f32 %v4000, %v4055
      %v4130 = vadd.f32 %v4001, %v4055
      %v4131 = vadd.f32 %v4002, %v4055
      %v4132 = vadd.f32 %v4003, %v4055
      %v4133 = vadd.f32 %v4004, %v4055
      %v4134 = vadd.f32 %v4005, %v4055
      %v4135 = vadd.f32 %v4006, %v4055
      %v4136 = vadd.f32 %v4007, %v4055
      %v4137 = vadd.f32 %v4008, %v4055
      %v4138 = vadd.f32 %v4009, %v4055
      %v4139 = vadd.f32 %v4010, %v4055
      %v4140 = vadd.f32 %v4011, %v4055
      %v4141 = vadd.f32 %v4012, %v4055
      %v4142 = vadd.f32 %v4013, %v4055
      %v4143 = vadd.f32 %v4014, %v4055
      %v4144 = vadd.f32 %v4015, %v4055
      %v4145 = vadd.f32 %v4016, %v4055
      %v4146 = vadd.f32 %v4017, %v4055
      %v4147 = vadd.f32 %v4018, %v4055
      %v4148 = vadd.f32 %v4019, %v4055
      %v4149 = vadd.f32 %v4020, %v4055
      %v4150 = vadd.f32 %v4021, %v4055
      %v4151 = vadd.f32 %v4022, %v4055
      %v4152 = vadd.f32 %v4023, %v4055
      %v4153 = vadd.f32 %v4024, %v4055
      %v4154 = vadd.f32 %v4025, %v4055
      %v4155 = vadd.f32 %v4026, %v4055
      %v4156 = vadd.f32 %v4027, %v4055
      %v4157 = vadd.f32 %v4028, %v4055
      %v4158 = vadd.f32 %v4029, %v4055
      %v4159 = vadd.f32 %v4030, %v4055
      %v4160 = vadd.f32 %v4031, %v4055
      %v4161 = vadd.f32 %v4032, %v4055
      %v4162 = vadd.f32 %v4033, %v4055
      %v4163 = vadd.f32 %v4034, %v4055
      %v4164 = vadd.f32 %v4035, %v4055
      %v4165 = vadd.f32 %v4036, %v4055
      %v4166 = vadd.f32 %v4037, %v4055
      %v4167 = vadd.f32 %v4038, %v4055
      %v4168 = vadd.f32 %v4039, %v4055
      %v4169 = vadd.f32 %v4040, %v4055
      %v4170 = vadd.f32 %v4041, %v4055
      %v4171 = vadd.f32 %v4042, %v4055
      %v4172 = vadd.f32 %v4043, %v4055
      %v4173 = vadd.f32 %v4044, %v4055
      %v4174 = vadd.f32 %v4045, %v4055
      %v4175 = vadd.f32 %v4046, %v4055
      %v4176 = vadd.f32 %v4047, %v4055
      %v4177 = vadd.f32 %v4048, %v4055
      %v4178 = vadd.f32 %v4049, %v4055
      %v4179 = vadd.f32 %v4050, %v4055
      %v4180 = vadd.f32 %v4051, %v4055
      %v4181 = vadd.f32 %v4052, %v4055
      %v4182 = vadd.f32 %v4053, %v4055
      %v4183 = vadd.f32 %v4054, %v4055
      %v4184 = vmax.f32 %v4056, 0.0
      %v4185 = vmax.f32 %v4057, 0.0
      %v4186 = vmax.f32 %v4058, 0.0
      %v4187 = vmax.f32 %v4059, 0.0
      %v4188 = vmax.f32 %v4060, 0.0
      %v4189 = vmax.f32 %v4061, 0.0
      %v4190 = vmax.f32 %v4062, 0.0
      %v4191 = vmax.f32 %v4063, 0.0
      %v4192 = vmax.f32 %v4064, 0.0
      %v4193 = vmax.f32 %v4065, 0.0
      %v4194 = vmax.f32 %v4066, 0.0
      %v4195 = vmax.f32 %v4067, 0.0
      %v4196 = vmax.f32 %v4068, 0.0
      %v4197 = vmax.f32 %v4069, 0.0
      %v4198 = vmax.f32 %v4070, 0.0
      %v4199 = vmax.f32 %v4071, 0.0
      %v4200 = vmax.f32 %v4072, 0.0
      %v4201 = vmax.f32 %v4073, 0.0
      %v4202 = vmax.f32 %v4074, 0.0
      %v4203 = vmax.f32 %v4075, 0.0
      %v4204 = vmax.f32 %v4076, 0.0
      %v4205 = vmax.f32 %v4077, 0.0
      %v4206 = vmax.f32 %v4078, 0.0
      %v4207 = vmax.f32 %v4079, 0.0
      %v4208 = vmax.f32 %v4080, 0.0
      %v4209 = vmax.f32 %v4081, 0.0
      %v4210 = vmax.f32 %v4082, 0.0
      %v4211 = vmax.f32 %v4083, 0.0
      %v4212 = vmax.f32 %v4084, 0.0
      %v4213 = vmax.f32 %v4085, 0.0
      %v4214 = vmax.f32 %v4086, 0.0
      %v4215 = vmax.f32 %v4087, 0.0
      %v4216 = vmax.f32 %v4088, 0.0
      %v4217 = vmax.f32 %v4089, 0.0
      %v4218 = vmax.f32 %v4090, 0.0
      %v4219 = vmax.f32 %v4091, 0.0
      %v4220 = vmax.f32 %v4092, 0.0
      %v4221 = vmax.f32 %v4093, 0.0
      %v4222 = vmax.f32 %v4094, 0.0
      %v4223 = vmax.f32 %v4095, 0.0
      %v4224 = vmax.f32 %v4096, 0.0
      %v4225 = vmax.f32 %v4097, 0.0
      %v4226 = vmax.f32 %v4098, 0.0
      %v4227 = vmax.f32 %v4099, 0.0
      %v4228 = vmax.f32 %v4100, 0.0
      %v4229 = vmax.f32 %v4101, 0.0
      %v4230 = vmax.f32 %v4102, 0.0
      %v4231 = vmax.f32 %v4103, 0.0
      %v4232 = vmax.f32 %v4104, 0.0
      %v4233 = vmax.f32 %v4105, 0.0
      %v4234 = vmax.f32 %v4106, 0.0
      %v4235 = vmax.f32 %v4107, 0.0
      %v4236 = vmax.f32 %v4108, 0.0
      %v4237 = vmax.f32 %v4109, 0.0
      %v4238 = vmax.f32 %v4110, 0.0
      %v4239 = vmax.f32 %v4111, 0.0
      %v4240 = vmax.f32 %v4112, 0.0
      %v4241 = vmax.f32 %v4113, 0.0
      %v4242 = vmax.f32 %v4114, 0.0
      %v4243 = vmax.f32 %v4115, 0.0
      %v4244 = vmax.f32 %v4116, 0.0
      %v4245 = vmax.f32 %v4117, 0.0
      %v4246 = vmax.f32 %v4118, 0.0
      %v4247 = vmax.f32 %v4119, 0.0
      %v4248 = vmax.f32 %v4120, 0.0
      %v4249 = vmax.f32 %v4121, 0.0
      %v4250 = vmax.f32 %v4122, 0.0
      %v4251 = vmax.f32 %v4123, 0.0
      %v4252 = vmax.f32 %v4124, 0.0
      %v4253 = vmax.f32 %v4125, 0.0
      %v4254 = vmax.f32 %v4126, 0.0
      %v4255 = vmax.f32 %v4127, 0.0
      %v4256 = vmax.f32 %v4128, 0.0
      %v4257 = vmax.f32 %v4129, 0.0
      %v4258 = vmax.f32 %v4130, 0.0
      %v4259 = vmax.f32 %v4131, 0.0
      %v4260 = vmax.f32 %v4132, 0.0
      %v4261 = vmax.f32 %v4133, 0.0
      %v4262 = vmax.f32 %v4134, 0.0
      %v4263 = vmax.f32 %v4135, 0.0
      %v4264 = vmax.f32 %v4136, 0.0
      %v4265 = vmax.f32 %v4137, 0.0
      %v4266 = vmax.f32 %v4138, 0.0
      %v4267 = vmax.f32 %v4139, 0.0
      %v4268 = vmax.f32 %v4140, 0.0
      %v4269 = vmax.f32 %v4141, 0.0
      %v4270 = vmax.f32 %v4142, 0.0
      %v4271 = vmax.f32 %v4143, 0.0
      %v4272 = vmax.f32 %v4144, 0.0
      %v4273 = vmax.f32 %v4145, 0.0
      %v4274 = vmax.f32 %v4146, 0.0
      %v4275 = vmax.f32 %v4147, 0.0
      %v4276 = vmax.f32 %v4148, 0.0
      %v4277 = vmax.f32 %v4149, 0.0
      %v4278 = vmax.f32 %v4150, 0.0
      %v4279 = vmax.f32 %v4151, 0.0
      %v4280 = vmax.f32 %v4152, 0.0
      %v4281 = vmax.f32 %v4153, 0.0
      %v4282 = vmax.f32 %v4154, 0.0
      %v4283 = vmax.f32 %v4155, 0.0
      %v4284 = vmax.f32 %v4156, 0.0
      %v4285 = vmax.f32 %v4157, 0.0
      %v4286 = vmax.f32 %v4158, 0.0
      %v4287 = vmax.f32 %v4159, 0.0
      %v4288 = vmax.f32 %v4160, 0.0
      %v4289 = vmax.f32 %v4161, 0.0
      %v4290 = vmax.f32 %v4162, 0.0
      %v4291 = vmax.f32 %v4163, 0.0
      %v4292 = vmax.f32 %v4164, 0.0
      %v4293 = vmax.f32 %v4165, 0.0
      %v4294 = vmax.f32 %v4166, 0.0
      %v4295 = vmax.f32 %v4167, 0.0
      %v4296 = vmax.f32 %v4168, 0.0
      %v4297 = vmax.f32 %v4169, 0.0
      %v4298 = vmax.f32 %v4170, 0.0
      %v4299 = vmax.f32 %v4171, 0.0
      %v4300 = vmax.f32 %v4172, 0.0
      %v4301 = vmax.f32 %v4173, 0.0
      %v4302 = vmax.f32 %v4174, 0.0
      %v4303 = vmax.f32 %v4175, 0.0
      %v4304 = vmax.f32 %v4176, 0.0
      %v4305 = vmax.f32 %v4177, 0.0
      %v4306 = vmax.f32 %v4178, 0.0
      %v4307 = vmax.f32 %v4179, 0.0
      %v4308 = vmax.f32 %v4180, 0.0
      %v4309 = vmax.f32 %v4181, 0.0
      %v4310 = vmax.f32 %v4182, 0.0
      %v4311 = vmax.f32 %v4183, 0.0
      %v4312 = vperm.slane %v314, 3
      %v4314 = vsel %vm1102, %v4184, 0
      %v4317 = vsel %vm1102, %v4185, 0
      %v4320 = vsel %vm1102, %v4186, 0
      %v4323 = vsel %vm1102, %v4187, 0
      %v4326 = vsel %vm1102, %v4188, 0
      %v4329 = vsel %vm1102, %v4189, 0
      %v4332 = vsel %vm1102, %v4190, 0
      %v4335 = vsel %vm1102, %v4191, 0
      %v4338 = vsel %vm1102, %v4192, 0
      %v4341 = vsel %vm1102, %v4193, 0
      %v4344 = vsel %vm1102, %v4194, 0
      %v4347 = vsel %vm1102, %v4195, 0
      %v4350 = vsel %vm1102, %v4196, 0
      %v4353 = vsel %vm1102, %v4197, 0
      %v4356 = vsel %vm1102, %v4198, 0
      %v4359 = vsel %vm1102, %v4199, 0
      %v4362 = vsel %vm1102, %v4200, 0
      %v4365 = vsel %vm1102, %v4201, 0
      %v4368 = vsel %vm1102, %v4202, 0
      %v4371 = vsel %vm1102, %v4203, 0
      %v4374 = vsel %vm1102, %v4204, 0
      %v4377 = vsel %vm1102, %v4205, 0
      %v4380 = vsel %vm1102, %v4206, 0
      %v4383 = vsel %vm1102, %v4207, 0
      %v4386 = vsel %vm1102, %v4208, 0
      %v4389 = vsel %vm1102, %v4209, 0
      %v4392 = vsel %vm1102, %v4210, 0
      %v4395 = vsel %vm1102, %v4211, 0
      %v4398 = vsel %vm1102, %v4212, 0
      %v4401 = vsel %vm1102, %v4213, 0
      %v4404 = vsel %vm1102, %v4214, 0
      %v4407 = vsel %vm1102, %v4215, 0
      %v4410 = vsel %vm1102, %v4216, 0
      %v4413 = vsel %vm1102, %v4217, 0
      %v4416 = vsel %vm1102, %v4218, 0
      %v4419 = vsel %vm1102, %v4219, 0
      %v4422 = vsel %vm1102, %v4220, 0
      %v4425 = vsel %vm1102, %v4221, 0
      %v4428 = vsel %vm1102, %v4222, 0
      %v4431 = vsel %vm1102, %v4223, 0
      %v4434 = vsel %vm1102, %v4224, 0
      %v4437 = vsel %vm1102, %v4225, 0
      %v4440 = vsel %vm1102, %v4226, 0
      %v4443 = vsel %vm1102, %v4227, 0
      %v4446 = vsel %vm1102, %v4228, 0
      %v4449 = vsel %vm1102, %v4229, 0
      %v4452 = vsel %vm1102, %v4230, 0
      %v4455 = vsel %vm1102, %v4231, 0
      %v4458 = vsel %vm1102, %v4232, 0
      %v4461 = vsel %vm1102, %v4233, 0
      %v4464 = vsel %vm1102, %v4234, 0
      %v4467 = vsel %vm1102, %v4235, 0
      %v4470 = vsel %vm1102, %v4236, 0
      %v4473 = vsel %vm1102, %v4237, 0
      %v4476 = vsel %vm1102, %v4238, 0
      %v4479 = vsel %vm1102, %v4239, 0
      %v4482 = vsel %vm1102, %v4240, 0
      %v4485 = vsel %vm1102, %v4241, 0
      %v4488 = vsel %vm1102, %v4242, 0
      %v4491 = vsel %vm1102, %v4243, 0
      %v4494 = vsel %vm1102, %v4244, 0
      %v4497 = vsel %vm1102, %v4245, 0
      %v4500 = vsel %vm1102, %v4246, 0
      %v4503 = vsel %vm1102, %v4247, 0
      %v4506 = vsel %vm1102, %v4248, 0
      %v4509 = vsel %vm1102, %v4249, 0
      %v4512 = vsel %vm1102, %v4250, 0
      %v4515 = vsel %vm1102, %v4251, 0
      %v4518 = vsel %vm1102, %v4252, 0
      %v4521 = vsel %vm1102, %v4253, 0
      %v4524 = vsel %vm1102, %v4254, 0
      %v4527 = vsel %vm1102, %v4255, 0
      %v4530 = vsel %vm1102, %v4256, 0
      %v4533 = vsel %vm1102, %v4257, 0
      %v4536 = vsel %vm1102, %v4258, 0
      %v4539 = vsel %vm1102, %v4259, 0
      %v4542 = vsel %vm1102, %v4260, 0
      %v4545 = vsel %vm1102, %v4261, 0
      %v4548 = vsel %vm1102, %v4262, 0
      %v4551 = vsel %vm1102, %v4263, 0
      %v4554 = vsel %vm1102, %v4264, 0
      %v4557 = vsel %vm1102, %v4265, 0
      %v4560 = vsel %vm1102, %v4266, 0
      %v4563 = vsel %vm1102, %v4267, 0
      %v4566 = vsel %vm1102, %v4268, 0
      %v4569 = vsel %vm1102, %v4269, 0
      %v4572 = vsel %vm1102, %v4270, 0
      %v4575 = vsel %vm1102, %v4271, 0
      %v4578 = vsel %vm1102, %v4272, 0
      %v4581 = vsel %vm1102, %v4273, 0
      %v4584 = vsel %vm1102, %v4274, 0
      %v4587 = vsel %vm1102, %v4275, 0
      %v4590 = vsel %vm1102, %v4276, 0
      %v4593 = vsel %vm1102, %v4277, 0
      %v4596 = vsel %vm1102, %v4278, 0
      %v4599 = vsel %vm1102, %v4279, 0
      %v4602 = vsel %vm1102, %v4280, 0
      %v4605 = vsel %vm1102, %v4281, 0
      %v4608 = vsel %vm1102, %v4282, 0
      %v4611 = vsel %vm1102, %v4283, 0
      %v4614 = vsel %vm1102, %v4284, 0
      %v4617 = vsel %vm1102, %v4285, 0
      %v4620 = vsel %vm1102, %v4286, 0
      %v4623 = vsel %vm1102, %v4287, 0
      %v4626 = vsel %vm1102, %v4288, 0
      %v4629 = vsel %vm1102, %v4289, 0
      %v4632 = vsel %vm1102, %v4290, 0
      %v4635 = vsel %vm1102, %v4291, 0
      %v4638 = vsel %vm1102, %v4292, 0
      %v4641 = vsel %vm1102, %v4293, 0
      %v4644 = vsel %vm1102, %v4294, 0
      %v4647 = vsel %vm1102, %v4295, 0
      %v4650 = vsel %vm1102, %v4296, 0
      %v4653 = vsel %vm1102, %v4297, 0
      %v4656 = vsel %vm1102, %v4298, 0
      %v4659 = vsel %vm1102, %v4299, 0
      %v4662 = vsel %vm1102, %v4300, 0
      %v4665 = vsel %vm1102, %v4301, 0
      %v4668 = vsel %vm1102, %v4302, 0
      %v4671 = vsel %vm1102, %v4303, 0
      %v4674 = vsel %vm1102, %v4304, 0
      %v4677 = vsel %vm1102, %v4305, 0
      %v4680 = vsel %vm1102, %v4306, 0
      %v4683 = vsel %vm1102, %v4307, 0
      %v4686 = vsel %vm1102, %v4308, 0
      %v4689 = vsel %vm1102, %v4309, 0
      %v4692 = vsel %vm1102, %v4310, 0
      %v4695 = vsel %vm1102, %v4311, 0
      %4697 = vmatpush.msra.mxu0 0.0
      %4698 = vmatpush.msra.mxu0 0.0
      %4699 = vmatpush.msra.mxu0 0.0
      %4700 = vmatpush.msra.mxu0 0.0
      %4701 = vmatpush.msra.mxu0 0.0
      %4702 = vmatpush.msra.mxu0 0.0
      %4703 = vmatpush.msra.mxu0 0.0
      %4704 = vmatpush.msra.mxu0 0.0
      %4705 = vmatpush.msra.mxu0 0.0
      %4706 = vmatpush.msra.mxu0 0.0
      %4707 = vmatpush.msra.mxu0 0.0
      %4708 = vmatpush.msra.mxu0 0.0
      %4709 = vmatpush.msra.mxu0 %v308
      %4710 = vmatpush.msra.mxu0 %v307
      %4711 = vmatpush.msra.mxu0 %v306
      %4712 = vmatpush.msra.mxu0 %v305
      %4713 = vmatmul.f32.gmra.mxu0 %v4314
      %v4714 = vpop.f32.mrf.mxu0
      %v4715 = vadd.f32 %v4312, %v4714
      %4716 = vmatmul.f32.gmra.mxu0 %v4317
      %v4717 = vpop.f32.mrf.mxu0
      %v4718 = vadd.f32 %v4312, %v4717
      %4719 = vmatmul.f32.gmra.mxu0 %v4320
      %v4720 = vpop.f32.mrf.mxu0
      %v4721 = vadd.f32 %v4312, %v4720
      %4722 = vmatmul.f32.gmra.mxu0 %v4323
      %v4723 = vpop.f32.mrf.mxu0
      %v4724 = vadd.f32 %v4312, %v4723
      %4725 = vmatmul.f32.gmra.mxu0 %v4326
      %v4726 = vpop.f32.mrf.mxu0
      %v4727 = vadd.f32 %v4312, %v4726
      %4728 = vmatmul.f32.gmra.mxu0 %v4329
      %v4729 = vpop.f32.mrf.mxu0
      %v4730 = vadd.f32 %v4312, %v4729
      %4731 = vmatmul.f32.gmra.mxu0 %v4332
      %v4732 = vpop.f32.mrf.mxu0
      %v4733 = vadd.f32 %v4312, %v4732
      %4734 = vmatmul.f32.gmra.mxu0 %v4335
      %v4735 = vpop.f32.mrf.mxu0
      %v4736 = vadd.f32 %v4312, %v4735
      %4737 = vmatmul.f32.gmra.mxu0 %v4338
      %v4738 = vpop.f32.mrf.mxu0
      %v4739 = vadd.f32 %v4312, %v4738
      %4740 = vmatmul.f32.gmra.mxu0 %v4341
      %v4741 = vpop.f32.mrf.mxu0
      %v4742 = vadd.f32 %v4312, %v4741
      %4743 = vmatmul.f32.gmra.mxu0 %v4344
      %v4744 = vpop.f32.mrf.mxu0
      %v4745 = vadd.f32 %v4312, %v4744
      %4746 = vmatmul.f32.gmra.mxu0 %v4347
      %v4747 = vpop.f32.mrf.mxu0
      %v4748 = vadd.f32 %v4312, %v4747
      %4749 = vmatmul.f32.gmra.mxu0 %v4350
      %v4750 = vpop.f32.mrf.mxu0
      %v4751 = vadd.f32 %v4312, %v4750
      %4752 = vmatmul.f32.gmra.mxu0 %v4353
      %v4753 = vpop.f32.mrf.mxu0
      %v4754 = vadd.f32 %v4312, %v4753
      %4755 = vmatmul.f32.gmra.mxu0 %v4356
      %v4756 = vpop.f32.mrf.mxu0
      %v4757 = vadd.f32 %v4312, %v4756
      %4758 = vmatmul.f32.gmra.mxu0 %v4359
      %v4759 = vpop.f32.mrf.mxu0
      %v4760 = vadd.f32 %v4312, %v4759
      %4761 = vmatmul.f32.gmra.mxu0 %v4362
      %v4762 = vpop.f32.mrf.mxu0
      %v4763 = vadd.f32 %v4312, %v4762
      %4764 = vmatmul.f32.gmra.mxu0 %v4365
      %v4765 = vpop.f32.mrf.mxu0
      %v4766 = vadd.f32 %v4312, %v4765
      %4767 = vmatmul.f32.gmra.mxu0 %v4368
      %v4768 = vpop.f32.mrf.mxu0
      %v4769 = vadd.f32 %v4312, %v4768
      %4770 = vmatmul.f32.gmra.mxu0 %v4371
      %v4771 = vpop.f32.mrf.mxu0
      %v4772 = vadd.f32 %v4312, %v4771
      %4773 = vmatmul.f32.gmra.mxu0 %v4374
      %v4774 = vpop.f32.mrf.mxu0
      %v4775 = vadd.f32 %v4312, %v4774
      %4776 = vmatmul.f32.gmra.mxu0 %v4377
      %v4777 = vpop.f32.mrf.mxu0
      %v4778 = vadd.f32 %v4312, %v4777
      %4779 = vmatmul.f32.gmra.mxu0 %v4380
      %v4780 = vpop.f32.mrf.mxu0
      %v4781 = vadd.f32 %v4312, %v4780
      %4782 = vmatmul.f32.gmra.mxu0 %v4383
      %v4783 = vpop.f32.mrf.mxu0
      %v4784 = vadd.f32 %v4312, %v4783
      %4785 = vmatmul.f32.gmra.mxu0 %v4386
      %v4786 = vpop.f32.mrf.mxu0
      %v4787 = vadd.f32 %v4312, %v4786
      %4788 = vmatmul.f32.gmra.mxu0 %v4389
      %v4789 = vpop.f32.mrf.mxu0
      %v4790 = vadd.f32 %v4312, %v4789
      %4791 = vmatmul.f32.gmra.mxu0 %v4392
      %v4792 = vpop.f32.mrf.mxu0
      %v4793 = vadd.f32 %v4312, %v4792
      %4794 = vmatmul.f32.gmra.mxu0 %v4395
      %v4795 = vpop.f32.mrf.mxu0
      %v4796 = vadd.f32 %v4312, %v4795
      %4797 = vmatmul.f32.gmra.mxu0 %v4398
      %v4798 = vpop.f32.mrf.mxu0
      %v4799 = vadd.f32 %v4312, %v4798
      %4800 = vmatmul.f32.gmra.mxu0 %v4401
      %v4801 = vpop.f32.mrf.mxu0
      %v4802 = vadd.f32 %v4312, %v4801
      %4803 = vmatmul.f32.gmra.mxu0 %v4404
      %v4804 = vpop.f32.mrf.mxu0
      %v4805 = vadd.f32 %v4312, %v4804
      %4806 = vmatmul.f32.gmra.mxu0 %v4407
      %v4807 = vpop.f32.mrf.mxu0
      %v4808 = vadd.f32 %v4312, %v4807
      %4809 = vmatmul.f32.gmra.mxu0 %v4410
      %v4810 = vpop.f32.mrf.mxu0
      %v4811 = vadd.f32 %v4312, %v4810
      %4812 = vmatmul.f32.gmra.mxu0 %v4413
      %v4813 = vpop.f32.mrf.mxu0
      %v4814 = vadd.f32 %v4312, %v4813
      %4815 = vmatmul.f32.gmra.mxu0 %v4416
      %v4816 = vpop.f32.mrf.mxu0
      %v4817 = vadd.f32 %v4312, %v4816
      %4818 = vmatmul.f32.gmra.mxu0 %v4419
      %v4819 = vpop.f32.mrf.mxu0
      %v4820 = vadd.f32 %v4312, %v4819
      %4821 = vmatmul.f32.gmra.mxu0 %v4422
      %v4822 = vpop.f32.mrf.mxu0
      %v4823 = vadd.f32 %v4312, %v4822
      %4824 = vmatmul.f32.gmra.mxu0 %v4425
      %v4825 = vpop.f32.mrf.mxu0
      %v4826 = vadd.f32 %v4312, %v4825
      %4827 = vmatmul.f32.gmra.mxu0 %v4428
      %v4828 = vpop.f32.mrf.mxu0
      %v4829 = vadd.f32 %v4312, %v4828
      %4830 = vmatmul.f32.gmra.mxu0 %v4431
      %v4831 = vpop.f32.mrf.mxu0
      %v4832 = vadd.f32 %v4312, %v4831
      %4833 = vmatmul.f32.gmra.mxu0 %v4434
      %v4834 = vpop.f32.mrf.mxu0
      %v4835 = vadd.f32 %v4312, %v4834
      %4836 = vmatmul.f32.gmra.mxu0 %v4437
      %v4837 = vpop.f32.mrf.mxu0
      %v4838 = vadd.f32 %v4312, %v4837
      %4839 = vmatmul.f32.gmra.mxu0 %v4440
      %v4840 = vpop.f32.mrf.mxu0
      %v4841 = vadd.f32 %v4312, %v4840
      %4842 = vmatmul.f32.gmra.mxu0 %v4443
      %v4843 = vpop.f32.mrf.mxu0
      %v4844 = vadd.f32 %v4312, %v4843
      %4845 = vmatmul.f32.gmra.mxu0 %v4446
      %v4846 = vpop.f32.mrf.mxu0
      %v4847 = vadd.f32 %v4312, %v4846
      %4848 = vmatmul.f32.gmra.mxu0 %v4449
      %v4849 = vpop.f32.mrf.mxu0
      %v4850 = vadd.f32 %v4312, %v4849
      %4851 = vmatmul.f32.gmra.mxu0 %v4452
      %v4852 = vpop.f32.mrf.mxu0
      %v4853 = vadd.f32 %v4312, %v4852
      %4854 = vmatmul.f32.gmra.mxu0 %v4455
      %v4855 = vpop.f32.mrf.mxu0
      %v4856 = vadd.f32 %v4312, %v4855
      %4857 = vmatmul.f32.gmra.mxu0 %v4458
      %v4858 = vpop.f32.mrf.mxu0
      %v4859 = vadd.f32 %v4312, %v4858
      %4860 = vmatmul.f32.gmra.mxu0 %v4461
      %v4861 = vpop.f32.mrf.mxu0
      %v4862 = vadd.f32 %v4312, %v4861
      %4863 = vmatmul.f32.gmra.mxu0 %v4464
      %v4864 = vpop.f32.mrf.mxu0
      %v4865 = vadd.f32 %v4312, %v4864
      %4866 = vmatmul.f32.gmra.mxu0 %v4467
      %v4867 = vpop.f32.mrf.mxu0
      %v4868 = vadd.f32 %v4312, %v4867
      %4869 = vmatmul.f32.gmra.mxu0 %v4470
      %v4870 = vpop.f32.mrf.mxu0
      %v4871 = vadd.f32 %v4312, %v4870
      %4872 = vmatmul.f32.gmra.mxu0 %v4473
      %v4873 = vpop.f32.mrf.mxu0
      %v4874 = vadd.f32 %v4312, %v4873
      %4875 = vmatmul.f32.gmra.mxu0 %v4476
      %v4876 = vpop.f32.mrf.mxu0
      %v4877 = vadd.f32 %v4312, %v4876
      %4878 = vmatmul.f32.gmra.mxu0 %v4479
      %v4879 = vpop.f32.mrf.mxu0
      %v4880 = vadd.f32 %v4312, %v4879
      %4881 = vmatmul.f32.gmra.mxu0 %v4482
      %v4882 = vpop.f32.mrf.mxu0
      %v4883 = vadd.f32 %v4312, %v4882
      %4884 = vmatmul.f32.gmra.mxu0 %v4485
      %v4885 = vpop.f32.mrf.mxu0
      %v4886 = vadd.f32 %v4312, %v4885
      %4887 = vmatmul.f32.gmra.mxu0 %v4488
      %v4888 = vpop.f32.mrf.mxu0
      %v4889 = vadd.f32 %v4312, %v4888
      %4890 = vmatmul.f32.gmra.mxu0 %v4491
      %v4891 = vpop.f32.mrf.mxu0
      %v4892 = vadd.f32 %v4312, %v4891
      %4893 = vmatmul.f32.gmra.mxu0 %v4494
      %v4894 = vpop.f32.mrf.mxu0
      %v4895 = vadd.f32 %v4312, %v4894
      %4896 = vmatmul.f32.gmra.mxu0 %v4497
      %v4897 = vpop.f32.mrf.mxu0
      %v4898 = vadd.f32 %v4312, %v4897
      %4899 = vmatmul.f32.gmra.mxu0 %v4500
      %v4900 = vpop.f32.mrf.mxu0
      %v4901 = vadd.f32 %v4312, %v4900
      %4902 = vmatmul.f32.gmra.mxu0 %v4503
      %v4903 = vpop.f32.mrf.mxu0
      %v4904 = vadd.f32 %v4312, %v4903
      %4905 = vmatmul.f32.gmra.mxu0 %v4506
      %v4906 = vpop.f32.mrf.mxu0
      %v4907 = vadd.f32 %v4312, %v4906
      %4908 = vmatmul.f32.gmra.mxu0 %v4509
      %v4909 = vpop.f32.mrf.mxu0
      %v4910 = vadd.f32 %v4312, %v4909
      %4911 = vmatmul.f32.gmra.mxu0 %v4512
      %v4912 = vpop.f32.mrf.mxu0
      %v4913 = vadd.f32 %v4312, %v4912
      %4914 = vmatmul.f32.gmra.mxu0 %v4515
      %v4915 = vpop.f32.mrf.mxu0
      %v4916 = vadd.f32 %v4312, %v4915
      %4917 = vmatmul.f32.gmra.mxu0 %v4518
      %v4918 = vpop.f32.mrf.mxu0
      %v4919 = vadd.f32 %v4312, %v4918
      %4920 = vmatmul.f32.gmra.mxu0 %v4521
      %v4921 = vpop.f32.mrf.mxu0
      %v4922 = vadd.f32 %v4312, %v4921
      %4923 = vmatmul.f32.gmra.mxu0 %v4524
      %v4924 = vpop.f32.mrf.mxu0
      %v4925 = vadd.f32 %v4312, %v4924
      %4926 = vmatmul.f32.gmra.mxu0 %v4527
      %v4927 = vpop.f32.mrf.mxu0
      %v4928 = vadd.f32 %v4312, %v4927
      %4929 = vmatmul.f32.gmra.mxu0 %v4530
      %v4930 = vpop.f32.mrf.mxu0
      %v4931 = vadd.f32 %v4312, %v4930
      %4932 = vmatmul.f32.gmra.mxu0 %v4533
      %v4933 = vpop.f32.mrf.mxu0
      %v4934 = vadd.f32 %v4312, %v4933
      %4935 = vmatmul.f32.gmra.mxu0 %v4536
      %v4936 = vpop.f32.mrf.mxu0
      %v4937 = vadd.f32 %v4312, %v4936
      %4938 = vmatmul.f32.gmra.mxu0 %v4539
      %v4939 = vpop.f32.mrf.mxu0
      %v4940 = vadd.f32 %v4312, %v4939
      %4941 = vmatmul.f32.gmra.mxu0 %v4542
      %v4942 = vpop.f32.mrf.mxu0
      %v4943 = vadd.f32 %v4312, %v4942
      %4944 = vmatmul.f32.gmra.mxu0 %v4545
      %v4945 = vpop.f32.mrf.mxu0
      %v4946 = vadd.f32 %v4312, %v4945
      %4947 = vmatmul.f32.gmra.mxu0 %v4548
      %v4948 = vpop.f32.mrf.mxu0
      %v4949 = vadd.f32 %v4312, %v4948
      %4950 = vmatmul.f32.gmra.mxu0 %v4551
      %v4951 = vpop.f32.mrf.mxu0
      %v4952 = vadd.f32 %v4312, %v4951
      %4953 = vmatmul.f32.gmra.mxu0 %v4554
      %v4954 = vpop.f32.mrf.mxu0
      %v4955 = vadd.f32 %v4312, %v4954
      %4956 = vmatmul.f32.gmra.mxu0 %v4557
      %v4957 = vpop.f32.mrf.mxu0
      %v4958 = vadd.f32 %v4312, %v4957
      %4959 = vmatmul.f32.gmra.mxu0 %v4560
      %v4960 = vpop.f32.mrf.mxu0
      %v4961 = vadd.f32 %v4312, %v4960
      %4962 = vmatmul.f32.gmra.mxu0 %v4563
      %v4963 = vpop.f32.mrf.mxu0
      %v4964 = vadd.f32 %v4312, %v4963
      %4965 = vmatmul.f32.gmra.mxu0 %v4566
      %v4966 = vpop.f32.mrf.mxu0
      %v4967 = vadd.f32 %v4312, %v4966
      %4968 = vmatmul.f32.gmra.mxu0 %v4569
      %v4969 = vpop.f32.mrf.mxu0
      %v4970 = vadd.f32 %v4312, %v4969
      %4971 = vmatmul.f32.gmra.mxu0 %v4572
      %v4972 = vpop.f32.mrf.mxu0
      %v4973 = vadd.f32 %v4312, %v4972
      %4974 = vmatmul.f32.gmra.mxu0 %v4575
      %v4975 = vpop.f32.mrf.mxu0
      %v4976 = vadd.f32 %v4312, %v4975
      %4977 = vmatmul.f32.gmra.mxu0 %v4578
      %v4978 = vpop.f32.mrf.mxu0
      %v4979 = vadd.f32 %v4312, %v4978
      %4980 = vmatmul.f32.gmra.mxu0 %v4581
      %v4981 = vpop.f32.mrf.mxu0
      %v4982 = vadd.f32 %v4312, %v4981
      %4983 = vmatmul.f32.gmra.mxu0 %v4584
      %v4984 = vpop.f32.mrf.mxu0
      %v4985 = vadd.f32 %v4312, %v4984
      %4986 = vmatmul.f32.gmra.mxu0 %v4587
      %v4987 = vpop.f32.mrf.mxu0
      %v4988 = vadd.f32 %v4312, %v4987
      %4989 = vmatmul.f32.gmra.mxu0 %v4590
      %v4990 = vpop.f32.mrf.mxu0
      %v4991 = vadd.f32 %v4312, %v4990
      %4992 = vmatmul.f32.gmra.mxu0 %v4593
      %v4993 = vpop.f32.mrf.mxu0
      %v4994 = vadd.f32 %v4312, %v4993
      %4995 = vmatmul.f32.gmra.mxu0 %v4596
      %v4996 = vpop.f32.mrf.mxu0
      %v4997 = vadd.f32 %v4312, %v4996
      %4998 = vmatmul.f32.gmra.mxu0 %v4599
      %v4999 = vpop.f32.mrf.mxu0
      %v5000 = vadd.f32 %v4312, %v4999
      %5001 = vmatmul.f32.gmra.mxu0 %v4602
      %v5002 = vpop.f32.mrf.mxu0
      %v5003 = vadd.f32 %v4312, %v5002
      %5004 = vmatmul.f32.gmra.mxu0 %v4605
      %v5005 = vpop.f32.mrf.mxu0
      %v5006 = vadd.f32 %v4312, %v5005
      %5007 = vmatmul.f32.gmra.mxu0 %v4608
      %v5008 = vpop.f32.mrf.mxu0
      %v5009 = vadd.f32 %v4312, %v5008
      %5010 = vmatmul.f32.gmra.mxu0 %v4611
      %v5011 = vpop.f32.mrf.mxu0
      %v5012 = vadd.f32 %v4312, %v5011
      %5013 = vmatmul.f32.gmra.mxu0 %v4614
      %v5014 = vpop.f32.mrf.mxu0
      %v5015 = vadd.f32 %v4312, %v5014
      %5016 = vmatmul.f32.gmra.mxu0 %v4617
      %v5017 = vpop.f32.mrf.mxu0
      %v5018 = vadd.f32 %v4312, %v5017
      %5019 = vmatmul.f32.gmra.mxu0 %v4620
      %v5020 = vpop.f32.mrf.mxu0
      %v5021 = vadd.f32 %v4312, %v5020
      %5022 = vmatmul.f32.gmra.mxu0 %v4623
      %v5023 = vpop.f32.mrf.mxu0
      %v5024 = vadd.f32 %v4312, %v5023
      %5025 = vmatmul.f32.gmra.mxu0 %v4626
      %v5026 = vpop.f32.mrf.mxu0
      %v5027 = vadd.f32 %v4312, %v5026
      %5028 = vmatmul.f32.gmra.mxu0 %v4629
      %v5029 = vpop.f32.mrf.mxu0
      %v5030 = vadd.f32 %v4312, %v5029
      %5031 = vmatmul.f32.gmra.mxu0 %v4632
      %v5032 = vpop.f32.mrf.mxu0
      %v5033 = vadd.f32 %v4312, %v5032
      %5034 = vmatmul.f32.gmra.mxu0 %v4635
      %v5035 = vpop.f32.mrf.mxu0
      %v5036 = vadd.f32 %v4312, %v5035
      %5037 = vmatmul.f32.gmra.mxu0 %v4638
      %v5038 = vpop.f32.mrf.mxu0
      %v5039 = vadd.f32 %v4312, %v5038
      %5040 = vmatmul.f32.gmra.mxu0 %v4641
      %v5041 = vpop.f32.mrf.mxu0
      %v5042 = vadd.f32 %v4312, %v5041
      %5043 = vmatmul.f32.gmra.mxu0 %v4644
      %v5044 = vpop.f32.mrf.mxu0
      %v5045 = vadd.f32 %v4312, %v5044
      %5046 = vmatmul.f32.gmra.mxu0 %v4647
      %v5047 = vpop.f32.mrf.mxu0
      %v5048 = vadd.f32 %v4312, %v5047
      %5049 = vmatmul.f32.gmra.mxu0 %v4650
      %v5050 = vpop.f32.mrf.mxu0
      %v5051 = vadd.f32 %v4312, %v5050
      %5052 = vmatmul.f32.gmra.mxu0 %v4653
      %v5053 = vpop.f32.mrf.mxu0
      %v5054 = vadd.f32 %v4312, %v5053
      %5055 = vmatmul.f32.gmra.mxu0 %v4656
      %v5056 = vpop.f32.mrf.mxu0
      %v5057 = vadd.f32 %v4312, %v5056
      %5058 = vmatmul.f32.gmra.mxu0 %v4659
      %v5059 = vpop.f32.mrf.mxu0
      %v5060 = vadd.f32 %v4312, %v5059
      %5061 = vmatmul.f32.gmra.mxu0 %v4662
      %v5062 = vpop.f32.mrf.mxu0
      %v5063 = vadd.f32 %v4312, %v5062
      %5064 = vmatmul.f32.gmra.mxu0 %v4665
      %v5065 = vpop.f32.mrf.mxu0
      %v5066 = vadd.f32 %v4312, %v5065
      %5067 = vmatmul.f32.gmra.mxu0 %v4668
      %v5068 = vpop.f32.mrf.mxu0
      %v5069 = vadd.f32 %v4312, %v5068
      %5070 = vmatmul.f32.gmra.mxu0 %v4671
      %v5071 = vpop.f32.mrf.mxu0
      %v5072 = vadd.f32 %v4312, %v5071
      %5073 = vmatmul.f32.gmra.mxu0 %v4674
      %v5074 = vpop.f32.mrf.mxu0
      %v5075 = vadd.f32 %v4312, %v5074
      %5076 = vmatmul.f32.gmra.mxu0 %v4677
      %v5077 = vpop.f32.mrf.mxu0
      %v5078 = vadd.f32 %v4312, %v5077
      %5079 = vmatmul.f32.gmra.mxu0 %v4680
      %v5080 = vpop.f32.mrf.mxu0
      %v5081 = vadd.f32 %v4312, %v5080
      %5082 = vmatmul.f32.gmra.mxu0 %v4683
      %v5083 = vpop.f32.mrf.mxu0
      %v5084 = vadd.f32 %v4312, %v5083
      %5085 = vmatmul.f32.gmra.mxu0 %v4686
      %v5086 = vpop.f32.mrf.mxu0
      %v5087 = vadd.f32 %v4312, %v5086
      %5088 = vmatmul.f32.gmra.mxu0 %v4689
      %v5089 = vpop.f32.mrf.mxu0
      %v5090 = vadd.f32 %v4312, %v5089
      %5091 = vmatmul.f32.gmra.mxu0 %v4692
      %v5092 = vpop.f32.mrf.mxu0
      %v5093 = vadd.f32 %v4312, %v5092
      %5094 = vmatmul.f32.gmra.mxu0 %v4695
      %v5095 = vpop.f32.mrf.mxu0
      %v5096 = vadd.f32 %v4312, %v5095
      %5097 = vdwg.mxu0
      %v5098 = vsel %vm1102, %v4715, 0.0
      %5099 = vadd.xlane.f32.xlu0 %v5098
      %v5100 = vpop.xlane.xlu0 %5099
      %v5101 = vsel %vm1102, %v4718, 0.0
      %5102 = vadd.xlane.f32.xlu0 %v5101
      %v5103 = vpop.xlane.xlu0 %5102
      %v5104 = vsel %vm1102, %v4721, 0.0
      %5105 = vadd.xlane.f32.xlu0 %v5104
      %v5106 = vpop.xlane.xlu0 %5105
      %v5107 = vsel %vm1102, %v4724, 0.0
      %5108 = vadd.xlane.f32.xlu0 %v5107
      %v5109 = vpop.xlane.xlu0 %5108
      %v5110 = vsel %vm1102, %v4727, 0.0
      %5111 = vadd.xlane.f32.xlu0 %v5110
      %v5112 = vpop.xlane.xlu0 %5111
      %v5113 = vsel %vm1102, %v4730, 0.0
      %5114 = vadd.xlane.f32.xlu0 %v5113
      %v5115 = vpop.xlane.xlu0 %5114
      %v5116 = vsel %vm1102, %v4733, 0.0
      %5117 = vadd.xlane.f32.xlu0 %v5116
      %v5118 = vpop.xlane.xlu0 %5117
      %v5119 = vsel %vm1102, %v4736, 0.0
      %5120 = vadd.xlane.f32.xlu0 %v5119
      %v5121 = vpop.xlane.xlu0 %5120
      %v5122 = vsel %vm1102, %v4739, 0.0
      %5123 = vadd.xlane.f32.xlu0 %v5122
      %v5124 = vpop.xlane.xlu0 %5123
      %v5125 = vsel %vm1102, %v4742, 0.0
      %5126 = vadd.xlane.f32.xlu0 %v5125
      %v5127 = vpop.xlane.xlu0 %5126
      %v5128 = vsel %vm1102, %v4745, 0.0
      %5129 = vadd.xlane.f32.xlu0 %v5128
      %v5130 = vpop.xlane.xlu0 %5129
      %v5131 = vsel %vm1102, %v4748, 0.0
      %5132 = vadd.xlane.f32.xlu0 %v5131
      %v5133 = vpop.xlane.xlu0 %5132
      %v5134 = vsel %vm1102, %v4751, 0.0
      %5135 = vadd.xlane.f32.xlu0 %v5134
      %v5136 = vpop.xlane.xlu0 %5135
      %v5137 = vsel %vm1102, %v4754, 0.0
      %5138 = vadd.xlane.f32.xlu0 %v5137
      %v5139 = vpop.xlane.xlu0 %5138
      %v5140 = vsel %vm1102, %v4757, 0.0
      %5141 = vadd.xlane.f32.xlu0 %v5140
      %v5142 = vpop.xlane.xlu0 %5141
      %v5143 = vsel %vm1102, %v4760, 0.0
      %5144 = vadd.xlane.f32.xlu0 %v5143
      %v5145 = vpop.xlane.xlu0 %5144
      %v5146 = vsel %vm1102, %v4763, 0.0
      %5147 = vadd.xlane.f32.xlu0 %v5146
      %v5148 = vpop.xlane.xlu0 %5147
      %v5149 = vsel %vm1102, %v4766, 0.0
      %5150 = vadd.xlane.f32.xlu0 %v5149
      %v5151 = vpop.xlane.xlu0 %5150
      %v5152 = vsel %vm1102, %v4769, 0.0
      %5153 = vadd.xlane.f32.xlu0 %v5152
      %v5154 = vpop.xlane.xlu0 %5153
      %v5155 = vsel %vm1102, %v4772, 0.0
      %5156 = vadd.xlane.f32.xlu0 %v5155
      %v5157 = vpop.xlane.xlu0 %5156
      %v5158 = vsel %vm1102, %v4775, 0.0
      %5159 = vadd.xlane.f32.xlu0 %v5158
      %v5160 = vpop.xlane.xlu0 %5159
      %v5161 = vsel %vm1102, %v4778, 0.0
      %5162 = vadd.xlane.f32.xlu0 %v5161
      %v5163 = vpop.xlane.xlu0 %5162
      %v5164 = vsel %vm1102, %v4781, 0.0
      %5165 = vadd.xlane.f32.xlu0 %v5164
      %v5166 = vpop.xlane.xlu0 %5165
      %v5167 = vsel %vm1102, %v4784, 0.0
      %5168 = vadd.xlane.f32.xlu0 %v5167
      %v5169 = vpop.xlane.xlu0 %5168
      %v5170 = vsel %vm1102, %v4787, 0.0
      %5171 = vadd.xlane.f32.xlu0 %v5170
      %v5172 = vpop.xlane.xlu0 %5171
      %v5173 = vsel %vm1102, %v4790, 0.0
      %5174 = vadd.xlane.f32.xlu0 %v5173
      %v5175 = vpop.xlane.xlu0 %5174
      %v5176 = vsel %vm1102, %v4793, 0.0
      %5177 = vadd.xlane.f32.xlu0 %v5176
      %v5178 = vpop.xlane.xlu0 %5177
      %v5179 = vsel %vm1102, %v4796, 0.0
      %5180 = vadd.xlane.f32.xlu0 %v5179
      %v5181 = vpop.xlane.xlu0 %5180
      %v5182 = vsel %vm1102, %v4799, 0.0
      %5183 = vadd.xlane.f32.xlu0 %v5182
      %v5184 = vpop.xlane.xlu0 %5183
      %v5185 = vsel %vm1102, %v4802, 0.0
      %5186 = vadd.xlane.f32.xlu0 %v5185
      %v5187 = vpop.xlane.xlu0 %5186
      %v5188 = vsel %vm1102, %v4805, 0.0
      %5189 = vadd.xlane.f32.xlu0 %v5188
      %v5190 = vpop.xlane.xlu0 %5189
      %v5191 = vsel %vm1102, %v4808, 0.0
      %5192 = vadd.xlane.f32.xlu0 %v5191
      %v5193 = vpop.xlane.xlu0 %5192
      %v5194 = vsel %vm1102, %v4811, 0.0
      %5195 = vadd.xlane.f32.xlu0 %v5194
      %v5196 = vpop.xlane.xlu0 %5195
      %v5197 = vsel %vm1102, %v4814, 0.0
      %5198 = vadd.xlane.f32.xlu0 %v5197
      %v5199 = vpop.xlane.xlu0 %5198
      %v5200 = vsel %vm1102, %v4817, 0.0
      %5201 = vadd.xlane.f32.xlu0 %v5200
      %v5202 = vpop.xlane.xlu0 %5201
      %v5203 = vsel %vm1102, %v4820, 0.0
      %5204 = vadd.xlane.f32.xlu0 %v5203
      %v5205 = vpop.xlane.xlu0 %5204
      %v5206 = vsel %vm1102, %v4823, 0.0
      %5207 = vadd.xlane.f32.xlu0 %v5206
      %v5208 = vpop.xlane.xlu0 %5207
      %v5209 = vsel %vm1102, %v4826, 0.0
      %5210 = vadd.xlane.f32.xlu0 %v5209
      %v5211 = vpop.xlane.xlu0 %5210
      %v5212 = vsel %vm1102, %v4829, 0.0
      %5213 = vadd.xlane.f32.xlu0 %v5212
      %v5214 = vpop.xlane.xlu0 %5213
      %v5215 = vsel %vm1102, %v4832, 0.0
      %5216 = vadd.xlane.f32.xlu0 %v5215
      %v5217 = vpop.xlane.xlu0 %5216
      %v5218 = vsel %vm1102, %v4835, 0.0
      %5219 = vadd.xlane.f32.xlu0 %v5218
      %v5220 = vpop.xlane.xlu0 %5219
      %v5221 = vsel %vm1102, %v4838, 0.0
      %5222 = vadd.xlane.f32.xlu0 %v5221
      %v5223 = vpop.xlane.xlu0 %5222
      %v5224 = vsel %vm1102, %v4841, 0.0
      %5225 = vadd.xlane.f32.xlu0 %v5224
      %v5226 = vpop.xlane.xlu0 %5225
      %v5227 = vsel %vm1102, %v4844, 0.0
      %5228 = vadd.xlane.f32.xlu0 %v5227
      %v5229 = vpop.xlane.xlu0 %5228
      %v5230 = vsel %vm1102, %v4847, 0.0
      %5231 = vadd.xlane.f32.xlu0 %v5230
      %v5232 = vpop.xlane.xlu0 %5231
      %v5233 = vsel %vm1102, %v4850, 0.0
      %5234 = vadd.xlane.f32.xlu0 %v5233
      %v5235 = vpop.xlane.xlu0 %5234
      %v5236 = vsel %vm1102, %v4853, 0.0
      %5237 = vadd.xlane.f32.xlu0 %v5236
      %v5238 = vpop.xlane.xlu0 %5237
      %v5239 = vsel %vm1102, %v4856, 0.0
      %5240 = vadd.xlane.f32.xlu0 %v5239
      %v5241 = vpop.xlane.xlu0 %5240
      %v5242 = vsel %vm1102, %v4859, 0.0
      %5243 = vadd.xlane.f32.xlu0 %v5242
      %v5244 = vpop.xlane.xlu0 %5243
      %v5245 = vsel %vm1102, %v4862, 0.0
      %5246 = vadd.xlane.f32.xlu0 %v5245
      %v5247 = vpop.xlane.xlu0 %5246
      %v5248 = vsel %vm1102, %v4865, 0.0
      %5249 = vadd.xlane.f32.xlu0 %v5248
      %v5250 = vpop.xlane.xlu0 %5249
      %v5251 = vsel %vm1102, %v4868, 0.0
      %5252 = vadd.xlane.f32.xlu0 %v5251
      %v5253 = vpop.xlane.xlu0 %5252
      %v5254 = vsel %vm1102, %v4871, 0.0
      %5255 = vadd.xlane.f32.xlu0 %v5254
      %v5256 = vpop.xlane.xlu0 %5255
      %v5257 = vsel %vm1102, %v4874, 0.0
      %5258 = vadd.xlane.f32.xlu0 %v5257
      %v5259 = vpop.xlane.xlu0 %5258
      %v5260 = vsel %vm1102, %v4877, 0.0
      %5261 = vadd.xlane.f32.xlu0 %v5260
      %v5262 = vpop.xlane.xlu0 %5261
      %v5263 = vsel %vm1102, %v4880, 0.0
      %5264 = vadd.xlane.f32.xlu0 %v5263
      %v5265 = vpop.xlane.xlu0 %5264
      %v5266 = vsel %vm1102, %v4883, 0.0
      %5267 = vadd.xlane.f32.xlu0 %v5266
      %v5268 = vpop.xlane.xlu0 %5267
      %v5269 = vsel %vm1102, %v4886, 0.0
      %5270 = vadd.xlane.f32.xlu0 %v5269
      %v5271 = vpop.xlane.xlu0 %5270
      %v5272 = vsel %vm1102, %v4889, 0.0
      %5273 = vadd.xlane.f32.xlu0 %v5272
      %v5274 = vpop.xlane.xlu0 %5273
      %v5275 = vsel %vm1102, %v4892, 0.0
      %5276 = vadd.xlane.f32.xlu0 %v5275
      %v5277 = vpop.xlane.xlu0 %5276
      %v5278 = vsel %vm1102, %v4895, 0.0
      %5279 = vadd.xlane.f32.xlu0 %v5278
      %v5280 = vpop.xlane.xlu0 %5279
      %v5281 = vsel %vm1102, %v4898, 0.0
      %5282 = vadd.xlane.f32.xlu0 %v5281
      %v5283 = vpop.xlane.xlu0 %5282
      %v5284 = vsel %vm1102, %v4901, 0.0
      %5285 = vadd.xlane.f32.xlu0 %v5284
      %v5286 = vpop.xlane.xlu0 %5285
      %v5287 = vsel %vm1102, %v4904, 0.0
      %5288 = vadd.xlane.f32.xlu0 %v5287
      %v5289 = vpop.xlane.xlu0 %5288
      %v5290 = vsel %vm1102, %v4907, 0.0
      %5291 = vadd.xlane.f32.xlu0 %v5290
      %v5292 = vpop.xlane.xlu0 %5291
      %v5293 = vsel %vm1102, %v4910, 0.0
      %5294 = vadd.xlane.f32.xlu0 %v5293
      %v5295 = vpop.xlane.xlu0 %5294
      %v5296 = vsel %vm1102, %v4913, 0.0
      %5297 = vadd.xlane.f32.xlu0 %v5296
      %v5298 = vpop.xlane.xlu0 %5297
      %v5299 = vsel %vm1102, %v4916, 0.0
      %5300 = vadd.xlane.f32.xlu0 %v5299
      %v5301 = vpop.xlane.xlu0 %5300
      %v5302 = vsel %vm1102, %v4919, 0.0
      %5303 = vadd.xlane.f32.xlu0 %v5302
      %v5304 = vpop.xlane.xlu0 %5303
      %v5305 = vsel %vm1102, %v4922, 0.0
      %5306 = vadd.xlane.f32.xlu0 %v5305
      %v5307 = vpop.xlane.xlu0 %5306
      %v5308 = vsel %vm1102, %v4925, 0.0
      %5309 = vadd.xlane.f32.xlu0 %v5308
      %v5310 = vpop.xlane.xlu0 %5309
      %v5311 = vsel %vm1102, %v4928, 0.0
      %5312 = vadd.xlane.f32.xlu0 %v5311
      %v5313 = vpop.xlane.xlu0 %5312
      %v5314 = vsel %vm1102, %v4931, 0.0
      %5315 = vadd.xlane.f32.xlu0 %v5314
      %v5316 = vpop.xlane.xlu0 %5315
      %v5317 = vsel %vm1102, %v4934, 0.0
      %5318 = vadd.xlane.f32.xlu0 %v5317
      %v5319 = vpop.xlane.xlu0 %5318
      %v5320 = vsel %vm1102, %v4937, 0.0
      %5321 = vadd.xlane.f32.xlu0 %v5320
      %v5322 = vpop.xlane.xlu0 %5321
      %v5323 = vsel %vm1102, %v4940, 0.0
      %5324 = vadd.xlane.f32.xlu0 %v5323
      %v5325 = vpop.xlane.xlu0 %5324
      %v5326 = vsel %vm1102, %v4943, 0.0
      %5327 = vadd.xlane.f32.xlu0 %v5326
      %v5328 = vpop.xlane.xlu0 %5327
      %v5329 = vsel %vm1102, %v4946, 0.0
      %5330 = vadd.xlane.f32.xlu0 %v5329
      %v5331 = vpop.xlane.xlu0 %5330
      %v5332 = vsel %vm1102, %v4949, 0.0
      %5333 = vadd.xlane.f32.xlu0 %v5332
      %v5334 = vpop.xlane.xlu0 %5333
      %v5335 = vsel %vm1102, %v4952, 0.0
      %5336 = vadd.xlane.f32.xlu0 %v5335
      %v5337 = vpop.xlane.xlu0 %5336
      %v5338 = vsel %vm1102, %v4955, 0.0
      %5339 = vadd.xlane.f32.xlu0 %v5338
      %v5340 = vpop.xlane.xlu0 %5339
      %v5341 = vsel %vm1102, %v4958, 0.0
      %5342 = vadd.xlane.f32.xlu0 %v5341
      %v5343 = vpop.xlane.xlu0 %5342
      %v5344 = vsel %vm1102, %v4961, 0.0
      %5345 = vadd.xlane.f32.xlu0 %v5344
      %v5346 = vpop.xlane.xlu0 %5345
      %v5347 = vsel %vm1102, %v4964, 0.0
      %5348 = vadd.xlane.f32.xlu0 %v5347
      %v5349 = vpop.xlane.xlu0 %5348
      %v5350 = vsel %vm1102, %v4967, 0.0
      %5351 = vadd.xlane.f32.xlu0 %v5350
      %v5352 = vpop.xlane.xlu0 %5351
      %v5353 = vsel %vm1102, %v4970, 0.0
      %5354 = vadd.xlane.f32.xlu0 %v5353
      %v5355 = vpop.xlane.xlu0 %5354
      %v5356 = vsel %vm1102, %v4973, 0.0
      %5357 = vadd.xlane.f32.xlu0 %v5356
      %v5358 = vpop.xlane.xlu0 %5357
      %v5359 = vsel %vm1102, %v4976, 0.0
      %5360 = vadd.xlane.f32.xlu0 %v5359
      %v5361 = vpop.xlane.xlu0 %5360
      %v5362 = vsel %vm1102, %v4979, 0.0
      %5363 = vadd.xlane.f32.xlu0 %v5362
      %v5364 = vpop.xlane.xlu0 %5363
      %v5365 = vsel %vm1102, %v4982, 0.0
      %5366 = vadd.xlane.f32.xlu0 %v5365
      %v5367 = vpop.xlane.xlu0 %5366
      %v5368 = vsel %vm1102, %v4985, 0.0
      %5369 = vadd.xlane.f32.xlu0 %v5368
      %v5370 = vpop.xlane.xlu0 %5369
      %v5371 = vsel %vm1102, %v4988, 0.0
      %5372 = vadd.xlane.f32.xlu0 %v5371
      %v5373 = vpop.xlane.xlu0 %5372
      %v5374 = vsel %vm1102, %v4991, 0.0
      %5375 = vadd.xlane.f32.xlu0 %v5374
      %v5376 = vpop.xlane.xlu0 %5375
      %v5377 = vsel %vm1102, %v4994, 0.0
      %5378 = vadd.xlane.f32.xlu0 %v5377
      %v5379 = vpop.xlane.xlu0 %5378
      %v5380 = vsel %vm1102, %v4997, 0.0
      %5381 = vadd.xlane.f32.xlu0 %v5380
      %v5382 = vpop.xlane.xlu0 %5381
      %v5383 = vsel %vm1102, %v5000, 0.0
      %5384 = vadd.xlane.f32.xlu0 %v5383
      %v5385 = vpop.xlane.xlu0 %5384
      %v5386 = vsel %vm1102, %v5003, 0.0
      %5387 = vadd.xlane.f32.xlu0 %v5386
      %v5388 = vpop.xlane.xlu0 %5387
      %v5389 = vsel %vm1102, %v5006, 0.0
      %5390 = vadd.xlane.f32.xlu0 %v5389
      %v5391 = vpop.xlane.xlu0 %5390
      %v5392 = vsel %vm1102, %v5009, 0.0
      %5393 = vadd.xlane.f32.xlu0 %v5392
      %v5394 = vpop.xlane.xlu0 %5393
      %v5395 = vsel %vm1102, %v5012, 0.0
      %5396 = vadd.xlane.f32.xlu0 %v5395
      %v5397 = vpop.xlane.xlu0 %5396
      %v5398 = vsel %vm1102, %v5015, 0.0
      %5399 = vadd.xlane.f32.xlu0 %v5398
      %v5400 = vpop.xlane.xlu0 %5399
      %v5401 = vsel %vm1102, %v5018, 0.0
      %5402 = vadd.xlane.f32.xlu0 %v5401
      %v5403 = vpop.xlane.xlu0 %5402
      %v5404 = vsel %vm1102, %v5021, 0.0
      %5405 = vadd.xlane.f32.xlu0 %v5404
      %v5406 = vpop.xlane.xlu0 %5405
      %v5407 = vsel %vm1102, %v5024, 0.0
      %5408 = vadd.xlane.f32.xlu0 %v5407
      %v5409 = vpop.xlane.xlu0 %5408
      %v5410 = vsel %vm1102, %v5027, 0.0
      %5411 = vadd.xlane.f32.xlu0 %v5410
      %v5412 = vpop.xlane.xlu0 %5411
      %v5413 = vsel %vm1102, %v5030, 0.0
      %5414 = vadd.xlane.f32.xlu0 %v5413
      %v5415 = vpop.xlane.xlu0 %5414
      %v5416 = vsel %vm1102, %v5033, 0.0
      %5417 = vadd.xlane.f32.xlu0 %v5416
      %v5418 = vpop.xlane.xlu0 %5417
      %v5419 = vsel %vm1102, %v5036, 0.0
      %5420 = vadd.xlane.f32.xlu0 %v5419
      %v5421 = vpop.xlane.xlu0 %5420
      %v5422 = vsel %vm1102, %v5039, 0.0
      %5423 = vadd.xlane.f32.xlu0 %v5422
      %v5424 = vpop.xlane.xlu0 %5423
      %v5425 = vsel %vm1102, %v5042, 0.0
      %5426 = vadd.xlane.f32.xlu0 %v5425
      %v5427 = vpop.xlane.xlu0 %5426
      %v5428 = vsel %vm1102, %v5045, 0.0
      %5429 = vadd.xlane.f32.xlu0 %v5428
      %v5430 = vpop.xlane.xlu0 %5429
      %v5431 = vsel %vm1102, %v5048, 0.0
      %5432 = vadd.xlane.f32.xlu0 %v5431
      %v5433 = vpop.xlane.xlu0 %5432
      %v5434 = vsel %vm1102, %v5051, 0.0
      %5435 = vadd.xlane.f32.xlu0 %v5434
      %v5436 = vpop.xlane.xlu0 %5435
      %v5437 = vsel %vm1102, %v5054, 0.0
      %5438 = vadd.xlane.f32.xlu0 %v5437
      %v5439 = vpop.xlane.xlu0 %5438
      %v5440 = vsel %vm1102, %v5057, 0.0
      %5441 = vadd.xlane.f32.xlu0 %v5440
      %v5442 = vpop.xlane.xlu0 %5441
      %v5443 = vsel %vm1102, %v5060, 0.0
      %5444 = vadd.xlane.f32.xlu0 %v5443
      %v5445 = vpop.xlane.xlu0 %5444
      %v5446 = vsel %vm1102, %v5063, 0.0
      %5447 = vadd.xlane.f32.xlu0 %v5446
      %v5448 = vpop.xlane.xlu0 %5447
      %v5449 = vsel %vm1102, %v5066, 0.0
      %5450 = vadd.xlane.f32.xlu0 %v5449
      %v5451 = vpop.xlane.xlu0 %5450
      %v5452 = vsel %vm1102, %v5069, 0.0
      %5453 = vadd.xlane.f32.xlu0 %v5452
      %v5454 = vpop.xlane.xlu0 %5453
      %v5455 = vsel %vm1102, %v5072, 0.0
      %5456 = vadd.xlane.f32.xlu0 %v5455
      %v5457 = vpop.xlane.xlu0 %5456
      %v5458 = vsel %vm1102, %v5075, 0.0
      %5459 = vadd.xlane.f32.xlu0 %v5458
      %v5460 = vpop.xlane.xlu0 %5459
      %v5461 = vsel %vm1102, %v5078, 0.0
      %5462 = vadd.xlane.f32.xlu0 %v5461
      %v5463 = vpop.xlane.xlu0 %5462
      %v5464 = vsel %vm1102, %v5081, 0.0
      %5465 = vadd.xlane.f32.xlu0 %v5464
      %v5466 = vpop.xlane.xlu0 %5465
      %v5467 = vsel %vm1102, %v5084, 0.0
      %5468 = vadd.xlane.f32.xlu0 %v5467
      %v5469 = vpop.xlane.xlu0 %5468
      %v5470 = vsel %vm1102, %v5087, 0.0
      %5471 = vadd.xlane.f32.xlu0 %v5470
      %v5472 = vpop.xlane.xlu0 %5471
      %v5473 = vsel %vm1102, %v5090, 0.0
      %5474 = vadd.xlane.f32.xlu0 %v5473
      %v5475 = vpop.xlane.xlu0 %5474
      %v5476 = vsel %vm1102, %v5093, 0.0
      %5477 = vadd.xlane.f32.xlu0 %v5476
      %v5478 = vpop.xlane.xlu0 %5477
      %v5479 = vsel %vm1102, %v5096, 0.0
      %5480 = vadd.xlane.f32.xlu0 %v5479
      %v5481 = vpop.xlane.xlu0 %5480
      %v5482 = vmul.f32 %v5100, %v1493
      %v5483 = vmul.f32 %v5103, %v1493
      %v5484 = vmul.f32 %v5106, %v1493
      %v5485 = vmul.f32 %v5109, %v1493
      %v5486 = vmul.f32 %v5112, %v1493
      %v5487 = vmul.f32 %v5115, %v1493
      %v5488 = vmul.f32 %v5118, %v1493
      %v5489 = vmul.f32 %v5121, %v1493
      %v5490 = vmul.f32 %v5124, %v1493
      %v5491 = vmul.f32 %v5127, %v1493
      %v5492 = vmul.f32 %v5130, %v1493
      %v5493 = vmul.f32 %v5133, %v1493
      %v5494 = vmul.f32 %v5136, %v1493
      %v5495 = vmul.f32 %v5139, %v1493
      %v5496 = vmul.f32 %v5142, %v1493
      %v5497 = vmul.f32 %v5145, %v1493
      %v5498 = vmul.f32 %v5148, %v1493
      %v5499 = vmul.f32 %v5151, %v1493
      %v5500 = vmul.f32 %v5154, %v1493
      %v5501 = vmul.f32 %v5157, %v1493
      %v5502 = vmul.f32 %v5160, %v1493
      %v5503 = vmul.f32 %v5163, %v1493
      %v5504 = vmul.f32 %v5166, %v1493
      %v5505 = vmul.f32 %v5169, %v1493
      %v5506 = vmul.f32 %v5172, %v1493
      %v5507 = vmul.f32 %v5175, %v1493
      %v5508 = vmul.f32 %v5178, %v1493
      %v5509 = vmul.f32 %v5181, %v1493
      %v5510 = vmul.f32 %v5184, %v1493
      %v5511 = vmul.f32 %v5187, %v1493
      %v5512 = vmul.f32 %v5190, %v1493
      %v5513 = vmul.f32 %v5193, %v1493
      %v5514 = vmul.f32 %v5196, %v1493
      %v5515 = vmul.f32 %v5199, %v1493
      %v5516 = vmul.f32 %v5202, %v1493
      %v5517 = vmul.f32 %v5205, %v1493
      %v5518 = vmul.f32 %v5208, %v1493
      %v5519 = vmul.f32 %v5211, %v1493
      %v5520 = vmul.f32 %v5214, %v1493
      %v5521 = vmul.f32 %v5217, %v1493
      %v5522 = vmul.f32 %v5220, %v1493
      %v5523 = vmul.f32 %v5223, %v1493
      %v5524 = vmul.f32 %v5226, %v1493
      %v5525 = vmul.f32 %v5229, %v1493
      %v5526 = vmul.f32 %v5232, %v1493
      %v5527 = vmul.f32 %v5235, %v1493
      %v5528 = vmul.f32 %v5238, %v1493
      %v5529 = vmul.f32 %v5241, %v1493
      %v5530 = vmul.f32 %v5244, %v1493
      %v5531 = vmul.f32 %v5247, %v1493
      %v5532 = vmul.f32 %v5250, %v1493
      %v5533 = vmul.f32 %v5253, %v1493
      %v5534 = vmul.f32 %v5256, %v1493
      %v5535 = vmul.f32 %v5259, %v1493
      %v5536 = vmul.f32 %v5262, %v1493
      %v5537 = vmul.f32 %v5265, %v1493
      %v5538 = vmul.f32 %v5268, %v1493
      %v5539 = vmul.f32 %v5271, %v1493
      %v5540 = vmul.f32 %v5274, %v1493
      %v5541 = vmul.f32 %v5277, %v1493
      %v5542 = vmul.f32 %v5280, %v1493
      %v5543 = vmul.f32 %v5283, %v1493
      %v5544 = vmul.f32 %v5286, %v1493
      %v5545 = vmul.f32 %v5289, %v1493
      %v5546 = vmul.f32 %v5292, %v1493
      %v5547 = vmul.f32 %v5295, %v1493
      %v5548 = vmul.f32 %v5298, %v1493
      %v5549 = vmul.f32 %v5301, %v1493
      %v5550 = vmul.f32 %v5304, %v1493
      %v5551 = vmul.f32 %v5307, %v1493
      %v5552 = vmul.f32 %v5310, %v1493
      %v5553 = vmul.f32 %v5313, %v1493
      %v5554 = vmul.f32 %v5316, %v1493
      %v5555 = vmul.f32 %v5319, %v1493
      %v5556 = vmul.f32 %v5322, %v1493
      %v5557 = vmul.f32 %v5325, %v1493
      %v5558 = vmul.f32 %v5328, %v1493
      %v5559 = vmul.f32 %v5331, %v1493
      %v5560 = vmul.f32 %v5334, %v1493
      %v5561 = vmul.f32 %v5337, %v1493
      %v5562 = vmul.f32 %v5340, %v1493
      %v5563 = vmul.f32 %v5343, %v1493
      %v5564 = vmul.f32 %v5346, %v1493
      %v5565 = vmul.f32 %v5349, %v1493
      %v5566 = vmul.f32 %v5352, %v1493
      %v5567 = vmul.f32 %v5355, %v1493
      %v5568 = vmul.f32 %v5358, %v1493
      %v5569 = vmul.f32 %v5361, %v1493
      %v5570 = vmul.f32 %v5364, %v1493
      %v5571 = vmul.f32 %v5367, %v1493
      %v5572 = vmul.f32 %v5370, %v1493
      %v5573 = vmul.f32 %v5373, %v1493
      %v5574 = vmul.f32 %v5376, %v1493
      %v5575 = vmul.f32 %v5379, %v1493
      %v5576 = vmul.f32 %v5382, %v1493
      %v5577 = vmul.f32 %v5385, %v1493
      %v5578 = vmul.f32 %v5388, %v1493
      %v5579 = vmul.f32 %v5391, %v1493
      %v5580 = vmul.f32 %v5394, %v1493
      %v5581 = vmul.f32 %v5397, %v1493
      %v5582 = vmul.f32 %v5400, %v1493
      %v5583 = vmul.f32 %v5403, %v1493
      %v5584 = vmul.f32 %v5406, %v1493
      %v5585 = vmul.f32 %v5409, %v1493
      %v5586 = vmul.f32 %v5412, %v1493
      %v5587 = vmul.f32 %v5415, %v1493
      %v5588 = vmul.f32 %v5418, %v1493
      %v5589 = vmul.f32 %v5421, %v1493
      %v5590 = vmul.f32 %v5424, %v1493
      %v5591 = vmul.f32 %v5427, %v1493
      %v5592 = vmul.f32 %v5430, %v1493
      %v5593 = vmul.f32 %v5433, %v1493
      %v5594 = vmul.f32 %v5436, %v1493
      %v5595 = vmul.f32 %v5439, %v1493
      %v5596 = vmul.f32 %v5442, %v1493
      %v5597 = vmul.f32 %v5445, %v1493
      %v5598 = vmul.f32 %v5448, %v1493
      %v5599 = vmul.f32 %v5451, %v1493
      %v5600 = vmul.f32 %v5454, %v1493
      %v5601 = vmul.f32 %v5457, %v1493
      %v5602 = vmul.f32 %v5460, %v1493
      %v5603 = vmul.f32 %v5463, %v1493
      %v5604 = vmul.f32 %v5466, %v1493
      %v5605 = vmul.f32 %v5469, %v1493
      %v5606 = vmul.f32 %v5472, %v1493
      %v5607 = vmul.f32 %v5475, %v1493
      %v5608 = vmul.f32 %v5478, %v1493
      %v5609 = vmul.f32 %v5481, %v1493
      %v5610 = vsub.f32 %v4715, %v5482
      %v5611 = vsub.f32 %v4718, %v5483
      %v5612 = vsub.f32 %v4721, %v5484
      %v5613 = vsub.f32 %v4724, %v5485
      %v5614 = vsub.f32 %v4727, %v5486
      %v5615 = vsub.f32 %v4730, %v5487
      %v5616 = vsub.f32 %v4733, %v5488
      %v5617 = vsub.f32 %v4736, %v5489
      %v5618 = vsub.f32 %v4739, %v5490
      %v5619 = vsub.f32 %v4742, %v5491
      %v5620 = vsub.f32 %v4745, %v5492
      %v5621 = vsub.f32 %v4748, %v5493
      %v5622 = vsub.f32 %v4751, %v5494
      %v5623 = vsub.f32 %v4754, %v5495
      %v5624 = vsub.f32 %v4757, %v5496
      %v5625 = vsub.f32 %v4760, %v5497
      %v5626 = vsub.f32 %v4763, %v5498
      %v5627 = vsub.f32 %v4766, %v5499
      %v5628 = vsub.f32 %v4769, %v5500
      %v5629 = vsub.f32 %v4772, %v5501
      %v5630 = vsub.f32 %v4775, %v5502
      %v5631 = vsub.f32 %v4778, %v5503
      %v5632 = vsub.f32 %v4781, %v5504
      %v5633 = vsub.f32 %v4784, %v5505
      %v5634 = vsub.f32 %v4787, %v5506
      %v5635 = vsub.f32 %v4790, %v5507
      %v5636 = vsub.f32 %v4793, %v5508
      %v5637 = vsub.f32 %v4796, %v5509
      %v5638 = vsub.f32 %v4799, %v5510
      %v5639 = vsub.f32 %v4802, %v5511
      %v5640 = vsub.f32 %v4805, %v5512
      %v5641 = vsub.f32 %v4808, %v5513
      %v5642 = vsub.f32 %v4811, %v5514
      %v5643 = vsub.f32 %v4814, %v5515
      %v5644 = vsub.f32 %v4817, %v5516
      %v5645 = vsub.f32 %v4820, %v5517
      %v5646 = vsub.f32 %v4823, %v5518
      %v5647 = vsub.f32 %v4826, %v5519
      %v5648 = vsub.f32 %v4829, %v5520
      %v5649 = vsub.f32 %v4832, %v5521
      %v5650 = vsub.f32 %v4835, %v5522
      %v5651 = vsub.f32 %v4838, %v5523
      %v5652 = vsub.f32 %v4841, %v5524
      %v5653 = vsub.f32 %v4844, %v5525
      %v5654 = vsub.f32 %v4847, %v5526
      %v5655 = vsub.f32 %v4850, %v5527
      %v5656 = vsub.f32 %v4853, %v5528
      %v5657 = vsub.f32 %v4856, %v5529
      %v5658 = vsub.f32 %v4859, %v5530
      %v5659 = vsub.f32 %v4862, %v5531
      %v5660 = vsub.f32 %v4865, %v5532
      %v5661 = vsub.f32 %v4868, %v5533
      %v5662 = vsub.f32 %v4871, %v5534
      %v5663 = vsub.f32 %v4874, %v5535
      %v5664 = vsub.f32 %v4877, %v5536
      %v5665 = vsub.f32 %v4880, %v5537
      %v5666 = vsub.f32 %v4883, %v5538
      %v5667 = vsub.f32 %v4886, %v5539
      %v5668 = vsub.f32 %v4889, %v5540
      %v5669 = vsub.f32 %v4892, %v5541
      %v5670 = vsub.f32 %v4895, %v5542
      %v5671 = vsub.f32 %v4898, %v5543
      %v5672 = vsub.f32 %v4901, %v5544
      %v5673 = vsub.f32 %v4904, %v5545
      %v5674 = vsub.f32 %v4907, %v5546
      %v5675 = vsub.f32 %v4910, %v5547
      %v5676 = vsub.f32 %v4913, %v5548
      %v5677 = vsub.f32 %v4916, %v5549
      %v5678 = vsub.f32 %v4919, %v5550
      %v5679 = vsub.f32 %v4922, %v5551
      %v5680 = vsub.f32 %v4925, %v5552
      %v5681 = vsub.f32 %v4928, %v5553
      %v5682 = vsub.f32 %v4931, %v5554
      %v5683 = vsub.f32 %v4934, %v5555
      %v5684 = vsub.f32 %v4937, %v5556
      %v5685 = vsub.f32 %v4940, %v5557
      %v5686 = vsub.f32 %v4943, %v5558
      %v5687 = vsub.f32 %v4946, %v5559
      %v5688 = vsub.f32 %v4949, %v5560
      %v5689 = vsub.f32 %v4952, %v5561
      %v5690 = vsub.f32 %v4955, %v5562
      %v5691 = vsub.f32 %v4958, %v5563
      %v5692 = vsub.f32 %v4961, %v5564
      %v5693 = vsub.f32 %v4964, %v5565
      %v5694 = vsub.f32 %v4967, %v5566
      %v5695 = vsub.f32 %v4970, %v5567
      %v5696 = vsub.f32 %v4973, %v5568
      %v5697 = vsub.f32 %v4976, %v5569
      %v5698 = vsub.f32 %v4979, %v5570
      %v5699 = vsub.f32 %v4982, %v5571
      %v5700 = vsub.f32 %v4985, %v5572
      %v5701 = vsub.f32 %v4988, %v5573
      %v5702 = vsub.f32 %v4991, %v5574
      %v5703 = vsub.f32 %v4994, %v5575
      %v5704 = vsub.f32 %v4997, %v5576
      %v5705 = vsub.f32 %v5000, %v5577
      %v5706 = vsub.f32 %v5003, %v5578
      %v5707 = vsub.f32 %v5006, %v5579
      %v5708 = vsub.f32 %v5009, %v5580
      %v5709 = vsub.f32 %v5012, %v5581
      %v5710 = vsub.f32 %v5015, %v5582
      %v5711 = vsub.f32 %v5018, %v5583
      %v5712 = vsub.f32 %v5021, %v5584
      %v5713 = vsub.f32 %v5024, %v5585
      %v5714 = vsub.f32 %v5027, %v5586
      %v5715 = vsub.f32 %v5030, %v5587
      %v5716 = vsub.f32 %v5033, %v5588
      %v5717 = vsub.f32 %v5036, %v5589
      %v5718 = vsub.f32 %v5039, %v5590
      %v5719 = vsub.f32 %v5042, %v5591
      %v5720 = vsub.f32 %v5045, %v5592
      %v5721 = vsub.f32 %v5048, %v5593
      %v5722 = vsub.f32 %v5051, %v5594
      %v5723 = vsub.f32 %v5054, %v5595
      %v5724 = vsub.f32 %v5057, %v5596
      %v5725 = vsub.f32 %v5060, %v5597
      %v5726 = vsub.f32 %v5063, %v5598
      %v5727 = vsub.f32 %v5066, %v5599
      %v5728 = vsub.f32 %v5069, %v5600
      %v5729 = vsub.f32 %v5072, %v5601
      %v5730 = vsub.f32 %v5075, %v5602
      %v5731 = vsub.f32 %v5078, %v5603
      %v5732 = vsub.f32 %v5081, %v5604
      %v5733 = vsub.f32 %v5084, %v5605
      %v5734 = vsub.f32 %v5087, %v5606
      %v5735 = vsub.f32 %v5090, %v5607
      %v5736 = vsub.f32 %v5093, %v5608
      %v5737 = vsub.f32 %v5096, %v5609
      %v5738 = vmul.f32 %v5610, %v5610
      %v5739 = vmul.f32 %v5611, %v5611
      %v5740 = vmul.f32 %v5612, %v5612
      %v5741 = vmul.f32 %v5613, %v5613
      %v5742 = vmul.f32 %v5614, %v5614
      %v5743 = vmul.f32 %v5615, %v5615
      %v5744 = vmul.f32 %v5616, %v5616
      %v5745 = vmul.f32 %v5617, %v5617
      %v5746 = vmul.f32 %v5618, %v5618
      %v5747 = vmul.f32 %v5619, %v5619
      %v5748 = vmul.f32 %v5620, %v5620
      %v5749 = vmul.f32 %v5621, %v5621
      %v5750 = vmul.f32 %v5622, %v5622
      %v5751 = vmul.f32 %v5623, %v5623
      %v5752 = vmul.f32 %v5624, %v5624
      %v5753 = vmul.f32 %v5625, %v5625
      %v5754 = vmul.f32 %v5626, %v5626
      %v5755 = vmul.f32 %v5627, %v5627
      %v5756 = vmul.f32 %v5628, %v5628
      %v5757 = vmul.f32 %v5629, %v5629
      %v5758 = vmul.f32 %v5630, %v5630
      %v5759 = vmul.f32 %v5631, %v5631
      %v5760 = vmul.f32 %v5632, %v5632
      %v5761 = vmul.f32 %v5633, %v5633
      %v5762 = vmul.f32 %v5634, %v5634
      %v5763 = vmul.f32 %v5635, %v5635
      %v5764 = vmul.f32 %v5636, %v5636
      %v5765 = vmul.f32 %v5637, %v5637
      %v5766 = vmul.f32 %v5638, %v5638
      %v5767 = vmul.f32 %v5639, %v5639
      %v5768 = vmul.f32 %v5640, %v5640
      %v5769 = vmul.f32 %v5641, %v5641
      %v5770 = vmul.f32 %v5642, %v5642
      %v5771 = vmul.f32 %v5643, %v5643
      %v5772 = vmul.f32 %v5644, %v5644
      %v5773 = vmul.f32 %v5645, %v5645
      %v5774 = vmul.f32 %v5646, %v5646
      %v5775 = vmul.f32 %v5647, %v5647
      %v5776 = vmul.f32 %v5648, %v5648
      %v5777 = vmul.f32 %v5649, %v5649
      %v5778 = vmul.f32 %v5650, %v5650
      %v5779 = vmul.f32 %v5651, %v5651
      %v5780 = vmul.f32 %v5652, %v5652
      %v5781 = vmul.f32 %v5653, %v5653
      %v5782 = vmul.f32 %v5654, %v5654
      %v5783 = vmul.f32 %v5655, %v5655
      %v5784 = vmul.f32 %v5656, %v5656
      %v5785 = vmul.f32 %v5657, %v5657
      %v5786 = vmul.f32 %v5658, %v5658
      %v5787 = vmul.f32 %v5659, %v5659
      %v5788 = vmul.f32 %v5660, %v5660
      %v5789 = vmul.f32 %v5661, %v5661
      %v5790 = vmul.f32 %v5662, %v5662
      %v5791 = vmul.f32 %v5663, %v5663
      %v5792 = vmul.f32 %v5664, %v5664
      %v5793 = vmul.f32 %v5665, %v5665
      %v5794 = vmul.f32 %v5666, %v5666
      %v5795 = vmul.f32 %v5667, %v5667
      %v5796 = vmul.f32 %v5668, %v5668
      %v5797 = vmul.f32 %v5669, %v5669
      %v5798 = vmul.f32 %v5670, %v5670
      %v5799 = vmul.f32 %v5671, %v5671
      %v5800 = vmul.f32 %v5672, %v5672
      %v5801 = vmul.f32 %v5673, %v5673
      %v5802 = vmul.f32 %v5674, %v5674
      %v5803 = vmul.f32 %v5675, %v5675
      %v5804 = vmul.f32 %v5676, %v5676
      %v5805 = vmul.f32 %v5677, %v5677
      %v5806 = vmul.f32 %v5678, %v5678
      %v5807 = vmul.f32 %v5679, %v5679
      %v5808 = vmul.f32 %v5680, %v5680
      %v5809 = vmul.f32 %v5681, %v5681
      %v5810 = vmul.f32 %v5682, %v5682
      %v5811 = vmul.f32 %v5683, %v5683
      %v5812 = vmul.f32 %v5684, %v5684
      %v5813 = vmul.f32 %v5685, %v5685
      %v5814 = vmul.f32 %v5686, %v5686
      %v5815 = vmul.f32 %v5687, %v5687
      %v5816 = vmul.f32 %v5688, %v5688
      %v5817 = vmul.f32 %v5689, %v5689
      %v5818 = vmul.f32 %v5690, %v5690
      %v5819 = vmul.f32 %v5691, %v5691
      %v5820 = vmul.f32 %v5692, %v5692
      %v5821 = vmul.f32 %v5693, %v5693
      %v5822 = vmul.f32 %v5694, %v5694
      %v5823 = vmul.f32 %v5695, %v5695
      %v5824 = vmul.f32 %v5696, %v5696
      %v5825 = vmul.f32 %v5697, %v5697
      %v5826 = vmul.f32 %v5698, %v5698
      %v5827 = vmul.f32 %v5699, %v5699
      %v5828 = vmul.f32 %v5700, %v5700
      %v5829 = vmul.f32 %v5701, %v5701
      %v5830 = vmul.f32 %v5702, %v5702
      %v5831 = vmul.f32 %v5703, %v5703
      %v5832 = vmul.f32 %v5704, %v5704
      %v5833 = vmul.f32 %v5705, %v5705
      %v5834 = vmul.f32 %v5706, %v5706
      %v5835 = vmul.f32 %v5707, %v5707
      %v5836 = vmul.f32 %v5708, %v5708
      %v5837 = vmul.f32 %v5709, %v5709
      %v5838 = vmul.f32 %v5710, %v5710
      %v5839 = vmul.f32 %v5711, %v5711
      %v5840 = vmul.f32 %v5712, %v5712
      %v5841 = vmul.f32 %v5713, %v5713
      %v5842 = vmul.f32 %v5714, %v5714
      %v5843 = vmul.f32 %v5715, %v5715
      %v5844 = vmul.f32 %v5716, %v5716
      %v5845 = vmul.f32 %v5717, %v5717
      %v5846 = vmul.f32 %v5718, %v5718
      %v5847 = vmul.f32 %v5719, %v5719
      %v5848 = vmul.f32 %v5720, %v5720
      %v5849 = vmul.f32 %v5721, %v5721
      %v5850 = vmul.f32 %v5722, %v5722
      %v5851 = vmul.f32 %v5723, %v5723
      %v5852 = vmul.f32 %v5724, %v5724
      %v5853 = vmul.f32 %v5725, %v5725
      %v5854 = vmul.f32 %v5726, %v5726
      %v5855 = vmul.f32 %v5727, %v5727
      %v5856 = vmul.f32 %v5728, %v5728
      %v5857 = vmul.f32 %v5729, %v5729
      %v5858 = vmul.f32 %v5730, %v5730
      %v5859 = vmul.f32 %v5731, %v5731
      %v5860 = vmul.f32 %v5732, %v5732
      %v5861 = vmul.f32 %v5733, %v5733
      %v5862 = vmul.f32 %v5734, %v5734
      %v5863 = vmul.f32 %v5735, %v5735
      %v5864 = vmul.f32 %v5736, %v5736
      %v5865 = vmul.f32 %v5737, %v5737
      %v5866 = vsel %vm1102, %v5738, 0.0
      %5867 = vadd.xlane.f32.xlu0 %v5866
      %v5868 = vpop.xlane.xlu0 %5867
      %v5869 = vsel %vm1102, %v5739, 0.0
      %5870 = vadd.xlane.f32.xlu0 %v5869
      %v5871 = vpop.xlane.xlu0 %5870
      %v5872 = vsel %vm1102, %v5740, 0.0
      %5873 = vadd.xlane.f32.xlu0 %v5872
      %v5874 = vpop.xlane.xlu0 %5873
      %v5875 = vsel %vm1102, %v5741, 0.0
      %5876 = vadd.xlane.f32.xlu0 %v5875
      %v5877 = vpop.xlane.xlu0 %5876
      %v5878 = vsel %vm1102, %v5742, 0.0
      %5879 = vadd.xlane.f32.xlu0 %v5878
      %v5880 = vpop.xlane.xlu0 %5879
      %v5881 = vsel %vm1102, %v5743, 0.0
      %5882 = vadd.xlane.f32.xlu0 %v5881
      %v5883 = vpop.xlane.xlu0 %5882
      %v5884 = vsel %vm1102, %v5744, 0.0
      %5885 = vadd.xlane.f32.xlu0 %v5884
      %v5886 = vpop.xlane.xlu0 %5885
      %v5887 = vsel %vm1102, %v5745, 0.0
      %5888 = vadd.xlane.f32.xlu0 %v5887
      %v5889 = vpop.xlane.xlu0 %5888
      %v5890 = vsel %vm1102, %v5746, 0.0
      %5891 = vadd.xlane.f32.xlu0 %v5890
      %v5892 = vpop.xlane.xlu0 %5891
      %v5893 = vsel %vm1102, %v5747, 0.0
      %5894 = vadd.xlane.f32.xlu0 %v5893
      %v5895 = vpop.xlane.xlu0 %5894
      %v5896 = vsel %vm1102, %v5748, 0.0
      %5897 = vadd.xlane.f32.xlu0 %v5896
      %v5898 = vpop.xlane.xlu0 %5897
      %v5899 = vsel %vm1102, %v5749, 0.0
      %5900 = vadd.xlane.f32.xlu0 %v5899
      %v5901 = vpop.xlane.xlu0 %5900
      %v5902 = vsel %vm1102, %v5750, 0.0
      %5903 = vadd.xlane.f32.xlu0 %v5902
      %v5904 = vpop.xlane.xlu0 %5903
      %v5905 = vsel %vm1102, %v5751, 0.0
      %5906 = vadd.xlane.f32.xlu0 %v5905
      %v5907 = vpop.xlane.xlu0 %5906
      %v5908 = vsel %vm1102, %v5752, 0.0
      %5909 = vadd.xlane.f32.xlu0 %v5908
      %v5910 = vpop.xlane.xlu0 %5909
      %v5911 = vsel %vm1102, %v5753, 0.0
      %5912 = vadd.xlane.f32.xlu0 %v5911
      %v5913 = vpop.xlane.xlu0 %5912
      %v5914 = vsel %vm1102, %v5754, 0.0
      %5915 = vadd.xlane.f32.xlu0 %v5914
      %v5916 = vpop.xlane.xlu0 %5915
      %v5917 = vsel %vm1102, %v5755, 0.0
      %5918 = vadd.xlane.f32.xlu0 %v5917
      %v5919 = vpop.xlane.xlu0 %5918
      %v5920 = vsel %vm1102, %v5756, 0.0
      %5921 = vadd.xlane.f32.xlu0 %v5920
      %v5922 = vpop.xlane.xlu0 %5921
      %v5923 = vsel %vm1102, %v5757, 0.0
      %5924 = vadd.xlane.f32.xlu0 %v5923
      %v5925 = vpop.xlane.xlu0 %5924
      %v5926 = vsel %vm1102, %v5758, 0.0
      %5927 = vadd.xlane.f32.xlu0 %v5926
      %v5928 = vpop.xlane.xlu0 %5927
      %v5929 = vsel %vm1102, %v5759, 0.0
      %5930 = vadd.xlane.f32.xlu0 %v5929
      %v5931 = vpop.xlane.xlu0 %5930
      %v5932 = vsel %vm1102, %v5760, 0.0
      %5933 = vadd.xlane.f32.xlu0 %v5932
      %v5934 = vpop.xlane.xlu0 %5933
      %v5935 = vsel %vm1102, %v5761, 0.0
      %5936 = vadd.xlane.f32.xlu0 %v5935
      %v5937 = vpop.xlane.xlu0 %5936
      %v5938 = vsel %vm1102, %v5762, 0.0
      %5939 = vadd.xlane.f32.xlu0 %v5938
      %v5940 = vpop.xlane.xlu0 %5939
      %v5941 = vsel %vm1102, %v5763, 0.0
      %5942 = vadd.xlane.f32.xlu0 %v5941
      %v5943 = vpop.xlane.xlu0 %5942
      %v5944 = vsel %vm1102, %v5764, 0.0
      %5945 = vadd.xlane.f32.xlu0 %v5944
      %v5946 = vpop.xlane.xlu0 %5945
      %v5947 = vsel %vm1102, %v5765, 0.0
      %5948 = vadd.xlane.f32.xlu0 %v5947
      %v5949 = vpop.xlane.xlu0 %5948
      %v5950 = vsel %vm1102, %v5766, 0.0
      %5951 = vadd.xlane.f32.xlu0 %v5950
      %v5952 = vpop.xlane.xlu0 %5951
      %v5953 = vsel %vm1102, %v5767, 0.0
      %5954 = vadd.xlane.f32.xlu0 %v5953
      %v5955 = vpop.xlane.xlu0 %5954
      %v5956 = vsel %vm1102, %v5768, 0.0
      %5957 = vadd.xlane.f32.xlu0 %v5956
      %v5958 = vpop.xlane.xlu0 %5957
      %v5959 = vsel %vm1102, %v5769, 0.0
      %5960 = vadd.xlane.f32.xlu0 %v5959
      %v5961 = vpop.xlane.xlu0 %5960
      %v5962 = vsel %vm1102, %v5770, 0.0
      %5963 = vadd.xlane.f32.xlu0 %v5962
      %v5964 = vpop.xlane.xlu0 %5963
      %v5965 = vsel %vm1102, %v5771, 0.0
      %5966 = vadd.xlane.f32.xlu0 %v5965
      %v5967 = vpop.xlane.xlu0 %5966
      %v5968 = vsel %vm1102, %v5772, 0.0
      %5969 = vadd.xlane.f32.xlu0 %v5968
      %v5970 = vpop.xlane.xlu0 %5969
      %v5971 = vsel %vm1102, %v5773, 0.0
      %5972 = vadd.xlane.f32.xlu0 %v5971
      %v5973 = vpop.xlane.xlu0 %5972
      %v5974 = vsel %vm1102, %v5774, 0.0
      %5975 = vadd.xlane.f32.xlu0 %v5974
      %v5976 = vpop.xlane.xlu0 %5975
      %v5977 = vsel %vm1102, %v5775, 0.0
      %5978 = vadd.xlane.f32.xlu0 %v5977
      %v5979 = vpop.xlane.xlu0 %5978
      %v5980 = vsel %vm1102, %v5776, 0.0
      %5981 = vadd.xlane.f32.xlu0 %v5980
      %v5982 = vpop.xlane.xlu0 %5981
      %v5983 = vsel %vm1102, %v5777, 0.0
      %5984 = vadd.xlane.f32.xlu0 %v5983
      %v5985 = vpop.xlane.xlu0 %5984
      %v5986 = vsel %vm1102, %v5778, 0.0
      %5987 = vadd.xlane.f32.xlu0 %v5986
      %v5988 = vpop.xlane.xlu0 %5987
      %v5989 = vsel %vm1102, %v5779, 0.0
      %5990 = vadd.xlane.f32.xlu0 %v5989
      %v5991 = vpop.xlane.xlu0 %5990
      %v5992 = vsel %vm1102, %v5780, 0.0
      %5993 = vadd.xlane.f32.xlu0 %v5992
      %v5994 = vpop.xlane.xlu0 %5993
      %v5995 = vsel %vm1102, %v5781, 0.0
      %5996 = vadd.xlane.f32.xlu0 %v5995
      %v5997 = vpop.xlane.xlu0 %5996
      %v5998 = vsel %vm1102, %v5782, 0.0
      %5999 = vadd.xlane.f32.xlu0 %v5998
      %v6000 = vpop.xlane.xlu0 %5999
      %v6001 = vsel %vm1102, %v5783, 0.0
      %6002 = vadd.xlane.f32.xlu0 %v6001
      %v6003 = vpop.xlane.xlu0 %6002
      %v6004 = vsel %vm1102, %v5784, 0.0
      %6005 = vadd.xlane.f32.xlu0 %v6004
      %v6006 = vpop.xlane.xlu0 %6005
      %v6007 = vsel %vm1102, %v5785, 0.0
      %6008 = vadd.xlane.f32.xlu0 %v6007
      %v6009 = vpop.xlane.xlu0 %6008
      %v6010 = vsel %vm1102, %v5786, 0.0
      %6011 = vadd.xlane.f32.xlu0 %v6010
      %v6012 = vpop.xlane.xlu0 %6011
      %v6013 = vsel %vm1102, %v5787, 0.0
      %6014 = vadd.xlane.f32.xlu0 %v6013
      %v6015 = vpop.xlane.xlu0 %6014
      %v6016 = vsel %vm1102, %v5788, 0.0
      %6017 = vadd.xlane.f32.xlu0 %v6016
      %v6018 = vpop.xlane.xlu0 %6017
      %v6019 = vsel %vm1102, %v5789, 0.0
      %6020 = vadd.xlane.f32.xlu0 %v6019
      %v6021 = vpop.xlane.xlu0 %6020
      %v6022 = vsel %vm1102, %v5790, 0.0
      %6023 = vadd.xlane.f32.xlu0 %v6022
      %v6024 = vpop.xlane.xlu0 %6023
      %v6025 = vsel %vm1102, %v5791, 0.0
      %6026 = vadd.xlane.f32.xlu0 %v6025
      %v6027 = vpop.xlane.xlu0 %6026
      %v6028 = vsel %vm1102, %v5792, 0.0
      %6029 = vadd.xlane.f32.xlu0 %v6028
      %v6030 = vpop.xlane.xlu0 %6029
      %v6031 = vsel %vm1102, %v5793, 0.0
      %6032 = vadd.xlane.f32.xlu0 %v6031
      %v6033 = vpop.xlane.xlu0 %6032
      %v6034 = vsel %vm1102, %v5794, 0.0
      %6035 = vadd.xlane.f32.xlu0 %v6034
      %v6036 = vpop.xlane.xlu0 %6035
      %v6037 = vsel %vm1102, %v5795, 0.0
      %6038 = vadd.xlane.f32.xlu0 %v6037
      %v6039 = vpop.xlane.xlu0 %6038
      %v6040 = vsel %vm1102, %v5796, 0.0
      %6041 = vadd.xlane.f32.xlu0 %v6040
      %v6042 = vpop.xlane.xlu0 %6041
      %v6043 = vsel %vm1102, %v5797, 0.0
      %6044 = vadd.xlane.f32.xlu0 %v6043
      %v6045 = vpop.xlane.xlu0 %6044
      %v6046 = vsel %vm1102, %v5798, 0.0
      %6047 = vadd.xlane.f32.xlu0 %v6046
      %v6048 = vpop.xlane.xlu0 %6047
      %v6049 = vsel %vm1102, %v5799, 0.0
      %6050 = vadd.xlane.f32.xlu0 %v6049
      %v6051 = vpop.xlane.xlu0 %6050
      %v6052 = vsel %vm1102, %v5800, 0.0
      %6053 = vadd.xlane.f32.xlu0 %v6052
      %v6054 = vpop.xlane.xlu0 %6053
      %v6055 = vsel %vm1102, %v5801, 0.0
      %6056 = vadd.xlane.f32.xlu0 %v6055
      %v6057 = vpop.xlane.xlu0 %6056
      %v6058 = vsel %vm1102, %v5802, 0.0
      %6059 = vadd.xlane.f32.xlu0 %v6058
      %v6060 = vpop.xlane.xlu0 %6059
      %v6061 = vsel %vm1102, %v5803, 0.0
      %6062 = vadd.xlane.f32.xlu0 %v6061
      %v6063 = vpop.xlane.xlu0 %6062
      %v6064 = vsel %vm1102, %v5804, 0.0
      %6065 = vadd.xlane.f32.xlu0 %v6064
      %v6066 = vpop.xlane.xlu0 %6065
      %v6067 = vsel %vm1102, %v5805, 0.0
      %6068 = vadd.xlane.f32.xlu0 %v6067
      %v6069 = vpop.xlane.xlu0 %6068
      %v6070 = vsel %vm1102, %v5806, 0.0
      %6071 = vadd.xlane.f32.xlu0 %v6070
      %v6072 = vpop.xlane.xlu0 %6071
      %v6073 = vsel %vm1102, %v5807, 0.0
      %6074 = vadd.xlane.f32.xlu0 %v6073
      %v6075 = vpop.xlane.xlu0 %6074
      %v6076 = vsel %vm1102, %v5808, 0.0
      %6077 = vadd.xlane.f32.xlu0 %v6076
      %v6078 = vpop.xlane.xlu0 %6077
      %v6079 = vsel %vm1102, %v5809, 0.0
      %6080 = vadd.xlane.f32.xlu0 %v6079
      %v6081 = vpop.xlane.xlu0 %6080
      %v6082 = vsel %vm1102, %v5810, 0.0
      %6083 = vadd.xlane.f32.xlu0 %v6082
      %v6084 = vpop.xlane.xlu0 %6083
      %v6085 = vsel %vm1102, %v5811, 0.0
      %6086 = vadd.xlane.f32.xlu0 %v6085
      %v6087 = vpop.xlane.xlu0 %6086
      %v6088 = vsel %vm1102, %v5812, 0.0
      %6089 = vadd.xlane.f32.xlu0 %v6088
      %v6090 = vpop.xlane.xlu0 %6089
      %v6091 = vsel %vm1102, %v5813, 0.0
      %6092 = vadd.xlane.f32.xlu0 %v6091
      %v6093 = vpop.xlane.xlu0 %6092
      %v6094 = vsel %vm1102, %v5814, 0.0
      %6095 = vadd.xlane.f32.xlu0 %v6094
      %v6096 = vpop.xlane.xlu0 %6095
      %v6097 = vsel %vm1102, %v5815, 0.0
      %6098 = vadd.xlane.f32.xlu0 %v6097
      %v6099 = vpop.xlane.xlu0 %6098
      %v6100 = vsel %vm1102, %v5816, 0.0
      %6101 = vadd.xlane.f32.xlu0 %v6100
      %v6102 = vpop.xlane.xlu0 %6101
      %v6103 = vsel %vm1102, %v5817, 0.0
      %6104 = vadd.xlane.f32.xlu0 %v6103
      %v6105 = vpop.xlane.xlu0 %6104
      %v6106 = vsel %vm1102, %v5818, 0.0
      %6107 = vadd.xlane.f32.xlu0 %v6106
      %v6108 = vpop.xlane.xlu0 %6107
      %v6109 = vsel %vm1102, %v5819, 0.0
      %6110 = vadd.xlane.f32.xlu0 %v6109
      %v6111 = vpop.xlane.xlu0 %6110
      %v6112 = vsel %vm1102, %v5820, 0.0
      %6113 = vadd.xlane.f32.xlu0 %v6112
      %v6114 = vpop.xlane.xlu0 %6113
      %v6115 = vsel %vm1102, %v5821, 0.0
      %6116 = vadd.xlane.f32.xlu0 %v6115
      %v6117 = vpop.xlane.xlu0 %6116
      %v6118 = vsel %vm1102, %v5822, 0.0
      %6119 = vadd.xlane.f32.xlu0 %v6118
      %v6120 = vpop.xlane.xlu0 %6119
      %v6121 = vsel %vm1102, %v5823, 0.0
      %6122 = vadd.xlane.f32.xlu0 %v6121
      %v6123 = vpop.xlane.xlu0 %6122
      %v6124 = vsel %vm1102, %v5824, 0.0
      %6125 = vadd.xlane.f32.xlu0 %v6124
      %v6126 = vpop.xlane.xlu0 %6125
      %v6127 = vsel %vm1102, %v5825, 0.0
      %6128 = vadd.xlane.f32.xlu0 %v6127
      %v6129 = vpop.xlane.xlu0 %6128
      %v6130 = vsel %vm1102, %v5826, 0.0
      %6131 = vadd.xlane.f32.xlu0 %v6130
      %v6132 = vpop.xlane.xlu0 %6131
      %v6133 = vsel %vm1102, %v5827, 0.0
      %6134 = vadd.xlane.f32.xlu0 %v6133
      %v6135 = vpop.xlane.xlu0 %6134
      %v6136 = vsel %vm1102, %v5828, 0.0
      %6137 = vadd.xlane.f32.xlu0 %v6136
      %v6138 = vpop.xlane.xlu0 %6137
      %v6139 = vsel %vm1102, %v5829, 0.0
      %6140 = vadd.xlane.f32.xlu0 %v6139
      %v6141 = vpop.xlane.xlu0 %6140
      %v6142 = vsel %vm1102, %v5830, 0.0
      %6143 = vadd.xlane.f32.xlu0 %v6142
      %v6144 = vpop.xlane.xlu0 %6143
      %v6145 = vsel %vm1102, %v5831, 0.0
      %6146 = vadd.xlane.f32.xlu0 %v6145
      %v6147 = vpop.xlane.xlu0 %6146
      %v6148 = vsel %vm1102, %v5832, 0.0
      %6149 = vadd.xlane.f32.xlu0 %v6148
      %v6150 = vpop.xlane.xlu0 %6149
      %v6151 = vsel %vm1102, %v5833, 0.0
      %6152 = vadd.xlane.f32.xlu0 %v6151
      %v6153 = vpop.xlane.xlu0 %6152
      %v6154 = vsel %vm1102, %v5834, 0.0
      %6155 = vadd.xlane.f32.xlu0 %v6154
      %v6156 = vpop.xlane.xlu0 %6155
      %v6157 = vsel %vm1102, %v5835, 0.0
      %6158 = vadd.xlane.f32.xlu0 %v6157
      %v6159 = vpop.xlane.xlu0 %6158
      %v6160 = vsel %vm1102, %v5836, 0.0
      %6161 = vadd.xlane.f32.xlu0 %v6160
      %v6162 = vpop.xlane.xlu0 %6161
      %v6163 = vsel %vm1102, %v5837, 0.0
      %6164 = vadd.xlane.f32.xlu0 %v6163
      %v6165 = vpop.xlane.xlu0 %6164
      %v6166 = vsel %vm1102, %v5838, 0.0
      %6167 = vadd.xlane.f32.xlu0 %v6166
      %v6168 = vpop.xlane.xlu0 %6167
      %v6169 = vsel %vm1102, %v5839, 0.0
      %6170 = vadd.xlane.f32.xlu0 %v6169
      %v6171 = vpop.xlane.xlu0 %6170
      %v6172 = vsel %vm1102, %v5840, 0.0
      %6173 = vadd.xlane.f32.xlu0 %v6172
      %v6174 = vpop.xlane.xlu0 %6173
      %v6175 = vsel %vm1102, %v5841, 0.0
      %6176 = vadd.xlane.f32.xlu0 %v6175
      %v6177 = vpop.xlane.xlu0 %6176
      %v6178 = vsel %vm1102, %v5842, 0.0
      %6179 = vadd.xlane.f32.xlu0 %v6178
      %v6180 = vpop.xlane.xlu0 %6179
      %v6181 = vsel %vm1102, %v5843, 0.0
      %6182 = vadd.xlane.f32.xlu0 %v6181
      %v6183 = vpop.xlane.xlu0 %6182
      %v6184 = vsel %vm1102, %v5844, 0.0
      %6185 = vadd.xlane.f32.xlu0 %v6184
      %v6186 = vpop.xlane.xlu0 %6185
      %v6187 = vsel %vm1102, %v5845, 0.0
      %6188 = vadd.xlane.f32.xlu0 %v6187
      %v6189 = vpop.xlane.xlu0 %6188
      %v6190 = vsel %vm1102, %v5846, 0.0
      %6191 = vadd.xlane.f32.xlu0 %v6190
      %v6192 = vpop.xlane.xlu0 %6191
      %v6193 = vsel %vm1102, %v5847, 0.0
      %6194 = vadd.xlane.f32.xlu0 %v6193
      %v6195 = vpop.xlane.xlu0 %6194
      %v6196 = vsel %vm1102, %v5848, 0.0
      %6197 = vadd.xlane.f32.xlu0 %v6196
      %v6198 = vpop.xlane.xlu0 %6197
      %v6199 = vsel %vm1102, %v5849, 0.0
      %6200 = vadd.xlane.f32.xlu0 %v6199
      %v6201 = vpop.xlane.xlu0 %6200
      %v6202 = vsel %vm1102, %v5850, 0.0
      %6203 = vadd.xlane.f32.xlu0 %v6202
      %v6204 = vpop.xlane.xlu0 %6203
      %v6205 = vsel %vm1102, %v5851, 0.0
      %6206 = vadd.xlane.f32.xlu0 %v6205
      %v6207 = vpop.xlane.xlu0 %6206
      %v6208 = vsel %vm1102, %v5852, 0.0
      %6209 = vadd.xlane.f32.xlu0 %v6208
      %v6210 = vpop.xlane.xlu0 %6209
      %v6211 = vsel %vm1102, %v5853, 0.0
      %6212 = vadd.xlane.f32.xlu0 %v6211
      %v6213 = vpop.xlane.xlu0 %6212
      %v6214 = vsel %vm1102, %v5854, 0.0
      %6215 = vadd.xlane.f32.xlu0 %v6214
      %v6216 = vpop.xlane.xlu0 %6215
      %v6217 = vsel %vm1102, %v5855, 0.0
      %6218 = vadd.xlane.f32.xlu0 %v6217
      %v6219 = vpop.xlane.xlu0 %6218
      %v6220 = vsel %vm1102, %v5856, 0.0
      %6221 = vadd.xlane.f32.xlu0 %v6220
      %v6222 = vpop.xlane.xlu0 %6221
      %v6223 = vsel %vm1102, %v5857, 0.0
      %6224 = vadd.xlane.f32.xlu0 %v6223
      %v6225 = vpop.xlane.xlu0 %6224
      %v6226 = vsel %vm1102, %v5858, 0.0
      %6227 = vadd.xlane.f32.xlu0 %v6226
      %v6228 = vpop.xlane.xlu0 %6227
      %v6229 = vsel %vm1102, %v5859, 0.0
      %6230 = vadd.xlane.f32.xlu0 %v6229
      %v6231 = vpop.xlane.xlu0 %6230
      %v6232 = vsel %vm1102, %v5860, 0.0
      %6233 = vadd.xlane.f32.xlu0 %v6232
      %v6234 = vpop.xlane.xlu0 %6233
      %v6235 = vsel %vm1102, %v5861, 0.0
      %6236 = vadd.xlane.f32.xlu0 %v6235
      %v6237 = vpop.xlane.xlu0 %6236
      %v6238 = vsel %vm1102, %v5862, 0.0
      %6239 = vadd.xlane.f32.xlu0 %v6238
      %v6240 = vpop.xlane.xlu0 %6239
      %v6241 = vsel %vm1102, %v5863, 0.0
      %6242 = vadd.xlane.f32.xlu0 %v6241
      %v6243 = vpop.xlane.xlu0 %6242
      %v6244 = vsel %vm1102, %v5864, 0.0
      %6245 = vadd.xlane.f32.xlu0 %v6244
      %v6246 = vpop.xlane.xlu0 %6245
      %v6247 = vsel %vm1102, %v5865, 0.0
      %6248 = vadd.xlane.f32.xlu0 %v6247
      %v6249 = vpop.xlane.xlu0 %6248
      %v6250 = vmul.f32 %v5868, %v1493
      %v6251 = vmul.f32 %v5871, %v1493
      %v6252 = vmul.f32 %v5874, %v1493
      %v6253 = vmul.f32 %v5877, %v1493
      %v6254 = vmul.f32 %v5880, %v1493
      %v6255 = vmul.f32 %v5883, %v1493
      %v6256 = vmul.f32 %v5886, %v1493
      %v6257 = vmul.f32 %v5889, %v1493
      %v6258 = vmul.f32 %v5892, %v1493
      %v6259 = vmul.f32 %v5895, %v1493
      %v6260 = vmul.f32 %v5898, %v1493
      %v6261 = vmul.f32 %v5901, %v1493
      %v6262 = vmul.f32 %v5904, %v1493
      %v6263 = vmul.f32 %v5907, %v1493
      %v6264 = vmul.f32 %v5910, %v1493
      %v6265 = vmul.f32 %v5913, %v1493
      %v6266 = vmul.f32 %v5916, %v1493
      %v6267 = vmul.f32 %v5919, %v1493
      %v6268 = vmul.f32 %v5922, %v1493
      %v6269 = vmul.f32 %v5925, %v1493
      %v6270 = vmul.f32 %v5928, %v1493
      %v6271 = vmul.f32 %v5931, %v1493
      %v6272 = vmul.f32 %v5934, %v1493
      %v6273 = vmul.f32 %v5937, %v1493
      %v6274 = vmul.f32 %v5940, %v1493
      %v6275 = vmul.f32 %v5943, %v1493
      %v6276 = vmul.f32 %v5946, %v1493
      %v6277 = vmul.f32 %v5949, %v1493
      %v6278 = vmul.f32 %v5952, %v1493
      %v6279 = vmul.f32 %v5955, %v1493
      %v6280 = vmul.f32 %v5958, %v1493
      %v6281 = vmul.f32 %v5961, %v1493
      %v6282 = vmul.f32 %v5964, %v1493
      %v6283 = vmul.f32 %v5967, %v1493
      %v6284 = vmul.f32 %v5970, %v1493
      %v6285 = vmul.f32 %v5973, %v1493
      %v6286 = vmul.f32 %v5976, %v1493
      %v6287 = vmul.f32 %v5979, %v1493
      %v6288 = vmul.f32 %v5982, %v1493
      %v6289 = vmul.f32 %v5985, %v1493
      %v6290 = vmul.f32 %v5988, %v1493
      %v6291 = vmul.f32 %v5991, %v1493
      %v6292 = vmul.f32 %v5994, %v1493
      %v6293 = vmul.f32 %v5997, %v1493
      %v6294 = vmul.f32 %v6000, %v1493
      %v6295 = vmul.f32 %v6003, %v1493
      %v6296 = vmul.f32 %v6006, %v1493
      %v6297 = vmul.f32 %v6009, %v1493
      %v6298 = vmul.f32 %v6012, %v1493
      %v6299 = vmul.f32 %v6015, %v1493
      %v6300 = vmul.f32 %v6018, %v1493
      %v6301 = vmul.f32 %v6021, %v1493
      %v6302 = vmul.f32 %v6024, %v1493
      %v6303 = vmul.f32 %v6027, %v1493
      %v6304 = vmul.f32 %v6030, %v1493
      %v6305 = vmul.f32 %v6033, %v1493
      %v6306 = vmul.f32 %v6036, %v1493
      %v6307 = vmul.f32 %v6039, %v1493
      %v6308 = vmul.f32 %v6042, %v1493
      %v6309 = vmul.f32 %v6045, %v1493
      %v6310 = vmul.f32 %v6048, %v1493
      %v6311 = vmul.f32 %v6051, %v1493
      %v6312 = vmul.f32 %v6054, %v1493
      %v6313 = vmul.f32 %v6057, %v1493
      %v6314 = vmul.f32 %v6060, %v1493
      %v6315 = vmul.f32 %v6063, %v1493
      %v6316 = vmul.f32 %v6066, %v1493
      %v6317 = vmul.f32 %v6069, %v1493
      %v6318 = vmul.f32 %v6072, %v1493
      %v6319 = vmul.f32 %v6075, %v1493
      %v6320 = vmul.f32 %v6078, %v1493
      %v6321 = vmul.f32 %v6081, %v1493
      %v6322 = vmul.f32 %v6084, %v1493
      %v6323 = vmul.f32 %v6087, %v1493
      %v6324 = vmul.f32 %v6090, %v1493
      %v6325 = vmul.f32 %v6093, %v1493
      %v6326 = vmul.f32 %v6096, %v1493
      %v6327 = vmul.f32 %v6099, %v1493
      %v6328 = vmul.f32 %v6102, %v1493
      %v6329 = vmul.f32 %v6105, %v1493
      %v6330 = vmul.f32 %v6108, %v1493
      %v6331 = vmul.f32 %v6111, %v1493
      %v6332 = vmul.f32 %v6114, %v1493
      %v6333 = vmul.f32 %v6117, %v1493
      %v6334 = vmul.f32 %v6120, %v1493
      %v6335 = vmul.f32 %v6123, %v1493
      %v6336 = vmul.f32 %v6126, %v1493
      %v6337 = vmul.f32 %v6129, %v1493
      %v6338 = vmul.f32 %v6132, %v1493
      %v6339 = vmul.f32 %v6135, %v1493
      %v6340 = vmul.f32 %v6138, %v1493
      %v6341 = vmul.f32 %v6141, %v1493
      %v6342 = vmul.f32 %v6144, %v1493
      %v6343 = vmul.f32 %v6147, %v1493
      %v6344 = vmul.f32 %v6150, %v1493
      %v6345 = vmul.f32 %v6153, %v1493
      %v6346 = vmul.f32 %v6156, %v1493
      %v6347 = vmul.f32 %v6159, %v1493
      %v6348 = vmul.f32 %v6162, %v1493
      %v6349 = vmul.f32 %v6165, %v1493
      %v6350 = vmul.f32 %v6168, %v1493
      %v6351 = vmul.f32 %v6171, %v1493
      %v6352 = vmul.f32 %v6174, %v1493
      %v6353 = vmul.f32 %v6177, %v1493
      %v6354 = vmul.f32 %v6180, %v1493
      %v6355 = vmul.f32 %v6183, %v1493
      %v6356 = vmul.f32 %v6186, %v1493
      %v6357 = vmul.f32 %v6189, %v1493
      %v6358 = vmul.f32 %v6192, %v1493
      %v6359 = vmul.f32 %v6195, %v1493
      %v6360 = vmul.f32 %v6198, %v1493
      %v6361 = vmul.f32 %v6201, %v1493
      %v6362 = vmul.f32 %v6204, %v1493
      %v6363 = vmul.f32 %v6207, %v1493
      %v6364 = vmul.f32 %v6210, %v1493
      %v6365 = vmul.f32 %v6213, %v1493
      %v6366 = vmul.f32 %v6216, %v1493
      %v6367 = vmul.f32 %v6219, %v1493
      %v6368 = vmul.f32 %v6222, %v1493
      %v6369 = vmul.f32 %v6225, %v1493
      %v6370 = vmul.f32 %v6228, %v1493
      %v6371 = vmul.f32 %v6231, %v1493
      %v6372 = vmul.f32 %v6234, %v1493
      %v6373 = vmul.f32 %v6237, %v1493
      %v6374 = vmul.f32 %v6240, %v1493
      %v6375 = vmul.f32 %v6243, %v1493
      %v6376 = vmul.f32 %v6246, %v1493
      %v6377 = vmul.f32 %v6249, %v1493
      %v6378 = vadd.f32 %v6250, 1e-05
      %v6379 = vadd.f32 %v6251, 1e-05
      %v6380 = vadd.f32 %v6252, 1e-05
      %v6381 = vadd.f32 %v6253, 1e-05
      %v6382 = vadd.f32 %v6254, 1e-05
      %v6383 = vadd.f32 %v6255, 1e-05
      %v6384 = vadd.f32 %v6256, 1e-05
      %v6385 = vadd.f32 %v6257, 1e-05
      %v6386 = vadd.f32 %v6258, 1e-05
      %v6387 = vadd.f32 %v6259, 1e-05
      %v6388 = vadd.f32 %v6260, 1e-05
      %v6389 = vadd.f32 %v6261, 1e-05
      %v6390 = vadd.f32 %v6262, 1e-05
      %v6391 = vadd.f32 %v6263, 1e-05
      %v6392 = vadd.f32 %v6264, 1e-05
      %v6393 = vadd.f32 %v6265, 1e-05
      %v6394 = vadd.f32 %v6266, 1e-05
      %v6395 = vadd.f32 %v6267, 1e-05
      %v6396 = vadd.f32 %v6268, 1e-05
      %v6397 = vadd.f32 %v6269, 1e-05
      %v6398 = vadd.f32 %v6270, 1e-05
      %v6399 = vadd.f32 %v6271, 1e-05
      %v6400 = vadd.f32 %v6272, 1e-05
      %v6401 = vadd.f32 %v6273, 1e-05
      %v6402 = vadd.f32 %v6274, 1e-05
      %v6403 = vadd.f32 %v6275, 1e-05
      %v6404 = vadd.f32 %v6276, 1e-05
      %v6405 = vadd.f32 %v6277, 1e-05
      %v6406 = vadd.f32 %v6278, 1e-05
      %v6407 = vadd.f32 %v6279, 1e-05
      %v6408 = vadd.f32 %v6280, 1e-05
      %v6409 = vadd.f32 %v6281, 1e-05
      %v6410 = vadd.f32 %v6282, 1e-05
      %v6411 = vadd.f32 %v6283, 1e-05
      %v6412 = vadd.f32 %v6284, 1e-05
      %v6413 = vadd.f32 %v6285, 1e-05
      %v6414 = vadd.f32 %v6286, 1e-05
      %v6415 = vadd.f32 %v6287, 1e-05
      %v6416 = vadd.f32 %v6288, 1e-05
      %v6417 = vadd.f32 %v6289, 1e-05
      %v6418 = vadd.f32 %v6290, 1e-05
      %v6419 = vadd.f32 %v6291, 1e-05
      %v6420 = vadd.f32 %v6292, 1e-05
      %v6421 = vadd.f32 %v6293, 1e-05
      %v6422 = vadd.f32 %v6294, 1e-05
      %v6423 = vadd.f32 %v6295, 1e-05
      %v6424 = vadd.f32 %v6296, 1e-05
      %v6425 = vadd.f32 %v6297, 1e-05
      %v6426 = vadd.f32 %v6298, 1e-05
      %v6427 = vadd.f32 %v6299, 1e-05
      %v6428 = vadd.f32 %v6300, 1e-05
      %v6429 = vadd.f32 %v6301, 1e-05
      %v6430 = vadd.f32 %v6302, 1e-05
      %v6431 = vadd.f32 %v6303, 1e-05
      %v6432 = vadd.f32 %v6304, 1e-05
      %v6433 = vadd.f32 %v6305, 1e-05
      %v6434 = vadd.f32 %v6306, 1e-05
      %v6435 = vadd.f32 %v6307, 1e-05
      %v6436 = vadd.f32 %v6308, 1e-05
      %v6437 = vadd.f32 %v6309, 1e-05
      %v6438 = vadd.f32 %v6310, 1e-05
      %v6439 = vadd.f32 %v6311, 1e-05
      %v6440 = vadd.f32 %v6312, 1e-05
      %v6441 = vadd.f32 %v6313, 1e-05
      %v6442 = vadd.f32 %v6314, 1e-05
      %v6443 = vadd.f32 %v6315, 1e-05
      %v6444 = vadd.f32 %v6316, 1e-05
      %v6445 = vadd.f32 %v6317, 1e-05
      %v6446 = vadd.f32 %v6318, 1e-05
      %v6447 = vadd.f32 %v6319, 1e-05
      %v6448 = vadd.f32 %v6320, 1e-05
      %v6449 = vadd.f32 %v6321, 1e-05
      %v6450 = vadd.f32 %v6322, 1e-05
      %v6451 = vadd.f32 %v6323, 1e-05
      %v6452 = vadd.f32 %v6324, 1e-05
      %v6453 = vadd.f32 %v6325, 1e-05
      %v6454 = vadd.f32 %v6326, 1e-05
      %v6455 = vadd.f32 %v6327, 1e-05
      %v6456 = vadd.f32 %v6328, 1e-05
      %v6457 = vadd.f32 %v6329, 1e-05
      %v6458 = vadd.f32 %v6330, 1e-05
      %v6459 = vadd.f32 %v6331, 1e-05
      %v6460 = vadd.f32 %v6332, 1e-05
      %v6461 = vadd.f32 %v6333, 1e-05
      %v6462 = vadd.f32 %v6334, 1e-05
      %v6463 = vadd.f32 %v6335, 1e-05
      %v6464 = vadd.f32 %v6336, 1e-05
      %v6465 = vadd.f32 %v6337, 1e-05
      %v6466 = vadd.f32 %v6338, 1e-05
      %v6467 = vadd.f32 %v6339, 1e-05
      %v6468 = vadd.f32 %v6340, 1e-05
      %v6469 = vadd.f32 %v6341, 1e-05
      %v6470 = vadd.f32 %v6342, 1e-05
      %v6471 = vadd.f32 %v6343, 1e-05
      %v6472 = vadd.f32 %v6344, 1e-05
      %v6473 = vadd.f32 %v6345, 1e-05
      %v6474 = vadd.f32 %v6346, 1e-05
      %v6475 = vadd.f32 %v6347, 1e-05
      %v6476 = vadd.f32 %v6348, 1e-05
      %v6477 = vadd.f32 %v6349, 1e-05
      %v6478 = vadd.f32 %v6350, 1e-05
      %v6479 = vadd.f32 %v6351, 1e-05
      %v6480 = vadd.f32 %v6352, 1e-05
      %v6481 = vadd.f32 %v6353, 1e-05
      %v6482 = vadd.f32 %v6354, 1e-05
      %v6483 = vadd.f32 %v6355, 1e-05
      %v6484 = vadd.f32 %v6356, 1e-05
      %v6485 = vadd.f32 %v6357, 1e-05
      %v6486 = vadd.f32 %v6358, 1e-05
      %v6487 = vadd.f32 %v6359, 1e-05
      %v6488 = vadd.f32 %v6360, 1e-05
      %v6489 = vadd.f32 %v6361, 1e-05
      %v6490 = vadd.f32 %v6362, 1e-05
      %v6491 = vadd.f32 %v6363, 1e-05
      %v6492 = vadd.f32 %v6364, 1e-05
      %v6493 = vadd.f32 %v6365, 1e-05
      %v6494 = vadd.f32 %v6366, 1e-05
      %v6495 = vadd.f32 %v6367, 1e-05
      %v6496 = vadd.f32 %v6368, 1e-05
      %v6497 = vadd.f32 %v6369, 1e-05
      %v6498 = vadd.f32 %v6370, 1e-05
      %v6499 = vadd.f32 %v6371, 1e-05
      %v6500 = vadd.f32 %v6372, 1e-05
      %v6501 = vadd.f32 %v6373, 1e-05
      %v6502 = vadd.f32 %v6374, 1e-05
      %v6503 = vadd.f32 %v6375, 1e-05
      %v6504 = vadd.f32 %v6376, 1e-05
      %v6505 = vadd.f32 %v6377, 1e-05
      %v6506 = vrsqrt.pop %v6378
      %v6507 = vmul.f32 %v6506, %v6378
      %v6508 = vmul.f32 %v6507, %v6506
      %v6509 = vmul.f32 0.5, %v6508
      %v6510 = vsub.f32 1.5, %v6509
      %v6511 = vmul.f32 %v6506, %v6510
      %vm6512 = vweird.f32 %v6378
      %vm6513 = vweird.f32 %v6506
      %vm6514 = vmor %vm6512, %vm6513
      %v6515 = vsel %vm6514, %v6506, %v6511
      %v6516 = vrsqrt.pop %v6379
      %v6517 = vmul.f32 %v6516, %v6379
      %v6518 = vmul.f32 %v6517, %v6516
      %v6519 = vmul.f32 0.5, %v6518
      %v6520 = vsub.f32 1.5, %v6519
      %v6521 = vmul.f32 %v6516, %v6520
      %vm6522 = vweird.f32 %v6379
      %vm6523 = vweird.f32 %v6516
      %vm6524 = vmor %vm6522, %vm6523
      %v6525 = vsel %vm6524, %v6516, %v6521
      %v6526 = vrsqrt.pop %v6380
      %v6527 = vmul.f32 %v6526, %v6380
      %v6528 = vmul.f32 %v6527, %v6526
      %v6529 = vmul.f32 0.5, %v6528
      %v6530 = vsub.f32 1.5, %v6529
      %v6531 = vmul.f32 %v6526, %v6530
      %vm6532 = vweird.f32 %v6380
      %vm6533 = vweird.f32 %v6526
      %vm6534 = vmor %vm6532, %vm6533
      %v6535 = vsel %vm6534, %v6526, %v6531
      %v6536 = vrsqrt.pop %v6381
      %v6537 = vmul.f32 %v6536, %v6381
      %v6538 = vmul.f32 %v6537, %v6536
      %v6539 = vmul.f32 0.5, %v6538
      %v6540 = vsub.f32 1.5, %v6539
      %v6541 = vmul.f32 %v6536, %v6540
      %vm6542 = vweird.f32 %v6381
      %vm6543 = vweird.f32 %v6536
      %vm6544 = vmor %vm6542, %vm6543
      %v6545 = vsel %vm6544, %v6536, %v6541
      %v6546 = vrsqrt.pop %v6382
      %v6547 = vmul.f32 %v6546, %v6382
      %v6548 = vmul.f32 %v6547, %v6546
      %v6549 = vmul.f32 0.5, %v6548
      %v6550 = vsub.f32 1.5, %v6549
      %v6551 = vmul.f32 %v6546, %v6550
      %vm6552 = vweird.f32 %v6382
      %vm6553 = vweird.f32 %v6546
      %vm6554 = vmor %vm6552, %vm6553
      %v6555 = vsel %vm6554, %v6546, %v6551
      %v6556 = vrsqrt.pop %v6383
      %v6557 = vmul.f32 %v6556, %v6383
      %v6558 = vmul.f32 %v6557, %v6556
      %v6559 = vmul.f32 0.5, %v6558
      %v6560 = vsub.f32 1.5, %v6559
      %v6561 = vmul.f32 %v6556, %v6560
      %vm6562 = vweird.f32 %v6383
      %vm6563 = vweird.f32 %v6556
      %vm6564 = vmor %vm6562, %vm6563
      %v6565 = vsel %vm6564, %v6556, %v6561
      %v6566 = vrsqrt.pop %v6384
      %v6567 = vmul.f32 %v6566, %v6384
      %v6568 = vmul.f32 %v6567, %v6566
      %v6569 = vmul.f32 0.5, %v6568
      %v6570 = vsub.f32 1.5, %v6569
      %v6571 = vmul.f32 %v6566, %v6570
      %vm6572 = vweird.f32 %v6384
      %vm6573 = vweird.f32 %v6566
      %vm6574 = vmor %vm6572, %vm6573
      %v6575 = vsel %vm6574, %v6566, %v6571
      %v6576 = vrsqrt.pop %v6385
      %v6577 = vmul.f32 %v6576, %v6385
      %v6578 = vmul.f32 %v6577, %v6576
      %v6579 = vmul.f32 0.5, %v6578
      %v6580 = vsub.f32 1.5, %v6579
      %v6581 = vmul.f32 %v6576, %v6580
      %vm6582 = vweird.f32 %v6385
      %vm6583 = vweird.f32 %v6576
      %vm6584 = vmor %vm6582, %vm6583
      %v6585 = vsel %vm6584, %v6576, %v6581
      %v6586 = vrsqrt.pop %v6386
      %v6587 = vmul.f32 %v6586, %v6386
      %v6588 = vmul.f32 %v6587, %v6586
      %v6589 = vmul.f32 0.5, %v6588
      %v6590 = vsub.f32 1.5, %v6589
      %v6591 = vmul.f32 %v6586, %v6590
      %vm6592 = vweird.f32 %v6386
      %vm6593 = vweird.f32 %v6586
      %vm6594 = vmor %vm6592, %vm6593
      %v6595 = vsel %vm6594, %v6586, %v6591
      %v6596 = vrsqrt.pop %v6387
      %v6597 = vmul.f32 %v6596, %v6387
      %v6598 = vmul.f32 %v6597, %v6596
      %v6599 = vmul.f32 0.5, %v6598
      %v6600 = vsub.f32 1.5, %v6599
      %v6601 = vmul.f32 %v6596, %v6600
      %vm6602 = vweird.f32 %v6387
      %vm6603 = vweird.f32 %v6596
      %vm6604 = vmor %vm6602, %vm6603
      %v6605 = vsel %vm6604, %v6596, %v6601
      %v6606 = vrsqrt.pop %v6388
      %v6607 = vmul.f32 %v6606, %v6388
      %v6608 = vmul.f32 %v6607, %v6606
      %v6609 = vmul.f32 0.5, %v6608
      %v6610 = vsub.f32 1.5, %v6609
      %v6611 = vmul.f32 %v6606, %v6610
      %vm6612 = vweird.f32 %v6388
      %vm6613 = vweird.f32 %v6606
      %vm6614 = vmor %vm6612, %vm6613
      %v6615 = vsel %vm6614, %v6606, %v6611
      %v6616 = vrsqrt.pop %v6389
      %v6617 = vmul.f32 %v6616, %v6389
      %v6618 = vmul.f32 %v6617, %v6616
      %v6619 = vmul.f32 0.5, %v6618
      %v6620 = vsub.f32 1.5, %v6619
      %v6621 = vmul.f32 %v6616, %v6620
      %vm6622 = vweird.f32 %v6389
      %vm6623 = vweird.f32 %v6616
      %vm6624 = vmor %vm6622, %vm6623
      %v6625 = vsel %vm6624, %v6616, %v6621
      %v6626 = vrsqrt.pop %v6390
      %v6627 = vmul.f32 %v6626, %v6390
      %v6628 = vmul.f32 %v6627, %v6626
      %v6629 = vmul.f32 0.5, %v6628
      %v6630 = vsub.f32 1.5, %v6629
      %v6631 = vmul.f32 %v6626, %v6630
      %vm6632 = vweird.f32 %v6390
      %vm6633 = vweird.f32 %v6626
      %vm6634 = vmor %vm6632, %vm6633
      %v6635 = vsel %vm6634, %v6626, %v6631
      %v6636 = vrsqrt.pop %v6391
      %v6637 = vmul.f32 %v6636, %v6391
      %v6638 = vmul.f32 %v6637, %v6636
      %v6639 = vmul.f32 0.5, %v6638
      %v6640 = vsub.f32 1.5, %v6639
      %v6641 = vmul.f32 %v6636, %v6640
      %vm6642 = vweird.f32 %v6391
      %vm6643 = vweird.f32 %v6636
      %vm6644 = vmor %vm6642, %vm6643
      %v6645 = vsel %vm6644, %v6636, %v6641
      %v6646 = vrsqrt.pop %v6392
      %v6647 = vmul.f32 %v6646, %v6392
      %v6648 = vmul.f32 %v6647, %v6646
      %v6649 = vmul.f32 0.5, %v6648
      %v6650 = vsub.f32 1.5, %v6649
      %v6651 = vmul.f32 %v6646, %v6650
      %vm6652 = vweird.f32 %v6392
      %vm6653 = vweird.f32 %v6646
      %vm6654 = vmor %vm6652, %vm6653
      %v6655 = vsel %vm6654, %v6646, %v6651
      %v6656 = vrsqrt.pop %v6393
      %v6657 = vmul.f32 %v6656, %v6393
      %v6658 = vmul.f32 %v6657, %v6656
      %v6659 = vmul.f32 0.5, %v6658
      %v6660 = vsub.f32 1.5, %v6659
      %v6661 = vmul.f32 %v6656, %v6660
      %vm6662 = vweird.f32 %v6393
      %vm6663 = vweird.f32 %v6656
      %vm6664 = vmor %vm6662, %vm6663
      %v6665 = vsel %vm6664, %v6656, %v6661
      %v6666 = vrsqrt.pop %v6394
      %v6667 = vmul.f32 %v6666, %v6394
      %v6668 = vmul.f32 %v6667, %v6666
      %v6669 = vmul.f32 0.5, %v6668
      %v6670 = vsub.f32 1.5, %v6669
      %v6671 = vmul.f32 %v6666, %v6670
      %vm6672 = vweird.f32 %v6394
      %vm6673 = vweird.f32 %v6666
      %vm6674 = vmor %vm6672, %vm6673
      %v6675 = vsel %vm6674, %v6666, %v6671
      %v6676 = vrsqrt.pop %v6395
      %v6677 = vmul.f32 %v6676, %v6395
      %v6678 = vmul.f32 %v6677, %v6676
      %v6679 = vmul.f32 0.5, %v6678
      %v6680 = vsub.f32 1.5, %v6679
      %v6681 = vmul.f32 %v6676, %v6680
      %vm6682 = vweird.f32 %v6395
      %vm6683 = vweird.f32 %v6676
      %vm6684 = vmor %vm6682, %vm6683
      %v6685 = vsel %vm6684, %v6676, %v6681
      %v6686 = vrsqrt.pop %v6396
      %v6687 = vmul.f32 %v6686, %v6396
      %v6688 = vmul.f32 %v6687, %v6686
      %v6689 = vmul.f32 0.5, %v6688
      %v6690 = vsub.f32 1.5, %v6689
      %v6691 = vmul.f32 %v6686, %v6690
      %vm6692 = vweird.f32 %v6396
      %vm6693 = vweird.f32 %v6686
      %vm6694 = vmor %vm6692, %vm6693
      %v6695 = vsel %vm6694, %v6686, %v6691
      %v6696 = vrsqrt.pop %v6397
      %v6697 = vmul.f32 %v6696, %v6397
      %v6698 = vmul.f32 %v6697, %v6696
      %v6699 = vmul.f32 0.5, %v6698
      %v6700 = vsub.f32 1.5, %v6699
      %v6701 = vmul.f32 %v6696, %v6700
      %vm6702 = vweird.f32 %v6397
      %vm6703 = vweird.f32 %v6696
      %vm6704 = vmor %vm6702, %vm6703
      %v6705 = vsel %vm6704, %v6696, %v6701
      %v6706 = vrsqrt.pop %v6398
      %v6707 = vmul.f32 %v6706, %v6398
      %v6708 = vmul.f32 %v6707, %v6706
      %v6709 = vmul.f32 0.5, %v6708
      %v6710 = vsub.f32 1.5, %v6709
      %v6711 = vmul.f32 %v6706, %v6710
      %vm6712 = vweird.f32 %v6398
      %vm6713 = vweird.f32 %v6706
      %vm6714 = vmor %vm6712, %vm6713
      %v6715 = vsel %vm6714, %v6706, %v6711
      %v6716 = vrsqrt.pop %v6399
      %v6717 = vmul.f32 %v6716, %v6399
      %v6718 = vmul.f32 %v6717, %v6716
      %v6719 = vmul.f32 0.5, %v6718
      %v6720 = vsub.f32 1.5, %v6719
      %v6721 = vmul.f32 %v6716, %v6720
      %vm6722 = vweird.f32 %v6399
      %vm6723 = vweird.f32 %v6716
      %vm6724 = vmor %vm6722, %vm6723
      %v6725 = vsel %vm6724, %v6716, %v6721
      %v6726 = vrsqrt.pop %v6400
      %v6727 = vmul.f32 %v6726, %v6400
      %v6728 = vmul.f32 %v6727, %v6726
      %v6729 = vmul.f32 0.5, %v6728
      %v6730 = vsub.f32 1.5, %v6729
      %v6731 = vmul.f32 %v6726, %v6730
      %vm6732 = vweird.f32 %v6400
      %vm6733 = vweird.f32 %v6726
      %vm6734 = vmor %vm6732, %vm6733
      %v6735 = vsel %vm6734, %v6726, %v6731
      %v6736 = vrsqrt.pop %v6401
      %v6737 = vmul.f32 %v6736, %v6401
      %v6738 = vmul.f32 %v6737, %v6736
      %v6739 = vmul.f32 0.5, %v6738
      %v6740 = vsub.f32 1.5, %v6739
      %v6741 = vmul.f32 %v6736, %v6740
      %vm6742 = vweird.f32 %v6401
      %vm6743 = vweird.f32 %v6736
      %vm6744 = vmor %vm6742, %vm6743
      %v6745 = vsel %vm6744, %v6736, %v6741
      %v6746 = vrsqrt.pop %v6402
      %v6747 = vmul.f32 %v6746, %v6402
      %v6748 = vmul.f32 %v6747, %v6746
      %v6749 = vmul.f32 0.5, %v6748
      %v6750 = vsub.f32 1.5, %v6749
      %v6751 = vmul.f32 %v6746, %v6750
      %vm6752 = vweird.f32 %v6402
      %vm6753 = vweird.f32 %v6746
      %vm6754 = vmor %vm6752, %vm6753
      %v6755 = vsel %vm6754, %v6746, %v6751
      %v6756 = vrsqrt.pop %v6403
      %v6757 = vmul.f32 %v6756, %v6403
      %v6758 = vmul.f32 %v6757, %v6756
      %v6759 = vmul.f32 0.5, %v6758
      %v6760 = vsub.f32 1.5, %v6759
      %v6761 = vmul.f32 %v6756, %v6760
      %vm6762 = vweird.f32 %v6403
      %vm6763 = vweird.f32 %v6756
      %vm6764 = vmor %vm6762, %vm6763
      %v6765 = vsel %vm6764, %v6756, %v6761
      %v6766 = vrsqrt.pop %v6404
      %v6767 = vmul.f32 %v6766, %v6404
      %v6768 = vmul.f32 %v6767, %v6766
      %v6769 = vmul.f32 0.5, %v6768
      %v6770 = vsub.f32 1.5, %v6769
      %v6771 = vmul.f32 %v6766, %v6770
      %vm6772 = vweird.f32 %v6404
      %vm6773 = vweird.f32 %v6766
      %vm6774 = vmor %vm6772, %vm6773
      %v6775 = vsel %vm6774, %v6766, %v6771
      %v6776 = vrsqrt.pop %v6405
      %v6777 = vmul.f32 %v6776, %v6405
      %v6778 = vmul.f32 %v6777, %v6776
      %v6779 = vmul.f32 0.5, %v6778
      %v6780 = vsub.f32 1.5, %v6779
      %v6781 = vmul.f32 %v6776, %v6780
      %vm6782 = vweird.f32 %v6405
      %vm6783 = vweird.f32 %v6776
      %vm6784 = vmor %vm6782, %vm6783
      %v6785 = vsel %vm6784, %v6776, %v6781
      %v6786 = vrsqrt.pop %v6406
      %v6787 = vmul.f32 %v6786, %v6406
      %v6788 = vmul.f32 %v6787, %v6786
      %v6789 = vmul.f32 0.5, %v6788
      %v6790 = vsub.f32 1.5, %v6789
      %v6791 = vmul.f32 %v6786, %v6790
      %vm6792 = vweird.f32 %v6406
      %vm6793 = vweird.f32 %v6786
      %vm6794 = vmor %vm6792, %vm6793
      %v6795 = vsel %vm6794, %v6786, %v6791
      %v6796 = vrsqrt.pop %v6407
      %v6797 = vmul.f32 %v6796, %v6407
      %v6798 = vmul.f32 %v6797, %v6796
      %v6799 = vmul.f32 0.5, %v6798
      %v6800 = vsub.f32 1.5, %v6799
      %v6801 = vmul.f32 %v6796, %v6800
      %vm6802 = vweird.f32 %v6407
      %vm6803 = vweird.f32 %v6796
      %vm6804 = vmor %vm6802, %vm6803
      %v6805 = vsel %vm6804, %v6796, %v6801
      %v6806 = vrsqrt.pop %v6408
      %v6807 = vmul.f32 %v6806, %v6408
      %v6808 = vmul.f32 %v6807, %v6806
      %v6809 = vmul.f32 0.5, %v6808
      %v6810 = vsub.f32 1.5, %v6809
      %v6811 = vmul.f32 %v6806, %v6810
      %vm6812 = vweird.f32 %v6408
      %vm6813 = vweird.f32 %v6806
      %vm6814 = vmor %vm6812, %vm6813
      %v6815 = vsel %vm6814, %v6806, %v6811
      %v6816 = vrsqrt.pop %v6409
      %v6817 = vmul.f32 %v6816, %v6409
      %v6818 = vmul.f32 %v6817, %v6816
      %v6819 = vmul.f32 0.5, %v6818
      %v6820 = vsub.f32 1.5, %v6819
      %v6821 = vmul.f32 %v6816, %v6820
      %vm6822 = vweird.f32 %v6409
      %vm6823 = vweird.f32 %v6816
      %vm6824 = vmor %vm6822, %vm6823
      %v6825 = vsel %vm6824, %v6816, %v6821
      %v6826 = vrsqrt.pop %v6410
      %v6827 = vmul.f32 %v6826, %v6410
      %v6828 = vmul.f32 %v6827, %v6826
      %v6829 = vmul.f32 0.5, %v6828
      %v6830 = vsub.f32 1.5, %v6829
      %v6831 = vmul.f32 %v6826, %v6830
      %vm6832 = vweird.f32 %v6410
      %vm6833 = vweird.f32 %v6826
      %vm6834 = vmor %vm6832, %vm6833
      %v6835 = vsel %vm6834, %v6826, %v6831
      %v6836 = vrsqrt.pop %v6411
      %v6837 = vmul.f32 %v6836, %v6411
      %v6838 = vmul.f32 %v6837, %v6836
      %v6839 = vmul.f32 0.5, %v6838
      %v6840 = vsub.f32 1.5, %v6839
      %v6841 = vmul.f32 %v6836, %v6840
      %vm6842 = vweird.f32 %v6411
      %vm6843 = vweird.f32 %v6836
      %vm6844 = vmor %vm6842, %vm6843
      %v6845 = vsel %vm6844, %v6836, %v6841
      %v6846 = vrsqrt.pop %v6412
      %v6847 = vmul.f32 %v6846, %v6412
      %v6848 = vmul.f32 %v6847, %v6846
      %v6849 = vmul.f32 0.5, %v6848
      %v6850 = vsub.f32 1.5, %v6849
      %v6851 = vmul.f32 %v6846, %v6850
      %vm6852 = vweird.f32 %v6412
      %vm6853 = vweird.f32 %v6846
      %vm6854 = vmor %vm6852, %vm6853
      %v6855 = vsel %vm6854, %v6846, %v6851
      %v6856 = vrsqrt.pop %v6413
      %v6857 = vmul.f32 %v6856, %v6413
      %v6858 = vmul.f32 %v6857, %v6856
      %v6859 = vmul.f32 0.5, %v6858
      %v6860 = vsub.f32 1.5, %v6859
      %v6861 = vmul.f32 %v6856, %v6860
      %vm6862 = vweird.f32 %v6413
      %vm6863 = vweird.f32 %v6856
      %vm6864 = vmor %vm6862, %vm6863
      %v6865 = vsel %vm6864, %v6856, %v6861
      %v6866 = vrsqrt.pop %v6414
      %v6867 = vmul.f32 %v6866, %v6414
      %v6868 = vmul.f32 %v6867, %v6866
      %v6869 = vmul.f32 0.5, %v6868
      %v6870 = vsub.f32 1.5, %v6869
      %v6871 = vmul.f32 %v6866, %v6870
      %vm6872 = vweird.f32 %v6414
      %vm6873 = vweird.f32 %v6866
      %vm6874 = vmor %vm6872, %vm6873
      %v6875 = vsel %vm6874, %v6866, %v6871
      %v6876 = vrsqrt.pop %v6415
      %v6877 = vmul.f32 %v6876, %v6415
      %v6878 = vmul.f32 %v6877, %v6876
      %v6879 = vmul.f32 0.5, %v6878
      %v6880 = vsub.f32 1.5, %v6879
      %v6881 = vmul.f32 %v6876, %v6880
      %vm6882 = vweird.f32 %v6415
      %vm6883 = vweird.f32 %v6876
      %vm6884 = vmor %vm6882, %vm6883
      %v6885 = vsel %vm6884, %v6876, %v6881
      %v6886 = vrsqrt.pop %v6416
      %v6887 = vmul.f32 %v6886, %v6416
      %v6888 = vmul.f32 %v6887, %v6886
      %v6889 = vmul.f32 0.5, %v6888
      %v6890 = vsub.f32 1.5, %v6889
      %v6891 = vmul.f32 %v6886, %v6890
      %vm6892 = vweird.f32 %v6416
      %vm6893 = vweird.f32 %v6886
      %vm6894 = vmor %vm6892, %vm6893
      %v6895 = vsel %vm6894, %v6886, %v6891
      %v6896 = vrsqrt.pop %v6417
      %v6897 = vmul.f32 %v6896, %v6417
      %v6898 = vmul.f32 %v6897, %v6896
      %v6899 = vmul.f32 0.5, %v6898
      %v6900 = vsub.f32 1.5, %v6899
      %v6901 = vmul.f32 %v6896, %v6900
      %vm6902 = vweird.f32 %v6417
      %vm6903 = vweird.f32 %v6896
      %vm6904 = vmor %vm6902, %vm6903
      %v6905 = vsel %vm6904, %v6896, %v6901
      %v6906 = vrsqrt.pop %v6418
      %v6907 = vmul.f32 %v6906, %v6418
      %v6908 = vmul.f32 %v6907, %v6906
      %v6909 = vmul.f32 0.5, %v6908
      %v6910 = vsub.f32 1.5, %v6909
      %v6911 = vmul.f32 %v6906, %v6910
      %vm6912 = vweird.f32 %v6418
      %vm6913 = vweird.f32 %v6906
      %vm6914 = vmor %vm6912, %vm6913
      %v6915 = vsel %vm6914, %v6906, %v6911
      %v6916 = vrsqrt.pop %v6419
      %v6917 = vmul.f32 %v6916, %v6419
      %v6918 = vmul.f32 %v6917, %v6916
      %v6919 = vmul.f32 0.5, %v6918
      %v6920 = vsub.f32 1.5, %v6919
      %v6921 = vmul.f32 %v6916, %v6920
      %vm6922 = vweird.f32 %v6419
      %vm6923 = vweird.f32 %v6916
      %vm6924 = vmor %vm6922, %vm6923
      %v6925 = vsel %vm6924, %v6916, %v6921
      %v6926 = vrsqrt.pop %v6420
      %v6927 = vmul.f32 %v6926, %v6420
      %v6928 = vmul.f32 %v6927, %v6926
      %v6929 = vmul.f32 0.5, %v6928
      %v6930 = vsub.f32 1.5, %v6929
      %v6931 = vmul.f32 %v6926, %v6930
      %vm6932 = vweird.f32 %v6420
      %vm6933 = vweird.f32 %v6926
      %vm6934 = vmor %vm6932, %vm6933
      %v6935 = vsel %vm6934, %v6926, %v6931
      %v6936 = vrsqrt.pop %v6421
      %v6937 = vmul.f32 %v6936, %v6421
      %v6938 = vmul.f32 %v6937, %v6936
      %v6939 = vmul.f32 0.5, %v6938
      %v6940 = vsub.f32 1.5, %v6939
      %v6941 = vmul.f32 %v6936, %v6940
      %vm6942 = vweird.f32 %v6421
      %vm6943 = vweird.f32 %v6936
      %vm6944 = vmor %vm6942, %vm6943
      %v6945 = vsel %vm6944, %v6936, %v6941
      %v6946 = vrsqrt.pop %v6422
      %v6947 = vmul.f32 %v6946, %v6422
      %v6948 = vmul.f32 %v6947, %v6946
      %v6949 = vmul.f32 0.5, %v6948
      %v6950 = vsub.f32 1.5, %v6949
      %v6951 = vmul.f32 %v6946, %v6950
      %vm6952 = vweird.f32 %v6422
      %vm6953 = vweird.f32 %v6946
      %vm6954 = vmor %vm6952, %vm6953
      %v6955 = vsel %vm6954, %v6946, %v6951
      %v6956 = vrsqrt.pop %v6423
      %v6957 = vmul.f32 %v6956, %v6423
      %v6958 = vmul.f32 %v6957, %v6956
      %v6959 = vmul.f32 0.5, %v6958
      %v6960 = vsub.f32 1.5, %v6959
      %v6961 = vmul.f32 %v6956, %v6960
      %vm6962 = vweird.f32 %v6423
      %vm6963 = vweird.f32 %v6956
      %vm6964 = vmor %vm6962, %vm6963
      %v6965 = vsel %vm6964, %v6956, %v6961
      %v6966 = vrsqrt.pop %v6424
      %v6967 = vmul.f32 %v6966, %v6424
      %v6968 = vmul.f32 %v6967, %v6966
      %v6969 = vmul.f32 0.5, %v6968
      %v6970 = vsub.f32 1.5, %v6969
      %v6971 = vmul.f32 %v6966, %v6970
      %vm6972 = vweird.f32 %v6424
      %vm6973 = vweird.f32 %v6966
      %vm6974 = vmor %vm6972, %vm6973
      %v6975 = vsel %vm6974, %v6966, %v6971
      %v6976 = vrsqrt.pop %v6425
      %v6977 = vmul.f32 %v6976, %v6425
      %v6978 = vmul.f32 %v6977, %v6976
      %v6979 = vmul.f32 0.5, %v6978
      %v6980 = vsub.f32 1.5, %v6979
      %v6981 = vmul.f32 %v6976, %v6980
      %vm6982 = vweird.f32 %v6425
      %vm6983 = vweird.f32 %v6976
      %vm6984 = vmor %vm6982, %vm6983
      %v6985 = vsel %vm6984, %v6976, %v6981
      %v6986 = vrsqrt.pop %v6426
      %v6987 = vmul.f32 %v6986, %v6426
      %v6988 = vmul.f32 %v6987, %v6986
      %v6989 = vmul.f32 0.5, %v6988
      %v6990 = vsub.f32 1.5, %v6989
      %v6991 = vmul.f32 %v6986, %v6990
      %vm6992 = vweird.f32 %v6426
      %vm6993 = vweird.f32 %v6986
      %vm6994 = vmor %vm6992, %vm6993
      %v6995 = vsel %vm6994, %v6986, %v6991
      %v6996 = vrsqrt.pop %v6427
      %v6997 = vmul.f32 %v6996, %v6427
      %v6998 = vmul.f32 %v6997, %v6996
      %v6999 = vmul.f32 0.5, %v6998
      %v7000 = vsub.f32 1.5, %v6999
      %v7001 = vmul.f32 %v6996, %v7000
      %vm7002 = vweird.f32 %v6427
      %vm7003 = vweird.f32 %v6996
      %vm7004 = vmor %vm7002, %vm7003
      %v7005 = vsel %vm7004, %v6996, %v7001
      %v7006 = vrsqrt.pop %v6428
      %v7007 = vmul.f32 %v7006, %v6428
      %v7008 = vmul.f32 %v7007, %v7006
      %v7009 = vmul.f32 0.5, %v7008
      %v7010 = vsub.f32 1.5, %v7009
      %v7011 = vmul.f32 %v7006, %v7010
      %vm7012 = vweird.f32 %v6428
      %vm7013 = vweird.f32 %v7006
      %vm7014 = vmor %vm7012, %vm7013
      %v7015 = vsel %vm7014, %v7006, %v7011
      %v7016 = vrsqrt.pop %v6429
      %v7017 = vmul.f32 %v7016, %v6429
      %v7018 = vmul.f32 %v7017, %v7016
      %v7019 = vmul.f32 0.5, %v7018
      %v7020 = vsub.f32 1.5, %v7019
      %v7021 = vmul.f32 %v7016, %v7020
      %vm7022 = vweird.f32 %v6429
      %vm7023 = vweird.f32 %v7016
      %vm7024 = vmor %vm7022, %vm7023
      %v7025 = vsel %vm7024, %v7016, %v7021
      %v7026 = vrsqrt.pop %v6430
      %v7027 = vmul.f32 %v7026, %v6430
      %v7028 = vmul.f32 %v7027, %v7026
      %v7029 = vmul.f32 0.5, %v7028
      %v7030 = vsub.f32 1.5, %v7029
      %v7031 = vmul.f32 %v7026, %v7030
      %vm7032 = vweird.f32 %v6430
      %vm7033 = vweird.f32 %v7026
      %vm7034 = vmor %vm7032, %vm7033
      %v7035 = vsel %vm7034, %v7026, %v7031
      %v7036 = vrsqrt.pop %v6431
      %v7037 = vmul.f32 %v7036, %v6431
      %v7038 = vmul.f32 %v7037, %v7036
      %v7039 = vmul.f32 0.5, %v7038
      %v7040 = vsub.f32 1.5, %v7039
      %v7041 = vmul.f32 %v7036, %v7040
      %vm7042 = vweird.f32 %v6431
      %vm7043 = vweird.f32 %v7036
      %vm7044 = vmor %vm7042, %vm7043
      %v7045 = vsel %vm7044, %v7036, %v7041
      %v7046 = vrsqrt.pop %v6432
      %v7047 = vmul.f32 %v7046, %v6432
      %v7048 = vmul.f32 %v7047, %v7046
      %v7049 = vmul.f32 0.5, %v7048
      %v7050 = vsub.f32 1.5, %v7049
      %v7051 = vmul.f32 %v7046, %v7050
      %vm7052 = vweird.f32 %v6432
      %vm7053 = vweird.f32 %v7046
      %vm7054 = vmor %vm7052, %vm7053
      %v7055 = vsel %vm7054, %v7046, %v7051
      %v7056 = vrsqrt.pop %v6433
      %v7057 = vmul.f32 %v7056, %v6433
      %v7058 = vmul.f32 %v7057, %v7056
      %v7059 = vmul.f32 0.5, %v7058
      %v7060 = vsub.f32 1.5, %v7059
      %v7061 = vmul.f32 %v7056, %v7060
      %vm7062 = vweird.f32 %v6433
      %vm7063 = vweird.f32 %v7056
      %vm7064 = vmor %vm7062, %vm7063
      %v7065 = vsel %vm7064, %v7056, %v7061
      %v7066 = vrsqrt.pop %v6434
      %v7067 = vmul.f32 %v7066, %v6434
      %v7068 = vmul.f32 %v7067, %v7066
      %v7069 = vmul.f32 0.5, %v7068
      %v7070 = vsub.f32 1.5, %v7069
      %v7071 = vmul.f32 %v7066, %v7070
      %vm7072 = vweird.f32 %v6434
      %vm7073 = vweird.f32 %v7066
      %vm7074 = vmor %vm7072, %vm7073
      %v7075 = vsel %vm7074, %v7066, %v7071
      %v7076 = vrsqrt.pop %v6435
      %v7077 = vmul.f32 %v7076, %v6435
      %v7078 = vmul.f32 %v7077, %v7076
      %v7079 = vmul.f32 0.5, %v7078
      %v7080 = vsub.f32 1.5, %v7079
      %v7081 = vmul.f32 %v7076, %v7080
      %vm7082 = vweird.f32 %v6435
      %vm7083 = vweird.f32 %v7076
      %vm7084 = vmor %vm7082, %vm7083
      %v7085 = vsel %vm7084, %v7076, %v7081
      %v7086 = vrsqrt.pop %v6436
      %v7087 = vmul.f32 %v7086, %v6436
      %v7088 = vmul.f32 %v7087, %v7086
      %v7089 = vmul.f32 0.5, %v7088
      %v7090 = vsub.f32 1.5, %v7089
      %v7091 = vmul.f32 %v7086, %v7090
      %vm7092 = vweird.f32 %v6436
      %vm7093 = vweird.f32 %v7086
      %vm7094 = vmor %vm7092, %vm7093
      %v7095 = vsel %vm7094, %v7086, %v7091
      %v7096 = vrsqrt.pop %v6437
      %v7097 = vmul.f32 %v7096, %v6437
      %v7098 = vmul.f32 %v7097, %v7096
      %v7099 = vmul.f32 0.5, %v7098
      %v7100 = vsub.f32 1.5, %v7099
      %v7101 = vmul.f32 %v7096, %v7100
      %vm7102 = vweird.f32 %v6437
      %vm7103 = vweird.f32 %v7096
      %vm7104 = vmor %vm7102, %vm7103
      %v7105 = vsel %vm7104, %v7096, %v7101
      %v7106 = vrsqrt.pop %v6438
      %v7107 = vmul.f32 %v7106, %v6438
      %v7108 = vmul.f32 %v7107, %v7106
      %v7109 = vmul.f32 0.5, %v7108
      %v7110 = vsub.f32 1.5, %v7109
      %v7111 = vmul.f32 %v7106, %v7110
      %vm7112 = vweird.f32 %v6438
      %vm7113 = vweird.f32 %v7106
      %vm7114 = vmor %vm7112, %vm7113
      %v7115 = vsel %vm7114, %v7106, %v7111
      %v7116 = vrsqrt.pop %v6439
      %v7117 = vmul.f32 %v7116, %v6439
      %v7118 = vmul.f32 %v7117, %v7116
      %v7119 = vmul.f32 0.5, %v7118
      %v7120 = vsub.f32 1.5, %v7119
      %v7121 = vmul.f32 %v7116, %v7120
      %vm7122 = vweird.f32 %v6439
      %vm7123 = vweird.f32 %v7116
      %vm7124 = vmor %vm7122, %vm7123
      %v7125 = vsel %vm7124, %v7116, %v7121
      %v7126 = vrsqrt.pop %v6440
      %v7127 = vmul.f32 %v7126, %v6440
      %v7128 = vmul.f32 %v7127, %v7126
      %v7129 = vmul.f32 0.5, %v7128
      %v7130 = vsub.f32 1.5, %v7129
      %v7131 = vmul.f32 %v7126, %v7130
      %vm7132 = vweird.f32 %v6440
      %vm7133 = vweird.f32 %v7126
      %vm7134 = vmor %vm7132, %vm7133
      %v7135 = vsel %vm7134, %v7126, %v7131
      %v7136 = vrsqrt.pop %v6441
      %v7137 = vmul.f32 %v7136, %v6441
      %v7138 = vmul.f32 %v7137, %v7136
      %v7139 = vmul.f32 0.5, %v7138
      %v7140 = vsub.f32 1.5, %v7139
      %v7141 = vmul.f32 %v7136, %v7140
      %vm7142 = vweird.f32 %v6441
      %vm7143 = vweird.f32 %v7136
      %vm7144 = vmor %vm7142, %vm7143
      %v7145 = vsel %vm7144, %v7136, %v7141
      %v7146 = vrsqrt.pop %v6442
      %v7147 = vmul.f32 %v7146, %v6442
      %v7148 = vmul.f32 %v7147, %v7146
      %v7149 = vmul.f32 0.5, %v7148
      %v7150 = vsub.f32 1.5, %v7149
      %v7151 = vmul.f32 %v7146, %v7150
      %vm7152 = vweird.f32 %v6442
      %vm7153 = vweird.f32 %v7146
      %vm7154 = vmor %vm7152, %vm7153
      %v7155 = vsel %vm7154, %v7146, %v7151
      %v7156 = vrsqrt.pop %v6443
      %v7157 = vmul.f32 %v7156, %v6443
      %v7158 = vmul.f32 %v7157, %v7156
      %v7159 = vmul.f32 0.5, %v7158
      %v7160 = vsub.f32 1.5, %v7159
      %v7161 = vmul.f32 %v7156, %v7160
      %vm7162 = vweird.f32 %v6443
      %vm7163 = vweird.f32 %v7156
      %vm7164 = vmor %vm7162, %vm7163
      %v7165 = vsel %vm7164, %v7156, %v7161
      %v7166 = vrsqrt.pop %v6444
      %v7167 = vmul.f32 %v7166, %v6444
      %v7168 = vmul.f32 %v7167, %v7166
      %v7169 = vmul.f32 0.5, %v7168
      %v7170 = vsub.f32 1.5, %v7169
      %v7171 = vmul.f32 %v7166, %v7170
      %vm7172 = vweird.f32 %v6444
      %vm7173 = vweird.f32 %v7166
      %vm7174 = vmor %vm7172, %vm7173
      %v7175 = vsel %vm7174, %v7166, %v7171
      %v7176 = vrsqrt.pop %v6445
      %v7177 = vmul.f32 %v7176, %v6445
      %v7178 = vmul.f32 %v7177, %v7176
      %v7179 = vmul.f32 0.5, %v7178
      %v7180 = vsub.f32 1.5, %v7179
      %v7181 = vmul.f32 %v7176, %v7180
      %vm7182 = vweird.f32 %v6445
      %vm7183 = vweird.f32 %v7176
      %vm7184 = vmor %vm7182, %vm7183
      %v7185 = vsel %vm7184, %v7176, %v7181
      %v7186 = vrsqrt.pop %v6446
      %v7187 = vmul.f32 %v7186, %v6446
      %v7188 = vmul.f32 %v7187, %v7186
      %v7189 = vmul.f32 0.5, %v7188
      %v7190 = vsub.f32 1.5, %v7189
      %v7191 = vmul.f32 %v7186, %v7190
      %vm7192 = vweird.f32 %v6446
      %vm7193 = vweird.f32 %v7186
      %vm7194 = vmor %vm7192, %vm7193
      %v7195 = vsel %vm7194, %v7186, %v7191
      %v7196 = vrsqrt.pop %v6447
      %v7197 = vmul.f32 %v7196, %v6447
      %v7198 = vmul.f32 %v7197, %v7196
      %v7199 = vmul.f32 0.5, %v7198
      %v7200 = vsub.f32 1.5, %v7199
      %v7201 = vmul.f32 %v7196, %v7200
      %vm7202 = vweird.f32 %v6447
      %vm7203 = vweird.f32 %v7196
      %vm7204 = vmor %vm7202, %vm7203
      %v7205 = vsel %vm7204, %v7196, %v7201
      %v7206 = vrsqrt.pop %v6448
      %v7207 = vmul.f32 %v7206, %v6448
      %v7208 = vmul.f32 %v7207, %v7206
      %v7209 = vmul.f32 0.5, %v7208
      %v7210 = vsub.f32 1.5, %v7209
      %v7211 = vmul.f32 %v7206, %v7210
      %vm7212 = vweird.f32 %v6448
      %vm7213 = vweird.f32 %v7206
      %vm7214 = vmor %vm7212, %vm7213
      %v7215 = vsel %vm7214, %v7206, %v7211
      %v7216 = vrsqrt.pop %v6449
      %v7217 = vmul.f32 %v7216, %v6449
      %v7218 = vmul.f32 %v7217, %v7216
      %v7219 = vmul.f32 0.5, %v7218
      %v7220 = vsub.f32 1.5, %v7219
      %v7221 = vmul.f32 %v7216, %v7220
      %vm7222 = vweird.f32 %v6449
      %vm7223 = vweird.f32 %v7216
      %vm7224 = vmor %vm7222, %vm7223
      %v7225 = vsel %vm7224, %v7216, %v7221
      %v7226 = vrsqrt.pop %v6450
      %v7227 = vmul.f32 %v7226, %v6450
      %v7228 = vmul.f32 %v7227, %v7226
      %v7229 = vmul.f32 0.5, %v7228
      %v7230 = vsub.f32 1.5, %v7229
      %v7231 = vmul.f32 %v7226, %v7230
      %vm7232 = vweird.f32 %v6450
      %vm7233 = vweird.f32 %v7226
      %vm7234 = vmor %vm7232, %vm7233
      %v7235 = vsel %vm7234, %v7226, %v7231
      %v7236 = vrsqrt.pop %v6451
      %v7237 = vmul.f32 %v7236, %v6451
      %v7238 = vmul.f32 %v7237, %v7236
      %v7239 = vmul.f32 0.5, %v7238
      %v7240 = vsub.f32 1.5, %v7239
      %v7241 = vmul.f32 %v7236, %v7240
      %vm7242 = vweird.f32 %v6451
      %vm7243 = vweird.f32 %v7236
      %vm7244 = vmor %vm7242, %vm7243
      %v7245 = vsel %vm7244, %v7236, %v7241
      %v7246 = vrsqrt.pop %v6452
      %v7247 = vmul.f32 %v7246, %v6452
      %v7248 = vmul.f32 %v7247, %v7246
      %v7249 = vmul.f32 0.5, %v7248
      %v7250 = vsub.f32 1.5, %v7249
      %v7251 = vmul.f32 %v7246, %v7250
      %vm7252 = vweird.f32 %v6452
      %vm7253 = vweird.f32 %v7246
      %vm7254 = vmor %vm7252, %vm7253
      %v7255 = vsel %vm7254, %v7246, %v7251
      %v7256 = vrsqrt.pop %v6453
      %v7257 = vmul.f32 %v7256, %v6453
      %v7258 = vmul.f32 %v7257, %v7256
      %v7259 = vmul.f32 0.5, %v7258
      %v7260 = vsub.f32 1.5, %v7259
      %v7261 = vmul.f32 %v7256, %v7260
      %vm7262 = vweird.f32 %v6453
      %vm7263 = vweird.f32 %v7256
      %vm7264 = vmor %vm7262, %vm7263
      %v7265 = vsel %vm7264, %v7256, %v7261
      %v7266 = vrsqrt.pop %v6454
      %v7267 = vmul.f32 %v7266, %v6454
      %v7268 = vmul.f32 %v7267, %v7266
      %v7269 = vmul.f32 0.5, %v7268
      %v7270 = vsub.f32 1.5, %v7269
      %v7271 = vmul.f32 %v7266, %v7270
      %vm7272 = vweird.f32 %v6454
      %vm7273 = vweird.f32 %v7266
      %vm7274 = vmor %vm7272, %vm7273
      %v7275 = vsel %vm7274, %v7266, %v7271
      %v7276 = vrsqrt.pop %v6455
      %v7277 = vmul.f32 %v7276, %v6455
      %v7278 = vmul.f32 %v7277, %v7276
      %v7279 = vmul.f32 0.5, %v7278
      %v7280 = vsub.f32 1.5, %v7279
      %v7281 = vmul.f32 %v7276, %v7280
      %vm7282 = vweird.f32 %v6455
      %vm7283 = vweird.f32 %v7276
      %vm7284 = vmor %vm7282, %vm7283
      %v7285 = vsel %vm7284, %v7276, %v7281
      %v7286 = vrsqrt.pop %v6456
      %v7287 = vmul.f32 %v7286, %v6456
      %v7288 = vmul.f32 %v7287, %v7286
      %v7289 = vmul.f32 0.5, %v7288
      %v7290 = vsub.f32 1.5, %v7289
      %v7291 = vmul.f32 %v7286, %v7290
      %vm7292 = vweird.f32 %v6456
      %vm7293 = vweird.f32 %v7286
      %vm7294 = vmor %vm7292, %vm7293
      %v7295 = vsel %vm7294, %v7286, %v7291
      %v7296 = vrsqrt.pop %v6457
      %v7297 = vmul.f32 %v7296, %v6457
      %v7298 = vmul.f32 %v7297, %v7296
      %v7299 = vmul.f32 0.5, %v7298
      %v7300 = vsub.f32 1.5, %v7299
      %v7301 = vmul.f32 %v7296, %v7300
      %vm7302 = vweird.f32 %v6457
      %vm7303 = vweird.f32 %v7296
      %vm7304 = vmor %vm7302, %vm7303
      %v7305 = vsel %vm7304, %v7296, %v7301
      %v7306 = vrsqrt.pop %v6458
      %v7307 = vmul.f32 %v7306, %v6458
      %v7308 = vmul.f32 %v7307, %v7306
      %v7309 = vmul.f32 0.5, %v7308
      %v7310 = vsub.f32 1.5, %v7309
      %v7311 = vmul.f32 %v7306, %v7310
      %vm7312 = vweird.f32 %v6458
      %vm7313 = vweird.f32 %v7306
      %vm7314 = vmor %vm7312, %vm7313
      %v7315 = vsel %vm7314, %v7306, %v7311
      %v7316 = vrsqrt.pop %v6459
      %v7317 = vmul.f32 %v7316, %v6459
      %v7318 = vmul.f32 %v7317, %v7316
      %v7319 = vmul.f32 0.5, %v7318
      %v7320 = vsub.f32 1.5, %v7319
      %v7321 = vmul.f32 %v7316, %v7320
      %vm7322 = vweird.f32 %v6459
      %vm7323 = vweird.f32 %v7316
      %vm7324 = vmor %vm7322, %vm7323
      %v7325 = vsel %vm7324, %v7316, %v7321
      %v7326 = vrsqrt.pop %v6460
      %v7327 = vmul.f32 %v7326, %v6460
      %v7328 = vmul.f32 %v7327, %v7326
      %v7329 = vmul.f32 0.5, %v7328
      %v7330 = vsub.f32 1.5, %v7329
      %v7331 = vmul.f32 %v7326, %v7330
      %vm7332 = vweird.f32 %v6460
      %vm7333 = vweird.f32 %v7326
      %vm7334 = vmor %vm7332, %vm7333
      %v7335 = vsel %vm7334, %v7326, %v7331
      %v7336 = vrsqrt.pop %v6461
      %v7337 = vmul.f32 %v7336, %v6461
      %v7338 = vmul.f32 %v7337, %v7336
      %v7339 = vmul.f32 0.5, %v7338
      %v7340 = vsub.f32 1.5, %v7339
      %v7341 = vmul.f32 %v7336, %v7340
      %vm7342 = vweird.f32 %v6461
      %vm7343 = vweird.f32 %v7336
      %vm7344 = vmor %vm7342, %vm7343
      %v7345 = vsel %vm7344, %v7336, %v7341
      %v7346 = vrsqrt.pop %v6462
      %v7347 = vmul.f32 %v7346, %v6462
      %v7348 = vmul.f32 %v7347, %v7346
      %v7349 = vmul.f32 0.5, %v7348
      %v7350 = vsub.f32 1.5, %v7349
      %v7351 = vmul.f32 %v7346, %v7350
      %vm7352 = vweird.f32 %v6462
      %vm7353 = vweird.f32 %v7346
      %vm7354 = vmor %vm7352, %vm7353
      %v7355 = vsel %vm7354, %v7346, %v7351
      %v7356 = vrsqrt.pop %v6463
      %v7357 = vmul.f32 %v7356, %v6463
      %v7358 = vmul.f32 %v7357, %v7356
      %v7359 = vmul.f32 0.5, %v7358
      %v7360 = vsub.f32 1.5, %v7359
      %v7361 = vmul.f32 %v7356, %v7360
      %vm7362 = vweird.f32 %v6463
      %vm7363 = vweird.f32 %v7356
      %vm7364 = vmor %vm7362, %vm7363
      %v7365 = vsel %vm7364, %v7356, %v7361
      %v7366 = vrsqrt.pop %v6464
      %v7367 = vmul.f32 %v7366, %v6464
      %v7368 = vmul.f32 %v7367, %v7366
      %v7369 = vmul.f32 0.5, %v7368
      %v7370 = vsub.f32 1.5, %v7369
      %v7371 = vmul.f32 %v7366, %v7370
      %vm7372 = vweird.f32 %v6464
      %vm7373 = vweird.f32 %v7366
      %vm7374 = vmor %vm7372, %vm7373
      %v7375 = vsel %vm7374, %v7366, %v7371
      %v7376 = vrsqrt.pop %v6465
      %v7377 = vmul.f32 %v7376, %v6465
      %v7378 = vmul.f32 %v7377, %v7376
      %v7379 = vmul.f32 0.5, %v7378
      %v7380 = vsub.f32 1.5, %v7379
      %v7381 = vmul.f32 %v7376, %v7380
      %vm7382 = vweird.f32 %v6465
      %vm7383 = vweird.f32 %v7376
      %vm7384 = vmor %vm7382, %vm7383
      %v7385 = vsel %vm7384, %v7376, %v7381
      %v7386 = vrsqrt.pop %v6466
      %v7387 = vmul.f32 %v7386, %v6466
      %v7388 = vmul.f32 %v7387, %v7386
      %v7389 = vmul.f32 0.5, %v7388
      %v7390 = vsub.f32 1.5, %v7389
      %v7391 = vmul.f32 %v7386, %v7390
      %vm7392 = vweird.f32 %v6466
      %vm7393 = vweird.f32 %v7386
      %vm7394 = vmor %vm7392, %vm7393
      %v7395 = vsel %vm7394, %v7386, %v7391
      %v7396 = vrsqrt.pop %v6467
      %v7397 = vmul.f32 %v7396, %v6467
      %v7398 = vmul.f32 %v7397, %v7396
      %v7399 = vmul.f32 0.5, %v7398
      %v7400 = vsub.f32 1.5, %v7399
      %v7401 = vmul.f32 %v7396, %v7400
      %vm7402 = vweird.f32 %v6467
      %vm7403 = vweird.f32 %v7396
      %vm7404 = vmor %vm7402, %vm7403
      %v7405 = vsel %vm7404, %v7396, %v7401
      %v7406 = vrsqrt.pop %v6468
      %v7407 = vmul.f32 %v7406, %v6468
      %v7408 = vmul.f32 %v7407, %v7406
      %v7409 = vmul.f32 0.5, %v7408
      %v7410 = vsub.f32 1.5, %v7409
      %v7411 = vmul.f32 %v7406, %v7410
      %vm7412 = vweird.f32 %v6468
      %vm7413 = vweird.f32 %v7406
      %vm7414 = vmor %vm7412, %vm7413
      %v7415 = vsel %vm7414, %v7406, %v7411
      %v7416 = vrsqrt.pop %v6469
      %v7417 = vmul.f32 %v7416, %v6469
      %v7418 = vmul.f32 %v7417, %v7416
      %v7419 = vmul.f32 0.5, %v7418
      %v7420 = vsub.f32 1.5, %v7419
      %v7421 = vmul.f32 %v7416, %v7420
      %vm7422 = vweird.f32 %v6469
      %vm7423 = vweird.f32 %v7416
      %vm7424 = vmor %vm7422, %vm7423
      %v7425 = vsel %vm7424, %v7416, %v7421
      %v7426 = vrsqrt.pop %v6470
      %v7427 = vmul.f32 %v7426, %v6470
      %v7428 = vmul.f32 %v7427, %v7426
      %v7429 = vmul.f32 0.5, %v7428
      %v7430 = vsub.f32 1.5, %v7429
      %v7431 = vmul.f32 %v7426, %v7430
      %vm7432 = vweird.f32 %v6470
      %vm7433 = vweird.f32 %v7426
      %vm7434 = vmor %vm7432, %vm7433
      %v7435 = vsel %vm7434, %v7426, %v7431
      %v7436 = vrsqrt.pop %v6471
      %v7437 = vmul.f32 %v7436, %v6471
      %v7438 = vmul.f32 %v7437, %v7436
      %v7439 = vmul.f32 0.5, %v7438
      %v7440 = vsub.f32 1.5, %v7439
      %v7441 = vmul.f32 %v7436, %v7440
      %vm7442 = vweird.f32 %v6471
      %vm7443 = vweird.f32 %v7436
      %vm7444 = vmor %vm7442, %vm7443
      %v7445 = vsel %vm7444, %v7436, %v7441
      %v7446 = vrsqrt.pop %v6472
      %v7447 = vmul.f32 %v7446, %v6472
      %v7448 = vmul.f32 %v7447, %v7446
      %v7449 = vmul.f32 0.5, %v7448
      %v7450 = vsub.f32 1.5, %v7449
      %v7451 = vmul.f32 %v7446, %v7450
      %vm7452 = vweird.f32 %v6472
      %vm7453 = vweird.f32 %v7446
      %vm7454 = vmor %vm7452, %vm7453
      %v7455 = vsel %vm7454, %v7446, %v7451
      %v7456 = vrsqrt.pop %v6473
      %v7457 = vmul.f32 %v7456, %v6473
      %v7458 = vmul.f32 %v7457, %v7456
      %v7459 = vmul.f32 0.5, %v7458
      %v7460 = vsub.f32 1.5, %v7459
      %v7461 = vmul.f32 %v7456, %v7460
      %vm7462 = vweird.f32 %v6473
      %vm7463 = vweird.f32 %v7456
      %vm7464 = vmor %vm7462, %vm7463
      %v7465 = vsel %vm7464, %v7456, %v7461
      %v7466 = vrsqrt.pop %v6474
      %v7467 = vmul.f32 %v7466, %v6474
      %v7468 = vmul.f32 %v7467, %v7466
      %v7469 = vmul.f32 0.5, %v7468
      %v7470 = vsub.f32 1.5, %v7469
      %v7471 = vmul.f32 %v7466, %v7470
      %vm7472 = vweird.f32 %v6474
      %vm7473 = vweird.f32 %v7466
      %vm7474 = vmor %vm7472, %vm7473
      %v7475 = vsel %vm7474, %v7466, %v7471
      %v7476 = vrsqrt.pop %v6475
      %v7477 = vmul.f32 %v7476, %v6475
      %v7478 = vmul.f32 %v7477, %v7476
      %v7479 = vmul.f32 0.5, %v7478
      %v7480 = vsub.f32 1.5, %v7479
      %v7481 = vmul.f32 %v7476, %v7480
      %vm7482 = vweird.f32 %v6475
      %vm7483 = vweird.f32 %v7476
      %vm7484 = vmor %vm7482, %vm7483
      %v7485 = vsel %vm7484, %v7476, %v7481
      %v7486 = vrsqrt.pop %v6476
      %v7487 = vmul.f32 %v7486, %v6476
      %v7488 = vmul.f32 %v7487, %v7486
      %v7489 = vmul.f32 0.5, %v7488
      %v7490 = vsub.f32 1.5, %v7489
      %v7491 = vmul.f32 %v7486, %v7490
      %vm7492 = vweird.f32 %v6476
      %vm7493 = vweird.f32 %v7486
      %vm7494 = vmor %vm7492, %vm7493
      %v7495 = vsel %vm7494, %v7486, %v7491
      %v7496 = vrsqrt.pop %v6477
      %v7497 = vmul.f32 %v7496, %v6477
      %v7498 = vmul.f32 %v7497, %v7496
      %v7499 = vmul.f32 0.5, %v7498
      %v7500 = vsub.f32 1.5, %v7499
      %v7501 = vmul.f32 %v7496, %v7500
      %vm7502 = vweird.f32 %v6477
      %vm7503 = vweird.f32 %v7496
      %vm7504 = vmor %vm7502, %vm7503
      %v7505 = vsel %vm7504, %v7496, %v7501
      %v7506 = vrsqrt.pop %v6478
      %v7507 = vmul.f32 %v7506, %v6478
      %v7508 = vmul.f32 %v7507, %v7506
      %v7509 = vmul.f32 0.5, %v7508
      %v7510 = vsub.f32 1.5, %v7509
      %v7511 = vmul.f32 %v7506, %v7510
      %vm7512 = vweird.f32 %v6478
      %vm7513 = vweird.f32 %v7506
      %vm7514 = vmor %vm7512, %vm7513
      %v7515 = vsel %vm7514, %v7506, %v7511
      %v7516 = vrsqrt.pop %v6479
      %v7517 = vmul.f32 %v7516, %v6479
      %v7518 = vmul.f32 %v7517, %v7516
      %v7519 = vmul.f32 0.5, %v7518
      %v7520 = vsub.f32 1.5, %v7519
      %v7521 = vmul.f32 %v7516, %v7520
      %vm7522 = vweird.f32 %v6479
      %vm7523 = vweird.f32 %v7516
      %vm7524 = vmor %vm7522, %vm7523
      %v7525 = vsel %vm7524, %v7516, %v7521
      %v7526 = vrsqrt.pop %v6480
      %v7527 = vmul.f32 %v7526, %v6480
      %v7528 = vmul.f32 %v7527, %v7526
      %v7529 = vmul.f32 0.5, %v7528
      %v7530 = vsub.f32 1.5, %v7529
      %v7531 = vmul.f32 %v7526, %v7530
      %vm7532 = vweird.f32 %v6480
      %vm7533 = vweird.f32 %v7526
      %vm7534 = vmor %vm7532, %vm7533
      %v7535 = vsel %vm7534, %v7526, %v7531
      %v7536 = vrsqrt.pop %v6481
      %v7537 = vmul.f32 %v7536, %v6481
      %v7538 = vmul.f32 %v7537, %v7536
      %v7539 = vmul.f32 0.5, %v7538
      %v7540 = vsub.f32 1.5, %v7539
      %v7541 = vmul.f32 %v7536, %v7540
      %vm7542 = vweird.f32 %v6481
      %vm7543 = vweird.f32 %v7536
      %vm7544 = vmor %vm7542, %vm7543
      %v7545 = vsel %vm7544, %v7536, %v7541
      %v7546 = vrsqrt.pop %v6482
      %v7547 = vmul.f32 %v7546, %v6482
      %v7548 = vmul.f32 %v7547, %v7546
      %v7549 = vmul.f32 0.5, %v7548
      %v7550 = vsub.f32 1.5, %v7549
      %v7551 = vmul.f32 %v7546, %v7550
      %vm7552 = vweird.f32 %v6482
      %vm7553 = vweird.f32 %v7546
      %vm7554 = vmor %vm7552, %vm7553
      %v7555 = vsel %vm7554, %v7546, %v7551
      %v7556 = vrsqrt.pop %v6483
      %v7557 = vmul.f32 %v7556, %v6483
      %v7558 = vmul.f32 %v7557, %v7556
      %v7559 = vmul.f32 0.5, %v7558
      %v7560 = vsub.f32 1.5, %v7559
      %v7561 = vmul.f32 %v7556, %v7560
      %vm7562 = vweird.f32 %v6483
      %vm7563 = vweird.f32 %v7556
      %vm7564 = vmor %vm7562, %vm7563
      %v7565 = vsel %vm7564, %v7556, %v7561
      %v7566 = vrsqrt.pop %v6484
      %v7567 = vmul.f32 %v7566, %v6484
      %v7568 = vmul.f32 %v7567, %v7566
      %v7569 = vmul.f32 0.5, %v7568
      %v7570 = vsub.f32 1.5, %v7569
      %v7571 = vmul.f32 %v7566, %v7570
      %vm7572 = vweird.f32 %v6484
      %vm7573 = vweird.f32 %v7566
      %vm7574 = vmor %vm7572, %vm7573
      %v7575 = vsel %vm7574, %v7566, %v7571
      %v7576 = vrsqrt.pop %v6485
      %v7577 = vmul.f32 %v7576, %v6485
      %v7578 = vmul.f32 %v7577, %v7576
      %v7579 = vmul.f32 0.5, %v7578
      %v7580 = vsub.f32 1.5, %v7579
      %v7581 = vmul.f32 %v7576, %v7580
      %vm7582 = vweird.f32 %v6485
      %vm7583 = vweird.f32 %v7576
      %vm7584 = vmor %vm7582, %vm7583
      %v7585 = vsel %vm7584, %v7576, %v7581
      %v7586 = vrsqrt.pop %v6486
      %v7587 = vmul.f32 %v7586, %v6486
      %v7588 = vmul.f32 %v7587, %v7586
      %v7589 = vmul.f32 0.5, %v7588
      %v7590 = vsub.f32 1.5, %v7589
      %v7591 = vmul.f32 %v7586, %v7590
      %vm7592 = vweird.f32 %v6486
      %vm7593 = vweird.f32 %v7586
      %vm7594 = vmor %vm7592, %vm7593
      %v7595 = vsel %vm7594, %v7586, %v7591
      %v7596 = vrsqrt.pop %v6487
      %v7597 = vmul.f32 %v7596, %v6487
      %v7598 = vmul.f32 %v7597, %v7596
      %v7599 = vmul.f32 0.5, %v7598
      %v7600 = vsub.f32 1.5, %v7599
      %v7601 = vmul.f32 %v7596, %v7600
      %vm7602 = vweird.f32 %v6487
      %vm7603 = vweird.f32 %v7596
      %vm7604 = vmor %vm7602, %vm7603
      %v7605 = vsel %vm7604, %v7596, %v7601
      %v7606 = vrsqrt.pop %v6488
      %v7607 = vmul.f32 %v7606, %v6488
      %v7608 = vmul.f32 %v7607, %v7606
      %v7609 = vmul.f32 0.5, %v7608
      %v7610 = vsub.f32 1.5, %v7609
      %v7611 = vmul.f32 %v7606, %v7610
      %vm7612 = vweird.f32 %v6488
      %vm7613 = vweird.f32 %v7606
      %vm7614 = vmor %vm7612, %vm7613
      %v7615 = vsel %vm7614, %v7606, %v7611
      %v7616 = vrsqrt.pop %v6489
      %v7617 = vmul.f32 %v7616, %v6489
      %v7618 = vmul.f32 %v7617, %v7616
      %v7619 = vmul.f32 0.5, %v7618
      %v7620 = vsub.f32 1.5, %v7619
      %v7621 = vmul.f32 %v7616, %v7620
      %vm7622 = vweird.f32 %v6489
      %vm7623 = vweird.f32 %v7616
      %vm7624 = vmor %vm7622, %vm7623
      %v7625 = vsel %vm7624, %v7616, %v7621
      %v7626 = vrsqrt.pop %v6490
      %v7627 = vmul.f32 %v7626, %v6490
      %v7628 = vmul.f32 %v7627, %v7626
      %v7629 = vmul.f32 0.5, %v7628
      %v7630 = vsub.f32 1.5, %v7629
      %v7631 = vmul.f32 %v7626, %v7630
      %vm7632 = vweird.f32 %v6490
      %vm7633 = vweird.f32 %v7626
      %vm7634 = vmor %vm7632, %vm7633
      %v7635 = vsel %vm7634, %v7626, %v7631
      %v7636 = vrsqrt.pop %v6491
      %v7637 = vmul.f32 %v7636, %v6491
      %v7638 = vmul.f32 %v7637, %v7636
      %v7639 = vmul.f32 0.5, %v7638
      %v7640 = vsub.f32 1.5, %v7639
      %v7641 = vmul.f32 %v7636, %v7640
      %vm7642 = vweird.f32 %v6491
      %vm7643 = vweird.f32 %v7636
      %vm7644 = vmor %vm7642, %vm7643
      %v7645 = vsel %vm7644, %v7636, %v7641
      %v7646 = vrsqrt.pop %v6492
      %v7647 = vmul.f32 %v7646, %v6492
      %v7648 = vmul.f32 %v7647, %v7646
      %v7649 = vmul.f32 0.5, %v7648
      %v7650 = vsub.f32 1.5, %v7649
      %v7651 = vmul.f32 %v7646, %v7650
      %vm7652 = vweird.f32 %v6492
      %vm7653 = vweird.f32 %v7646
      %vm7654 = vmor %vm7652, %vm7653
      %v7655 = vsel %vm7654, %v7646, %v7651
      %v7656 = vrsqrt.pop %v6493
      %v7657 = vmul.f32 %v7656, %v6493
      %v7658 = vmul.f32 %v7657, %v7656
      %v7659 = vmul.f32 0.5, %v7658
      %v7660 = vsub.f32 1.5, %v7659
      %v7661 = vmul.f32 %v7656, %v7660
      %vm7662 = vweird.f32 %v6493
      %vm7663 = vweird.f32 %v7656
      %vm7664 = vmor %vm7662, %vm7663
      %v7665 = vsel %vm7664, %v7656, %v7661
      %v7666 = vrsqrt.pop %v6494
      %v7667 = vmul.f32 %v7666, %v6494
      %v7668 = vmul.f32 %v7667, %v7666
      %v7669 = vmul.f32 0.5, %v7668
      %v7670 = vsub.f32 1.5, %v7669
      %v7671 = vmul.f32 %v7666, %v7670
      %vm7672 = vweird.f32 %v6494
      %vm7673 = vweird.f32 %v7666
      %vm7674 = vmor %vm7672, %vm7673
      %v7675 = vsel %vm7674, %v7666, %v7671
      %v7676 = vrsqrt.pop %v6495
      %v7677 = vmul.f32 %v7676, %v6495
      %v7678 = vmul.f32 %v7677, %v7676
      %v7679 = vmul.f32 0.5, %v7678
      %v7680 = vsub.f32 1.5, %v7679
      %v7681 = vmul.f32 %v7676, %v7680
      %vm7682 = vweird.f32 %v6495
      %vm7683 = vweird.f32 %v7676
      %vm7684 = vmor %vm7682, %vm7683
      %v7685 = vsel %vm7684, %v7676, %v7681
      %v7686 = vrsqrt.pop %v6496
      %v7687 = vmul.f32 %v7686, %v6496
      %v7688 = vmul.f32 %v7687, %v7686
      %v7689 = vmul.f32 0.5, %v7688
      %v7690 = vsub.f32 1.5, %v7689
      %v7691 = vmul.f32 %v7686, %v7690
      %vm7692 = vweird.f32 %v6496
      %vm7693 = vweird.f32 %v7686
      %vm7694 = vmor %vm7692, %vm7693
      %v7695 = vsel %vm7694, %v7686, %v7691
      %v7696 = vrsqrt.pop %v6497
      %v7697 = vmul.f32 %v7696, %v6497
      %v7698 = vmul.f32 %v7697, %v7696
      %v7699 = vmul.f32 0.5, %v7698
      %v7700 = vsub.f32 1.5, %v7699
      %v7701 = vmul.f32 %v7696, %v7700
      %vm7702 = vweird.f32 %v6497
      %vm7703 = vweird.f32 %v7696
      %vm7704 = vmor %vm7702, %vm7703
      %v7705 = vsel %vm7704, %v7696, %v7701
      %v7706 = vrsqrt.pop %v6498
      %v7707 = vmul.f32 %v7706, %v6498
      %v7708 = vmul.f32 %v7707, %v7706
      %v7709 = vmul.f32 0.5, %v7708
      %v7710 = vsub.f32 1.5, %v7709
      %v7711 = vmul.f32 %v7706, %v7710
      %vm7712 = vweird.f32 %v6498
      %vm7713 = vweird.f32 %v7706
      %vm7714 = vmor %vm7712, %vm7713
      %v7715 = vsel %vm7714, %v7706, %v7711
      %v7716 = vrsqrt.pop %v6499
      %v7717 = vmul.f32 %v7716, %v6499
      %v7718 = vmul.f32 %v7717, %v7716
      %v7719 = vmul.f32 0.5, %v7718
      %v7720 = vsub.f32 1.5, %v7719
      %v7721 = vmul.f32 %v7716, %v7720
      %vm7722 = vweird.f32 %v6499
      %vm7723 = vweird.f32 %v7716
      %vm7724 = vmor %vm7722, %vm7723
      %v7725 = vsel %vm7724, %v7716, %v7721
      %v7726 = vrsqrt.pop %v6500
      %v7727 = vmul.f32 %v7726, %v6500
      %v7728 = vmul.f32 %v7727, %v7726
      %v7729 = vmul.f32 0.5, %v7728
      %v7730 = vsub.f32 1.5, %v7729
      %v7731 = vmul.f32 %v7726, %v7730
      %vm7732 = vweird.f32 %v6500
      %vm7733 = vweird.f32 %v7726
      %vm7734 = vmor %vm7732, %vm7733
      %v7735 = vsel %vm7734, %v7726, %v7731
      %v7736 = vrsqrt.pop %v6501
      %v7737 = vmul.f32 %v7736, %v6501
      %v7738 = vmul.f32 %v7737, %v7736
      %v7739 = vmul.f32 0.5, %v7738
      %v7740 = vsub.f32 1.5, %v7739
      %v7741 = vmul.f32 %v7736, %v7740
      %vm7742 = vweird.f32 %v6501
      %vm7743 = vweird.f32 %v7736
      %vm7744 = vmor %vm7742, %vm7743
      %v7745 = vsel %vm7744, %v7736, %v7741
      %v7746 = vrsqrt.pop %v6502
      %v7747 = vmul.f32 %v7746, %v6502
      %v7748 = vmul.f32 %v7747, %v7746
      %v7749 = vmul.f32 0.5, %v7748
      %v7750 = vsub.f32 1.5, %v7749
      %v7751 = vmul.f32 %v7746, %v7750
      %vm7752 = vweird.f32 %v6502
      %vm7753 = vweird.f32 %v7746
      %vm7754 = vmor %vm7752, %vm7753
      %v7755 = vsel %vm7754, %v7746, %v7751
      %v7756 = vrsqrt.pop %v6503
      %v7757 = vmul.f32 %v7756, %v6503
      %v7758 = vmul.f32 %v7757, %v7756
      %v7759 = vmul.f32 0.5, %v7758
      %v7760 = vsub.f32 1.5, %v7759
      %v7761 = vmul.f32 %v7756, %v7760
      %vm7762 = vweird.f32 %v6503
      %vm7763 = vweird.f32 %v7756
      %vm7764 = vmor %vm7762, %vm7763
      %v7765 = vsel %vm7764, %v7756, %v7761
      %v7766 = vrsqrt.pop %v6504
      %v7767 = vmul.f32 %v7766, %v6504
      %v7768 = vmul.f32 %v7767, %v7766
      %v7769 = vmul.f32 0.5, %v7768
      %v7770 = vsub.f32 1.5, %v7769
      %v7771 = vmul.f32 %v7766, %v7770
      %vm7772 = vweird.f32 %v6504
      %vm7773 = vweird.f32 %v7766
      %vm7774 = vmor %vm7772, %vm7773
      %v7775 = vsel %vm7774, %v7766, %v7771
      %v7776 = vrsqrt.pop %v6505
      %v7777 = vmul.f32 %v7776, %v6505
      %v7778 = vmul.f32 %v7777, %v7776
      %v7779 = vmul.f32 0.5, %v7778
      %v7780 = vsub.f32 1.5, %v7779
      %v7781 = vmul.f32 %v7776, %v7780
      %vm7782 = vweird.f32 %v6505
      %vm7783 = vweird.f32 %v7776
      %vm7784 = vmor %vm7782, %vm7783
      %v7785 = vsel %vm7784, %v7776, %v7781
      %v7786 = vmul.f32 %v5610, %v6515
      %v7787 = vmul.f32 %v5611, %v6525
      %v7788 = vmul.f32 %v5612, %v6535
      %v7789 = vmul.f32 %v5613, %v6545
      %v7790 = vmul.f32 %v5614, %v6555
      %v7791 = vmul.f32 %v5615, %v6565
      %v7792 = vmul.f32 %v5616, %v6575
      %v7793 = vmul.f32 %v5617, %v6585
      %v7794 = vmul.f32 %v5618, %v6595
      %v7795 = vmul.f32 %v5619, %v6605
      %v7796 = vmul.f32 %v5620, %v6615
      %v7797 = vmul.f32 %v5621, %v6625
      %v7798 = vmul.f32 %v5622, %v6635
      %v7799 = vmul.f32 %v5623, %v6645
      %v7800 = vmul.f32 %v5624, %v6655
      %v7801 = vmul.f32 %v5625, %v6665
      %v7802 = vmul.f32 %v5626, %v6675
      %v7803 = vmul.f32 %v5627, %v6685
      %v7804 = vmul.f32 %v5628, %v6695
      %v7805 = vmul.f32 %v5629, %v6705
      %v7806 = vmul.f32 %v5630, %v6715
      %v7807 = vmul.f32 %v5631, %v6725
      %v7808 = vmul.f32 %v5632, %v6735
      %v7809 = vmul.f32 %v5633, %v6745
      %v7810 = vmul.f32 %v5634, %v6755
      %v7811 = vmul.f32 %v5635, %v6765
      %v7812 = vmul.f32 %v5636, %v6775
      %v7813 = vmul.f32 %v5637, %v6785
      %v7814 = vmul.f32 %v5638, %v6795
      %v7815 = vmul.f32 %v5639, %v6805
      %v7816 = vmul.f32 %v5640, %v6815
      %v7817 = vmul.f32 %v5641, %v6825
      %v7818 = vmul.f32 %v5642, %v6835
      %v7819 = vmul.f32 %v5643, %v6845
      %v7820 = vmul.f32 %v5644, %v6855
      %v7821 = vmul.f32 %v5645, %v6865
      %v7822 = vmul.f32 %v5646, %v6875
      %v7823 = vmul.f32 %v5647, %v6885
      %v7824 = vmul.f32 %v5648, %v6895
      %v7825 = vmul.f32 %v5649, %v6905
      %v7826 = vmul.f32 %v5650, %v6915
      %v7827 = vmul.f32 %v5651, %v6925
      %v7828 = vmul.f32 %v5652, %v6935
      %v7829 = vmul.f32 %v5653, %v6945
      %v7830 = vmul.f32 %v5654, %v6955
      %v7831 = vmul.f32 %v5655, %v6965
      %v7832 = vmul.f32 %v5656, %v6975
      %v7833 = vmul.f32 %v5657, %v6985
      %v7834 = vmul.f32 %v5658, %v6995
      %v7835 = vmul.f32 %v5659, %v7005
      %v7836 = vmul.f32 %v5660, %v7015
      %v7837 = vmul.f32 %v5661, %v7025
      %v7838 = vmul.f32 %v5662, %v7035
      %v7839 = vmul.f32 %v5663, %v7045
      %v7840 = vmul.f32 %v5664, %v7055
      %v7841 = vmul.f32 %v5665, %v7065
      %v7842 = vmul.f32 %v5666, %v7075
      %v7843 = vmul.f32 %v5667, %v7085
      %v7844 = vmul.f32 %v5668, %v7095
      %v7845 = vmul.f32 %v5669, %v7105
      %v7846 = vmul.f32 %v5670, %v7115
      %v7847 = vmul.f32 %v5671, %v7125
      %v7848 = vmul.f32 %v5672, %v7135
      %v7849 = vmul.f32 %v5673, %v7145
      %v7850 = vmul.f32 %v5674, %v7155
      %v7851 = vmul.f32 %v5675, %v7165
      %v7852 = vmul.f32 %v5676, %v7175
      %v7853 = vmul.f32 %v5677, %v7185
      %v7854 = vmul.f32 %v5678, %v7195
      %v7855 = vmul.f32 %v5679, %v7205
      %v7856 = vmul.f32 %v5680, %v7215
      %v7857 = vmul.f32 %v5681, %v7225
      %v7858 = vmul.f32 %v5682, %v7235
      %v7859 = vmul.f32 %v5683, %v7245
      %v7860 = vmul.f32 %v5684, %v7255
      %v7861 = vmul.f32 %v5685, %v7265
      %v7862 = vmul.f32 %v5686, %v7275
      %v7863 = vmul.f32 %v5687, %v7285
      %v7864 = vmul.f32 %v5688, %v7295
      %v7865 = vmul.f32 %v5689, %v7305
      %v7866 = vmul.f32 %v5690, %v7315
      %v7867 = vmul.f32 %v5691, %v7325
      %v7868 = vmul.f32 %v5692, %v7335
      %v7869 = vmul.f32 %v5693, %v7345
      %v7870 = vmul.f32 %v5694, %v7355
      %v7871 = vmul.f32 %v5695, %v7365
      %v7872 = vmul.f32 %v5696, %v7375
      %v7873 = vmul.f32 %v5697, %v7385
      %v7874 = vmul.f32 %v5698, %v7395
      %v7875 = vmul.f32 %v5699, %v7405
      %v7876 = vmul.f32 %v5700, %v7415
      %v7877 = vmul.f32 %v5701, %v7425
      %v7878 = vmul.f32 %v5702, %v7435
      %v7879 = vmul.f32 %v5703, %v7445
      %v7880 = vmul.f32 %v5704, %v7455
      %v7881 = vmul.f32 %v5705, %v7465
      %v7882 = vmul.f32 %v5706, %v7475
      %v7883 = vmul.f32 %v5707, %v7485
      %v7884 = vmul.f32 %v5708, %v7495
      %v7885 = vmul.f32 %v5709, %v7505
      %v7886 = vmul.f32 %v5710, %v7515
      %v7887 = vmul.f32 %v5711, %v7525
      %v7888 = vmul.f32 %v5712, %v7535
      %v7889 = vmul.f32 %v5713, %v7545
      %v7890 = vmul.f32 %v5714, %v7555
      %v7891 = vmul.f32 %v5715, %v7565
      %v7892 = vmul.f32 %v5716, %v7575
      %v7893 = vmul.f32 %v5717, %v7585
      %v7894 = vmul.f32 %v5718, %v7595
      %v7895 = vmul.f32 %v5719, %v7605
      %v7896 = vmul.f32 %v5720, %v7615
      %v7897 = vmul.f32 %v5721, %v7625
      %v7898 = vmul.f32 %v5722, %v7635
      %v7899 = vmul.f32 %v5723, %v7645
      %v7900 = vmul.f32 %v5724, %v7655
      %v7901 = vmul.f32 %v5725, %v7665
      %v7902 = vmul.f32 %v5726, %v7675
      %v7903 = vmul.f32 %v5727, %v7685
      %v7904 = vmul.f32 %v5728, %v7695
      %v7905 = vmul.f32 %v5729, %v7705
      %v7906 = vmul.f32 %v5730, %v7715
      %v7907 = vmul.f32 %v5731, %v7725
      %v7908 = vmul.f32 %v5732, %v7735
      %v7909 = vmul.f32 %v5733, %v7745
      %v7910 = vmul.f32 %v5734, %v7755
      %v7911 = vmul.f32 %v5735, %v7765
      %v7912 = vmul.f32 %v5736, %v7775
      %v7913 = vmul.f32 %v5737, %v7785
      %v7914 = vperm.slane %v314, 4
      %v7915 = vmul.f32 %v7786, %v7914
      %v7916 = vmul.f32 %v7787, %v7914
      %v7917 = vmul.f32 %v7788, %v7914
      %v7918 = vmul.f32 %v7789, %v7914
      %v7919 = vmul.f32 %v7790, %v7914
      %v7920 = vmul.f32 %v7791, %v7914
      %v7921 = vmul.f32 %v7792, %v7914
      %v7922 = vmul.f32 %v7793, %v7914
      %v7923 = vmul.f32 %v7794, %v7914
      %v7924 = vmul.f32 %v7795, %v7914
      %v7925 = vmul.f32 %v7796, %v7914
      %v7926 = vmul.f32 %v7797, %v7914
      %v7927 = vmul.f32 %v7798, %v7914
      %v7928 = vmul.f32 %v7799, %v7914
      %v7929 = vmul.f32 %v7800, %v7914
      %v7930 = vmul.f32 %v7801, %v7914
      %v7931 = vmul.f32 %v7802, %v7914
      %v7932 = vmul.f32 %v7803, %v7914
      %v7933 = vmul.f32 %v7804, %v7914
      %v7934 = vmul.f32 %v7805, %v7914
      %v7935 = vmul.f32 %v7806, %v7914
      %v7936 = vmul.f32 %v7807, %v7914
      %v7937 = vmul.f32 %v7808, %v7914
      %v7938 = vmul.f32 %v7809, %v7914
      %v7939 = vmul.f32 %v7810, %v7914
      %v7940 = vmul.f32 %v7811, %v7914
      %v7941 = vmul.f32 %v7812, %v7914
      %v7942 = vmul.f32 %v7813, %v7914
      %v7943 = vmul.f32 %v7814, %v7914
      %v7944 = vmul.f32 %v7815, %v7914
      %v7945 = vmul.f32 %v7816, %v7914
      %v7946 = vmul.f32 %v7817, %v7914
      %v7947 = vmul.f32 %v7818, %v7914
      %v7948 = vmul.f32 %v7819, %v7914
      %v7949 = vmul.f32 %v7820, %v7914
      %v7950 = vmul.f32 %v7821, %v7914
      %v7951 = vmul.f32 %v7822, %v7914
      %v7952 = vmul.f32 %v7823, %v7914
      %v7953 = vmul.f32 %v7824, %v7914
      %v7954 = vmul.f32 %v7825, %v7914
      %v7955 = vmul.f32 %v7826, %v7914
      %v7956 = vmul.f32 %v7827, %v7914
      %v7957 = vmul.f32 %v7828, %v7914
      %v7958 = vmul.f32 %v7829, %v7914
      %v7959 = vmul.f32 %v7830, %v7914
      %v7960 = vmul.f32 %v7831, %v7914
      %v7961 = vmul.f32 %v7832, %v7914
      %v7962 = vmul.f32 %v7833, %v7914
      %v7963 = vmul.f32 %v7834, %v7914
      %v7964 = vmul.f32 %v7835, %v7914
      %v7965 = vmul.f32 %v7836, %v7914
      %v7966 = vmul.f32 %v7837, %v7914
      %v7967 = vmul.f32 %v7838, %v7914
      %v7968 = vmul.f32 %v7839, %v7914
      %v7969 = vmul.f32 %v7840, %v7914
      %v7970 = vmul.f32 %v7841, %v7914
      %v7971 = vmul.f32 %v7842, %v7914
      %v7972 = vmul.f32 %v7843, %v7914
      %v7973 = vmul.f32 %v7844, %v7914
      %v7974 = vmul.f32 %v7845, %v7914
      %v7975 = vmul.f32 %v7846, %v7914
      %v7976 = vmul.f32 %v7847, %v7914
      %v7977 = vmul.f32 %v7848, %v7914
      %v7978 = vmul.f32 %v7849, %v7914
      %v7979 = vmul.f32 %v7850, %v7914
      %v7980 = vmul.f32 %v7851, %v7914
      %v7981 = vmul.f32 %v7852, %v7914
      %v7982 = vmul.f32 %v7853, %v7914
      %v7983 = vmul.f32 %v7854, %v7914
      %v7984 = vmul.f32 %v7855, %v7914
      %v7985 = vmul.f32 %v7856, %v7914
      %v7986 = vmul.f32 %v7857, %v7914
      %v7987 = vmul.f32 %v7858, %v7914
      %v7988 = vmul.f32 %v7859, %v7914
      %v7989 = vmul.f32 %v7860, %v7914
      %v7990 = vmul.f32 %v7861, %v7914
      %v7991 = vmul.f32 %v7862, %v7914
      %v7992 = vmul.f32 %v7863, %v7914
      %v7993 = vmul.f32 %v7864, %v7914
      %v7994 = vmul.f32 %v7865, %v7914
      %v7995 = vmul.f32 %v7866, %v7914
      %v7996 = vmul.f32 %v7867, %v7914
      %v7997 = vmul.f32 %v7868, %v7914
      %v7998 = vmul.f32 %v7869, %v7914
      %v7999 = vmul.f32 %v7870, %v7914
      %v8000 = vmul.f32 %v7871, %v7914
      %v8001 = vmul.f32 %v7872, %v7914
      %v8002 = vmul.f32 %v7873, %v7914
      %v8003 = vmul.f32 %v7874, %v7914
      %v8004 = vmul.f32 %v7875, %v7914
      %v8005 = vmul.f32 %v7876, %v7914
      %v8006 = vmul.f32 %v7877, %v7914
      %v8007 = vmul.f32 %v7878, %v7914
      %v8008 = vmul.f32 %v7879, %v7914
      %v8009 = vmul.f32 %v7880, %v7914
      %v8010 = vmul.f32 %v7881, %v7914
      %v8011 = vmul.f32 %v7882, %v7914
      %v8012 = vmul.f32 %v7883, %v7914
      %v8013 = vmul.f32 %v7884, %v7914
      %v8014 = vmul.f32 %v7885, %v7914
      %v8015 = vmul.f32 %v7886, %v7914
      %v8016 = vmul.f32 %v7887, %v7914
      %v8017 = vmul.f32 %v7888, %v7914
      %v8018 = vmul.f32 %v7889, %v7914
      %v8019 = vmul.f32 %v7890, %v7914
      %v8020 = vmul.f32 %v7891, %v7914
      %v8021 = vmul.f32 %v7892, %v7914
      %v8022 = vmul.f32 %v7893, %v7914
      %v8023 = vmul.f32 %v7894, %v7914
      %v8024 = vmul.f32 %v7895, %v7914
      %v8025 = vmul.f32 %v7896, %v7914
      %v8026 = vmul.f32 %v7897, %v7914
      %v8027 = vmul.f32 %v7898, %v7914
      %v8028 = vmul.f32 %v7899, %v7914
      %v8029 = vmul.f32 %v7900, %v7914
      %v8030 = vmul.f32 %v7901, %v7914
      %v8031 = vmul.f32 %v7902, %v7914
      %v8032 = vmul.f32 %v7903, %v7914
      %v8033 = vmul.f32 %v7904, %v7914
      %v8034 = vmul.f32 %v7905, %v7914
      %v8035 = vmul.f32 %v7906, %v7914
      %v8036 = vmul.f32 %v7907, %v7914
      %v8037 = vmul.f32 %v7908, %v7914
      %v8038 = vmul.f32 %v7909, %v7914
      %v8039 = vmul.f32 %v7910, %v7914
      %v8040 = vmul.f32 %v7911, %v7914
      %v8041 = vmul.f32 %v7912, %v7914
      %v8042 = vmul.f32 %v7913, %v7914
      %v8043 = vperm.slane %v314, 5
      %v8044 = vadd.f32 %v7915, %v8043
      %v8045 = vadd.f32 %v7916, %v8043
      %v8046 = vadd.f32 %v7917, %v8043
      %v8047 = vadd.f32 %v7918, %v8043
      %v8048 = vadd.f32 %v7919, %v8043
      %v8049 = vadd.f32 %v7920, %v8043
      %v8050 = vadd.f32 %v7921, %v8043
      %v8051 = vadd.f32 %v7922, %v8043
      %v8052 = vadd.f32 %v7923, %v8043
      %v8053 = vadd.f32 %v7924, %v8043
      %v8054 = vadd.f32 %v7925, %v8043
      %v8055 = vadd.f32 %v7926, %v8043
      %v8056 = vadd.f32 %v7927, %v8043
      %v8057 = vadd.f32 %v7928, %v8043
      %v8058 = vadd.f32 %v7929, %v8043
      %v8059 = vadd.f32 %v7930, %v8043
      %v8060 = vadd.f32 %v7931, %v8043
      %v8061 = vadd.f32 %v7932, %v8043
      %v8062 = vadd.f32 %v7933, %v8043
      %v8063 = vadd.f32 %v7934, %v8043
      %v8064 = vadd.f32 %v7935, %v8043
      %v8065 = vadd.f32 %v7936, %v8043
      %v8066 = vadd.f32 %v7937, %v8043
      %v8067 = vadd.f32 %v7938, %v8043
      %v8068 = vadd.f32 %v7939, %v8043
      %v8069 = vadd.f32 %v7940, %v8043
      %v8070 = vadd.f32 %v7941, %v8043
      %v8071 = vadd.f32 %v7942, %v8043
      %v8072 = vadd.f32 %v7943, %v8043
      %v8073 = vadd.f32 %v7944, %v8043
      %v8074 = vadd.f32 %v7945, %v8043
      %v8075 = vadd.f32 %v7946, %v8043
      %v8076 = vadd.f32 %v7947, %v8043
      %v8077 = vadd.f32 %v7948, %v8043
      %v8078 = vadd.f32 %v7949, %v8043
      %v8079 = vadd.f32 %v7950, %v8043
      %v8080 = vadd.f32 %v7951, %v8043
      %v8081 = vadd.f32 %v7952, %v8043
      %v8082 = vadd.f32 %v7953, %v8043
      %v8083 = vadd.f32 %v7954, %v8043
      %v8084 = vadd.f32 %v7955, %v8043
      %v8085 = vadd.f32 %v7956, %v8043
      %v8086 = vadd.f32 %v7957, %v8043
      %v8087 = vadd.f32 %v7958, %v8043
      %v8088 = vadd.f32 %v7959, %v8043
      %v8089 = vadd.f32 %v7960, %v8043
      %v8090 = vadd.f32 %v7961, %v8043
      %v8091 = vadd.f32 %v7962, %v8043
      %v8092 = vadd.f32 %v7963, %v8043
      %v8093 = vadd.f32 %v7964, %v8043
      %v8094 = vadd.f32 %v7965, %v8043
      %v8095 = vadd.f32 %v7966, %v8043
      %v8096 = vadd.f32 %v7967, %v8043
      %v8097 = vadd.f32 %v7968, %v8043
      %v8098 = vadd.f32 %v7969, %v8043
      %v8099 = vadd.f32 %v7970, %v8043
      %v8100 = vadd.f32 %v7971, %v8043
      %v8101 = vadd.f32 %v7972, %v8043
      %v8102 = vadd.f32 %v7973, %v8043
      %v8103 = vadd.f32 %v7974, %v8043
      %v8104 = vadd.f32 %v7975, %v8043
      %v8105 = vadd.f32 %v7976, %v8043
      %v8106 = vadd.f32 %v7977, %v8043
      %v8107 = vadd.f32 %v7978, %v8043
      %v8108 = vadd.f32 %v7979, %v8043
      %v8109 = vadd.f32 %v7980, %v8043
      %v8110 = vadd.f32 %v7981, %v8043
      %v8111 = vadd.f32 %v7982, %v8043
      %v8112 = vadd.f32 %v7983, %v8043
      %v8113 = vadd.f32 %v7984, %v8043
      %v8114 = vadd.f32 %v7985, %v8043
      %v8115 = vadd.f32 %v7986, %v8043
      %v8116 = vadd.f32 %v7987, %v8043
      %v8117 = vadd.f32 %v7988, %v8043
      %v8118 = vadd.f32 %v7989, %v8043
      %v8119 = vadd.f32 %v7990, %v8043
      %v8120 = vadd.f32 %v7991, %v8043
      %v8121 = vadd.f32 %v7992, %v8043
      %v8122 = vadd.f32 %v7993, %v8043
      %v8123 = vadd.f32 %v7994, %v8043
      %v8124 = vadd.f32 %v7995, %v8043
      %v8125 = vadd.f32 %v7996, %v8043
      %v8126 = vadd.f32 %v7997, %v8043
      %v8127 = vadd.f32 %v7998, %v8043
      %v8128 = vadd.f32 %v7999, %v8043
      %v8129 = vadd.f32 %v8000, %v8043
      %v8130 = vadd.f32 %v8001, %v8043
      %v8131 = vadd.f32 %v8002, %v8043
      %v8132 = vadd.f32 %v8003, %v8043
      %v8133 = vadd.f32 %v8004, %v8043
      %v8134 = vadd.f32 %v8005, %v8043
      %v8135 = vadd.f32 %v8006, %v8043
      %v8136 = vadd.f32 %v8007, %v8043
      %v8137 = vadd.f32 %v8008, %v8043
      %v8138 = vadd.f32 %v8009, %v8043
      %v8139 = vadd.f32 %v8010, %v8043
      %v8140 = vadd.f32 %v8011, %v8043
      %v8141 = vadd.f32 %v8012, %v8043
      %v8142 = vadd.f32 %v8013, %v8043
      %v8143 = vadd.f32 %v8014, %v8043
      %v8144 = vadd.f32 %v8015, %v8043
      %v8145 = vadd.f32 %v8016, %v8043
      %v8146 = vadd.f32 %v8017, %v8043
      %v8147 = vadd.f32 %v8018, %v8043
      %v8148 = vadd.f32 %v8019, %v8043
      %v8149 = vadd.f32 %v8020, %v8043
      %v8150 = vadd.f32 %v8021, %v8043
      %v8151 = vadd.f32 %v8022, %v8043
      %v8152 = vadd.f32 %v8023, %v8043
      %v8153 = vadd.f32 %v8024, %v8043
      %v8154 = vadd.f32 %v8025, %v8043
      %v8155 = vadd.f32 %v8026, %v8043
      %v8156 = vadd.f32 %v8027, %v8043
      %v8157 = vadd.f32 %v8028, %v8043
      %v8158 = vadd.f32 %v8029, %v8043
      %v8159 = vadd.f32 %v8030, %v8043
      %v8160 = vadd.f32 %v8031, %v8043
      %v8161 = vadd.f32 %v8032, %v8043
      %v8162 = vadd.f32 %v8033, %v8043
      %v8163 = vadd.f32 %v8034, %v8043
      %v8164 = vadd.f32 %v8035, %v8043
      %v8165 = vadd.f32 %v8036, %v8043
      %v8166 = vadd.f32 %v8037, %v8043
      %v8167 = vadd.f32 %v8038, %v8043
      %v8168 = vadd.f32 %v8039, %v8043
      %v8169 = vadd.f32 %v8040, %v8043
      %v8170 = vadd.f32 %v8041, %v8043
      %v8171 = vadd.f32 %v8042, %v8043
      %v8172 = vmax.f32 %v8044, 0.0
      %v8173 = vmax.f32 %v8045, 0.0
      %v8174 = vmax.f32 %v8046, 0.0
      %v8175 = vmax.f32 %v8047, 0.0
      %v8176 = vmax.f32 %v8048, 0.0
      %v8177 = vmax.f32 %v8049, 0.0
      %v8178 = vmax.f32 %v8050, 0.0
      %v8179 = vmax.f32 %v8051, 0.0
      %v8180 = vmax.f32 %v8052, 0.0
      %v8181 = vmax.f32 %v8053, 0.0
      %v8182 = vmax.f32 %v8054, 0.0
      %v8183 = vmax.f32 %v8055, 0.0
      %v8184 = vmax.f32 %v8056, 0.0
      %v8185 = vmax.f32 %v8057, 0.0
      %v8186 = vmax.f32 %v8058, 0.0
      %v8187 = vmax.f32 %v8059, 0.0
      %v8188 = vmax.f32 %v8060, 0.0
      %v8189 = vmax.f32 %v8061, 0.0
      %v8190 = vmax.f32 %v8062, 0.0
      %v8191 = vmax.f32 %v8063, 0.0
      %v8192 = vmax.f32 %v8064, 0.0
      %v8193 = vmax.f32 %v8065, 0.0
      %v8194 = vmax.f32 %v8066, 0.0
      %v8195 = vmax.f32 %v8067, 0.0
      %v8196 = vmax.f32 %v8068, 0.0
      %v8197 = vmax.f32 %v8069, 0.0
      %v8198 = vmax.f32 %v8070, 0.0
      %v8199 = vmax.f32 %v8071, 0.0
      %v8200 = vmax.f32 %v8072, 0.0
      %v8201 = vmax.f32 %v8073, 0.0
      %v8202 = vmax.f32 %v8074, 0.0
      %v8203 = vmax.f32 %v8075, 0.0
      %v8204 = vmax.f32 %v8076, 0.0
      %v8205 = vmax.f32 %v8077, 0.0
      %v8206 = vmax.f32 %v8078, 0.0
      %v8207 = vmax.f32 %v8079, 0.0
      %v8208 = vmax.f32 %v8080, 0.0
      %v8209 = vmax.f32 %v8081, 0.0
      %v8210 = vmax.f32 %v8082, 0.0
      %v8211 = vmax.f32 %v8083, 0.0
      %v8212 = vmax.f32 %v8084, 0.0
      %v8213 = vmax.f32 %v8085, 0.0
      %v8214 = vmax.f32 %v8086, 0.0
      %v8215 = vmax.f32 %v8087, 0.0
      %v8216 = vmax.f32 %v8088, 0.0
      %v8217 = vmax.f32 %v8089, 0.0
      %v8218 = vmax.f32 %v8090, 0.0
      %v8219 = vmax.f32 %v8091, 0.0
      %v8220 = vmax.f32 %v8092, 0.0
      %v8221 = vmax.f32 %v8093, 0.0
      %v8222 = vmax.f32 %v8094, 0.0
      %v8223 = vmax.f32 %v8095, 0.0
      %v8224 = vmax.f32 %v8096, 0.0
      %v8225 = vmax.f32 %v8097, 0.0
      %v8226 = vmax.f32 %v8098, 0.0
      %v8227 = vmax.f32 %v8099, 0.0
      %v8228 = vmax.f32 %v8100, 0.0
      %v8229 = vmax.f32 %v8101, 0.0
      %v8230 = vmax.f32 %v8102, 0.0
      %v8231 = vmax.f32 %v8103, 0.0
      %v8232 = vmax.f32 %v8104, 0.0
      %v8233 = vmax.f32 %v8105, 0.0
      %v8234 = vmax.f32 %v8106, 0.0
      %v8235 = vmax.f32 %v8107, 0.0
      %v8236 = vmax.f32 %v8108, 0.0
      %v8237 = vmax.f32 %v8109, 0.0
      %v8238 = vmax.f32 %v8110, 0.0
      %v8239 = vmax.f32 %v8111, 0.0
      %v8240 = vmax.f32 %v8112, 0.0
      %v8241 = vmax.f32 %v8113, 0.0
      %v8242 = vmax.f32 %v8114, 0.0
      %v8243 = vmax.f32 %v8115, 0.0
      %v8244 = vmax.f32 %v8116, 0.0
      %v8245 = vmax.f32 %v8117, 0.0
      %v8246 = vmax.f32 %v8118, 0.0
      %v8247 = vmax.f32 %v8119, 0.0
      %v8248 = vmax.f32 %v8120, 0.0
      %v8249 = vmax.f32 %v8121, 0.0
      %v8250 = vmax.f32 %v8122, 0.0
      %v8251 = vmax.f32 %v8123, 0.0
      %v8252 = vmax.f32 %v8124, 0.0
      %v8253 = vmax.f32 %v8125, 0.0
      %v8254 = vmax.f32 %v8126, 0.0
      %v8255 = vmax.f32 %v8127, 0.0
      %v8256 = vmax.f32 %v8128, 0.0
      %v8257 = vmax.f32 %v8129, 0.0
      %v8258 = vmax.f32 %v8130, 0.0
      %v8259 = vmax.f32 %v8131, 0.0
      %v8260 = vmax.f32 %v8132, 0.0
      %v8261 = vmax.f32 %v8133, 0.0
      %v8262 = vmax.f32 %v8134, 0.0
      %v8263 = vmax.f32 %v8135, 0.0
      %v8264 = vmax.f32 %v8136, 0.0
      %v8265 = vmax.f32 %v8137, 0.0
      %v8266 = vmax.f32 %v8138, 0.0
      %v8267 = vmax.f32 %v8139, 0.0
      %v8268 = vmax.f32 %v8140, 0.0
      %v8269 = vmax.f32 %v8141, 0.0
      %v8270 = vmax.f32 %v8142, 0.0
      %v8271 = vmax.f32 %v8143, 0.0
      %v8272 = vmax.f32 %v8144, 0.0
      %v8273 = vmax.f32 %v8145, 0.0
      %v8274 = vmax.f32 %v8146, 0.0
      %v8275 = vmax.f32 %v8147, 0.0
      %v8276 = vmax.f32 %v8148, 0.0
      %v8277 = vmax.f32 %v8149, 0.0
      %v8278 = vmax.f32 %v8150, 0.0
      %v8279 = vmax.f32 %v8151, 0.0
      %v8280 = vmax.f32 %v8152, 0.0
      %v8281 = vmax.f32 %v8153, 0.0
      %v8282 = vmax.f32 %v8154, 0.0
      %v8283 = vmax.f32 %v8155, 0.0
      %v8284 = vmax.f32 %v8156, 0.0
      %v8285 = vmax.f32 %v8157, 0.0
      %v8286 = vmax.f32 %v8158, 0.0
      %v8287 = vmax.f32 %v8159, 0.0
      %v8288 = vmax.f32 %v8160, 0.0
      %v8289 = vmax.f32 %v8161, 0.0
      %v8290 = vmax.f32 %v8162, 0.0
      %v8291 = vmax.f32 %v8163, 0.0
      %v8292 = vmax.f32 %v8164, 0.0
      %v8293 = vmax.f32 %v8165, 0.0
      %v8294 = vmax.f32 %v8166, 0.0
      %v8295 = vmax.f32 %v8167, 0.0
      %v8296 = vmax.f32 %v8168, 0.0
      %v8297 = vmax.f32 %v8169, 0.0
      %v8298 = vmax.f32 %v8170, 0.0
      %v8299 = vmax.f32 %v8171, 0.0
      %v8300 = vperm.slane %v314, 6
      %v8302 = vsel %vm1102, %v8172, 0
      %v8305 = vsel %vm1102, %v8173, 0
      %v8308 = vsel %vm1102, %v8174, 0
      %v8311 = vsel %vm1102, %v8175, 0
      %v8314 = vsel %vm1102, %v8176, 0
      %v8317 = vsel %vm1102, %v8177, 0
      %v8320 = vsel %vm1102, %v8178, 0
      %v8323 = vsel %vm1102, %v8179, 0
      %v8326 = vsel %vm1102, %v8180, 0
      %v8329 = vsel %vm1102, %v8181, 0
      %v8332 = vsel %vm1102, %v8182, 0
      %v8335 = vsel %vm1102, %v8183, 0
      %v8338 = vsel %vm1102, %v8184, 0
      %v8341 = vsel %vm1102, %v8185, 0
      %v8344 = vsel %vm1102, %v8186, 0
      %v8347 = vsel %vm1102, %v8187, 0
      %v8350 = vsel %vm1102, %v8188, 0
      %v8353 = vsel %vm1102, %v8189, 0
      %v8356 = vsel %vm1102, %v8190, 0
      %v8359 = vsel %vm1102, %v8191, 0
      %v8362 = vsel %vm1102, %v8192, 0
      %v8365 = vsel %vm1102, %v8193, 0
      %v8368 = vsel %vm1102, %v8194, 0
      %v8371 = vsel %vm1102, %v8195, 0
      %v8374 = vsel %vm1102, %v8196, 0
      %v8377 = vsel %vm1102, %v8197, 0
      %v8380 = vsel %vm1102, %v8198, 0
      %v8383 = vsel %vm1102, %v8199, 0
      %v8386 = vsel %vm1102, %v8200, 0
      %v8389 = vsel %vm1102, %v8201, 0
      %v8392 = vsel %vm1102, %v8202, 0
      %v8395 = vsel %vm1102, %v8203, 0
      %v8398 = vsel %vm1102, %v8204, 0
      %v8401 = vsel %vm1102, %v8205, 0
      %v8404 = vsel %vm1102, %v8206, 0
      %v8407 = vsel %vm1102, %v8207, 0
      %v8410 = vsel %vm1102, %v8208, 0
      %v8413 = vsel %vm1102, %v8209, 0
      %v8416 = vsel %vm1102, %v8210, 0
      %v8419 = vsel %vm1102, %v8211, 0
      %v8422 = vsel %vm1102, %v8212, 0
      %v8425 = vsel %vm1102, %v8213, 0
      %v8428 = vsel %vm1102, %v8214, 0
      %v8431 = vsel %vm1102, %v8215, 0
      %v8434 = vsel %vm1102, %v8216, 0
      %v8437 = vsel %vm1102, %v8217, 0
      %v8440 = vsel %vm1102, %v8218, 0
      %v8443 = vsel %vm1102, %v8219, 0
      %v8446 = vsel %vm1102, %v8220, 0
      %v8449 = vsel %vm1102, %v8221, 0
      %v8452 = vsel %vm1102, %v8222, 0
      %v8455 = vsel %vm1102, %v8223, 0
      %v8458 = vsel %vm1102, %v8224, 0
      %v8461 = vsel %vm1102, %v8225, 0
      %v8464 = vsel %vm1102, %v8226, 0
      %v8467 = vsel %vm1102, %v8227, 0
      %v8470 = vsel %vm1102, %v8228, 0
      %v8473 = vsel %vm1102, %v8229, 0
      %v8476 = vsel %vm1102, %v8230, 0
      %v8479 = vsel %vm1102, %v8231, 0
      %v8482 = vsel %vm1102, %v8232, 0
      %v8485 = vsel %vm1102, %v8233, 0
      %v8488 = vsel %vm1102, %v8234, 0
      %v8491 = vsel %vm1102, %v8235, 0
      %v8494 = vsel %vm1102, %v8236, 0
      %v8497 = vsel %vm1102, %v8237, 0
      %v8500 = vsel %vm1102, %v8238, 0
      %v8503 = vsel %vm1102, %v8239, 0
      %v8506 = vsel %vm1102, %v8240, 0
      %v8509 = vsel %vm1102, %v8241, 0
      %v8512 = vsel %vm1102, %v8242, 0
      %v8515 = vsel %vm1102, %v8243, 0
      %v8518 = vsel %vm1102, %v8244, 0
      %v8521 = vsel %vm1102, %v8245, 0
      %v8524 = vsel %vm1102, %v8246, 0
      %v8527 = vsel %vm1102, %v8247, 0
      %v8530 = vsel %vm1102, %v8248, 0
      %v8533 = vsel %vm1102, %v8249, 0
      %v8536 = vsel %vm1102, %v8250, 0
      %v8539 = vsel %vm1102, %v8251, 0
      %v8542 = vsel %vm1102, %v8252, 0
      %v8545 = vsel %vm1102, %v8253, 0
      %v8548 = vsel %vm1102, %v8254, 0
      %v8551 = vsel %vm1102, %v8255, 0
      %v8554 = vsel %vm1102, %v8256, 0
      %v8557 = vsel %vm1102, %v8257, 0
      %v8560 = vsel %vm1102, %v8258, 0
      %v8563 = vsel %vm1102, %v8259, 0
      %v8566 = vsel %vm1102, %v8260, 0
      %v8569 = vsel %vm1102, %v8261, 0
      %v8572 = vsel %vm1102, %v8262, 0
      %v8575 = vsel %vm1102, %v8263, 0
      %v8578 = vsel %vm1102, %v8264, 0
      %v8581 = vsel %vm1102, %v8265, 0
      %v8584 = vsel %vm1102, %v8266, 0
      %v8587 = vsel %vm1102, %v8267, 0
      %v8590 = vsel %vm1102, %v8268, 0
      %v8593 = vsel %vm1102, %v8269, 0
      %v8596 = vsel %vm1102, %v8270, 0
      %v8599 = vsel %vm1102, %v8271, 0
      %v8602 = vsel %vm1102, %v8272, 0
      %v8605 = vsel %vm1102, %v8273, 0
      %v8608 = vsel %vm1102, %v8274, 0
      %v8611 = vsel %vm1102, %v8275, 0
      %v8614 = vsel %vm1102, %v8276, 0
      %v8617 = vsel %vm1102, %v8277, 0
      %v8620 = vsel %vm1102, %v8278, 0
      %v8623 = vsel %vm1102, %v8279, 0
      %v8626 = vsel %vm1102, %v8280, 0
      %v8629 = vsel %vm1102, %v8281, 0
      %v8632 = vsel %vm1102, %v8282, 0
      %v8635 = vsel %vm1102, %v8283, 0
      %v8638 = vsel %vm1102, %v8284, 0
      %v8641 = vsel %vm1102, %v8285, 0
      %v8644 = vsel %vm1102, %v8286, 0
      %v8647 = vsel %vm1102, %v8287, 0
      %v8650 = vsel %vm1102, %v8288, 0
      %v8653 = vsel %vm1102, %v8289, 0
      %v8656 = vsel %vm1102, %v8290, 0
      %v8659 = vsel %vm1102, %v8291, 0
      %v8662 = vsel %vm1102, %v8292, 0
      %v8665 = vsel %vm1102, %v8293, 0
      %v8668 = vsel %vm1102, %v8294, 0
      %v8671 = vsel %vm1102, %v8295, 0
      %v8674 = vsel %vm1102, %v8296, 0
      %v8677 = vsel %vm1102, %v8297, 0
      %v8680 = vsel %vm1102, %v8298, 0
      %v8683 = vsel %vm1102, %v8299, 0
      %8685 = vmatpush.msra.mxu0 0.0
      %8686 = vmatpush.msra.mxu0 0.0
      %8687 = vmatpush.msra.mxu0 0.0
      %8688 = vmatpush.msra.mxu0 0.0
      %8689 = vmatpush.msra.mxu0 0.0
      %8690 = vmatpush.msra.mxu0 0.0
      %8691 = vmatpush.msra.mxu0 0.0
      %8692 = vmatpush.msra.mxu0 0.0
      %8693 = vmatpush.msra.mxu0 0.0
      %8694 = vmatpush.msra.mxu0 0.0
      %8695 = vmatpush.msra.mxu0 0.0
      %8696 = vmatpush.msra.mxu0 0.0
      %8697 = vmatpush.msra.mxu0 %v313
      %8698 = vmatpush.msra.mxu0 %v312
      %8699 = vmatpush.msra.mxu0 %v311
      %8700 = vmatpush.msra.mxu0 %v310
      %8701 = vmatmul.f32.gmra.mxu0 %v8302
      %v8702 = vpop.f32.mrf.mxu0
      %v8703 = vadd.f32 %v8300, %v8702
      %8704 = vmatmul.f32.gmra.mxu0 %v8305
      %v8705 = vpop.f32.mrf.mxu0
      %v8706 = vadd.f32 %v8300, %v8705
      %8707 = vmatmul.f32.gmra.mxu0 %v8308
      %v8708 = vpop.f32.mrf.mxu0
      %v8709 = vadd.f32 %v8300, %v8708
      %8710 = vmatmul.f32.gmra.mxu0 %v8311
      %v8711 = vpop.f32.mrf.mxu0
      %v8712 = vadd.f32 %v8300, %v8711
      %8713 = vmatmul.f32.gmra.mxu0 %v8314
      %v8714 = vpop.f32.mrf.mxu0
      %v8715 = vadd.f32 %v8300, %v8714
      %8716 = vmatmul.f32.gmra.mxu0 %v8317
      %v8717 = vpop.f32.mrf.mxu0
      %v8718 = vadd.f32 %v8300, %v8717
      %8719 = vmatmul.f32.gmra.mxu0 %v8320
      %v8720 = vpop.f32.mrf.mxu0
      %v8721 = vadd.f32 %v8300, %v8720
      %8722 = vmatmul.f32.gmra.mxu0 %v8323
      %v8723 = vpop.f32.mrf.mxu0
      %v8724 = vadd.f32 %v8300, %v8723
      %8725 = vmatmul.f32.gmra.mxu0 %v8326
      %v8726 = vpop.f32.mrf.mxu0
      %v8727 = vadd.f32 %v8300, %v8726
      %8728 = vmatmul.f32.gmra.mxu0 %v8329
      %v8729 = vpop.f32.mrf.mxu0
      %v8730 = vadd.f32 %v8300, %v8729
      %8731 = vmatmul.f32.gmra.mxu0 %v8332
      %v8732 = vpop.f32.mrf.mxu0
      %v8733 = vadd.f32 %v8300, %v8732
      %8734 = vmatmul.f32.gmra.mxu0 %v8335
      %v8735 = vpop.f32.mrf.mxu0
      %v8736 = vadd.f32 %v8300, %v8735
      %8737 = vmatmul.f32.gmra.mxu0 %v8338
      %v8738 = vpop.f32.mrf.mxu0
      %v8739 = vadd.f32 %v8300, %v8738
      %8740 = vmatmul.f32.gmra.mxu0 %v8341
      %v8741 = vpop.f32.mrf.mxu0
      %v8742 = vadd.f32 %v8300, %v8741
      %8743 = vmatmul.f32.gmra.mxu0 %v8344
      %v8744 = vpop.f32.mrf.mxu0
      %v8745 = vadd.f32 %v8300, %v8744
      %8746 = vmatmul.f32.gmra.mxu0 %v8347
      %v8747 = vpop.f32.mrf.mxu0
      %v8748 = vadd.f32 %v8300, %v8747
      %8749 = vmatmul.f32.gmra.mxu0 %v8350
      %v8750 = vpop.f32.mrf.mxu0
      %v8751 = vadd.f32 %v8300, %v8750
      %8752 = vmatmul.f32.gmra.mxu0 %v8353
      %v8753 = vpop.f32.mrf.mxu0
      %v8754 = vadd.f32 %v8300, %v8753
      %8755 = vmatmul.f32.gmra.mxu0 %v8356
      %v8756 = vpop.f32.mrf.mxu0
      %v8757 = vadd.f32 %v8300, %v8756
      %8758 = vmatmul.f32.gmra.mxu0 %v8359
      %v8759 = vpop.f32.mrf.mxu0
      %v8760 = vadd.f32 %v8300, %v8759
      %8761 = vmatmul.f32.gmra.mxu0 %v8362
      %v8762 = vpop.f32.mrf.mxu0
      %v8763 = vadd.f32 %v8300, %v8762
      %8764 = vmatmul.f32.gmra.mxu0 %v8365
      %v8765 = vpop.f32.mrf.mxu0
      %v8766 = vadd.f32 %v8300, %v8765
      %8767 = vmatmul.f32.gmra.mxu0 %v8368
      %v8768 = vpop.f32.mrf.mxu0
      %v8769 = vadd.f32 %v8300, %v8768
      %8770 = vmatmul.f32.gmra.mxu0 %v8371
      %v8771 = vpop.f32.mrf.mxu0
      %v8772 = vadd.f32 %v8300, %v8771
      %8773 = vmatmul.f32.gmra.mxu0 %v8374
      %v8774 = vpop.f32.mrf.mxu0
      %v8775 = vadd.f32 %v8300, %v8774
      %8776 = vmatmul.f32.gmra.mxu0 %v8377
      %v8777 = vpop.f32.mrf.mxu0
      %v8778 = vadd.f32 %v8300, %v8777
      %8779 = vmatmul.f32.gmra.mxu0 %v8380
      %v8780 = vpop.f32.mrf.mxu0
      %v8781 = vadd.f32 %v8300, %v8780
      %8782 = vmatmul.f32.gmra.mxu0 %v8383
      %v8783 = vpop.f32.mrf.mxu0
      %v8784 = vadd.f32 %v8300, %v8783
      %8785 = vmatmul.f32.gmra.mxu0 %v8386
      %v8786 = vpop.f32.mrf.mxu0
      %v8787 = vadd.f32 %v8300, %v8786
      %8788 = vmatmul.f32.gmra.mxu0 %v8389
      %v8789 = vpop.f32.mrf.mxu0
      %v8790 = vadd.f32 %v8300, %v8789
      %8791 = vmatmul.f32.gmra.mxu0 %v8392
      %v8792 = vpop.f32.mrf.mxu0
      %v8793 = vadd.f32 %v8300, %v8792
      %8794 = vmatmul.f32.gmra.mxu0 %v8395
      %v8795 = vpop.f32.mrf.mxu0
      %v8796 = vadd.f32 %v8300, %v8795
      %8797 = vmatmul.f32.gmra.mxu0 %v8398
      %v8798 = vpop.f32.mrf.mxu0
      %v8799 = vadd.f32 %v8300, %v8798
      %8800 = vmatmul.f32.gmra.mxu0 %v8401
      %v8801 = vpop.f32.mrf.mxu0
      %v8802 = vadd.f32 %v8300, %v8801
      %8803 = vmatmul.f32.gmra.mxu0 %v8404
      %v8804 = vpop.f32.mrf.mxu0
      %v8805 = vadd.f32 %v8300, %v8804
      %8806 = vmatmul.f32.gmra.mxu0 %v8407
      %v8807 = vpop.f32.mrf.mxu0
      %v8808 = vadd.f32 %v8300, %v8807
      %8809 = vmatmul.f32.gmra.mxu0 %v8410
      %v8810 = vpop.f32.mrf.mxu0
      %v8811 = vadd.f32 %v8300, %v8810
      %8812 = vmatmul.f32.gmra.mxu0 %v8413
      %v8813 = vpop.f32.mrf.mxu0
      %v8814 = vadd.f32 %v8300, %v8813
      %8815 = vmatmul.f32.gmra.mxu0 %v8416
      %v8816 = vpop.f32.mrf.mxu0
      %v8817 = vadd.f32 %v8300, %v8816
      %8818 = vmatmul.f32.gmra.mxu0 %v8419
      %v8819 = vpop.f32.mrf.mxu0
      %v8820 = vadd.f32 %v8300, %v8819
      %8821 = vmatmul.f32.gmra.mxu0 %v8422
      %v8822 = vpop.f32.mrf.mxu0
      %v8823 = vadd.f32 %v8300, %v8822
      %8824 = vmatmul.f32.gmra.mxu0 %v8425
      %v8825 = vpop.f32.mrf.mxu0
      %v8826 = vadd.f32 %v8300, %v8825
      %8827 = vmatmul.f32.gmra.mxu0 %v8428
      %v8828 = vpop.f32.mrf.mxu0
      %v8829 = vadd.f32 %v8300, %v8828
      %8830 = vmatmul.f32.gmra.mxu0 %v8431
      %v8831 = vpop.f32.mrf.mxu0
      %v8832 = vadd.f32 %v8300, %v8831
      %8833 = vmatmul.f32.gmra.mxu0 %v8434
      %v8834 = vpop.f32.mrf.mxu0
      %v8835 = vadd.f32 %v8300, %v8834
      %8836 = vmatmul.f32.gmra.mxu0 %v8437
      %v8837 = vpop.f32.mrf.mxu0
      %v8838 = vadd.f32 %v8300, %v8837
      %8839 = vmatmul.f32.gmra.mxu0 %v8440
      %v8840 = vpop.f32.mrf.mxu0
      %v8841 = vadd.f32 %v8300, %v8840
      %8842 = vmatmul.f32.gmra.mxu0 %v8443
      %v8843 = vpop.f32.mrf.mxu0
      %v8844 = vadd.f32 %v8300, %v8843
      %8845 = vmatmul.f32.gmra.mxu0 %v8446
      %v8846 = vpop.f32.mrf.mxu0
      %v8847 = vadd.f32 %v8300, %v8846
      %8848 = vmatmul.f32.gmra.mxu0 %v8449
      %v8849 = vpop.f32.mrf.mxu0
      %v8850 = vadd.f32 %v8300, %v8849
      %8851 = vmatmul.f32.gmra.mxu0 %v8452
      %v8852 = vpop.f32.mrf.mxu0
      %v8853 = vadd.f32 %v8300, %v8852
      %8854 = vmatmul.f32.gmra.mxu0 %v8455
      %v8855 = vpop.f32.mrf.mxu0
      %v8856 = vadd.f32 %v8300, %v8855
      %8857 = vmatmul.f32.gmra.mxu0 %v8458
      %v8858 = vpop.f32.mrf.mxu0
      %v8859 = vadd.f32 %v8300, %v8858
      %8860 = vmatmul.f32.gmra.mxu0 %v8461
      %v8861 = vpop.f32.mrf.mxu0
      %v8862 = vadd.f32 %v8300, %v8861
      %8863 = vmatmul.f32.gmra.mxu0 %v8464
      %v8864 = vpop.f32.mrf.mxu0
      %v8865 = vadd.f32 %v8300, %v8864
      %8866 = vmatmul.f32.gmra.mxu0 %v8467
      %v8867 = vpop.f32.mrf.mxu0
      %v8868 = vadd.f32 %v8300, %v8867
      %8869 = vmatmul.f32.gmra.mxu0 %v8470
      %v8870 = vpop.f32.mrf.mxu0
      %v8871 = vadd.f32 %v8300, %v8870
      %8872 = vmatmul.f32.gmra.mxu0 %v8473
      %v8873 = vpop.f32.mrf.mxu0
      %v8874 = vadd.f32 %v8300, %v8873
      %8875 = vmatmul.f32.gmra.mxu0 %v8476
      %v8876 = vpop.f32.mrf.mxu0
      %v8877 = vadd.f32 %v8300, %v8876
      %8878 = vmatmul.f32.gmra.mxu0 %v8479
      %v8879 = vpop.f32.mrf.mxu0
      %v8880 = vadd.f32 %v8300, %v8879
      %8881 = vmatmul.f32.gmra.mxu0 %v8482
      %v8882 = vpop.f32.mrf.mxu0
      %v8883 = vadd.f32 %v8300, %v8882
      %8884 = vmatmul.f32.gmra.mxu0 %v8485
      %v8885 = vpop.f32.mrf.mxu0
      %v8886 = vadd.f32 %v8300, %v8885
      %8887 = vmatmul.f32.gmra.mxu0 %v8488
      %v8888 = vpop.f32.mrf.mxu0
      %v8889 = vadd.f32 %v8300, %v8888
      %8890 = vmatmul.f32.gmra.mxu0 %v8491
      %v8891 = vpop.f32.mrf.mxu0
      %v8892 = vadd.f32 %v8300, %v8891
      %8893 = vmatmul.f32.gmra.mxu0 %v8494
      %v8894 = vpop.f32.mrf.mxu0
      %v8895 = vadd.f32 %v8300, %v8894
      %8896 = vmatmul.f32.gmra.mxu0 %v8497
      %v8897 = vpop.f32.mrf.mxu0
      %v8898 = vadd.f32 %v8300, %v8897
      %8899 = vmatmul.f32.gmra.mxu0 %v8500
      %v8900 = vpop.f32.mrf.mxu0
      %v8901 = vadd.f32 %v8300, %v8900
      %8902 = vmatmul.f32.gmra.mxu0 %v8503
      %v8903 = vpop.f32.mrf.mxu0
      %v8904 = vadd.f32 %v8300, %v8903
      %8905 = vmatmul.f32.gmra.mxu0 %v8506
      %v8906 = vpop.f32.mrf.mxu0
      %v8907 = vadd.f32 %v8300, %v8906
      %8908 = vmatmul.f32.gmra.mxu0 %v8509
      %v8909 = vpop.f32.mrf.mxu0
      %v8910 = vadd.f32 %v8300, %v8909
      %8911 = vmatmul.f32.gmra.mxu0 %v8512
      %v8912 = vpop.f32.mrf.mxu0
      %v8913 = vadd.f32 %v8300, %v8912
      %8914 = vmatmul.f32.gmra.mxu0 %v8515
      %v8915 = vpop.f32.mrf.mxu0
      %v8916 = vadd.f32 %v8300, %v8915
      %8917 = vmatmul.f32.gmra.mxu0 %v8518
      %v8918 = vpop.f32.mrf.mxu0
      %v8919 = vadd.f32 %v8300, %v8918
      %8920 = vmatmul.f32.gmra.mxu0 %v8521
      %v8921 = vpop.f32.mrf.mxu0
      %v8922 = vadd.f32 %v8300, %v8921
      %8923 = vmatmul.f32.gmra.mxu0 %v8524
      %v8924 = vpop.f32.mrf.mxu0
      %v8925 = vadd.f32 %v8300, %v8924
      %8926 = vmatmul.f32.gmra.mxu0 %v8527
      %v8927 = vpop.f32.mrf.mxu0
      %v8928 = vadd.f32 %v8300, %v8927
      %8929 = vmatmul.f32.gmra.mxu0 %v8530
      %v8930 = vpop.f32.mrf.mxu0
      %v8931 = vadd.f32 %v8300, %v8930
      %8932 = vmatmul.f32.gmra.mxu0 %v8533
      %v8933 = vpop.f32.mrf.mxu0
      %v8934 = vadd.f32 %v8300, %v8933
      %8935 = vmatmul.f32.gmra.mxu0 %v8536
      %v8936 = vpop.f32.mrf.mxu0
      %v8937 = vadd.f32 %v8300, %v8936
      %8938 = vmatmul.f32.gmra.mxu0 %v8539
      %v8939 = vpop.f32.mrf.mxu0
      %v8940 = vadd.f32 %v8300, %v8939
      %8941 = vmatmul.f32.gmra.mxu0 %v8542
      %v8942 = vpop.f32.mrf.mxu0
      %v8943 = vadd.f32 %v8300, %v8942
      %8944 = vmatmul.f32.gmra.mxu0 %v8545
      %v8945 = vpop.f32.mrf.mxu0
      %v8946 = vadd.f32 %v8300, %v8945
      %8947 = vmatmul.f32.gmra.mxu0 %v8548
      %v8948 = vpop.f32.mrf.mxu0
      %v8949 = vadd.f32 %v8300, %v8948
      %8950 = vmatmul.f32.gmra.mxu0 %v8551
      %v8951 = vpop.f32.mrf.mxu0
      %v8952 = vadd.f32 %v8300, %v8951
      %8953 = vmatmul.f32.gmra.mxu0 %v8554
      %v8954 = vpop.f32.mrf.mxu0
      %v8955 = vadd.f32 %v8300, %v8954
      %8956 = vmatmul.f32.gmra.mxu0 %v8557
      %v8957 = vpop.f32.mrf.mxu0
      %v8958 = vadd.f32 %v8300, %v8957
      %8959 = vmatmul.f32.gmra.mxu0 %v8560
      %v8960 = vpop.f32.mrf.mxu0
      %v8961 = vadd.f32 %v8300, %v8960
      %8962 = vmatmul.f32.gmra.mxu0 %v8563
      %v8963 = vpop.f32.mrf.mxu0
      %v8964 = vadd.f32 %v8300, %v8963
      %8965 = vmatmul.f32.gmra.mxu0 %v8566
      %v8966 = vpop.f32.mrf.mxu0
      %v8967 = vadd.f32 %v8300, %v8966
      %8968 = vmatmul.f32.gmra.mxu0 %v8569
      %v8969 = vpop.f32.mrf.mxu0
      %v8970 = vadd.f32 %v8300, %v8969
      %8971 = vmatmul.f32.gmra.mxu0 %v8572
      %v8972 = vpop.f32.mrf.mxu0
      %v8973 = vadd.f32 %v8300, %v8972
      %8974 = vmatmul.f32.gmra.mxu0 %v8575
      %v8975 = vpop.f32.mrf.mxu0
      %v8976 = vadd.f32 %v8300, %v8975
      %8977 = vmatmul.f32.gmra.mxu0 %v8578
      %v8978 = vpop.f32.mrf.mxu0
      %v8979 = vadd.f32 %v8300, %v8978
      %8980 = vmatmul.f32.gmra.mxu0 %v8581
      %v8981 = vpop.f32.mrf.mxu0
      %v8982 = vadd.f32 %v8300, %v8981
      %8983 = vmatmul.f32.gmra.mxu0 %v8584
      %v8984 = vpop.f32.mrf.mxu0
      %v8985 = vadd.f32 %v8300, %v8984
      %8986 = vmatmul.f32.gmra.mxu0 %v8587
      %v8987 = vpop.f32.mrf.mxu0
      %v8988 = vadd.f32 %v8300, %v8987
      %8989 = vmatmul.f32.gmra.mxu0 %v8590
      %v8990 = vpop.f32.mrf.mxu0
      %v8991 = vadd.f32 %v8300, %v8990
      %8992 = vmatmul.f32.gmra.mxu0 %v8593
      %v8993 = vpop.f32.mrf.mxu0
      %v8994 = vadd.f32 %v8300, %v8993
      %8995 = vmatmul.f32.gmra.mxu0 %v8596
      %v8996 = vpop.f32.mrf.mxu0
      %v8997 = vadd.f32 %v8300, %v8996
      %8998 = vmatmul.f32.gmra.mxu0 %v8599
      %v8999 = vpop.f32.mrf.mxu0
      %v9000 = vadd.f32 %v8300, %v8999
      %9001 = vmatmul.f32.gmra.mxu0 %v8602
      %v9002 = vpop.f32.mrf.mxu0
      %v9003 = vadd.f32 %v8300, %v9002
      %9004 = vmatmul.f32.gmra.mxu0 %v8605
      %v9005 = vpop.f32.mrf.mxu0
      %v9006 = vadd.f32 %v8300, %v9005
      %9007 = vmatmul.f32.gmra.mxu0 %v8608
      %v9008 = vpop.f32.mrf.mxu0
      %v9009 = vadd.f32 %v8300, %v9008
      %9010 = vmatmul.f32.gmra.mxu0 %v8611
      %v9011 = vpop.f32.mrf.mxu0
      %v9012 = vadd.f32 %v8300, %v9011
      %9013 = vmatmul.f32.gmra.mxu0 %v8614
      %v9014 = vpop.f32.mrf.mxu0
      %v9015 = vadd.f32 %v8300, %v9014
      %9016 = vmatmul.f32.gmra.mxu0 %v8617
      %v9017 = vpop.f32.mrf.mxu0
      %v9018 = vadd.f32 %v8300, %v9017
      %9019 = vmatmul.f32.gmra.mxu0 %v8620
      %v9020 = vpop.f32.mrf.mxu0
      %v9021 = vadd.f32 %v8300, %v9020
      %9022 = vmatmul.f32.gmra.mxu0 %v8623
      %v9023 = vpop.f32.mrf.mxu0
      %v9024 = vadd.f32 %v8300, %v9023
      %9025 = vmatmul.f32.gmra.mxu0 %v8626
      %v9026 = vpop.f32.mrf.mxu0
      %v9027 = vadd.f32 %v8300, %v9026
      %9028 = vmatmul.f32.gmra.mxu0 %v8629
      %v9029 = vpop.f32.mrf.mxu0
      %v9030 = vadd.f32 %v8300, %v9029
      %9031 = vmatmul.f32.gmra.mxu0 %v8632
      %v9032 = vpop.f32.mrf.mxu0
      %v9033 = vadd.f32 %v8300, %v9032
      %9034 = vmatmul.f32.gmra.mxu0 %v8635
      %v9035 = vpop.f32.mrf.mxu0
      %v9036 = vadd.f32 %v8300, %v9035
      %9037 = vmatmul.f32.gmra.mxu0 %v8638
      %v9038 = vpop.f32.mrf.mxu0
      %v9039 = vadd.f32 %v8300, %v9038
      %9040 = vmatmul.f32.gmra.mxu0 %v8641
      %v9041 = vpop.f32.mrf.mxu0
      %v9042 = vadd.f32 %v8300, %v9041
      %9043 = vmatmul.f32.gmra.mxu0 %v8644
      %v9044 = vpop.f32.mrf.mxu0
      %v9045 = vadd.f32 %v8300, %v9044
      %9046 = vmatmul.f32.gmra.mxu0 %v8647
      %v9047 = vpop.f32.mrf.mxu0
      %v9048 = vadd.f32 %v8300, %v9047
      %9049 = vmatmul.f32.gmra.mxu0 %v8650
      %v9050 = vpop.f32.mrf.mxu0
      %v9051 = vadd.f32 %v8300, %v9050
      %9052 = vmatmul.f32.gmra.mxu0 %v8653
      %v9053 = vpop.f32.mrf.mxu0
      %v9054 = vadd.f32 %v8300, %v9053
      %9055 = vmatmul.f32.gmra.mxu0 %v8656
      %v9056 = vpop.f32.mrf.mxu0
      %v9057 = vadd.f32 %v8300, %v9056
      %9058 = vmatmul.f32.gmra.mxu0 %v8659
      %v9059 = vpop.f32.mrf.mxu0
      %v9060 = vadd.f32 %v8300, %v9059
      %9061 = vmatmul.f32.gmra.mxu0 %v8662
      %v9062 = vpop.f32.mrf.mxu0
      %v9063 = vadd.f32 %v8300, %v9062
      %9064 = vmatmul.f32.gmra.mxu0 %v8665
      %v9065 = vpop.f32.mrf.mxu0
      %v9066 = vadd.f32 %v8300, %v9065
      %9067 = vmatmul.f32.gmra.mxu0 %v8668
      %v9068 = vpop.f32.mrf.mxu0
      %v9069 = vadd.f32 %v8300, %v9068
      %9070 = vmatmul.f32.gmra.mxu0 %v8671
      %v9071 = vpop.f32.mrf.mxu0
      %v9072 = vadd.f32 %v8300, %v9071
      %9073 = vmatmul.f32.gmra.mxu0 %v8674
      %v9074 = vpop.f32.mrf.mxu0
      %v9075 = vadd.f32 %v8300, %v9074
      %9076 = vmatmul.f32.gmra.mxu0 %v8677
      %v9077 = vpop.f32.mrf.mxu0
      %v9078 = vadd.f32 %v8300, %v9077
      %9079 = vmatmul.f32.gmra.mxu0 %v8680
      %v9080 = vpop.f32.mrf.mxu0
      %v9081 = vadd.f32 %v8300, %v9080
      %9082 = vmatmul.f32.gmra.mxu0 %v8683
      %v9083 = vpop.f32.mrf.mxu0
      %v9084 = vadd.f32 %v8300, %v9083
      %9085 = vdwg.mxu0
      %vm9086 = vcmask 64512
      %9087 = vst.msk [vmem:[%s172] sm:$0xff] %vm9086, %v8703
      %9088 = vst.msk [vmem:[%s172 + $0x8] sm:$0xff] %vm9086, %v8706
      %9089 = vst.msk [vmem:[%s172 + $0x10] sm:$0xff] %vm9086, %v8709
      %9090 = vst.msk [vmem:[%s172 + $0x18] sm:$0xff] %vm9086, %v8712
      %9091 = vst.msk [vmem:[%s172 + $0x20] sm:$0xff] %vm9086, %v8715
      %9092 = vst.msk [vmem:[%s172 + $0x28] sm:$0xff] %vm9086, %v8718
      %9093 = vst.msk [vmem:[%s172 + $0x30] sm:$0xff] %vm9086, %v8721
      %9094 = vst.msk [vmem:[%s172 + $0x38] sm:$0xff] %vm9086, %v8724
      %9095 = vst.msk [vmem:[%s172 + $0x40] sm:$0xff] %vm9086, %v8727
      %9096 = vst.msk [vmem:[%s172 + $0x48] sm:$0xff] %vm9086, %v8730
      %9097 = vst.msk [vmem:[%s172 + $0x50] sm:$0xff] %vm9086, %v8733
      %9098 = vst.msk [vmem:[%s172 + $0x58] sm:$0xff] %vm9086, %v8736
      %9099 = vst.msk [vmem:[%s172 + $0x60] sm:$0xff] %vm9086, %v8739
      %9100 = vst.msk [vmem:[%s172 + $0x68] sm:$0xff] %vm9086, %v8742
      %9101 = vst.msk [vmem:[%s172 + $0x70] sm:$0xff] %vm9086, %v8745
      %9102 = vst.msk [vmem:[%s172 + $0x78] sm:$0xff] %vm9086, %v8748
      %9103 = vst.msk [vmem:[%s172 + $0x80] sm:$0xff] %vm9086, %v8751
      %9104 = vst.msk [vmem:[%s172 + $0x88] sm:$0xff] %vm9086, %v8754
      %9105 = vst.msk [vmem:[%s172 + $0x90] sm:$0xff] %vm9086, %v8757
      %9106 = vst.msk [vmem:[%s172 + $0x98] sm:$0xff] %vm9086, %v8760
      %9107 = vst.msk [vmem:[%s172 + $0xa0] sm:$0xff] %vm9086, %v8763
      %9108 = vst.msk [vmem:[%s172 + $0xa8] sm:$0xff] %vm9086, %v8766
      %9109 = vst.msk [vmem:[%s172 + $0xb0] sm:$0xff] %vm9086, %v8769
      %9110 = vst.msk [vmem:[%s172 + $0xb8] sm:$0xff] %vm9086, %v8772
      %9111 = vst.msk [vmem:[%s172 + $0xc0] sm:$0xff] %vm9086, %v8775
      %9112 = vst.msk [vmem:[%s172 + $0xc8] sm:$0xff] %vm9086, %v8778
      %9113 = vst.msk [vmem:[%s172 + $0xd0] sm:$0xff] %vm9086, %v8781
      %9114 = vst.msk [vmem:[%s172 + $0xd8] sm:$0xff] %vm9086, %v8784
      %9115 = vst.msk [vmem:[%s172 + $0xe0] sm:$0xff] %vm9086, %v8787
      %9116 = vst.msk [vmem:[%s172 + $0xe8] sm:$0xff] %vm9086, %v8790
      %9117 = vst.msk [vmem:[%s172 + $0xf0] sm:$0xff] %vm9086, %v8793
      %9118 = vst.msk [vmem:[%s172 + $0xf8] sm:$0xff] %vm9086, %v8796
      %9119 = vst.msk [vmem:[%s172 + $0x100] sm:$0xff] %vm9086, %v8799
      %9120 = vst.msk [vmem:[%s172 + $0x108] sm:$0xff] %vm9086, %v8802
      %9121 = vst.msk [vmem:[%s172 + $0x110] sm:$0xff] %vm9086, %v8805
      %9122 = vst.msk [vmem:[%s172 + $0x118] sm:$0xff] %vm9086, %v8808
      %9123 = vst.msk [vmem:[%s172 + $0x120] sm:$0xff] %vm9086, %v8811
      %9124 = vst.msk [vmem:[%s172 + $0x128] sm:$0xff] %vm9086, %v8814
      %9125 = vst.msk [vmem:[%s172 + $0x130] sm:$0xff] %vm9086, %v8817
      %9126 = vst.msk [vmem:[%s172 + $0x138] sm:$0xff] %vm9086, %v8820
      %9127 = vst.msk [vmem:[%s172 + $0x140] sm:$0xff] %vm9086, %v8823
      %9128 = vst.msk [vmem:[%s172 + $0x148] sm:$0xff] %vm9086, %v8826
      %9129 = vst.msk [vmem:[%s172 + $0x150] sm:$0xff] %vm9086, %v8829
      %9130 = vst.msk [vmem:[%s172 + $0x158] sm:$0xff] %vm9086, %v8832
      %9131 = vst.msk [vmem:[%s172 + $0x160] sm:$0xff] %vm9086, %v8835
      %9132 = vst.msk [vmem:[%s172 + $0x168] sm:$0xff] %vm9086, %v8838
      %9133 = vst.msk [vmem:[%s172 + $0x170] sm:$0xff] %vm9086, %v8841
      %9134 = vst.msk [vmem:[%s172 + $0x178] sm:$0xff] %vm9086, %v8844
      %9135 = vst.msk [vmem:[%s172 + $0x180] sm:$0xff] %vm9086, %v8847
      %9136 = vst.msk [vmem:[%s172 + $0x188] sm:$0xff] %vm9086, %v8850
      %9137 = vst.msk [vmem:[%s172 + $0x190] sm:$0xff] %vm9086, %v8853
      %9138 = vst.msk [vmem:[%s172 + $0x198] sm:$0xff] %vm9086, %v8856
      %9139 = vst.msk [vmem:[%s172 + $0x1a0] sm:$0xff] %vm9086, %v8859
      %9140 = vst.msk [vmem:[%s172 + $0x1a8] sm:$0xff] %vm9086, %v8862
      %9141 = vst.msk [vmem:[%s172 + $0x1b0] sm:$0xff] %vm9086, %v8865
      %9142 = vst.msk [vmem:[%s172 + $0x1b8] sm:$0xff] %vm9086, %v8868
      %9143 = vst.msk [vmem:[%s172 + $0x1c0] sm:$0xff] %vm9086, %v8871
      %9144 = vst.msk [vmem:[%s172 + $0x1c8] sm:$0xff] %vm9086, %v8874
      %9145 = vst.msk [vmem:[%s172 + $0x1d0] sm:$0xff] %vm9086, %v8877
      %9146 = vst.msk [vmem:[%s172 + $0x1d8] sm:$0xff] %vm9086, %v8880
      %9147 = vst.msk [vmem:[%s172 + $0x1e0] sm:$0xff] %vm9086, %v8883
      %9148 = vst.msk [vmem:[%s172 + $0x1e8] sm:$0xff] %vm9086, %v8886
      %9149 = vst.msk [vmem:[%s172 + $0x1f0] sm:$0xff] %vm9086, %v8889
      %9150 = vst.msk [vmem:[%s172 + $0x1f8] sm:$0xff] %vm9086, %v8892
      %9151 = vst.msk [vmem:[%s172 + $0x200] sm:$0xff] %vm9086, %v8895
      %9152 = vst.msk [vmem:[%s172 + $0x208] sm:$0xff] %vm9086, %v8898
      %9153 = vst.msk [vmem:[%s172 + $0x210] sm:$0xff] %vm9086, %v8901
      %9154 = vst.msk [vmem:[%s172 + $0x218] sm:$0xff] %vm9086, %v8904
      %9155 = vst.msk [vmem:[%s172 + $0x220] sm:$0xff] %vm9086, %v8907
      %9156 = vst.msk [vmem:[%s172 + $0x228] sm:$0xff] %vm9086, %v8910
      %9157 = vst.msk [vmem:[%s172 + $0x230] sm:$0xff] %vm9086, %v8913
      %9158 = vst.msk [vmem:[%s172 + $0x238] sm:$0xff] %vm9086, %v8916
      %9159 = vst.msk [vmem:[%s172 + $0x240] sm:$0xff] %vm9086, %v8919
      %9160 = vst.msk [vmem:[%s172 + $0x248] sm:$0xff] %vm9086, %v8922
      %9161 = vst.msk [vmem:[%s172 + $0x250] sm:$0xff] %vm9086, %v8925
      %9162 = vst.msk [vmem:[%s172 + $0x258] sm:$0xff] %vm9086, %v8928
      %9163 = vst.msk [vmem:[%s172 + $0x260] sm:$0xff] %vm9086, %v8931
      %9164 = vst.msk [vmem:[%s172 + $0x268] sm:$0xff] %vm9086, %v8934
      %9165 = vst.msk [vmem:[%s172 + $0x270] sm:$0xff] %vm9086, %v8937
      %9166 = vst.msk [vmem:[%s172 + $0x278] sm:$0xff] %vm9086, %v8940
      %9167 = vst.msk [vmem:[%s172 + $0x280] sm:$0xff] %vm9086, %v8943
      %9168 = vst.msk [vmem:[%s172 + $0x288] sm:$0xff] %vm9086, %v8946
      %9169 = vst.msk [vmem:[%s172 + $0x290] sm:$0xff] %vm9086, %v8949
      %9170 = vst.msk [vmem:[%s172 + $0x298] sm:$0xff] %vm9086, %v8952
      %9171 = vst.msk [vmem:[%s172 + $0x2a0] sm:$0xff] %vm9086, %v8955
      %9172 = vst.msk [vmem:[%s172 + $0x2a8] sm:$0xff] %vm9086, %v8958
      %9173 = vst.msk [vmem:[%s172 + $0x2b0] sm:$0xff] %vm9086, %v8961
      %9174 = vst.msk [vmem:[%s172 + $0x2b8] sm:$0xff] %vm9086, %v8964
      %9175 = vst.msk [vmem:[%s172 + $0x2c0] sm:$0xff] %vm9086, %v8967
      %9176 = vst.msk [vmem:[%s172 + $0x2c8] sm:$0xff] %vm9086, %v8970
      %9177 = vst.msk [vmem:[%s172 + $0x2d0] sm:$0xff] %vm9086, %v8973
      %9178 = vst.msk [vmem:[%s172 + $0x2d8] sm:$0xff] %vm9086, %v8976
      %9179 = vst.msk [vmem:[%s172 + $0x2e0] sm:$0xff] %vm9086, %v8979
      %9180 = vst.msk [vmem:[%s172 + $0x2e8] sm:$0xff] %vm9086, %v8982
      %9181 = vst.msk [vmem:[%s172 + $0x2f0] sm:$0xff] %vm9086, %v8985
      %9182 = vst.msk [vmem:[%s172 + $0x2f8] sm:$0xff] %vm9086, %v8988
      %9183 = vst.msk [vmem:[%s172 + $0x300] sm:$0xff] %vm9086, %v8991
      %9184 = vst.msk [vmem:[%s172 + $0x308] sm:$0xff] %vm9086, %v8994
      %9185 = vst.msk [vmem:[%s172 + $0x310] sm:$0xff] %vm9086, %v8997
      %9186 = vst.msk [vmem:[%s172 + $0x318] sm:$0xff] %vm9086, %v9000
      %9187 = vst.msk [vmem:[%s172 + $0x320] sm:$0xff] %vm9086, %v9003
      %9188 = vst.msk [vmem:[%s172 + $0x328] sm:$0xff] %vm9086, %v9006
      %9189 = vst.msk [vmem:[%s172 + $0x330] sm:$0xff] %vm9086, %v9009
      %9190 = vst.msk [vmem:[%s172 + $0x338] sm:$0xff] %vm9086, %v9012
      %9191 = vst.msk [vmem:[%s172 + $0x340] sm:$0xff] %vm9086, %v9015
      %9192 = vst.msk [vmem:[%s172 + $0x348] sm:$0xff] %vm9086, %v9018
      %9193 = vst.msk [vmem:[%s172 + $0x350] sm:$0xff] %vm9086, %v9021
      %9194 = vst.msk [vmem:[%s172 + $0x358] sm:$0xff] %vm9086, %v9024
      %9195 = vst.msk [vmem:[%s172 + $0x360] sm:$0xff] %vm9086, %v9027
      %9196 = vst.msk [vmem:[%s172 + $0x368] sm:$0xff] %vm9086, %v9030
      %9197 = vst.msk [vmem:[%s172 + $0x370] sm:$0xff] %vm9086, %v9033
      %9198 = vst.msk [vmem:[%s172 + $0x378] sm:$0xff] %vm9086, %v9036
      %9199 = vst.msk [vmem:[%s172 + $0x380] sm:$0xff] %vm9086, %v9039
      %9200 = vst.msk [vmem:[%s172 + $0x388] sm:$0xff] %vm9086, %v9042
      %9201 = vst.msk [vmem:[%s172 + $0x390] sm:$0xff] %vm9086, %v9045
      %9202 = vst.msk [vmem:[%s172 + $0x398] sm:$0xff] %vm9086, %v9048
      %9203 = vst.msk [vmem:[%s172 + $0x3a0] sm:$0xff] %vm9086, %v9051
      %9204 = vst.msk [vmem:[%s172 + $0x3a8] sm:$0xff] %vm9086, %v9054
      %9205 = vst.msk [vmem:[%s172 + $0x3b0] sm:$0xff] %vm9086, %v9057
      %9206 = vst.msk [vmem:[%s172 + $0x3b8] sm:$0xff] %vm9086, %v9060
      %9207 = vst.msk [vmem:[%s172 + $0x3c0] sm:$0xff] %vm9086, %v9063
      %9208 = vst.msk [vmem:[%s172 + $0x3c8] sm:$0xff] %vm9086, %v9066
      %9209 = vst.msk [vmem:[%s172 + $0x3d0] sm:$0xff] %vm9086, %v9069
      %9210 = vst.msk [vmem:[%s172 + $0x3d8] sm:$0xff] %vm9086, %v9072
      %9211 = vst.msk [vmem:[%s172 + $0x3e0] sm:$0xff] %vm9086, %v9075
      %9212 = vst.msk [vmem:[%s172 + $0x3e8] sm:$0xff] %vm9086, %v9078
      %9213 = vst.msk [vmem:[%s172 + $0x3f0] sm:$0xff] %vm9086, %v9081
      %9214 = vst.msk [vmem:[%s172 + $0x3f8] sm:$0xff] %vm9086, %v9084
      %s9215 = smul.u32 128, %s14
      %p9216 = scmp.lt.s32.totalorder %s9215, 255
      %s9217 = scalar_select %p9216, %s9215, 255
      %s9218 = smul.addr %s9217, 8
      %s9219 = scalar_lea.vmem %s3, %s9218
      // Predicated region
      $region33: #{mlp_forward.1} parent=31 // pred_check
        %p9220 = pneg %p100
      $region34: #{mlp_forward.1} parent=31 // pred_check_branch
        %9222 = sbr.rel (%p9220) target = $region36
      $region35: #{mlp_forward.1} parent=31 // pred_region
        %s9223 = smul.u32 128, %s14
      $region36: #{mlp_forward.1} parent=31 // pred_fallthru
        _
    $region32: #{mlp_forward.1} parent=5 // pred_fallthru
      _
    %p9224 = scmp.le.s32.totalorder 2, %s9
    // Predicated region
    $region37: #{mlp_forward.1} parent=5 // pred_check
      %p9225 = pneg %p9224
    $region38: #{mlp_forward.1} parent=5 // pred_check_branch
      %9227 = sbr.rel (%p9225) target = $region40
    $region39: #{mlp_forward.1} parent=5 // pred_region
      %s9228 = ssub.s32 %s9, 2
      // Predicated region
      $region41: #{mlp_forward.1} parent=39 // pred_check
        %p9229 = pneg %p106
      $region42: #{mlp_forward.1} parent=39 // pred_check_branch
        %9231 = sbr.rel (%p9229) target = $region44
      $region43: #{mlp_forward.1} parent=39 // pred_region
        %s9232 = smul.u32 128, %s15
        %p9233 = scmp.lt.s32.totalorder %s9232, 255
        %s9234 = scalar_select %p9233, %s9232, 255
        %s9235 = smul.addr %s9234, 8
        %s9236 = scalar_lea.vmem %s3, %s9235
      $region44: #{mlp_forward.1} parent=39 // pred_fallthru
        _
    $region40: #{mlp_forward.1} parent=5 // pred_fallthru
      _
  $region6: #{mlp_forward.1} parent=0 // loop_footer
    %s13 = sadd.s32 1, %s9
  $region7: #{mlp_forward.1} parent=0 // loop_footer_branch
    %8 = sbr.rel target = $region3
  $region8: #{mlp_forward.1} parent=0 // loop_exit
    _

</llo_original>
